<compile_context>
chip_gen: v7x
topology: tpu7x:2x2x1
jax: 0.10.0
libtpu: 0.0.40
codegen_flags: <defaults>
</compile_context>

<pallas_src>
import functools

import jax
import jax.numpy as jnp
from jax import lax
from jax.experimental import pallas as pl
from jax.experimental.pallas import tpu as pltpu


# ----------------------------------------------------------------------------
# Fused kernel: all LSTM layers, both directions, full-sequence recurrence.
# ----------------------------------------------------------------------------
def _encoder_lstm_kernel(*refs, hidden_dim, seq_len, batch, num_layers, unroll):
    H, T, B, L = hidden_dim, seq_len, batch, num_layers
    G = 4 * H                                    # per-direction gate width
    n_pairs = min(2, max(L - 1, 0))              # ping/pong inter-layer buffers

    x_ref = refs[0]                              # (T*B, E) time-major, flattened
    w_refs = refs[1:1 + 3 * L]                   # per layer: wih_cat, whh_bd, b_cat
    outf_ref, outb_ref, h_n_ref, c_n_ref = refs[1 + 3 * L:5 + 3 * L]
    pg_scr = refs[5 + 3 * L]                     # (T*B, 8H) pre-gates (reused)
    base = 6 + 3 * L
    seq_bufs = [(refs[base + 2 * p], refs[base + 2 * p + 1])
                for p in range(n_pairs)]         # per-direction (T*B, H) buffers

    def cell(gates, c_prev):
        # Kernel gate order i, f, o, g (repacked offline from PyTorch i, f, g, o)
        # -> one contiguous sigmoid over (B, 3H), one tanh over (B, H).
        sig = jax.nn.sigmoid(gates[:, 0:3 * H])
        i = sig[:, 0:H]
        f = sig[:, H:2 * H]
        o = sig[:, 2 * H:3 * H]
        g = jnp.tanh(gates[:, 3 * H:4 * H])
        c_new = f * c_prev + i * g
        return o * jnp.tanh(c_new), c_new

    for l in range(L):
        wih_ref, whh_ref, b_ref = w_refs[3 * l:3 * l + 3]

        # ---- Phase 1: input projections for every timestep & both directions
        #      as one big MXU matmul (off the serial critical path). -----------
        if l == 0:
            pg_scr[...] = (jnp.dot(x_ref[...], wih_ref[...],
                                   preferred_element_type=jnp.float32)
                           + b_ref[...])
        else:
            prev_f, prev_b = seq_bufs[(l - 1) % n_pairs]
            pg_scr[...] = (jnp.dot(prev_f[...], wih_ref[0:H, :],
                                   preferred_element_type=jnp.float32)
                           + jnp.dot(prev_b[...], wih_ref[H:2 * H, :],
                                     preferred_element_type=jnp.float32)
                           + b_ref[...])

        # ---- Phase 2: serial recurrence; one block-diagonal W_hh matmul per
        #      step covers both directions; h/c stay in loop-carry vregs. ------
        if l == L - 1:
            out_f, out_b = outf_ref, outb_ref
        else:
            out_f, out_b = seq_bufs[l % n_pairs]

        def step(t, carry, _whh=whh_ref, _of=out_f, _ob=out_b):
            h_f, c_f, h_b, c_b = carry
            tr = T - 1 - t
            off_f = pl.multiple_of(t * B, B)
            off_b = pl.multiple_of(tr * B, B)
            h_cat = jnp.concatenate([h_f, h_b], axis=-1)             # (B, 2H)
            rec = jnp.dot(h_cat, _whh[...],
                          preferred_element_type=jnp.float32)        # (B, 8H)
            gates_f = rec[:, 0:G] + pg_scr[pl.ds(off_f, B), pl.ds(0, G)]
            gates_b = rec[:, G:2 * G] + pg_scr[pl.ds(off_b, B), pl.ds(G, G)]
            h_f, c_f = cell(gates_f, c_f)
            h_b, c_b = cell(gates_b, c_b)
            _of[pl.ds(off_f, B), :] = h_f
            _ob[pl.ds(off_b, B), :] = h_b
            return h_f, c_f, h_b, c_b

        z = jnp.zeros((B, H), jnp.float32)       # h_0 = c_0 = 0 (PyTorch default)
        h_f, c_f, h_b, c_b = lax.fori_loop(0, T, step, (z, z, z, z),
                                           unroll=unroll)

        # PyTorch ordering: index = layer * 2 + direction (0=fwd, 1=bwd).
        h_n_ref[2 * l + 0] = h_f
        h_n_ref[2 * l + 1] = h_b
        c_n_ref[2 * l + 0] = c_f
        c_n_ref[2 * l + 1] = c_b


def encoder_lstm(x_tm_flat, packed_layers, *, hidden_dim, seq_len, batch):
    """All BiLSTM layers over time-major flattened input (T*B, E).

    Returns (out_fwd (T*B,H), out_bwd (T*B,H), h_n (2L,B,H), c_n (2L,B,H))."""
    T, B, H = seq_len, batch, hidden_dim
    L = len(packed_layers)
    E = x_tm_flat.shape[1]
    n_pairs = min(2, max(L - 1, 0))

    flat_w = []
    for (wih, whh, b) in packed_layers:
        flat_w.extend((wih, whh, b))

    vmem = pl.BlockSpec(memory_space=pltpu.MemorySpace.VMEM)
    out_shape = (
        jax.ShapeDtypeStruct((T * B, H), jnp.float32),       # top-layer fwd seq
        jax.ShapeDtypeStruct((T * B, H), jnp.float32),       # top-layer bwd seq
        jax.ShapeDtypeStruct((2 * L, B, H), jnp.float32),    # h_n
        jax.ShapeDtypeStruct((2 * L, B, H), jnp.float32),    # c_n
    )
    scratch = [pltpu.VMEM((T * B, 8 * H), jnp.float32)]      # pre-gates
    for _ in range(n_pairs):                                 # inter-layer buffers
        scratch.append(pltpu.VMEM((T * B, H), jnp.float32))
        scratch.append(pltpu.VMEM((T * B, H), jnp.float32))

    # Everything (inputs / outputs / scratch) is VMEM-resident at once.
    elems = T * B * E + sum(int(w.size) for w in flat_w)
    elems += 2 * T * B * H + 2 * (2 * L * B * H)
    elems += T * B * 8 * H + 2 * n_pairs * T * B * H
    vmem_limit = int(min(64 << 20, max(16 << 20, 2 * elems * 4)))

    kernel = functools.partial(_encoder_lstm_kernel, hidden_dim=H, seq_len=T,
                               batch=B, num_layers=L, unroll=min(T, 8))
    return pl.pallas_call(
        kernel,
        out_shape=out_shape,
        in_specs=[vmem] * (1 + 3 * L),
        out_specs=(vmem, vmem, vmem, vmem),
        scratch_shapes=scratch,
        compiler_params=pltpu.CompilerParams(vmem_limit_bytes=vmem_limit),
    )(x_tm_flat, *flat_w)


# ----------------------------------------------------------------------------
# Offline weight repacking (PyTorch layout -> kernel layout).
# ----------------------------------------------------------------------------
def _reorder_gates(w):
    # PyTorch gate order (i, f, g, o) -> kernel order (i, f, o, g), along axis 0.
    i, f, g, o = jnp.split(w, 4, axis=0)
    return jnp.concatenate([i, f, o, g], axis=0)


def pack_bilstm_layer(fwd, bwd, hidden_dim):
    """Pack one bidirectional layer's PyTorch-style params into kernel layout."""
    H = hidden_dim

    def direction(p):
        w_ih, w_hh, b_ih, b_hh = p
        wih_k = _reorder_gates(w_ih).T                        # (Din, 4H)
        whh_k = _reorder_gates(w_hh).T                        # (H, 4H)
        b_k = _reorder_gates(b_ih) + _reorder_gates(b_hh)     # (4H,) summed bias
        return wih_k, whh_k, b_k

    wih_f, whh_f, b_f = direction(fwd)
    wih_b, whh_b, b_b = direction(bwd)

    wih_cat = jnp.concatenate([wih_f, wih_b], axis=1)              # (Din, 8H)
    b_cat = jnp.concatenate([b_f, b_b], axis=0).reshape(1, 8 * H)  # (1, 8H)
    whh_bd = jnp.zeros((2 * H, 8 * H), jnp.float32)                # block-diag
    whh_bd = whh_bd.at[0:H, 0:4 * H].set(whh_f)
    whh_bd = whh_bd.at[H:2 * H, 4 * H:8 * H].set(whh_b)
    return wih_cat, whh_bd, b_cat


# ----------------------------------------------------------------------------
# Parameter setup (deterministic, synthetic — mirrors nn.Embedding + nn.LSTM).
# ----------------------------------------------------------------------------
def init_encoder_params(key, vocab_size, embedding_dim, hidden_dim, num_layers):
    keys = jax.random.split(key, 1 + num_layers * 2 * 4)
    k = iter(keys)

    emb = 0.1 * jax.random.normal(next(k), (vocab_size, embedding_dim),
                                  jnp.float32)
    emb = emb.at[0].set(0.0)                     # padding_idx=0 -> zero row

    raw_layers = []
    for l in range(num_layers):
        d_in = embedding_dim if l == 0 else 2 * hidden_dim
        dirs = []
        for _ in range(2):                       # forward, reverse
            w_ih = 0.1 * jax.random.normal(next(k), (4 * hidden_dim, d_in),
                                           jnp.float32)
            w_hh = 0.1 * jax.random.normal(next(k), (4 * hidden_dim, hidden_dim),
                                           jnp.float32)
            b_ih = 0.1 * jax.random.normal(next(k), (4 * hidden_dim,), jnp.float32)
            b_hh = 0.1 * jax.random.normal(next(k), (4 * hidden_dim,), jnp.float32)
            dirs.append((w_ih, w_hh, b_ih, b_hh))
        raw_layers.append(tuple(dirs))

    packed = [pack_bilstm_layer(fwd, bwd, hidden_dim) for (fwd, bwd) in raw_layers]
    return {"embedding": emb, "raw_layers": raw_layers, "packed_layers": packed,
            "hidden_dim": hidden_dim, "num_layers": num_layers}


# ----------------------------------------------------------------------------
# Encoder forward: embedding gather (glue) + one fused Pallas kernel.
# ----------------------------------------------------------------------------
def encoder_forward(params, tokens):
    H = params["hidden_dim"]
    B, T = tokens.shape

    embedded = jnp.take(params["embedding"], tokens, axis=0)       # (B, T, E)
    x_flat = jnp.transpose(embedded, (1, 0, 2)).reshape(T * B, -1)  # (T*B, E)

    out_f, out_b, h_n, c_n = encoder_lstm(
        x_flat, params["packed_layers"], hidden_dim=H, seq_len=T, batch=B)

    out_tm = jnp.concatenate([out_f.reshape(T, B, H),
                              out_b.reshape(T, B, H)], axis=-1)     # (T, B, 2H)
    outputs = jnp.transpose(out_tm, (1, 0, 2))                      # (B, T, 2H)
    return outputs, h_n, c_n


# ----------------------------------------------------------------------------
# Pure-JAX reference (straight PyTorch formulation) for a correctness check.
# ----------------------------------------------------------------------------
def _encoder_reference(params, tokens):
    H = params["hidden_dim"]
    x = jnp.take(params["embedding"], tokens, axis=0)               # (B, T, E)
    B, T, _ = x.shape
    h_all, c_all = [], []
    for layer in params["raw_layers"]:
        dir_outs = []
        for d, (w_ih, w_hh, b_ih, b_hh) in enumerate(layer):
            h = jnp.zeros((B, H), jnp.float32)
            c = jnp.zeros((B, H), jnp.float32)
            seq = [None] * T
            order = range(T) if d == 0 else range(T - 1, -1, -1)
            for t in order:
                gates = x[:, t, :] @ w_ih.T + b_ih + h @ w_hh.T + b_hh
                i = jax.nn.sigmoid(gates[:, 0:H])
                f = jax.nn.sigmoid(gates[:, H:2 * H])
                g = jnp.tanh(gates[:, 2 * H:3 * H])
                o = jax.nn.sigmoid(gates[:, 3 * H:4 * H])
                c = f * c + i * g
                h = o * jnp.tanh(c)
                seq[t] = h
            dir_outs.append(jnp.stack(seq, axis=1))                 # (B, T, H)
            h_all.append(h)
            c_all.append(c)
        x = jnp.concatenate(dir_outs, axis=-1)                      # (B, T, 2H)
    return x, jnp.stack(h_all, axis=0), jnp.stack(c_all, axis=0)


# ----------------------------------------------------------------------------
if __name__ == "__main__":
    VOCAB = 50
    EMBED_DIM = 64
    HIDDEN_DIM = 64    # 2H = 128 -> recurrent state / matmul LHS span one vreg
    NUM_LAYERS = 2
    B, T = 8, 8        # B=8 keeps per-timestep row blocks sublane-tile aligned

    key = jax.random.PRNGKey(0)
    k_params, k_tok = jax.random.split(key)

    params = init_encoder_params(k_params, VOCAB, EMBED_DIM, HIDDEN_DIM,
                                 NUM_LAYERS)
    tokens = jax.random.randint(k_tok, (B, T), 0, VOCAB, dtype=jnp.int32)
    tokens = tokens.at[:, -2:].set(0)            # some padding tokens (idx 0)

    outputs, hidden, cell = encoder_forward(params, tokens)
    jax.block_until_ready((outputs, hidden, cell))

    assert outputs.shape == (B, T, 2 * HIDDEN_DIM)
    assert hidden.shape == (NUM_LAYERS * 2, B, HIDDEN_DIM)
    assert cell.shape == (NUM_LAYERS * 2, B, HIDDEN_DIM)
    assert bool(jnp.all(jnp.isfinite(outputs)))

    ref_out, ref_h, ref_c = _encoder_reference(params, tokens)
    assert bool(jnp.allclose(outputs, ref_out, atol=2e-3, rtol=2e-2)), "outputs"
    assert bool(jnp.allclose(hidden, ref_h, atol=2e-3, rtol=2e-2)), "hidden"
    assert bool(jnp.allclose(cell, ref_c, atol=2e-3, rtol=2e-2)), "cell"

    print("KERNEL_OK")
</pallas_src>

<mosaic_0001>
module attributes {stable_mosaic.version = 11 : i64} {
  func.func @_encoder_lstm_kernel(%arg0: memref<64x64xf32, #tpu.memory_space<vmem>>, %arg1: memref<64x512xf32, #tpu.memory_space<vmem>>, %arg2: memref<128x512xf32, #tpu.memory_space<vmem>>, %arg3: memref<1x512xf32, #tpu.memory_space<vmem>>, %arg4: memref<128x512xf32, #tpu.memory_space<vmem>>, %arg5: memref<128x512xf32, #tpu.memory_space<vmem>>, %arg6: memref<1x512xf32, #tpu.memory_space<vmem>>, %arg7: memref<64x64xf32, #tpu.memory_space<vmem>>, %arg8: memref<64x64xf32, #tpu.memory_space<vmem>>, %arg9: memref<4x8x64xf32, #tpu.memory_space<vmem>>, %arg10: memref<4x8x64xf32, #tpu.memory_space<vmem>>, %arg11: memref<64x512xf32, #tpu.memory_space<vmem>>, %arg12: memref<64x64xf32, #tpu.memory_space<vmem>>, %arg13: memref<64x64xf32, #tpu.memory_space<vmem>>) attributes {dimension_semantics = [], scalar_prefetch = 0 : i64, scratch_operands = 3 : i64, tpu.core_type = #tpu.core_type<tc>} {
    %c0 = arith.constant 0 : index
    %c0_0 = arith.constant 0 : index
    %0 = vector.load %arg0[%c0, %c0_0] : memref<64x64xf32, #tpu.memory_space<vmem>>, vector<64x64xf32>
    %c0_1 = arith.constant 0 : index
    %c0_2 = arith.constant 0 : index
    %1 = vector.load %arg1[%c0_1, %c0_2] : memref<64x512xf32, #tpu.memory_space<vmem>>, vector<64x512xf32>
    %cst = arith.constant dense<0.000000e+00> : vector<64x512xf32>
    %2 = tpu.matmul %0, %1, %cst {dimension_numbers = #tpu.dot_dimension_numbers<[1], [0], [0], [1], [0, 0, 1, 1], [], []>} : vector<64x64xf32>, vector<64x512xf32>, vector<64x512xf32> -> vector<64x512xf32>
    %c0_3 = arith.constant 0 : index
    %c0_4 = arith.constant 0 : index
    %3 = vector.load %arg3[%c0_3, %c0_4] : memref<1x512xf32, #tpu.memory_space<vmem>>, vector<1x512xf32>
    %4 = vector.broadcast %3 : vector<1x512xf32> to vector<64x512xf32>
    %5 = arith.addf %2, %4 : vector<64x512xf32>
    %c0_5 = arith.constant 0 : index
    %c0_6 = arith.constant 0 : index
    %6 = vector.load %arg11[%c0_5, %c0_6] : memref<64x512xf32, #tpu.memory_space<vmem>>, vector<64x512xf32>
    tpu.vector_store %arg11[%c0_5, %c0_6], %5 {strides = array<i32>} : memref<64x512xf32, #tpu.memory_space<vmem>>, vector<64x512xf32>,
    %cst_7 = arith.constant 0.000000e+00 : f32
    %7 = vector.broadcast %cst_7 : f32 to vector<8x64xf32>
    %c0_i32 = arith.constant 0 : i32
    %c7_i32 = arith.constant 7 : i32
    %8 = arith.subi %c7_i32, %c0_i32 : i32
    %c8_i32 = arith.constant 8 : i32
    %9 = arith.muli %c0_i32, %c8_i32 : i32
    %10 = tpu.assume_multiple %9, 8 : i32
    %c8_i32_8 = arith.constant 8 : i32
    %11 = arith.muli %8, %c8_i32_8 : i32
    %12 = tpu.assume_multiple %11, 8 : i32
    %13 = tpu.concatenate %7, %7 in 1 : vector<8x64xf32>, vector<8x64xf32> -> vector<8x128xf32>
    %c0_9 = arith.constant 0 : index
    %c0_10 = arith.constant 0 : index
    %14 = vector.load %arg2[%c0_9, %c0_10] : memref<128x512xf32, #tpu.memory_space<vmem>>, vector<128x512xf32>
    %cst_11 = arith.constant dense<0.000000e+00> : vector<8x512xf32>
    %15 = tpu.matmul %13, %14, %cst_11 {dimension_numbers = #tpu.dot_dimension_numbers<[1], [0], [0], [1], [0, 0, 1, 1], [], []>} : vector<8x128xf32>, vector<128x512xf32>, vector<8x512xf32> -> vector<8x512xf32>
    %16 = vector.extract_strided_slice %15 {offsets = [0, 0], sizes = [8, 256], strides = [1, 1]} : vector<8x512xf32> to vector<8x256xf32>
    %17 = arith.index_cast %10 : i32 to index
    %c0_12 = arith.constant 0 : index
    %18 = vector.load %arg11[%17, %c0_12] : memref<64x512xf32, #tpu.memory_space<vmem>>, vector<8x256xf32>
    %19 = arith.addf %16, %18 : vector<8x256xf32>
    %20 = vector.extract_strided_slice %15 {offsets = [0, 256], sizes = [8, 256], strides = [1, 1]} : vector<8x512xf32> to vector<8x256xf32>
    %21 = arith.index_cast %12 : i32 to index
    %c256 = arith.constant 256 : index
    %22 = vector.load %arg11[%21, %c256] : memref<64x512xf32, #tpu.memory_space<vmem>>, vector<8x256xf32>
    %23 = arith.addf %20, %22 : vector<8x256xf32>
    %24 = vector.extract_strided_slice %19 {offsets = [0, 0], sizes = [8, 192], strides = [1, 1]} : vector<8x256xf32> to vector<8x192xf32>
    %25 = arith.negf %24 : vector<8x192xf32>
    %26 = math.exp %25 : vector<8x192xf32>
    %cst_13 = arith.constant 1.000000e+00 : f32
    %27 = vector.broadcast %cst_13 : f32 to vector<8x192xf32>
    %28 = arith.addf %27, %26 : vector<8x192xf32>
    %29 = arith.divf %27, %28 : vector<8x192xf32>
    %30 = vector.extract_strided_slice %29 {offsets = [0, 0], sizes = [8, 64], strides = [1, 1]} : vector<8x192xf32> to vector<8x64xf32>
    %31 = vector.extract_strided_slice %29 {offsets = [0, 64], sizes = [8, 64], strides = [1, 1]} : vector<8x192xf32> to vector<8x64xf32>
    %32 = vector.extract_strided_slice %29 {offsets = [0, 128], sizes = [8, 64], strides = [1, 1]} : vector<8x192xf32> to vector<8x64xf32>
    %33 = vector.extract_strided_slice %19 {offsets = [0, 192], sizes = [8, 64], strides = [1, 1]} : vector<8x256xf32> to vector<8x64xf32>
    %34 = math.tanh %33 : vector<8x64xf32>
    %35 = arith.mulf %31, %7 : vector<8x64xf32>
    %36 = arith.mulf %30, %34 : vector<8x64xf32>
    %37 = arith.addf %35, %36 : vector<8x64xf32>
    %38 = math.tanh %37 : vector<8x64xf32>
    %39 = arith.mulf %32, %38 : vector<8x64xf32>
    %40 = vector.extract_strided_slice %23 {offsets = [0, 0], sizes = [8, 192], strides = [1, 1]} : vector<8x256xf32> to vector<8x192xf32>
    %41 = arith.negf %40 : vector<8x192xf32>
    %42 = math.exp %41 : vector<8x192xf32>
    %cst_14 = arith.constant 1.000000e+00 : f32
    %43 = vector.broadcast %cst_14 : f32 to vector<8x192xf32>
    %44 = arith.addf %43, %42 : vector<8x192xf32>
    %45 = arith.divf %43, %44 : vector<8x192xf32>
    %46 = vector.extract_strided_slice %45 {offsets = [0, 0], sizes = [8, 64], strides = [1, 1]} : vector<8x192xf32> to vector<8x64xf32>
    %47 = vector.extract_strided_slice %45 {offsets = [0, 64], sizes = [8, 64], strides = [1, 1]} : vector<8x192xf32> to vector<8x64xf32>
    %48 = vector.extract_strided_slice %45 {offsets = [0, 128], sizes = [8, 64], strides = [1, 1]} : vector<8x192xf32> to vector<8x64xf32>
    %49 = vector.extract_strided_slice %23 {offsets = [0, 192], sizes = [8, 64], strides = [1, 1]} : vector<8x256xf32> to vector<8x64xf32>
    %50 = math.tanh %49 : vector<8x64xf32>
    %51 = arith.mulf %47, %7 : vector<8x64xf32>
    %52 = arith.mulf %46, %50 : vector<8x64xf32>
    %53 = arith.addf %51, %52 : vector<8x64xf32>
    %54 = math.tanh %53 : vector<8x64xf32>
    %55 = arith.mulf %48, %54 : vector<8x64xf32>
    %56 = arith.index_cast %10 : i32 to index
    %c0_15 = arith.constant 0 : index
    %57 = vector.load %arg12[%56, %c0_15] : memref<64x64xf32, #tpu.memory_space<vmem>>, vector<8x64xf32>
    tpu.vector_store %arg12[%56, %c0_15], %39 {strides = array<i32>} : memref<64x64xf32, #tpu.memory_space<vmem>>, vector<8x64xf32>,
    %58 = arith.index_cast %12 : i32 to index
    %c0_16 = arith.constant 0 : index
    %59 = vector.load %arg13[%58, %c0_16] : memref<64x64xf32, #tpu.memory_space<vmem>>, vector<8x64xf32>
    tpu.vector_store %arg13[%58, %c0_16], %55 {strides = array<i32>} : memref<64x64xf32, #tpu.memory_space<vmem>>, vector<8x64xf32>,
    %c1_i32 = arith.constant 1 : i32
    %c7_i32_17 = arith.constant 7 : i32
    %60 = arith.subi %c7_i32_17, %c1_i32 : i32
    %c8_i32_18 = arith.constant 8 : i32
    %61 = arith.muli %c1_i32, %c8_i32_18 : i32
    %62 = tpu.assume_multiple %61, 8 : i32
    %c8_i32_19 = arith.constant 8 : i32
    %63 = arith.muli %60, %c8_i32_19 : i32
    %64 = tpu.assume_multiple %63, 8 : i32
    %65 = tpu.concatenate %39, %55 in 1 : vector<8x64xf32>, vector<8x64xf32> -> vector<8x128xf32>
    %c0_20 = arith.constant 0 : index
    %c0_21 = arith.constant 0 : index
    %66 = vector.load %arg2[%c0_20, %c0_21] : memref<128x512xf32, #tpu.memory_space<vmem>>, vector<128x512xf32>
    %cst_22 = arith.constant dense<0.000000e+00> : vector<8x512xf32>
    %67 = tpu.matmul %65, %66, %cst_22 {dimension_numbers = #tpu.dot_dimension_numbers<[1], [0], [0], [1], [0, 0, 1, 1], [], []>} : vector<8x128xf32>, vector<128x512xf32>, vector<8x512xf32> -> vector<8x512xf32>
    %68 = vector.extract_strided_slice %67 {offsets = [0, 0], sizes = [8, 256], strides = [1, 1]} : vector<8x512xf32> to vector<8x256xf32>
    %69 = arith.index_cast %62 : i32 to index
    %c0_23 = arith.constant 0 : index
    %70 = vector.load %arg11[%69, %c0_23] : memref<64x512xf32, #tpu.memory_space<vmem>>, vector<8x256xf32>
    %71 = arith.addf %68, %70 : vector<8x256xf32>
    %72 = vector.extract_strided_slice %67 {offsets = [0, 256], sizes = [8, 256], strides = [1, 1]} : vector<8x512xf32> to vector<8x256xf32>
    %73 = arith.index_cast %64 : i32 to index
    %c256_24 = arith.constant 256 : index
    %74 = vector.load %arg11[%73, %c256_24] : memref<64x512xf32, #tpu.memory_space<vmem>>, vector<8x256xf32>
    %75 = arith.addf %72, %74 : vector<8x256xf32>
    %76 = vector.extract_strided_slice %71 {offsets = [0, 0], sizes = [8, 192], strides = [1, 1]} : vector<8x256xf32> to vector<8x192xf32>
    %77 = arith.negf %76 : vector<8x192xf32>
    %78 = math.exp %77 : vector<8x192xf32>
    %cst_25 = arith.constant 1.000000e+00 : f32
    %79 = vector.broadcast %cst_25 : f32 to vector<8x192xf32>
    %80 = arith.addf %79, %78 : vector<8x192xf32>
    %81 = arith.divf %79, %80 : vector<8x192xf32>
    %82 = vector.extract_strided_slice %81 {offsets = [0, 0], sizes = [8, 64], strides = [1, 1]} : vector<8x192xf32> to vector<8x64xf32>
    %83 = vector.extract_strided_slice %81 {offsets = [0, 64], sizes = [8, 64], strides = [1, 1]} : vector<8x192xf32> to vector<8x64xf32>
    %84 = vector.extract_strided_slice %81 {offsets = [0, 128], sizes = [8, 64], strides = [1, 1]} : vector<8x192xf32> to vector<8x64xf32>
    %85 = vector.extract_strided_slice %71 {offsets = [0, 192], sizes = [8, 64], strides = [1, 1]} : vector<8x256xf32> to vector<8x64xf32>
    %86 = math.tanh %85 : vector<8x64xf32>
    %87 = arith.mulf %83, %37 : vector<8x64xf32>
    %88 = arith.mulf %82, %86 : vector<8x64xf32>
    %89 = arith.addf %87, %88 : vector<8x64xf32>
    %90 = math.tanh %89 : vector<8x64xf32>
    %91 = arith.mulf %84, %90 : vector<8x64xf32>
    %92 = vector.extract_strided_slice %75 {offsets = [0, 0], sizes = [8, 192], strides = [1, 1]} : vector<8x256xf32> to vector<8x192xf32>
    %93 = arith.negf %92 : vector<8x192xf32>
    %94 = math.exp %93 : vector<8x192xf32>
    %cst_26 = arith.constant 1.000000e+00 : f32
    %95 = vector.broadcast %cst_26 : f32 to vector<8x192xf32>
    %96 = arith.addf %95, %94 : vector<8x192xf32>
    %97 = arith.divf %95, %96 : vector<8x192xf32>
    %98 = vector.extract_strided_slice %97 {offsets = [0, 0], sizes = [8, 64], strides = [1, 1]} : vector<8x192xf32> to vector<8x64xf32>
    %99 = vector.extract_strided_slice %97 {offsets = [0, 64], sizes = [8, 64], strides = [1, 1]} : vector<8x192xf32> to vector<8x64xf32>
    %100 = vector.extract_strided_slice %97 {offsets = [0, 128], sizes = [8, 64], strides = [1, 1]} : vector<8x192xf32> to vector<8x64xf32>
    %101 = vector.extract_strided_slice %75 {offsets = [0, 192], sizes = [8, 64], strides = [1, 1]} : vector<8x256xf32> to vector<8x64xf32>
    %102 = math.tanh %101 : vector<8x64xf32>
    %103 = arith.mulf %99, %53 : vector<8x64xf32>
    %104 = arith.mulf %98, %102 : vector<8x64xf32>
    %105 = arith.addf %103, %104 : vector<8x64xf32>
    %106 = math.tanh %105 : vector<8x64xf32>
    %107 = arith.mulf %100, %106 : vector<8x64xf32>
    %108 = arith.index_cast %62 : i32 to index
    %c0_27 = arith.constant 0 : index
    %109 = vector.load %arg12[%108, %c0_27] : memref<64x64xf32, #tpu.memory_space<vmem>>, vector<8x64xf32>
    tpu.vector_store %arg12[%108, %c0_27], %91 {strides = array<i32>} : memref<64x64xf32, #tpu.memory_space<vmem>>, vector<8x64xf32>,
    %110 = arith.index_cast %64 : i32 to index
    %c0_28 = arith.constant 0 : index
    %111 = vector.load %arg13[%110, %c0_28] : memref<64x64xf32, #tpu.memory_space<vmem>>, vector<8x64xf32>
    tpu.vector_store %arg13[%110, %c0_28], %107 {strides = array<i32>} : memref<64x64xf32, #tpu.memory_space<vmem>>, vector<8x64xf32>,
    %c2_i32 = arith.constant 2 : i32
    %c7_i32_29 = arith.constant 7 : i32
    %112 = arith.subi %c7_i32_29, %c2_i32 : i32
    %c8_i32_30 = arith.constant 8 : i32
    %113 = arith.muli %c2_i32, %c8_i32_30 : i32
    %114 = tpu.assume_multiple %113, 8 : i32
    %c8_i32_31 = arith.constant 8 : i32
    %115 = arith.muli %112, %c8_i32_31 : i32
    %116 = tpu.assume_multiple %115, 8 : i32
    %117 = tpu.concatenate %91, %107 in 1 : vector<8x64xf32>, vector<8x64xf32> -> vector<8x128xf32>
    %c0_32 = arith.constant 0 : index
    %c0_33 = arith.constant 0 : index
    %118 = vector.load %arg2[%c0_32, %c0_33] : memref<128x512xf32, #tpu.memory_space<vmem>>, vector<128x512xf32>
    %cst_34 = arith.constant dense<0.000000e+00> : vector<8x512xf32>
    %119 = tpu.matmul %117, %118, %cst_34 {dimension_numbers = #tpu.dot_dimension_numbers<[1], [0], [0], [1], [0, 0, 1, 1], [], []>} : vector<8x128xf32>, vector<128x512xf32>, vector<8x512xf32> -> vector<8x512xf32>
    %120 = vector.extract_strided_slice %119 {offsets = [0, 0], sizes = [8, 256], strides = [1, 1]} : vector<8x512xf32> to vector<8x256xf32>
    %121 = arith.index_cast %114 : i32 to index
    %c0_35 = arith.constant 0 : index
    %122 = vector.load %arg11[%121, %c0_35] : memref<64x512xf32, #tpu.memory_space<vmem>>, vector<8x256xf32>
    %123 = arith.addf %120, %122 : vector<8x256xf32>
    %124 = vector.extract_strided_slice %119 {offsets = [0, 256], sizes = [8, 256], strides = [1, 1]} : vector<8x512xf32> to vector<8x256xf32>
    %125 = arith.index_cast %116 : i32 to index
    %c256_36 = arith.constant 256 : index
    %126 = vector.load %arg11[%125, %c256_36] : memref<64x512xf32, #tpu.memory_space<vmem>>, vector<8x256xf32>
    %127 = arith.addf %124, %126 : vector<8x256xf32>
    %128 = vector.extract_strided_slice %123 {offsets = [0, 0], sizes = [8, 192], strides = [1, 1]} : vector<8x256xf32> to vector<8x192xf32>
    %129 = arith.negf %128 : vector<8x192xf32>
    %130 = math.exp %129 : vector<8x192xf32>
    %cst_37 = arith.constant 1.000000e+00 : f32
    %131 = vector.broadcast %cst_37 : f32 to vector<8x192xf32>
    %132 = arith.addf %131, %130 : vector<8x192xf32>
    %133 = arith.divf %131, %132 : vector<8x192xf32>
    %134 = vector.extract_strided_slice %133 {offsets = [0, 0], sizes = [8, 64], strides = [1, 1]} : vector<8x192xf32> to vector<8x64xf32>
    %135 = vector.extract_strided_slice %133 {offsets = [0, 64], sizes = [8, 64], strides = [1, 1]} : vector<8x192xf32> to vector<8x64xf32>
    %136 = vector.extract_strided_slice %133 {offsets = [0, 128], sizes = [8, 64], strides = [1, 1]} : vector<8x192xf32> to vector<8x64xf32>
    %137 = vector.extract_strided_slice %123 {offsets = [0, 192], sizes = [8, 64], strides = [1, 1]} : vector<8x256xf32> to vector<8x64xf32>
    %138 = math.tanh %137 : vector<8x64xf32>
    %139 = arith.mulf %135, %89 : vector<8x64xf32>
    %140 = arith.mulf %134, %138 : vector<8x64xf32>
    %141 = arith.addf %139, %140 : vector<8x64xf32>
    %142 = math.tanh %141 : vector<8x64xf32>
    %143 = arith.mulf %136, %142 : vector<8x64xf32>
    %144 = vector.extract_strided_slice %127 {offsets = [0, 0], sizes = [8, 192], strides = [1, 1]} : vector<8x256xf32> to vector<8x192xf32>
    %145 = arith.negf %144 : vector<8x192xf32>
    %146 = math.exp %145 : vector<8x192xf32>
    %cst_38 = arith.constant 1.000000e+00 : f32
    %147 = vector.broadcast %cst_38 : f32 to vector<8x192xf32>
    %148 = arith.addf %147, %146 : vector<8x192xf32>
    %149 = arith.divf %147, %148 : vector<8x192xf32>
    %150 = vector.extract_strided_slice %149 {offsets = [0, 0], sizes = [8, 64], strides = [1, 1]} : vector<8x192xf32> to vector<8x64xf32>
    %151 = vector.extract_strided_slice %149 {offsets = [0, 64], sizes = [8, 64], strides = [1, 1]} : vector<8x192xf32> to vector<8x64xf32>
    %152 = vector.extract_strided_slice %149 {offsets = [0, 128], sizes = [8, 64], strides = [1, 1]} : vector<8x192xf32> to vector<8x64xf32>
    %153 = vector.extract_strided_slice %127 {offsets = [0, 192], sizes = [8, 64], strides = [1, 1]} : vector<8x256xf32> to vector<8x64xf32>
    %154 = math.tanh %153 : vector<8x64xf32>
    %155 = arith.mulf %151, %105 : vector<8x64xf32>
    %156 = arith.mulf %150, %154 : vector<8x64xf32>
    %157 = arith.addf %155, %156 : vector<8x64xf32>
    %158 = math.tanh %157 : vector<8x64xf32>
    %159 = arith.mulf %152, %158 : vector<8x64xf32>
    %160 = arith.index_cast %114 : i32 to index
    %c0_39 = arith.constant 0 : index
    %161 = vector.load %arg12[%160, %c0_39] : memref<64x64xf32, #tpu.memory_space<vmem>>, vector<8x64xf32>
    tpu.vector_store %arg12[%160, %c0_39], %143 {strides = array<i32>} : memref<64x64xf32, #tpu.memory_space<vmem>>, vector<8x64xf32>,
    %162 = arith.index_cast %116 : i32 to index
    %c0_40 = arith.constant 0 : index
    %163 = vector.load %arg13[%162, %c0_40] : memref<64x64xf32, #tpu.memory_space<vmem>>, vector<8x64xf32>
    tpu.vector_store %arg13[%162, %c0_40], %159 {strides = array<i32>} : memref<64x64xf32, #tpu.memory_space<vmem>>, vector<8x64xf32>,
    %c3_i32 = arith.constant 3 : i32
    %c7_i32_41 = arith.constant 7 : i32
    %164 = arith.subi %c7_i32_41, %c3_i32 : i32
    %c8_i32_42 = arith.constant 8 : i32
    %165 = arith.muli %c3_i32, %c8_i32_42 : i32
    %166 = tpu.assume_multiple %165, 8 : i32
    %c8_i32_43 = arith.constant 8 : i32
    %167 = arith.muli %164, %c8_i32_43 : i32
    %168 = tpu.assume_multiple %167, 8 : i32
    %169 = tpu.concatenate %143, %159 in 1 : vector<8x64xf32>, vector<8x64xf32> -> vector<8x128xf32>
    %c0_44 = arith.constant 0 : index
    %c0_45 = arith.constant 0 : index
    %170 = vector.load %arg2[%c0_44, %c0_45] : memref<128x512xf32, #tpu.memory_space<vmem>>, vector<128x512xf32>
    %cst_46 = arith.constant dense<0.000000e+00> : vector<8x512xf32>
    %171 = tpu.matmul %169, %170, %cst_46 {dimension_numbers = #tpu.dot_dimension_numbers<[1], [0], [0], [1], [0, 0, 1, 1], [], []>} : vector<8x128xf32>, vector<128x512xf32>, vector<8x512xf32> -> vector<8x512xf32>
    %172 = vector.extract_strided_slice %171 {offsets = [0, 0], sizes = [8, 256], strides = [1, 1]} : vector<8x512xf32> to vector<8x256xf32>
    %173 = arith.index_cast %166 : i32 to index
    %c0_47 = arith.constant 0 : index
    %174 = vector.load %arg11[%173, %c0_47] : memref<64x512xf32, #tpu.memory_space<vmem>>, vector<8x256xf32>
    %175 = arith.addf %172, %174 : vector<8x256xf32>
    %176 = vector.extract_strided_slice %171 {offsets = [0, 256], sizes = [8, 256], strides = [1, 1]} : vector<8x512xf32> to vector<8x256xf32>
    %177 = arith.index_cast %168 : i32 to index
    %c256_48 = arith.constant 256 : index
    %178 = vector.load %arg11[%177, %c256_48] : memref<64x512xf32, #tpu.memory_space<vmem>>, vector<8x256xf32>
    %179 = arith.addf %176, %178 : vector<8x256xf32>
    %180 = vector.extract_strided_slice %175 {offsets = [0, 0], sizes = [8, 192], strides = [1, 1]} : vector<8x256xf32> to vector<8x192xf32>
    %181 = arith.negf %180 : vector<8x192xf32>
    %182 = math.exp %181 : vector<8x192xf32>
    %cst_49 = arith.constant 1.000000e+00 : f32
    %183 = vector.broadcast %cst_49 : f32 to vector<8x192xf32>
    %184 = arith.addf %183, %182 : vector<8x192xf32>
    %185 = arith.divf %183, %184 : vector<8x192xf32>
    %186 = vector.extract_strided_slice %185 {offsets = [0, 0], sizes = [8, 64], strides = [1, 1]} : vector<8x192xf32> to vector<8x64xf32>
    %187 = vector.extract_strided_slice %185 {offsets = [0, 64], sizes = [8, 64], strides = [1, 1]} : vector<8x192xf32> to vector<8x64xf32>
    %188 = vector.extract_strided_slice %185 {offsets = [0, 128], sizes = [8, 64], strides = [1, 1]} : vector<8x192xf32> to vector<8x64xf32>
    %189 = vector.extract_strided_slice %175 {offsets = [0, 192], sizes = [8, 64], strides = [1, 1]} : vector<8x256xf32> to vector<8x64xf32>
    %190 = math.tanh %189 : vector<8x64xf32>
    %191 = arith.mulf %187, %141 : vector<8x64xf32>
    %192 = arith.mulf %186, %190 : vector<8x64xf32>
    %193 = arith.addf %191, %192 : vector<8x64xf32>
    %194 = math.tanh %193 : vector<8x64xf32>
    %195 = arith.mulf %188, %194 : vector<8x64xf32>
    %196 = vector.extract_strided_slice %179 {offsets = [0, 0], sizes = [8, 192], strides = [1, 1]} : vector<8x256xf32> to vector<8x192xf32>
    %197 = arith.negf %196 : vector<8x192xf32>
    %198 = math.exp %197 : vector<8x192xf32>
    %cst_50 = arith.constant 1.000000e+00 : f32
    %199 = vector.broadcast %cst_50 : f32 to vector<8x192xf32>
    %200 = arith.addf %199, %198 : vector<8x192xf32>
    %201 = arith.divf %199, %200 : vector<8x192xf32>
    %202 = vector.extract_strided_slice %201 {offsets = [0, 0], sizes = [8, 64], strides = [1, 1]} : vector<8x192xf32> to vector<8x64xf32>
    %203 = vector.extract_strided_slice %201 {offsets = [0, 64], sizes = [8, 64], strides = [1, 1]} : vector<8x192xf32> to vector<8x64xf32>
    %204 = vector.extract_strided_slice %201 {offsets = [0, 128], sizes = [8, 64], strides = [1, 1]} : vector<8x192xf32> to vector<8x64xf32>
    %205 = vector.extract_strided_slice %179 {offsets = [0, 192], sizes = [8, 64], strides = [1, 1]} : vector<8x256xf32> to vector<8x64xf32>
    %206 = math.tanh %205 : vector<8x64xf32>
    %207 = arith.mulf %203, %157 : vector<8x64xf32>
    %208 = arith.mulf %202, %206 : vector<8x64xf32>
    %209 = arith.addf %207, %208 : vector<8x64xf32>
    %210 = math.tanh %209 : vector<8x64xf32>
    %211 = arith.mulf %204, %210 : vector<8x64xf32>
    %212 = arith.index_cast %166 : i32 to index
    %c0_51 = arith.constant 0 : index
    %213 = vector.load %arg12[%212, %c0_51] : memref<64x64xf32, #tpu.memory_space<vmem>>, vector<8x64xf32>
    tpu.vector_store %arg12[%212, %c0_51], %195 {strides = array<i32>} : memref<64x64xf32, #tpu.memory_space<vmem>>, vector<8x64xf32>,
    %214 = arith.index_cast %168 : i32 to index
    %c0_52 = arith.constant 0 : index
    %215 = vector.load %arg13[%214, %c0_52] : memref<64x64xf32, #tpu.memory_space<vmem>>, vector<8x64xf32>
    tpu.vector_store %arg13[%214, %c0_52], %211 {strides = array<i32>} : memref<64x64xf32, #tpu.memory_space<vmem>>, vector<8x64xf32>,
    %c4_i32 = arith.constant 4 : i32
    %c7_i32_53 = arith.constant 7 : i32
    %216 = arith.subi %c7_i32_53, %c4_i32 : i32
    %c8_i32_54 = arith.constant 8 : i32
    %217 = arith.muli %c4_i32, %c8_i32_54 : i32
    %218 = tpu.assume_multiple %217, 8 : i32
    %c8_i32_55 = arith.constant 8 : i32
    %219 = arith.muli %216, %c8_i32_55 : i32
    %220 = tpu.assume_multiple %219, 8 : i32
    %221 = tpu.concatenate %195, %211 in 1 : vector<8x64xf32>, vector<8x64xf32> -> vector<8x128xf32>
    %c0_56 = arith.constant 0 : index
    %c0_57 = arith.constant 0 : index
    %222 = vector.load %arg2[%c0_56, %c0_57] : memref<128x512xf32, #tpu.memory_space<vmem>>, vector<128x512xf32>
    %cst_58 = arith.constant dense<0.000000e+00> : vector<8x512xf32>
    %223 = tpu.matmul %221, %222, %cst_58 {dimension_numbers = #tpu.dot_dimension_numbers<[1], [0], [0], [1], [0, 0, 1, 1], [], []>} : vector<8x128xf32>, vector<128x512xf32>, vector<8x512xf32> -> vector<8x512xf32>
    %224 = vector.extract_strided_slice %223 {offsets = [0, 0], sizes = [8, 256], strides = [1, 1]} : vector<8x512xf32> to vector<8x256xf32>
    %225 = arith.index_cast %218 : i32 to index
    %c0_59 = arith.constant 0 : index
    %226 = vector.load %arg11[%225, %c0_59] : memref<64x512xf32, #tpu.memory_space<vmem>>, vector<8x256xf32>
    %227 = arith.addf %224, %226 : vector<8x256xf32>
    %228 = vector.extract_strided_slice %223 {offsets = [0, 256], sizes = [8, 256], strides = [1, 1]} : vector<8x512xf32> to vector<8x256xf32>
    %229 = arith.index_cast %220 : i32 to index
    %c256_60 = arith.constant 256 : index
    %230 = vector.load %arg11[%229, %c256_60] : memref<64x512xf32, #tpu.memory_space<vmem>>, vector<8x256xf32>
    %231 = arith.addf %228, %230 : vector<8x256xf32>
    %232 = vector.extract_strided_slice %227 {offsets = [0, 0], sizes = [8, 192], strides = [1, 1]} : vector<8x256xf32> to vector<8x192xf32>
    %233 = arith.negf %232 : vector<8x192xf32>
    %234 = math.exp %233 : vector<8x192xf32>
    %cst_61 = arith.constant 1.000000e+00 : f32
    %235 = vector.broadcast %cst_61 : f32 to vector<8x192xf32>
    %236 = arith.addf %235, %234 : vector<8x192xf32>
    %237 = arith.divf %235, %236 : vector<8x192xf32>
    %238 = vector.extract_strided_slice %237 {offsets = [0, 0], sizes = [8, 64], strides = [1, 1]} : vector<8x192xf32> to vector<8x64xf32>
    %239 = vector.extract_strided_slice %237 {offsets = [0, 64], sizes = [8, 64], strides = [1, 1]} : vector<8x192xf32> to vector<8x64xf32>
    %240 = vector.extract_strided_slice %237 {offsets = [0, 128], sizes = [8, 64], strides = [1, 1]} : vector<8x192xf32> to vector<8x64xf32>
    %241 = vector.extract_strided_slice %227 {offsets = [0, 192], sizes = [8, 64], strides = [1, 1]} : vector<8x256xf32> to vector<8x64xf32>
    %242 = math.tanh %241 : vector<8x64xf32>
    %243 = arith.mulf %239, %193 : vector<8x64xf32>
    %244 = arith.mulf %238, %242 : vector<8x64xf32>
    %245 = arith.addf %243, %244 : vector<8x64xf32>
    %246 = math.tanh %245 : vector<8x64xf32>
    %247 = arith.mulf %240, %246 : vector<8x64xf32>
    %248 = vector.extract_strided_slice %231 {offsets = [0, 0], sizes = [8, 192], strides = [1, 1]} : vector<8x256xf32> to vector<8x192xf32>
    %249 = arith.negf %248 : vector<8x192xf32>
    %250 = math.exp %249 : vector<8x192xf32>
    %cst_62 = arith.constant 1.000000e+00 : f32
    %251 = vector.broadcast %cst_62 : f32 to vector<8x192xf32>
    %252 = arith.addf %251, %250 : vector<8x192xf32>
    %253 = arith.divf %251, %252 : vector<8x192xf32>
    %254 = vector.extract_strided_slice %253 {offsets = [0, 0], sizes = [8, 64], strides = [1, 1]} : vector<8x192xf32> to vector<8x64xf32>
    %255 = vector.extract_strided_slice %253 {offsets = [0, 64], sizes = [8, 64], strides = [1, 1]} : vector<8x192xf32> to vector<8x64xf32>
    %256 = vector.extract_strided_slice %253 {offsets = [0, 128], sizes = [8, 64], strides = [1, 1]} : vector<8x192xf32> to vector<8x64xf32>
    %257 = vector.extract_strided_slice %231 {offsets = [0, 192], sizes = [8, 64], strides = [1, 1]} : vector<8x256xf32> to vector<8x64xf32>
    %258 = math.tanh %257 : vector<8x64xf32>
    %259 = arith.mulf %255, %209 : vector<8x64xf32>
    %260 = arith.mulf %254, %258 : vector<8x64xf32>
    %261 = arith.addf %259, %260 : vector<8x64xf32>
    %262 = math.tanh %261 : vector<8x64xf32>
    %263 = arith.mulf %256, %262 : vector<8x64xf32>
    %264 = arith.index_cast %218 : i32 to index
    %c0_63 = arith.constant 0 : index
    %265 = vector.load %arg12[%264, %c0_63] : memref<64x64xf32, #tpu.memory_space<vmem>>, vector<8x64xf32>
    tpu.vector_store %arg12[%264, %c0_63], %247 {strides = array<i32>} : memref<64x64xf32, #tpu.memory_space<vmem>>, vector<8x64xf32>,
    %266 = arith.index_cast %220 : i32 to index
    %c0_64 = arith.constant 0 : index
    %267 = vector.load %arg13[%266, %c0_64] : memref<64x64xf32, #tpu.memory_space<vmem>>, vector<8x64xf32>
    tpu.vector_store %arg13[%266, %c0_64], %263 {strides = array<i32>} : memref<64x64xf32, #tpu.memory_space<vmem>>, vector<8x64xf32>,
    %c5_i32 = arith.constant 5 : i32
    %c7_i32_65 = arith.constant 7 : i32
    %268 = arith.subi %c7_i32_65, %c5_i32 : i32
    %c8_i32_66 = arith.constant 8 : i32
    %269 = arith.muli %c5_i32, %c8_i32_66 : i32
    %270 = tpu.assume_multiple %269, 8 : i32
    %c8_i32_67 = arith.constant 8 : i32
    %271 = arith.muli %268, %c8_i32_67 : i32
    %272 = tpu.assume_multiple %271, 8 : i32
    %273 = tpu.concatenate %247, %263 in 1 : vector<8x64xf32>, vector<8x64xf32> -> vector<8x128xf32>
    %c0_68 = arith.constant 0 : index
    %c0_69 = arith.constant 0 : index
    %274 = vector.load %arg2[%c0_68, %c0_69] : memref<128x512xf32, #tpu.memory_space<vmem>>, vector<128x512xf32>
    %cst_70 = arith.constant dense<0.000000e+00> : vector<8x512xf32>
    %275 = tpu.matmul %273, %274, %cst_70 {dimension_numbers = #tpu.dot_dimension_numbers<[1], [0], [0], [1], [0, 0, 1, 1], [], []>} : vector<8x128xf32>, vector<128x512xf32>, vector<8x512xf32> -> vector<8x512xf32>
    %276 = vector.extract_strided_slice %275 {offsets = [0, 0], sizes = [8, 256], strides = [1, 1]} : vector<8x512xf32> to vector<8x256xf32>
    %277 = arith.index_cast %270 : i32 to index
    %c0_71 = arith.constant 0 : index
    %278 = vector.load %arg11[%277, %c0_71] : memref<64x512xf32, #tpu.memory_space<vmem>>, vector<8x256xf32>
    %279 = arith.addf %276, %278 : vector<8x256xf32>
    %280 = vector.extract_strided_slice %275 {offsets = [0, 256], sizes = [8, 256], strides = [1, 1]} : vector<8x512xf32> to vector<8x256xf32>
    %281 = arith.index_cast %272 : i32 to index
    %c256_72 = arith.constant 256 : index
    %282 = vector.load %arg11[%281, %c256_72] : memref<64x512xf32, #tpu.memory_space<vmem>>, vector<8x256xf32>
    %283 = arith.addf %280, %282 : vector<8x256xf32>
    %284 = vector.extract_strided_slice %279 {offsets = [0, 0], sizes = [8, 192], strides = [1, 1]} : vector<8x256xf32> to vector<8x192xf32>
    %285 = arith.negf %284 : vector<8x192xf32>
    %286 = math.exp %285 : vector<8x192xf32>
    %cst_73 = arith.constant 1.000000e+00 : f32
    %287 = vector.broadcast %cst_73 : f32 to vector<8x192xf32>
    %288 = arith.addf %287, %286 : vector<8x192xf32>
    %289 = arith.divf %287, %288 : vector<8x192xf32>
    %290 = vector.extract_strided_slice %289 {offsets = [0, 0], sizes = [8, 64], strides = [1, 1]} : vector<8x192xf32> to vector<8x64xf32>
    %291 = vector.extract_strided_slice %289 {offsets = [0, 64], sizes = [8, 64], strides = [1, 1]} : vector<8x192xf32> to vector<8x64xf32>
    %292 = vector.extract_strided_slice %289 {offsets = [0, 128], sizes = [8, 64], strides = [1, 1]} : vector<8x192xf32> to vector<8x64xf32>
    %293 = vector.extract_strided_slice %279 {offsets = [0, 192], sizes = [8, 64], strides = [1, 1]} : vector<8x256xf32> to vector<8x64xf32>
    %294 = math.tanh %293 : vector<8x64xf32>
    %295 = arith.mulf %291, %245 : vector<8x64xf32>
    %296 = arith.mulf %290, %294 : vector<8x64xf32>
    %297 = arith.addf %295, %296 : vector<8x64xf32>
    %298 = math.tanh %297 : vector<8x64xf32>
    %299 = arith.mulf %292, %298 : vector<8x64xf32>
    %300 = vector.extract_strided_slice %283 {offsets = [0, 0], sizes = [8, 192], strides = [1, 1]} : vector<8x256xf32> to vector<8x192xf32>
    %301 = arith.negf %300 : vector<8x192xf32>
    %302 = math.exp %301 : vector<8x192xf32>
    %cst_74 = arith.constant 1.000000e+00 : f32
    %303 = vector.broadcast %cst_74 : f32 to vector<8x192xf32>
    %304 = arith.addf %303, %302 : vector<8x192xf32>
    %305 = arith.divf %303, %304 : vector<8x192xf32>
    %306 = vector.extract_strided_slice %305 {offsets = [0, 0], sizes = [8, 64], strides = [1, 1]} : vector<8x192xf32> to vector<8x64xf32>
    %307 = vector.extract_strided_slice %305 {offsets = [0, 64], sizes = [8, 64], strides = [1, 1]} : vector<8x192xf32> to vector<8x64xf32>
    %308 = vector.extract_strided_slice %305 {offsets = [0, 128], sizes = [8, 64], strides = [1, 1]} : vector<8x192xf32> to vector<8x64xf32>
    %309 = vector.extract_strided_slice %283 {offsets = [0, 192], sizes = [8, 64], strides = [1, 1]} : vector<8x256xf32> to vector<8x64xf32>
    %310 = math.tanh %309 : vector<8x64xf32>
    %311 = arith.mulf %307, %261 : vector<8x64xf32>
    %312 = arith.mulf %306, %310 : vector<8x64xf32>
    %313 = arith.addf %311, %312 : vector<8x64xf32>
    %314 = math.tanh %313 : vector<8x64xf32>
    %315 = arith.mulf %308, %314 : vector<8x64xf32>
    %316 = arith.index_cast %270 : i32 to index
    %c0_75 = arith.constant 0 : index
    %317 = vector.load %arg12[%316, %c0_75] : memref<64x64xf32, #tpu.memory_space<vmem>>, vector<8x64xf32>
    tpu.vector_store %arg12[%316, %c0_75], %299 {strides = array<i32>} : memref<64x64xf32, #tpu.memory_space<vmem>>, vector<8x64xf32>,
    %318 = arith.index_cast %272 : i32 to index
    %c0_76 = arith.constant 0 : index
    %319 = vector.load %arg13[%318, %c0_76] : memref<64x64xf32, #tpu.memory_space<vmem>>, vector<8x64xf32>
    tpu.vector_store %arg13[%318, %c0_76], %315 {strides = array<i32>} : memref<64x64xf32, #tpu.memory_space<vmem>>, vector<8x64xf32>,
    %c6_i32 = arith.constant 6 : i32
    %c7_i32_77 = arith.constant 7 : i32
    %320 = arith.subi %c7_i32_77, %c6_i32 : i32
    %c8_i32_78 = arith.constant 8 : i32
    %321 = arith.muli %c6_i32, %c8_i32_78 : i32
    %322 = tpu.assume_multiple %321, 8 : i32
    %c8_i32_79 = arith.constant 8 : i32
    %323 = arith.muli %320, %c8_i32_79 : i32
    %324 = tpu.assume_multiple %323, 8 : i32
    %325 = tpu.concatenate %299, %315 in 1 : vector<8x64xf32>, vector<8x64xf32> -> vector<8x128xf32>
    %c0_80 = arith.constant 0 : index
    %c0_81 = arith.constant 0 : index
    %326 = vector.load %arg2[%c0_80, %c0_81] : memref<128x512xf32, #tpu.memory_space<vmem>>, vector<128x512xf32>
    %cst_82 = arith.constant dense<0.000000e+00> : vector<8x512xf32>
    %327 = tpu.matmul %325, %326, %cst_82 {dimension_numbers = #tpu.dot_dimension_numbers<[1], [0], [0], [1], [0, 0, 1, 1], [], []>} : vector<8x128xf32>, vector<128x512xf32>, vector<8x512xf32> -> vector<8x512xf32>
    %328 = vector.extract_strided_slice %327 {offsets = [0, 0], sizes = [8, 256], strides = [1, 1]} : vector<8x512xf32> to vector<8x256xf32>
    %329 = arith.index_cast %322 : i32 to index
    %c0_83 = arith.constant 0 : index
    %330 = vector.load %arg11[%329, %c0_83] : memref<64x512xf32, #tpu.memory_space<vmem>>, vector<8x256xf32>
    %331 = arith.addf %328, %330 : vector<8x256xf32>
    %332 = vector.extract_strided_slice %327 {offsets = [0, 256], sizes = [8, 256], strides = [1, 1]} : vector<8x512xf32> to vector<8x256xf32>
    %333 = arith.index_cast %324 : i32 to index
    %c256_84 = arith.constant 256 : index
    %334 = vector.load %arg11[%333, %c256_84] : memref<64x512xf32, #tpu.memory_space<vmem>>, vector<8x256xf32>
    %335 = arith.addf %332, %334 : vector<8x256xf32>
    %336 = vector.extract_strided_slice %331 {offsets = [0, 0], sizes = [8, 192], strides = [1, 1]} : vector<8x256xf32> to vector<8x192xf32>
    %337 = arith.negf %336 : vector<8x192xf32>
    %338 = math.exp %337 : vector<8x192xf32>
    %cst_85 = arith.constant 1.000000e+00 : f32
    %339 = vector.broadcast %cst_85 : f32 to vector<8x192xf32>
    %340 = arith.addf %339, %338 : vector<8x192xf32>
    %341 = arith.divf %339, %340 : vector<8x192xf32>
    %342 = vector.extract_strided_slice %341 {offsets = [0, 0], sizes = [8, 64], strides = [1, 1]} : vector<8x192xf32> to vector<8x64xf32>
    %343 = vector.extract_strided_slice %341 {offsets = [0, 64], sizes = [8, 64], strides = [1, 1]} : vector<8x192xf32> to vector<8x64xf32>
    %344 = vector.extract_strided_slice %341 {offsets = [0, 128], sizes = [8, 64], strides = [1, 1]} : vector<8x192xf32> to vector<8x64xf32>
    %345 = vector.extract_strided_slice %331 {offsets = [0, 192], sizes = [8, 64], strides = [1, 1]} : vector<8x256xf32> to vector<8x64xf32>
    %346 = math.tanh %345 : vector<8x64xf32>
    %347 = arith.mulf %343, %297 : vector<8x64xf32>
    %348 = arith.mulf %342, %346 : vector<8x64xf32>
    %349 = arith.addf %347, %348 : vector<8x64xf32>
    %350 = math.tanh %349 : vector<8x64xf32>
    %351 = arith.mulf %344, %350 : vector<8x64xf32>
    %352 = vector.extract_strided_slice %335 {offsets = [0, 0], sizes = [8, 192], strides = [1, 1]} : vector<8x256xf32> to vector<8x192xf32>
    %353 = arith.negf %352 : vector<8x192xf32>
    %354 = math.exp %353 : vector<8x192xf32>
    %cst_86 = arith.constant 1.000000e+00 : f32
    %355 = vector.broadcast %cst_86 : f32 to vector<8x192xf32>
    %356 = arith.addf %355, %354 : vector<8x192xf32>
    %357 = arith.divf %355, %356 : vector<8x192xf32>
    %358 = vector.extract_strided_slice %357 {offsets = [0, 0], sizes = [8, 64], strides = [1, 1]} : vector<8x192xf32> to vector<8x64xf32>
    %359 = vector.extract_strided_slice %357 {offsets = [0, 64], sizes = [8, 64], strides = [1, 1]} : vector<8x192xf32> to vector<8x64xf32>
    %360 = vector.extract_strided_slice %357 {offsets = [0, 128], sizes = [8, 64], strides = [1, 1]} : vector<8x192xf32> to vector<8x64xf32>
    %361 = vector.extract_strided_slice %335 {offsets = [0, 192], sizes = [8, 64], strides = [1, 1]} : vector<8x256xf32> to vector<8x64xf32>
    %362 = math.tanh %361 : vector<8x64xf32>
    %363 = arith.mulf %359, %313 : vector<8x64xf32>
    %364 = arith.mulf %358, %362 : vector<8x64xf32>
    %365 = arith.addf %363, %364 : vector<8x64xf32>
    %366 = math.tanh %365 : vector<8x64xf32>
    %367 = arith.mulf %360, %366 : vector<8x64xf32>
    %368 = arith.index_cast %322 : i32 to index
    %c0_87 = arith.constant 0 : index
    %369 = vector.load %arg12[%368, %c0_87] : memref<64x64xf32, #tpu.memory_space<vmem>>, vector<8x64xf32>
    tpu.vector_store %arg12[%368, %c0_87], %351 {strides = array<i32>} : memref<64x64xf32, #tpu.memory_space<vmem>>, vector<8x64xf32>,
    %370 = arith.index_cast %324 : i32 to index
    %c0_88 = arith.constant 0 : index
    %371 = vector.load %arg13[%370, %c0_88] : memref<64x64xf32, #tpu.memory_space<vmem>>, vector<8x64xf32>
    tpu.vector_store %arg13[%370, %c0_88], %367 {strides = array<i32>} : memref<64x64xf32, #tpu.memory_space<vmem>>, vector<8x64xf32>,
    %c7_i32_89 = arith.constant 7 : i32
    %c7_i32_90 = arith.constant 7 : i32
    %372 = arith.subi %c7_i32_90, %c7_i32_89 : i32
    %c8_i32_91 = arith.constant 8 : i32
    %373 = arith.muli %c7_i32_89, %c8_i32_91 : i32
    %374 = tpu.assume_multiple %373, 8 : i32
    %c8_i32_92 = arith.constant 8 : i32
    %375 = arith.muli %372, %c8_i32_92 : i32
    %376 = tpu.assume_multiple %375, 8 : i32
    %377 = tpu.concatenate %351, %367 in 1 : vector<8x64xf32>, vector<8x64xf32> -> vector<8x128xf32>
    %c0_93 = arith.constant 0 : index
    %c0_94 = arith.constant 0 : index
    %378 = vector.load %arg2[%c0_93, %c0_94] : memref<128x512xf32, #tpu.memory_space<vmem>>, vector<128x512xf32>
    %cst_95 = arith.constant dense<0.000000e+00> : vector<8x512xf32>
    %379 = tpu.matmul %377, %378, %cst_95 {dimension_numbers = #tpu.dot_dimension_numbers<[1], [0], [0], [1], [0, 0, 1, 1], [], []>} : vector<8x128xf32>, vector<128x512xf32>, vector<8x512xf32> -> vector<8x512xf32>
    %380 = vector.extract_strided_slice %379 {offsets = [0, 0], sizes = [8, 256], strides = [1, 1]} : vector<8x512xf32> to vector<8x256xf32>
    %381 = arith.index_cast %374 : i32 to index
    %c0_96 = arith.constant 0 : index
    %382 = vector.load %arg11[%381, %c0_96] : memref<64x512xf32, #tpu.memory_space<vmem>>, vector<8x256xf32>
    %383 = arith.addf %380, %382 : vector<8x256xf32>
    %384 = vector.extract_strided_slice %379 {offsets = [0, 256], sizes = [8, 256], strides = [1, 1]} : vector<8x512xf32> to vector<8x256xf32>
    %385 = arith.index_cast %376 : i32 to index
    %c256_97 = arith.constant 256 : index
    %386 = vector.load %arg11[%385, %c256_97] : memref<64x512xf32, #tpu.memory_space<vmem>>, vector<8x256xf32>
    %387 = arith.addf %384, %386 : vector<8x256xf32>
    %388 = vector.extract_strided_slice %383 {offsets = [0, 0], sizes = [8, 192], strides = [1, 1]} : vector<8x256xf32> to vector<8x192xf32>
    %389 = arith.negf %388 : vector<8x192xf32>
    %390 = math.exp %389 : vector<8x192xf32>
    %cst_98 = arith.constant 1.000000e+00 : f32
    %391 = vector.broadcast %cst_98 : f32 to vector<8x192xf32>
    %392 = arith.addf %391, %390 : vector<8x192xf32>
    %393 = arith.divf %391, %392 : vector<8x192xf32>
    %394 = vector.extract_strided_slice %393 {offsets = [0, 0], sizes = [8, 64], strides = [1, 1]} : vector<8x192xf32> to vector<8x64xf32>
    %395 = vector.extract_strided_slice %393 {offsets = [0, 64], sizes = [8, 64], strides = [1, 1]} : vector<8x192xf32> to vector<8x64xf32>
    %396 = vector.extract_strided_slice %393 {offsets = [0, 128], sizes = [8, 64], strides = [1, 1]} : vector<8x192xf32> to vector<8x64xf32>
    %397 = vector.extract_strided_slice %383 {offsets = [0, 192], sizes = [8, 64], strides = [1, 1]} : vector<8x256xf32> to vector<8x64xf32>
    %398 = math.tanh %397 : vector<8x64xf32>
    %399 = arith.mulf %395, %349 : vector<8x64xf32>
    %400 = arith.mulf %394, %398 : vector<8x64xf32>
    %401 = arith.addf %399, %400 : vector<8x64xf32>
    %402 = math.tanh %401 : vector<8x64xf32>
    %403 = arith.mulf %396, %402 : vector<8x64xf32>
    %404 = vector.extract_strided_slice %387 {offsets = [0, 0], sizes = [8, 192], strides = [1, 1]} : vector<8x256xf32> to vector<8x192xf32>
    %405 = arith.negf %404 : vector<8x192xf32>
    %406 = math.exp %405 : vector<8x192xf32>
    %cst_99 = arith.constant 1.000000e+00 : f32
    %407 = vector.broadcast %cst_99 : f32 to vector<8x192xf32>
    %408 = arith.addf %407, %406 : vector<8x192xf32>
    %409 = arith.divf %407, %408 : vector<8x192xf32>
    %410 = vector.extract_strided_slice %409 {offsets = [0, 0], sizes = [8, 64], strides = [1, 1]} : vector<8x192xf32> to vector<8x64xf32>
    %411 = vector.extract_strided_slice %409 {offsets = [0, 64], sizes = [8, 64], strides = [1, 1]} : vector<8x192xf32> to vector<8x64xf32>
    %412 = vector.extract_strided_slice %409 {offsets = [0, 128], sizes = [8, 64], strides = [1, 1]} : vector<8x192xf32> to vector<8x64xf32>
    %413 = vector.extract_strided_slice %387 {offsets = [0, 192], sizes = [8, 64], strides = [1, 1]} : vector<8x256xf32> to vector<8x64xf32>
    %414 = math.tanh %413 : vector<8x64xf32>
    %415 = arith.mulf %411, %365 : vector<8x64xf32>
    %416 = arith.mulf %410, %414 : vector<8x64xf32>
    %417 = arith.addf %415, %416 : vector<8x64xf32>
    %418 = math.tanh %417 : vector<8x64xf32>
    %419 = arith.mulf %412, %418 : vector<8x64xf32>
    %420 = arith.index_cast %374 : i32 to index
    %c0_100 = arith.constant 0 : index
    %421 = vector.load %arg12[%420, %c0_100] : memref<64x64xf32, #tpu.memory_space<vmem>>, vector<8x64xf32>
    tpu.vector_store %arg12[%420, %c0_100], %403 {strides = array<i32>} : memref<64x64xf32, #tpu.memory_space<vmem>>, vector<8x64xf32>,
    %422 = arith.index_cast %376 : i32 to index
    %c0_101 = arith.constant 0 : index
    %423 = vector.load %arg13[%422, %c0_101] : memref<64x64xf32, #tpu.memory_space<vmem>>, vector<8x64xf32>
    tpu.vector_store %arg13[%422, %c0_101], %419 {strides = array<i32>} : memref<64x64xf32, #tpu.memory_space<vmem>>, vector<8x64xf32>,
    %c8_i32_102 = arith.constant 8 : i32
    %c0_103 = arith.constant 0 : index
    %c0_104 = arith.constant 0 : index
    %c0_105 = arith.constant 0 : index
    %424 = vector.load %arg9[%c0_103, %c0_104, %c0_105] : memref<4x8x64xf32, #tpu.memory_space<vmem>>, vector<1x8x64xf32>
    %425 = vector.shape_cast %424 : vector<1x8x64xf32> to vector<8x64xf32>
    %426 = vector.shape_cast %403 : vector<8x64xf32> to vector<1x8x64xf32>
    tpu.vector_store %arg9[%c0_103, %c0_104, %c0_105], %426 {strides = array<i32>} : memref<4x8x64xf32, #tpu.memory_space<vmem>>, vector<1x8x64xf32>,
    %c1 = arith.constant 1 : index
    %c0_106 = arith.constant 0 : index
    %c0_107 = arith.constant 0 : index
    %427 = vector.load %arg9[%c1, %c0_106, %c0_107] : memref<4x8x64xf32, #tpu.memory_space<vmem>>, vector<1x8x64xf32>
    %428 = vector.shape_cast %427 : vector<1x8x64xf32> to vector<8x64xf32>
    %429 = vector.shape_cast %419 : vector<8x64xf32> to vector<1x8x64xf32>
    tpu.vector_store %arg9[%c1, %c0_106, %c0_107], %429 {strides = array<i32>} : memref<4x8x64xf32, #tpu.memory_space<vmem>>, vector<1x8x64xf32>,
    %c0_108 = arith.constant 0 : index
    %c0_109 = arith.constant 0 : index
    %c0_110 = arith.constant 0 : index
    %430 = vector.load %arg10[%c0_108, %c0_109, %c0_110] : memref<4x8x64xf32, #tpu.memory_space<vmem>>, vector<1x8x64xf32>
    %431 = vector.shape_cast %430 : vector<1x8x64xf32> to vector<8x64xf32>
    %432 = vector.shape_cast %401 : vector<8x64xf32> to vector<1x8x64xf32>
    tpu.vector_store %arg10[%c0_108, %c0_109, %c0_110], %432 {strides = array<i32>} : memref<4x8x64xf32, #tpu.memory_space<vmem>>, vector<1x8x64xf32>,
    %c1_111 = arith.constant 1 : index
    %c0_112 = arith.constant 0 : index
    %c0_113 = arith.constant 0 : index
    %433 = vector.load %arg10[%c1_111, %c0_112, %c0_113] : memref<4x8x64xf32, #tpu.memory_space<vmem>>, vector<1x8x64xf32>
    %434 = vector.shape_cast %433 : vector<1x8x64xf32> to vector<8x64xf32>
    %435 = vector.shape_cast %417 : vector<8x64xf32> to vector<1x8x64xf32>
    tpu.vector_store %arg10[%c1_111, %c0_112, %c0_113], %435 {strides = array<i32>} : memref<4x8x64xf32, #tpu.memory_space<vmem>>, vector<1x8x64xf32>,
    %c0_114 = arith.constant 0 : index
    %c0_115 = arith.constant 0 : index
    %436 = vector.load %arg12[%c0_114, %c0_115] : memref<64x64xf32, #tpu.memory_space<vmem>>, vector<64x64xf32>
    %c0_116 = arith.constant 0 : index
    %c0_117 = arith.constant 0 : index
    %437 = vector.load %arg4[%c0_116, %c0_117] : memref<128x512xf32, #tpu.memory_space<vmem>>, vector<64x512xf32>
    %cst_118 = arith.constant dense<0.000000e+00> : vector<64x512xf32>
    %438 = tpu.matmul %436, %437, %cst_118 {dimension_numbers = #tpu.dot_dimension_numbers<[1], [0], [0], [1], [0, 0, 1, 1], [], []>} : vector<64x64xf32>, vector<64x512xf32>, vector<64x512xf32> -> vector<64x512xf32>
    %c0_119 = arith.constant 0 : index
    %c0_120 = arith.constant 0 : index
    %439 = vector.load %arg13[%c0_119, %c0_120] : memref<64x64xf32, #tpu.memory_space<vmem>>, vector<64x64xf32>
    %c64 = arith.constant 64 : index
    %c0_121 = arith.constant 0 : index
    %440 = vector.load %arg4[%c64, %c0_121] : memref<128x512xf32, #tpu.memory_space<vmem>>, vector<64x512xf32>
    %cst_122 = arith.constant dense<0.000000e+00> : vector<64x512xf32>
    %441 = tpu.matmul %439, %440, %cst_122 {dimension_numbers = #tpu.dot_dimension_numbers<[1], [0], [0], [1], [0, 0, 1, 1], [], []>} : vector<64x64xf32>, vector<64x512xf32>, vector<64x512xf32> -> vector<64x512xf32>
    %442 = arith.addf %438, %441 : vector<64x512xf32>
    %c0_123 = arith.constant 0 : index
    %c0_124 = arith.constant 0 : index
    %443 = vector.load %arg6[%c0_123, %c0_124] : memref<1x512xf32, #tpu.memory_space<vmem>>, vector<1x512xf32>
    %444 = vector.broadcast %443 : vector<1x512xf32> to vector<64x512xf32>
    %445 = arith.addf %442, %444 : vector<64x512xf32>
    %c0_125 = arith.constant 0 : index
    %c0_126 = arith.constant 0 : index
    %446 = vector.load %arg11[%c0_125, %c0_126] : memref<64x512xf32, #tpu.memory_space<vmem>>, vector<64x512xf32>
    tpu.vector_store %arg11[%c0_125, %c0_126], %445 {strides = array<i32>} : memref<64x512xf32, #tpu.memory_space<vmem>>, vector<64x512xf32>,
    %cst_127 = arith.constant 0.000000e+00 : f32
    %447 = vector.broadcast %cst_127 : f32 to vector<8x64xf32>
    %c0_i32_128 = arith.constant 0 : i32
    %c7_i32_129 = arith.constant 7 : i32
    %448 = arith.subi %c7_i32_129, %c0_i32_128 : i32
    %c8_i32_130 = arith.constant 8 : i32
    %449 = arith.muli %c0_i32_128, %c8_i32_130 : i32
    %450 = tpu.assume_multiple %449, 8 : i32
    %c8_i32_131 = arith.constant 8 : i32
    %451 = arith.muli %448, %c8_i32_131 : i32
    %452 = tpu.assume_multiple %451, 8 : i32
    %453 = tpu.concatenate %447, %447 in 1 : vector<8x64xf32>, vector<8x64xf32> -> vector<8x128xf32>
    %c0_132 = arith.constant 0 : index
    %c0_133 = arith.constant 0 : index
    %454 = vector.load %arg5[%c0_132, %c0_133] : memref<128x512xf32, #tpu.memory_space<vmem>>, vector<128x512xf32>
    %cst_134 = arith.constant dense<0.000000e+00> : vector<8x512xf32>
    %455 = tpu.matmul %453, %454, %cst_134 {dimension_numbers = #tpu.dot_dimension_numbers<[1], [0], [0], [1], [0, 0, 1, 1], [], []>} : vector<8x128xf32>, vector<128x512xf32>, vector<8x512xf32> -> vector<8x512xf32>
    %456 = vector.extract_strided_slice %455 {offsets = [0, 0], sizes = [8, 256], strides = [1, 1]} : vector<8x512xf32> to vector<8x256xf32>
    %457 = arith.index_cast %450 : i32 to index
    %c0_135 = arith.constant 0 : index
    %458 = vector.load %arg11[%457, %c0_135] : memref<64x512xf32, #tpu.memory_space<vmem>>, vector<8x256xf32>
    %459 = arith.addf %456, %458 : vector<8x256xf32>
    %460 = vector.extract_strided_slice %455 {offsets = [0, 256], sizes = [8, 256], strides = [1, 1]} : vector<8x512xf32> to vector<8x256xf32>
    %461 = arith.index_cast %452 : i32 to index
    %c256_136 = arith.constant 256 : index
    %462 = vector.load %arg11[%461, %c256_136] : memref<64x512xf32, #tpu.memory_space<vmem>>, vector<8x256xf32>
    %463 = arith.addf %460, %462 : vector<8x256xf32>
    %464 = vector.extract_strided_slice %459 {offsets = [0, 0], sizes = [8, 192], strides = [1, 1]} : vector<8x256xf32> to vector<8x192xf32>
    %465 = arith.negf %464 : vector<8x192xf32>
    %466 = math.exp %465 : vector<8x192xf32>
    %cst_137 = arith.constant 1.000000e+00 : f32
    %467 = vector.broadcast %cst_137 : f32 to vector<8x192xf32>
    %468 = arith.addf %467, %466 : vector<8x192xf32>
    %469 = arith.divf %467, %468 : vector<8x192xf32>
    %470 = vector.extract_strided_slice %469 {offsets = [0, 0], sizes = [8, 64], strides = [1, 1]} : vector<8x192xf32> to vector<8x64xf32>
    %471 = vector.extract_strided_slice %469 {offsets = [0, 64], sizes = [8, 64], strides = [1, 1]} : vector<8x192xf32> to vector<8x64xf32>
    %472 = vector.extract_strided_slice %469 {offsets = [0, 128], sizes = [8, 64], strides = [1, 1]} : vector<8x192xf32> to vector<8x64xf32>
    %473 = vector.extract_strided_slice %459 {offsets = [0, 192], sizes = [8, 64], strides = [1, 1]} : vector<8x256xf32> to vector<8x64xf32>
    %474 = math.tanh %473 : vector<8x64xf32>
    %475 = arith.mulf %471, %447 : vector<8x64xf32>
    %476 = arith.mulf %470, %474 : vector<8x64xf32>
    %477 = arith.addf %475, %476 : vector<8x64xf32>
    %478 = math.tanh %477 : vector<8x64xf32>
    %479 = arith.mulf %472, %478 : vector<8x64xf32>
    %480 = vector.extract_strided_slice %463 {offsets = [0, 0], sizes = [8, 192], strides = [1, 1]} : vector<8x256xf32> to vector<8x192xf32>
    %481 = arith.negf %480 : vector<8x192xf32>
    %482 = math.exp %481 : vector<8x192xf32>
    %cst_138 = arith.constant 1.000000e+00 : f32
    %483 = vector.broadcast %cst_138 : f32 to vector<8x192xf32>
    %484 = arith.addf %483, %482 : vector<8x192xf32>
    %485 = arith.divf %483, %484 : vector<8x192xf32>
    %486 = vector.extract_strided_slice %485 {offsets = [0, 0], sizes = [8, 64], strides = [1, 1]} : vector<8x192xf32> to vector<8x64xf32>
    %487 = vector.extract_strided_slice %485 {offsets = [0, 64], sizes = [8, 64], strides = [1, 1]} : vector<8x192xf32> to vector<8x64xf32>
    %488 = vector.extract_strided_slice %485 {offsets = [0, 128], sizes = [8, 64], strides = [1, 1]} : vector<8x192xf32> to vector<8x64xf32>
    %489 = vector.extract_strided_slice %463 {offsets = [0, 192], sizes = [8, 64], strides = [1, 1]} : vector<8x256xf32> to vector<8x64xf32>
    %490 = math.tanh %489 : vector<8x64xf32>
    %491 = arith.mulf %487, %447 : vector<8x64xf32>
    %492 = arith.mulf %486, %490 : vector<8x64xf32>
    %493 = arith.addf %491, %492 : vector<8x64xf32>
    %494 = math.tanh %493 : vector<8x64xf32>
    %495 = arith.mulf %488, %494 : vector<8x64xf32>
    %496 = arith.index_cast %450 : i32 to index
    %c0_139 = arith.constant 0 : index
    %497 = vector.load %arg7[%496, %c0_139] : memref<64x64xf32, #tpu.memory_space<vmem>>, vector<8x64xf32>
    tpu.vector_store %arg7[%496, %c0_139], %479 {strides = array<i32>} : memref<64x64xf32, #tpu.memory_space<vmem>>, vector<8x64xf32>,
    %498 = arith.index_cast %452 : i32 to index
    %c0_140 = arith.constant 0 : index
    %499 = vector.load %arg8[%498, %c0_140] : memref<64x64xf32, #tpu.memory_space<vmem>>, vector<8x64xf32>
    tpu.vector_store %arg8[%498, %c0_140], %495 {strides = array<i32>} : memref<64x64xf32, #tpu.memory_space<vmem>>, vector<8x64xf32>,
    %c1_i32_141 = arith.constant 1 : i32
    %c7_i32_142 = arith.constant 7 : i32
    %500 = arith.subi %c7_i32_142, %c1_i32_141 : i32
    %c8_i32_143 = arith.constant 8 : i32
    %501 = arith.muli %c1_i32_141, %c8_i32_143 : i32
    %502 = tpu.assume_multiple %501, 8 : i32
    %c8_i32_144 = arith.constant 8 : i32
    %503 = arith.muli %500, %c8_i32_144 : i32
    %504 = tpu.assume_multiple %503, 8 : i32
    %505 = tpu.concatenate %479, %495 in 1 : vector<8x64xf32>, vector<8x64xf32> -> vector<8x128xf32>
    %c0_145 = arith.constant 0 : index
    %c0_146 = arith.constant 0 : index
    %506 = vector.load %arg5[%c0_145, %c0_146] : memref<128x512xf32, #tpu.memory_space<vmem>>, vector<128x512xf32>
    %cst_147 = arith.constant dense<0.000000e+00> : vector<8x512xf32>
    %507 = tpu.matmul %505, %506, %cst_147 {dimension_numbers = #tpu.dot_dimension_numbers<[1], [0], [0], [1], [0, 0, 1, 1], [], []>} : vector<8x128xf32>, vector<128x512xf32>, vector<8x512xf32> -> vector<8x512xf32>
    %508 = vector.extract_strided_slice %507 {offsets = [0, 0], sizes = [8, 256], strides = [1, 1]} : vector<8x512xf32> to vector<8x256xf32>
    %509 = arith.index_cast %502 : i32 to index
    %c0_148 = arith.constant 0 : index
    %510 = vector.load %arg11[%509, %c0_148] : memref<64x512xf32, #tpu.memory_space<vmem>>, vector<8x256xf32>
    %511 = arith.addf %508, %510 : vector<8x256xf32>
    %512 = vector.extract_strided_slice %507 {offsets = [0, 256], sizes = [8, 256], strides = [1, 1]} : vector<8x512xf32> to vector<8x256xf32>
    %513 = arith.index_cast %504 : i32 to index
    %c256_149 = arith.constant 256 : index
    %514 = vector.load %arg11[%513, %c256_149] : memref<64x512xf32, #tpu.memory_space<vmem>>, vector<8x256xf32>
    %515 = arith.addf %512, %514 : vector<8x256xf32>
    %516 = vector.extract_strided_slice %511 {offsets = [0, 0], sizes = [8, 192], strides = [1, 1]} : vector<8x256xf32> to vector<8x192xf32>
    %517 = arith.negf %516 : vector<8x192xf32>
    %518 = math.exp %517 : vector<8x192xf32>
    %cst_150 = arith.constant 1.000000e+00 : f32
    %519 = vector.broadcast %cst_150 : f32 to vector<8x192xf32>
    %520 = arith.addf %519, %518 : vector<8x192xf32>
    %521 = arith.divf %519, %520 : vector<8x192xf32>
    %522 = vector.extract_strided_slice %521 {offsets = [0, 0], sizes = [8, 64], strides = [1, 1]} : vector<8x192xf32> to vector<8x64xf32>
    %523 = vector.extract_strided_slice %521 {offsets = [0, 64], sizes = [8, 64], strides = [1, 1]} : vector<8x192xf32> to vector<8x64xf32>
    %524 = vector.extract_strided_slice %521 {offsets = [0, 128], sizes = [8, 64], strides = [1, 1]} : vector<8x192xf32> to vector<8x64xf32>
    %525 = vector.extract_strided_slice %511 {offsets = [0, 192], sizes = [8, 64], strides = [1, 1]} : vector<8x256xf32> to vector<8x64xf32>
    %526 = math.tanh %525 : vector<8x64xf32>
    %527 = arith.mulf %523, %477 : vector<8x64xf32>
    %528 = arith.mulf %522, %526 : vector<8x64xf32>
    %529 = arith.addf %527, %528 : vector<8x64xf32>
    %530 = math.tanh %529 : vector<8x64xf32>
    %531 = arith.mulf %524, %530 : vector<8x64xf32>
    %532 = vector.extract_strided_slice %515 {offsets = [0, 0], sizes = [8, 192], strides = [1, 1]} : vector<8x256xf32> to vector<8x192xf32>
    %533 = arith.negf %532 : vector<8x192xf32>
    %534 = math.exp %533 : vector<8x192xf32>
    %cst_151 = arith.constant 1.000000e+00 : f32
    %535 = vector.broadcast %cst_151 : f32 to vector<8x192xf32>
    %536 = arith.addf %535, %534 : vector<8x192xf32>
    %537 = arith.divf %535, %536 : vector<8x192xf32>
    %538 = vector.extract_strided_slice %537 {offsets = [0, 0], sizes = [8, 64], strides = [1, 1]} : vector<8x192xf32> to vector<8x64xf32>
    %539 = vector.extract_strided_slice %537 {offsets = [0, 64], sizes = [8, 64], strides = [1, 1]} : vector<8x192xf32> to vector<8x64xf32>
    %540 = vector.extract_strided_slice %537 {offsets = [0, 128], sizes = [8, 64], strides = [1, 1]} : vector<8x192xf32> to vector<8x64xf32>
    %541 = vector.extract_strided_slice %515 {offsets = [0, 192], sizes = [8, 64], strides = [1, 1]} : vector<8x256xf32> to vector<8x64xf32>
    %542 = math.tanh %541 : vector<8x64xf32>
    %543 = arith.mulf %539, %493 : vector<8x64xf32>
    %544 = arith.mulf %538, %542 : vector<8x64xf32>
    %545 = arith.addf %543, %544 : vector<8x64xf32>
    %546 = math.tanh %545 : vector<8x64xf32>
    %547 = arith.mulf %540, %546 : vector<8x64xf32>
    %548 = arith.index_cast %502 : i32 to index
    %c0_152 = arith.constant 0 : index
    %549 = vector.load %arg7[%548, %c0_152] : memref<64x64xf32, #tpu.memory_space<vmem>>, vector<8x64xf32>
    tpu.vector_store %arg7[%548, %c0_152], %531 {strides = array<i32>} : memref<64x64xf32, #tpu.memory_space<vmem>>, vector<8x64xf32>,
    %550 = arith.index_cast %504 : i32 to index
    %c0_153 = arith.constant 0 : index
    %551 = vector.load %arg8[%550, %c0_153] : memref<64x64xf32, #tpu.memory_space<vmem>>, vector<8x64xf32>
    tpu.vector_store %arg8[%550, %c0_153], %547 {strides = array<i32>} : memref<64x64xf32, #tpu.memory_space<vmem>>, vector<8x64xf32>,
    %c2_i32_154 = arith.constant 2 : i32
    %c7_i32_155 = arith.constant 7 : i32
    %552 = arith.subi %c7_i32_155, %c2_i32_154 : i32
    %c8_i32_156 = arith.constant 8 : i32
    %553 = arith.muli %c2_i32_154, %c8_i32_156 : i32
    %554 = tpu.assume_multiple %553, 8 : i32
    %c8_i32_157 = arith.constant 8 : i32
    %555 = arith.muli %552, %c8_i32_157 : i32
    %556 = tpu.assume_multiple %555, 8 : i32
    %557 = tpu.concatenate %531, %547 in 1 : vector<8x64xf32>, vector<8x64xf32> -> vector<8x128xf32>
    %c0_158 = arith.constant 0 : index
    %c0_159 = arith.constant 0 : index
    %558 = vector.load %arg5[%c0_158, %c0_159] : memref<128x512xf32, #tpu.memory_space<vmem>>, vector<128x512xf32>
    %cst_160 = arith.constant dense<0.000000e+00> : vector<8x512xf32>
    %559 = tpu.matmul %557, %558, %cst_160 {dimension_numbers = #tpu.dot_dimension_numbers<[1], [0], [0], [1], [0, 0, 1, 1], [], []>} : vector<8x128xf32>, vector<128x512xf32>, vector<8x512xf32> -> vector<8x512xf32>
    %560 = vector.extract_strided_slice %559 {offsets = [0, 0], sizes = [8, 256], strides = [1, 1]} : vector<8x512xf32> to vector<8x256xf32>
    %561 = arith.index_cast %554 : i32 to index
    %c0_161 = arith.constant 0 : index
    %562 = vector.load %arg11[%561, %c0_161] : memref<64x512xf32, #tpu.memory_space<vmem>>, vector<8x256xf32>
    %563 = arith.addf %560, %562 : vector<8x256xf32>
    %564 = vector.extract_strided_slice %559 {offsets = [0, 256], sizes = [8, 256], strides = [1, 1]} : vector<8x512xf32> to vector<8x256xf32>
    %565 = arith.index_cast %556 : i32 to index
    %c256_162 = arith.constant 256 : index
    %566 = vector.load %arg11[%565, %c256_162] : memref<64x512xf32, #tpu.memory_space<vmem>>, vector<8x256xf32>
    %567 = arith.addf %564, %566 : vector<8x256xf32>
    %568 = vector.extract_strided_slice %563 {offsets = [0, 0], sizes = [8, 192], strides = [1, 1]} : vector<8x256xf32> to vector<8x192xf32>
    %569 = arith.negf %568 : vector<8x192xf32>
    %570 = math.exp %569 : vector<8x192xf32>
    %cst_163 = arith.constant 1.000000e+00 : f32
    %571 = vector.broadcast %cst_163 : f32 to vector<8x192xf32>
    %572 = arith.addf %571, %570 : vector<8x192xf32>
    %573 = arith.divf %571, %572 : vector<8x192xf32>
    %574 = vector.extract_strided_slice %573 {offsets = [0, 0], sizes = [8, 64], strides = [1, 1]} : vector<8x192xf32> to vector<8x64xf32>
    %575 = vector.extract_strided_slice %573 {offsets = [0, 64], sizes = [8, 64], strides = [1, 1]} : vector<8x192xf32> to vector<8x64xf32>
    %576 = vector.extract_strided_slice %573 {offsets = [0, 128], sizes = [8, 64], strides = [1, 1]} : vector<8x192xf32> to vector<8x64xf32>
    %577 = vector.extract_strided_slice %563 {offsets = [0, 192], sizes = [8, 64], strides = [1, 1]} : vector<8x256xf32> to vector<8x64xf32>
    %578 = math.tanh %577 : vector<8x64xf32>
    %579 = arith.mulf %575, %529 : vector<8x64xf32>
    %580 = arith.mulf %574, %578 : vector<8x64xf32>
    %581 = arith.addf %579, %580 : vector<8x64xf32>
    %582 = math.tanh %581 : vector<8x64xf32>
    %583 = arith.mulf %576, %582 : vector<8x64xf32>
    %584 = vector.extract_strided_slice %567 {offsets = [0, 0], sizes = [8, 192], strides = [1, 1]} : vector<8x256xf32> to vector<8x192xf32>
    %585 = arith.negf %584 : vector<8x192xf32>
    %586 = math.exp %585 : vector<8x192xf32>
    %cst_164 = arith.constant 1.000000e+00 : f32
    %587 = vector.broadcast %cst_164 : f32 to vector<8x192xf32>
    %588 = arith.addf %587, %586 : vector<8x192xf32>
    %589 = arith.divf %587, %588 : vector<8x192xf32>
    %590 = vector.extract_strided_slice %589 {offsets = [0, 0], sizes = [8, 64], strides = [1, 1]} : vector<8x192xf32> to vector<8x64xf32>
    %591 = vector.extract_strided_slice %589 {offsets = [0, 64], sizes = [8, 64], strides = [1, 1]} : vector<8x192xf32> to vector<8x64xf32>
    %592 = vector.extract_strided_slice %589 {offsets = [0, 128], sizes = [8, 64], strides = [1, 1]} : vector<8x192xf32> to vector<8x64xf32>
    %593 = vector.extract_strided_slice %567 {offsets = [0, 192], sizes = [8, 64], strides = [1, 1]} : vector<8x256xf32> to vector<8x64xf32>
    %594 = math.tanh %593 : vector<8x64xf32>
    %595 = arith.mulf %591, %545 : vector<8x64xf32>
    %596 = arith.mulf %590, %594 : vector<8x64xf32>
    %597 = arith.addf %595, %596 : vector<8x64xf32>
    %598 = math.tanh %597 : vector<8x64xf32>
    %599 = arith.mulf %592, %598 : vector<8x64xf32>
    %600 = arith.index_cast %554 : i32 to index
    %c0_165 = arith.constant 0 : index
    %601 = vector.load %arg7[%600, %c0_165] : memref<64x64xf32, #tpu.memory_space<vmem>>, vector<8x64xf32>
    tpu.vector_store %arg7[%600, %c0_165], %583 {strides = array<i32>} : memref<64x64xf32, #tpu.memory_space<vmem>>, vector<8x64xf32>,
    %602 = arith.index_cast %556 : i32 to index
    %c0_166 = arith.constant 0 : index
    %603 = vector.load %arg8[%602, %c0_166] : memref<64x64xf32, #tpu.memory_space<vmem>>, vector<8x64xf32>
    tpu.vector_store %arg8[%602, %c0_166], %599 {strides = array<i32>} : memref<64x64xf32, #tpu.memory_space<vmem>>, vector<8x64xf32>,
    %c3_i32_167 = arith.constant 3 : i32
    %c7_i32_168 = arith.constant 7 : i32
    %604 = arith.subi %c7_i32_168, %c3_i32_167 : i32
    %c8_i32_169 = arith.constant 8 : i32
    %605 = arith.muli %c3_i32_167, %c8_i32_169 : i32
    %606 = tpu.assume_multiple %605, 8 : i32
    %c8_i32_170 = arith.constant 8 : i32
    %607 = arith.muli %604, %c8_i32_170 : i32
    %608 = tpu.assume_multiple %607, 8 : i32
    %609 = tpu.concatenate %583, %599 in 1 : vector<8x64xf32>, vector<8x64xf32> -> vector<8x128xf32>
    %c0_171 = arith.constant 0 : index
    %c0_172 = arith.constant 0 : index
    %610 = vector.load %arg5[%c0_171, %c0_172] : memref<128x512xf32, #tpu.memory_space<vmem>>, vector<128x512xf32>
    %cst_173 = arith.constant dense<0.000000e+00> : vector<8x512xf32>
    %611 = tpu.matmul %609, %610, %cst_173 {dimension_numbers = #tpu.dot_dimension_numbers<[1], [0], [0], [1], [0, 0, 1, 1], [], []>} : vector<8x128xf32>, vector<128x512xf32>, vector<8x512xf32> -> vector<8x512xf32>
    %612 = vector.extract_strided_slice %611 {offsets = [0, 0], sizes = [8, 256], strides = [1, 1]} : vector<8x512xf32> to vector<8x256xf32>
    %613 = arith.index_cast %606 : i32 to index
    %c0_174 = arith.constant 0 : index
    %614 = vector.load %arg11[%613, %c0_174] : memref<64x512xf32, #tpu.memory_space<vmem>>, vector<8x256xf32>
    %615 = arith.addf %612, %614 : vector<8x256xf32>
    %616 = vector.extract_strided_slice %611 {offsets = [0, 256], sizes = [8, 256], strides = [1, 1]} : vector<8x512xf32> to vector<8x256xf32>
    %617 = arith.index_cast %608 : i32 to index
    %c256_175 = arith.constant 256 : index
    %618 = vector.load %arg11[%617, %c256_175] : memref<64x512xf32, #tpu.memory_space<vmem>>, vector<8x256xf32>
    %619 = arith.addf %616, %618 : vector<8x256xf32>
    %620 = vector.extract_strided_slice %615 {offsets = [0, 0], sizes = [8, 192], strides = [1, 1]} : vector<8x256xf32> to vector<8x192xf32>
    %621 = arith.negf %620 : vector<8x192xf32>
    %622 = math.exp %621 : vector<8x192xf32>
    %cst_176 = arith.constant 1.000000e+00 : f32
    %623 = vector.broadcast %cst_176 : f32 to vector<8x192xf32>
    %624 = arith.addf %623, %622 : vector<8x192xf32>
    %625 = arith.divf %623, %624 : vector<8x192xf32>
    %626 = vector.extract_strided_slice %625 {offsets = [0, 0], sizes = [8, 64], strides = [1, 1]} : vector<8x192xf32> to vector<8x64xf32>
    %627 = vector.extract_strided_slice %625 {offsets = [0, 64], sizes = [8, 64], strides = [1, 1]} : vector<8x192xf32> to vector<8x64xf32>
    %628 = vector.extract_strided_slice %625 {offsets = [0, 128], sizes = [8, 64], strides = [1, 1]} : vector<8x192xf32> to vector<8x64xf32>
    %629 = vector.extract_strided_slice %615 {offsets = [0, 192], sizes = [8, 64], strides = [1, 1]} : vector<8x256xf32> to vector<8x64xf32>
    %630 = math.tanh %629 : vector<8x64xf32>
    %631 = arith.mulf %627, %581 : vector<8x64xf32>
    %632 = arith.mulf %626, %630 : vector<8x64xf32>
    %633 = arith.addf %631, %632 : vector<8x64xf32>
    %634 = math.tanh %633 : vector<8x64xf32>
    %635 = arith.mulf %628, %634 : vector<8x64xf32>
    %636 = vector.extract_strided_slice %619 {offsets = [0, 0], sizes = [8, 192], strides = [1, 1]} : vector<8x256xf32> to vector<8x192xf32>
    %637 = arith.negf %636 : vector<8x192xf32>
    %638 = math.exp %637 : vector<8x192xf32>
    %cst_177 = arith.constant 1.000000e+00 : f32
    %639 = vector.broadcast %cst_177 : f32 to vector<8x192xf32>
    %640 = arith.addf %639, %638 : vector<8x192xf32>
    %641 = arith.divf %639, %640 : vector<8x192xf32>
    %642 = vector.extract_strided_slice %641 {offsets = [0, 0], sizes = [8, 64], strides = [1, 1]} : vector<8x192xf32> to vector<8x64xf32>
    %643 = vector.extract_strided_slice %641 {offsets = [0, 64], sizes = [8, 64], strides = [1, 1]} : vector<8x192xf32> to vector<8x64xf32>
    %644 = vector.extract_strided_slice %641 {offsets = [0, 128], sizes = [8, 64], strides = [1, 1]} : vector<8x192xf32> to vector<8x64xf32>
    %645 = vector.extract_strided_slice %619 {offsets = [0, 192], sizes = [8, 64], strides = [1, 1]} : vector<8x256xf32> to vector<8x64xf32>
    %646 = math.tanh %645 : vector<8x64xf32>
    %647 = arith.mulf %643, %597 : vector<8x64xf32>
    %648 = arith.mulf %642, %646 : vector<8x64xf32>
    %649 = arith.addf %647, %648 : vector<8x64xf32>
    %650 = math.tanh %649 : vector<8x64xf32>
    %651 = arith.mulf %644, %650 : vector<8x64xf32>
    %652 = arith.index_cast %606 : i32 to index
    %c0_178 = arith.constant 0 : index
    %653 = vector.load %arg7[%652, %c0_178] : memref<64x64xf32, #tpu.memory_space<vmem>>, vector<8x64xf32>
    tpu.vector_store %arg7[%652, %c0_178], %635 {strides = array<i32>} : memref<64x64xf32, #tpu.memory_space<vmem>>, vector<8x64xf32>,
    %654 = arith.index_cast %608 : i32 to index
    %c0_179 = arith.constant 0 : index
    %655 = vector.load %arg8[%654, %c0_179] : memref<64x64xf32, #tpu.memory_space<vmem>>, vector<8x64xf32>
    tpu.vector_store %arg8[%654, %c0_179], %651 {strides = array<i32>} : memref<64x64xf32, #tpu.memory_space<vmem>>, vector<8x64xf32>,
    %c4_i32_180 = arith.constant 4 : i32
    %c7_i32_181 = arith.constant 7 : i32
    %656 = arith.subi %c7_i32_181, %c4_i32_180 : i32
    %c8_i32_182 = arith.constant 8 : i32
    %657 = arith.muli %c4_i32_180, %c8_i32_182 : i32
    %658 = tpu.assume_multiple %657, 8 : i32
    %c8_i32_183 = arith.constant 8 : i32
    %659 = arith.muli %656, %c8_i32_183 : i32
    %660 = tpu.assume_multiple %659, 8 : i32
    %661 = tpu.concatenate %635, %651 in 1 : vector<8x64xf32>, vector<8x64xf32> -> vector<8x128xf32>
    %c0_184 = arith.constant 0 : index
    %c0_185 = arith.constant 0 : index
    %662 = vector.load %arg5[%c0_184, %c0_185] : memref<128x512xf32, #tpu.memory_space<vmem>>, vector<128x512xf32>
    %cst_186 = arith.constant dense<0.000000e+00> : vector<8x512xf32>
    %663 = tpu.matmul %661, %662, %cst_186 {dimension_numbers = #tpu.dot_dimension_numbers<[1], [0], [0], [1], [0, 0, 1, 1], [], []>} : vector<8x128xf32>, vector<128x512xf32>, vector<8x512xf32> -> vector<8x512xf32>
    %664 = vector.extract_strided_slice %663 {offsets = [0, 0], sizes = [8, 256], strides = [1, 1]} : vector<8x512xf32> to vector<8x256xf32>
    %665 = arith.index_cast %658 : i32 to index
    %c0_187 = arith.constant 0 : index
    %666 = vector.load %arg11[%665, %c0_187] : memref<64x512xf32, #tpu.memory_space<vmem>>, vector<8x256xf32>
    %667 = arith.addf %664, %666 : vector<8x256xf32>
    %668 = vector.extract_strided_slice %663 {offsets = [0, 256], sizes = [8, 256], strides = [1, 1]} : vector<8x512xf32> to vector<8x256xf32>
    %669 = arith.index_cast %660 : i32 to index
    %c256_188 = arith.constant 256 : index
    %670 = vector.load %arg11[%669, %c256_188] : memref<64x512xf32, #tpu.memory_space<vmem>>, vector<8x256xf32>
    %671 = arith.addf %668, %670 : vector<8x256xf32>
    %672 = vector.extract_strided_slice %667 {offsets = [0, 0], sizes = [8, 192], strides = [1, 1]} : vector<8x256xf32> to vector<8x192xf32>
    %673 = arith.negf %672 : vector<8x192xf32>
    %674 = math.exp %673 : vector<8x192xf32>
    %cst_189 = arith.constant 1.000000e+00 : f32
    %675 = vector.broadcast %cst_189 : f32 to vector<8x192xf32>
    %676 = arith.addf %675, %674 : vector<8x192xf32>
    %677 = arith.divf %675, %676 : vector<8x192xf32>
    %678 = vector.extract_strided_slice %677 {offsets = [0, 0], sizes = [8, 64], strides = [1, 1]} : vector<8x192xf32> to vector<8x64xf32>
    %679 = vector.extract_strided_slice %677 {offsets = [0, 64], sizes = [8, 64], strides = [1, 1]} : vector<8x192xf32> to vector<8x64xf32>
    %680 = vector.extract_strided_slice %677 {offsets = [0, 128], sizes = [8, 64], strides = [1, 1]} : vector<8x192xf32> to vector<8x64xf32>
    %681 = vector.extract_strided_slice %667 {offsets = [0, 192], sizes = [8, 64], strides = [1, 1]} : vector<8x256xf32> to vector<8x64xf32>
    %682 = math.tanh %681 : vector<8x64xf32>
    %683 = arith.mulf %679, %633 : vector<8x64xf32>
    %684 = arith.mulf %678, %682 : vector<8x64xf32>
    %685 = arith.addf %683, %684 : vector<8x64xf32>
    %686 = math.tanh %685 : vector<8x64xf32>
    %687 = arith.mulf %680, %686 : vector<8x64xf32>
    %688 = vector.extract_strided_slice %671 {offsets = [0, 0], sizes = [8, 192], strides = [1, 1]} : vector<8x256xf32> to vector<8x192xf32>
    %689 = arith.negf %688 : vector<8x192xf32>
    %690 = math.exp %689 : vector<8x192xf32>
    %cst_190 = arith.constant 1.000000e+00 : f32
    %691 = vector.broadcast %cst_190 : f32 to vector<8x192xf32>
    %692 = arith.addf %691, %690 : vector<8x192xf32>
    %693 = arith.divf %691, %692 : vector<8x192xf32>
    %694 = vector.extract_strided_slice %693 {offsets = [0, 0], sizes = [8, 64], strides = [1, 1]} : vector<8x192xf32> to vector<8x64xf32>
    %695 = vector.extract_strided_slice %693 {offsets = [0, 64], sizes = [8, 64], strides = [1, 1]} : vector<8x192xf32> to vector<8x64xf32>
    %696 = vector.extract_strided_slice %693 {offsets = [0, 128], sizes = [8, 64], strides = [1, 1]} : vector<8x192xf32> to vector<8x64xf32>
    %697 = vector.extract_strided_slice %671 {offsets = [0, 192], sizes = [8, 64], strides = [1, 1]} : vector<8x256xf32> to vector<8x64xf32>
    %698 = math.tanh %697 : vector<8x64xf32>
    %699 = arith.mulf %695, %649 : vector<8x64xf32>
    %700 = arith.mulf %694, %698 : vector<8x64xf32>
    %701 = arith.addf %699, %700 : vector<8x64xf32>
    %702 = math.tanh %701 : vector<8x64xf32>
    %703 = arith.mulf %696, %702 : vector<8x64xf32>
    %704 = arith.index_cast %658 : i32 to index
    %c0_191 = arith.constant 0 : index
    %705 = vector.load %arg7[%704, %c0_191] : memref<64x64xf32, #tpu.memory_space<vmem>>, vector<8x64xf32>
    tpu.vector_store %arg7[%704, %c0_191], %687 {strides = array<i32>} : memref<64x64xf32, #tpu.memory_space<vmem>>, vector<8x64xf32>,
    %706 = arith.index_cast %660 : i32 to index
    %c0_192 = arith.constant 0 : index
    %707 = vector.load %arg8[%706, %c0_192] : memref<64x64xf32, #tpu.memory_space<vmem>>, vector<8x64xf32>
    tpu.vector_store %arg8[%706, %c0_192], %703 {strides = array<i32>} : memref<64x64xf32, #tpu.memory_space<vmem>>, vector<8x64xf32>,
    %c5_i32_193 = arith.constant 5 : i32
    %c7_i32_194 = arith.constant 7 : i32
    %708 = arith.subi %c7_i32_194, %c5_i32_193 : i32
    %c8_i32_195 = arith.constant 8 : i32
    %709 = arith.muli %c5_i32_193, %c8_i32_195 : i32
    %710 = tpu.assume_multiple %709, 8 : i32
    %c8_i32_196 = arith.constant 8 : i32
    %711 = arith.muli %708, %c8_i32_196 : i32
    %712 = tpu.assume_multiple %711, 8 : i32
    %713 = tpu.concatenate %687, %703 in 1 : vector<8x64xf32>, vector<8x64xf32> -> vector<8x128xf32>
    %c0_197 = arith.constant 0 : index
    %c0_198 = arith.constant 0 : index
    %714 = vector.load %arg5[%c0_197, %c0_198] : memref<128x512xf32, #tpu.memory_space<vmem>>, vector<128x512xf32>
    %cst_199 = arith.constant dense<0.000000e+00> : vector<8x512xf32>
    %715 = tpu.matmul %713, %714, %cst_199 {dimension_numbers = #tpu.dot_dimension_numbers<[1], [0], [0], [1], [0, 0, 1, 1], [], []>} : vector<8x128xf32>, vector<128x512xf32>, vector<8x512xf32> -> vector<8x512xf32>
    %716 = vector.extract_strided_slice %715 {offsets = [0, 0], sizes = [8, 256], strides = [1, 1]} : vector<8x512xf32> to vector<8x256xf32>
    %717 = arith.index_cast %710 : i32 to index
    %c0_200 = arith.constant 0 : index
    %718 = vector.load %arg11[%717, %c0_200] : memref<64x512xf32, #tpu.memory_space<vmem>>, vector<8x256xf32>
    %719 = arith.addf %716, %718 : vector<8x256xf32>
    %720 = vector.extract_strided_slice %715 {offsets = [0, 256], sizes = [8, 256], strides = [1, 1]} : vector<8x512xf32> to vector<8x256xf32>
    %721 = arith.index_cast %712 : i32 to index
    %c256_201 = arith.constant 256 : index
    %722 = vector.load %arg11[%721, %c256_201] : memref<64x512xf32, #tpu.memory_space<vmem>>, vector<8x256xf32>
    %723 = arith.addf %720, %722 : vector<8x256xf32>
    %724 = vector.extract_strided_slice %719 {offsets = [0, 0], sizes = [8, 192], strides = [1, 1]} : vector<8x256xf32> to vector<8x192xf32>
    %725 = arith.negf %724 : vector<8x192xf32>
    %726 = math.exp %725 : vector<8x192xf32>
    %cst_202 = arith.constant 1.000000e+00 : f32
    %727 = vector.broadcast %cst_202 : f32 to vector<8x192xf32>
    %728 = arith.addf %727, %726 : vector<8x192xf32>
    %729 = arith.divf %727, %728 : vector<8x192xf32>
    %730 = vector.extract_strided_slice %729 {offsets = [0, 0], sizes = [8, 64], strides = [1, 1]} : vector<8x192xf32> to vector<8x64xf32>
    %731 = vector.extract_strided_slice %729 {offsets = [0, 64], sizes = [8, 64], strides = [1, 1]} : vector<8x192xf32> to vector<8x64xf32>
    %732 = vector.extract_strided_slice %729 {offsets = [0, 128], sizes = [8, 64], strides = [1, 1]} : vector<8x192xf32> to vector<8x64xf32>
    %733 = vector.extract_strided_slice %719 {offsets = [0, 192], sizes = [8, 64], strides = [1, 1]} : vector<8x256xf32> to vector<8x64xf32>
    %734 = math.tanh %733 : vector<8x64xf32>
    %735 = arith.mulf %731, %685 : vector<8x64xf32>
    %736 = arith.mulf %730, %734 : vector<8x64xf32>
    %737 = arith.addf %735, %736 : vector<8x64xf32>
    %738 = math.tanh %737 : vector<8x64xf32>
    %739 = arith.mulf %732, %738 : vector<8x64xf32>
    %740 = vector.extract_strided_slice %723 {offsets = [0, 0], sizes = [8, 192], strides = [1, 1]} : vector<8x256xf32> to vector<8x192xf32>
    %741 = arith.negf %740 : vector<8x192xf32>
    %742 = math.exp %741 : vector<8x192xf32>
    %cst_203 = arith.constant 1.000000e+00 : f32
    %743 = vector.broadcast %cst_203 : f32 to vector<8x192xf32>
    %744 = arith.addf %743, %742 : vector<8x192xf32>
    %745 = arith.divf %743, %744 : vector<8x192xf32>
    %746 = vector.extract_strided_slice %745 {offsets = [0, 0], sizes = [8, 64], strides = [1, 1]} : vector<8x192xf32> to vector<8x64xf32>
    %747 = vector.extract_strided_slice %745 {offsets = [0, 64], sizes = [8, 64], strides = [1, 1]} : vector<8x192xf32> to vector<8x64xf32>
    %748 = vector.extract_strided_slice %745 {offsets = [0, 128], sizes = [8, 64], strides = [1, 1]} : vector<8x192xf32> to vector<8x64xf32>
    %749 = vector.extract_strided_slice %723 {offsets = [0, 192], sizes = [8, 64], strides = [1, 1]} : vector<8x256xf32> to vector<8x64xf32>
    %750 = math.tanh %749 : vector<8x64xf32>
    %751 = arith.mulf %747, %701 : vector<8x64xf32>
    %752 = arith.mulf %746, %750 : vector<8x64xf32>
    %753 = arith.addf %751, %752 : vector<8x64xf32>
    %754 = math.tanh %753 : vector<8x64xf32>
    %755 = arith.mulf %748, %754 : vector<8x64xf32>
    %756 = arith.index_cast %710 : i32 to index
    %c0_204 = arith.constant 0 : index
    %757 = vector.load %arg7[%756, %c0_204] : memref<64x64xf32, #tpu.memory_space<vmem>>, vector<8x64xf32>
    tpu.vector_store %arg7[%756, %c0_204], %739 {strides = array<i32>} : memref<64x64xf32, #tpu.memory_space<vmem>>, vector<8x64xf32>,
    %758 = arith.index_cast %712 : i32 to index
    %c0_205 = arith.constant 0 : index
    %759 = vector.load %arg8[%758, %c0_205] : memref<64x64xf32, #tpu.memory_space<vmem>>, vector<8x64xf32>
    tpu.vector_store %arg8[%758, %c0_205], %755 {strides = array<i32>} : memref<64x64xf32, #tpu.memory_space<vmem>>, vector<8x64xf32>,
    %c6_i32_206 = arith.constant 6 : i32
    %c7_i32_207 = arith.constant 7 : i32
    %760 = arith.subi %c7_i32_207, %c6_i32_206 : i32
    %c8_i32_208 = arith.constant 8 : i32
    %761 = arith.muli %c6_i32_206, %c8_i32_208 : i32
    %762 = tpu.assume_multiple %761, 8 : i32
    %c8_i32_209 = arith.constant 8 : i32
    %763 = arith.muli %760, %c8_i32_209 : i32
    %764 = tpu.assume_multiple %763, 8 : i32
    %765 = tpu.concatenate %739, %755 in 1 : vector<8x64xf32>, vector<8x64xf32> -> vector<8x128xf32>
    %c0_210 = arith.constant 0 : index
    %c0_211 = arith.constant 0 : index
    %766 = vector.load %arg5[%c0_210, %c0_211] : memref<128x512xf32, #tpu.memory_space<vmem>>, vector<128x512xf32>
    %cst_212 = arith.constant dense<0.000000e+00> : vector<8x512xf32>
    %767 = tpu.matmul %765, %766, %cst_212 {dimension_numbers = #tpu.dot_dimension_numbers<[1], [0], [0], [1], [0, 0, 1, 1], [], []>} : vector<8x128xf32>, vector<128x512xf32>, vector<8x512xf32> -> vector<8x512xf32>
    %768 = vector.extract_strided_slice %767 {offsets = [0, 0], sizes = [8, 256], strides = [1, 1]} : vector<8x512xf32> to vector<8x256xf32>
    %769 = arith.index_cast %762 : i32 to index
    %c0_213 = arith.constant 0 : index
    %770 = vector.load %arg11[%769, %c0_213] : memref<64x512xf32, #tpu.memory_space<vmem>>, vector<8x256xf32>
    %771 = arith.addf %768, %770 : vector<8x256xf32>
    %772 = vector.extract_strided_slice %767 {offsets = [0, 256], sizes = [8, 256], strides = [1, 1]} : vector<8x512xf32> to vector<8x256xf32>
    %773 = arith.index_cast %764 : i32 to index
    %c256_214 = arith.constant 256 : index
    %774 = vector.load %arg11[%773, %c256_214] : memref<64x512xf32, #tpu.memory_space<vmem>>, vector<8x256xf32>
    %775 = arith.addf %772, %774 : vector<8x256xf32>
    %776 = vector.extract_strided_slice %771 {offsets = [0, 0], sizes = [8, 192], strides = [1, 1]} : vector<8x256xf32> to vector<8x192xf32>
    %777 = arith.negf %776 : vector<8x192xf32>
    %778 = math.exp %777 : vector<8x192xf32>
    %cst_215 = arith.constant 1.000000e+00 : f32
    %779 = vector.broadcast %cst_215 : f32 to vector<8x192xf32>
    %780 = arith.addf %779, %778 : vector<8x192xf32>
    %781 = arith.divf %779, %780 : vector<8x192xf32>
    %782 = vector.extract_strided_slice %781 {offsets = [0, 0], sizes = [8, 64], strides = [1, 1]} : vector<8x192xf32> to vector<8x64xf32>
    %783 = vector.extract_strided_slice %781 {offsets = [0, 64], sizes = [8, 64], strides = [1, 1]} : vector<8x192xf32> to vector<8x64xf32>
    %784 = vector.extract_strided_slice %781 {offsets = [0, 128], sizes = [8, 64], strides = [1, 1]} : vector<8x192xf32> to vector<8x64xf32>
    %785 = vector.extract_strided_slice %771 {offsets = [0, 192], sizes = [8, 64], strides = [1, 1]} : vector<8x256xf32> to vector<8x64xf32>
    %786 = math.tanh %785 : vector<8x64xf32>
    %787 = arith.mulf %783, %737 : vector<8x64xf32>
    %788 = arith.mulf %782, %786 : vector<8x64xf32>
    %789 = arith.addf %787, %788 : vector<8x64xf32>
    %790 = math.tanh %789 : vector<8x64xf32>
    %791 = arith.mulf %784, %790 : vector<8x64xf32>
    %792 = vector.extract_strided_slice %775 {offsets = [0, 0], sizes = [8, 192], strides = [1, 1]} : vector<8x256xf32> to vector<8x192xf32>
    %793 = arith.negf %792 : vector<8x192xf32>
    %794 = math.exp %793 : vector<8x192xf32>
    %cst_216 = arith.constant 1.000000e+00 : f32
    %795 = vector.broadcast %cst_216 : f32 to vector<8x192xf32>
    %796 = arith.addf %795, %794 : vector<8x192xf32>
    %797 = arith.divf %795, %796 : vector<8x192xf32>
    %798 = vector.extract_strided_slice %797 {offsets = [0, 0], sizes = [8, 64], strides = [1, 1]} : vector<8x192xf32> to vector<8x64xf32>
    %799 = vector.extract_strided_slice %797 {offsets = [0, 64], sizes = [8, 64], strides = [1, 1]} : vector<8x192xf32> to vector<8x64xf32>
    %800 = vector.extract_strided_slice %797 {offsets = [0, 128], sizes = [8, 64], strides = [1, 1]} : vector<8x192xf32> to vector<8x64xf32>
    %801 = vector.extract_strided_slice %775 {offsets = [0, 192], sizes = [8, 64], strides = [1, 1]} : vector<8x256xf32> to vector<8x64xf32>
    %802 = math.tanh %801 : vector<8x64xf32>
    %803 = arith.mulf %799, %753 : vector<8x64xf32>
    %804 = arith.mulf %798, %802 : vector<8x64xf32>
    %805 = arith.addf %803, %804 : vector<8x64xf32>
    %806 = math.tanh %805 : vector<8x64xf32>
    %807 = arith.mulf %800, %806 : vector<8x64xf32>
    %808 = arith.index_cast %762 : i32 to index
    %c0_217 = arith.constant 0 : index
    %809 = vector.load %arg7[%808, %c0_217] : memref<64x64xf32, #tpu.memory_space<vmem>>, vector<8x64xf32>
    tpu.vector_store %arg7[%808, %c0_217], %791 {strides = array<i32>} : memref<64x64xf32, #tpu.memory_space<vmem>>, vector<8x64xf32>,
    %810 = arith.index_cast %764 : i32 to index
    %c0_218 = arith.constant 0 : index
    %811 = vector.load %arg8[%810, %c0_218] : memref<64x64xf32, #tpu.memory_space<vmem>>, vector<8x64xf32>
    tpu.vector_store %arg8[%810, %c0_218], %807 {strides = array<i32>} : memref<64x64xf32, #tpu.memory_space<vmem>>, vector<8x64xf32>,
    %c7_i32_219 = arith.constant 7 : i32
    %c7_i32_220 = arith.constant 7 : i32
    %812 = arith.subi %c7_i32_220, %c7_i32_219 : i32
    %c8_i32_221 = arith.constant 8 : i32
    %813 = arith.muli %c7_i32_219, %c8_i32_221 : i32
    %814 = tpu.assume_multiple %813, 8 : i32
    %c8_i32_222 = arith.constant 8 : i32
    %815 = arith.muli %812, %c8_i32_222 : i32
    %816 = tpu.assume_multiple %815, 8 : i32
    %817 = tpu.concatenate %791, %807 in 1 : vector<8x64xf32>, vector<8x64xf32> -> vector<8x128xf32>
    %c0_223 = arith.constant 0 : index
    %c0_224 = arith.constant 0 : index
    %818 = vector.load %arg5[%c0_223, %c0_224] : memref<128x512xf32, #tpu.memory_space<vmem>>, vector<128x512xf32>
    %cst_225 = arith.constant dense<0.000000e+00> : vector<8x512xf32>
    %819 = tpu.matmul %817, %818, %cst_225 {dimension_numbers = #tpu.dot_dimension_numbers<[1], [0], [0], [1], [0, 0, 1, 1], [], []>} : vector<8x128xf32>, vector<128x512xf32>, vector<8x512xf32> -> vector<8x512xf32>
    %820 = vector.extract_strided_slice %819 {offsets = [0, 0], sizes = [8, 256], strides = [1, 1]} : vector<8x512xf32> to vector<8x256xf32>
    %821 = arith.index_cast %814 : i32 to index
    %c0_226 = arith.constant 0 : index
    %822 = vector.load %arg11[%821, %c0_226] : memref<64x512xf32, #tpu.memory_space<vmem>>, vector<8x256xf32>
    %823 = arith.addf %820, %822 : vector<8x256xf32>
    %824 = vector.extract_strided_slice %819 {offsets = [0, 256], sizes = [8, 256], strides = [1, 1]} : vector<8x512xf32> to vector<8x256xf32>
    %825 = arith.index_cast %816 : i32 to index
    %c256_227 = arith.constant 256 : index
    %826 = vector.load %arg11[%825, %c256_227] : memref<64x512xf32, #tpu.memory_space<vmem>>, vector<8x256xf32>
    %827 = arith.addf %824, %826 : vector<8x256xf32>
    %828 = vector.extract_strided_slice %823 {offsets = [0, 0], sizes = [8, 192], strides = [1, 1]} : vector<8x256xf32> to vector<8x192xf32>
    %829 = arith.negf %828 : vector<8x192xf32>
    %830 = math.exp %829 : vector<8x192xf32>
    %cst_228 = arith.constant 1.000000e+00 : f32
    %831 = vector.broadcast %cst_228 : f32 to vector<8x192xf32>
    %832 = arith.addf %831, %830 : vector<8x192xf32>
    %833 = arith.divf %831, %832 : vector<8x192xf32>
    %834 = vector.extract_strided_slice %833 {offsets = [0, 0], sizes = [8, 64], strides = [1, 1]} : vector<8x192xf32> to vector<8x64xf32>
    %835 = vector.extract_strided_slice %833 {offsets = [0, 64], sizes = [8, 64], strides = [1, 1]} : vector<8x192xf32> to vector<8x64xf32>
    %836 = vector.extract_strided_slice %833 {offsets = [0, 128], sizes = [8, 64], strides = [1, 1]} : vector<8x192xf32> to vector<8x64xf32>
    %837 = vector.extract_strided_slice %823 {offsets = [0, 192], sizes = [8, 64], strides = [1, 1]} : vector<8x256xf32> to vector<8x64xf32>
    %838 = math.tanh %837 : vector<8x64xf32>
    %839 = arith.mulf %835, %789 : vector<8x64xf32>
    %840 = arith.mulf %834, %838 : vector<8x64xf32>
    %841 = arith.addf %839, %840 : vector<8x64xf32>
    %842 = math.tanh %841 : vector<8x64xf32>
    %843 = arith.mulf %836, %842 : vector<8x64xf32>
    %844 = vector.extract_strided_slice %827 {offsets = [0, 0], sizes = [8, 192], strides = [1, 1]} : vector<8x256xf32> to vector<8x192xf32>
    %845 = arith.negf %844 : vector<8x192xf32>
    %846 = math.exp %845 : vector<8x192xf32>
    %cst_229 = arith.constant 1.000000e+00 : f32
    %847 = vector.broadcast %cst_229 : f32 to vector<8x192xf32>
    %848 = arith.addf %847, %846 : vector<8x192xf32>
    %849 = arith.divf %847, %848 : vector<8x192xf32>
    %850 = vector.extract_strided_slice %849 {offsets = [0, 0], sizes = [8, 64], strides = [1, 1]} : vector<8x192xf32> to vector<8x64xf32>
    %851 = vector.extract_strided_slice %849 {offsets = [0, 64], sizes = [8, 64], strides = [1, 1]} : vector<8x192xf32> to vector<8x64xf32>
    %852 = vector.extract_strided_slice %849 {offsets = [0, 128], sizes = [8, 64], strides = [1, 1]} : vector<8x192xf32> to vector<8x64xf32>
    %853 = vector.extract_strided_slice %827 {offsets = [0, 192], sizes = [8, 64], strides = [1, 1]} : vector<8x256xf32> to vector<8x64xf32>
    %854 = math.tanh %853 : vector<8x64xf32>
    %855 = arith.mulf %851, %805 : vector<8x64xf32>
    %856 = arith.mulf %850, %854 : vector<8x64xf32>
    %857 = arith.addf %855, %856 : vector<8x64xf32>
    %858 = math.tanh %857 : vector<8x64xf32>
    %859 = arith.mulf %852, %858 : vector<8x64xf32>
    %860 = arith.index_cast %814 : i32 to index
    %c0_230 = arith.constant 0 : index
    %861 = vector.load %arg7[%860, %c0_230] : memref<64x64xf32, #tpu.memory_space<vmem>>, vector<8x64xf32>
    tpu.vector_store %arg7[%860, %c0_230], %843 {strides = array<i32>} : memref<64x64xf32, #tpu.memory_space<vmem>>, vector<8x64xf32>,
    %862 = arith.index_cast %816 : i32 to index
    %c0_231 = arith.constant 0 : index
    %863 = vector.load %arg8[%862, %c0_231] : memref<64x64xf32, #tpu.memory_space<vmem>>, vector<8x64xf32>
    tpu.vector_store %arg8[%862, %c0_231], %859 {strides = array<i32>} : memref<64x64xf32, #tpu.memory_space<vmem>>, vector<8x64xf32>,
    %c8_i32_232 = arith.constant 8 : i32
    %c2 = arith.constant 2 : index
    %c0_233 = arith.constant 0 : index
    %c0_234 = arith.constant 0 : index
    %864 = vector.load %arg9[%c2, %c0_233, %c0_234] : memref<4x8x64xf32, #tpu.memory_space<vmem>>, vector<1x8x64xf32>
    %865 = vector.shape_cast %864 : vector<1x8x64xf32> to vector<8x64xf32>
    %866 = vector.shape_cast %843 : vector<8x64xf32> to vector<1x8x64xf32>
    tpu.vector_store %arg9[%c2, %c0_233, %c0_234], %866 {strides = array<i32>} : memref<4x8x64xf32, #tpu.memory_space<vmem>>, vector<1x8x64xf32>,
    %c3 = arith.constant 3 : index
    %c0_235 = arith.constant 0 : index
    %c0_236 = arith.constant 0 : index
    %867 = vector.load %arg9[%c3, %c0_235, %c0_236] : memref<4x8x64xf32, #tpu.memory_space<vmem>>, vector<1x8x64xf32>
    %868 = vector.shape_cast %867 : vector<1x8x64xf32> to vector<8x64xf32>
    %869 = vector.shape_cast %859 : vector<8x64xf32> to vector<1x8x64xf32>
    tpu.vector_store %arg9[%c3, %c0_235, %c0_236], %869 {strides = array<i32>} : memref<4x8x64xf32, #tpu.memory_space<vmem>>, vector<1x8x64xf32>,
    %c2_237 = arith.constant 2 : index
    %c0_238 = arith.constant 0 : index
    %c0_239 = arith.constant 0 : index
    %870 = vector.load %arg10[%c2_237, %c0_238, %c0_239] : memref<4x8x64xf32, #tpu.memory_space<vmem>>, vector<1x8x64xf32>
    %871 = vector.shape_cast %870 : vector<1x8x64xf32> to vector<8x64xf32>
    %872 = vector.shape_cast %841 : vector<8x64xf32> to vector<1x8x64xf32>
    tpu.vector_store %arg10[%c2_237, %c0_238, %c0_239], %872 {strides = array<i32>} : memref<4x8x64xf32, #tpu.memory_space<vmem>>, vector<1x8x64xf32>,
    %c3_240 = arith.constant 3 : index
    %c0_241 = arith.constant 0 : index
    %c0_242 = arith.constant 0 : index
    %873 = vector.load %arg10[%c3_240, %c0_241, %c0_242] : memref<4x8x64xf32, #tpu.memory_space<vmem>>, vector<1x8x64xf32>
    %874 = vector.shape_cast %873 : vector<1x8x64xf32> to vector<8x64xf32>
    %875 = vector.shape_cast %857 : vector<8x64xf32> to vector<1x8x64xf32>
    tpu.vector_store %arg10[%c3_240, %c0_241, %c0_242], %875 {strides = array<i32>} : memref<4x8x64xf32, #tpu.memory_space<vmem>>, vector<1x8x64xf32>,
    return
  }
}

</mosaic_0001>

<llo_original>
// kernel: tpu_custom_call.1
$region0: #{tpu_custom_call.1}
  #allocation0 [shape = 'u32[]', space=smem, size = 0x4, offset = 0x4, fixed_abs, tag = 'smem constant byte address 0x4 - core index']
  #allocation1 [shape = 'u32[144,128]{1,0:T(1,128)}', space=vmem, size = 0x12000, scoped, tag = 'internal scratch']
  #allocation2 [shape = 'f32[64,512]{1,0:T(8,128)}', space=vmem, size = 0x20000, scoped, tag = 'scratch operand']
  #allocation3 [shape = 'f32[64,64]{1,0:T(8,128)}', space=vmem, size = 0x8000, scoped, tag = 'scratch operand']
  #allocation4 [shape = 'f32[64,64]{1,0:T(8,128)}', space=vmem, size = 0x8000, scoped, tag = 'scratch operand']
  %s0 = inlined_call_operand.hbm [shape: f32[64,64], index: 0, kind: input, shape index: {}]
  %s1 = inlined_call_operand.hbm [shape: f32[64,512], index: 1, kind: input, shape index: {}]
  %s2 = inlined_call_operand.hbm [shape: f32[128,512], index: 2, kind: input, shape index: {}]
  %s3 = inlined_call_operand.vmem [shape: f32[1,512], index: 3, kind: input, shape index: {}]
  %s4 = inlined_call_operand.hbm [shape: f32[128,512], index: 4, kind: input, shape index: {}]
  %s5 = inlined_call_operand.hbm [shape: f32[128,512], index: 5, kind: input, shape index: {}]
  %s6 = inlined_call_operand.vmem [shape: f32[1,512], index: 6, kind: input, shape index: {}]
  %s7 = inlined_call_operand.hbm [shape: f32[64,64], index: 7, kind: output, shape index: {0}]
  %s8 = inlined_call_operand.hbm [shape: f32[64,64], index: 8, kind: output, shape index: {1}]
  %s9 = inlined_call_operand.hbm [shape: f32[4,8,64], index: 9, kind: output, shape index: {2}]
  %s10 = inlined_call_operand.hbm [shape: f32[4,8,64], index: 10, kind: output, shape index: {3}]
  %11 = xla_tuple %s7, %s8, %s9, %s10
  %s12 = sld [smem:[#allocation0]]
  $region82: #{tpu_custom_call.1} parent=0
    _
  %s14 = ssub.s32 1, %s12
  %s15 = scalar_select 0, %s14, %s12
  $region1: #{tpu_custom_call.1} parent=0
    #allocation5 [shape = 'u8[32768]{0}', space=vmem, size = 0x8000, scoped, tag = 'input window, operand 0, single buffered']
    #allocation6 [shape = 's32[1]{0}', space=sflag, size = 0x4, scoped, tag = 'scoped memory for tpu_custom_call.1']
    #allocation7 [shape = 's32[1]{0}', space=sflag, size = 0x4, scoped, tag = 'scoped memory for tpu_custom_call.1']
    #allocation8 [shape = 'u8[131072]{0}', space=vmem, size = 0x20000, scoped, tag = 'input window, operand 1, single buffered']
    #allocation9 [shape = 's32[1]{0}', space=sflag, size = 0x4, scoped, tag = 'scoped memory for tpu_custom_call.1']
    #allocation10 [shape = 'u8[262144]{0}', space=vmem, size = 0x40000, scoped, tag = 'input window, operand 2, single buffered']
    #allocation11 [shape = 'u8[262144]{0}', space=vmem, size = 0x40000, scoped, tag = 'input window, operand 4, single buffered']
    #allocation12 [shape = 's32[1]{0}', space=sflag, size = 0x4, scoped, tag = 'scoped memory for tpu_custom_call.1']
    #allocation13 [shape = 'u8[262144]{0}', space=vmem, size = 0x40000, scoped, tag = 'input window, operand 5, single buffered']
    #allocation14 [shape = 'u8[32768]{0}', space=vmem, size = 0x8000, scoped, tag = 'output window, operand 0, single buffered']
    #allocation15 [shape = 'u8[32768]{0}', space=vmem, size = 0x8000, scoped, tag = 'output window, operand 1, single buffered']
    #allocation16 [shape = 's32[1]{0}', space=sflag, size = 0x4, scoped, tag = 'scoped memory for tpu_custom_call.1']
    #allocation17 [shape = 'u8[16384]{0}', space=vmem, size = 0x4000, scoped, tag = 'output window, operand 2, single buffered']
    #allocation18 [shape = 'u8[16384]{0}', space=vmem, size = 0x4000, scoped, tag = 'output window, operand 3, single buffered']
    #allocation19 [shape = 's32[1]{0}', space=sflag, size = 0x4, scoped, tag = 'scoped memory for tpu_custom_call.1']
    %16 = vsyncpa [#allocation6], 0
    %17 = vsyncpa [#allocation9], 0
    %18 = vsyncpa [#allocation12], 0
    %19 = vsyncpa [#allocation7], 0
    %20 = vsyncpa [#allocation16], 0
    %21 = vsyncpa [#allocation19], 0
    // Predicated region
    $region2: #{tpu_custom_call.1} parent=1 // pred_check
      _
    $region3: #{tpu_custom_call.1} parent=1 // pred_check_branch
      %23 = sbr.rel (0) target = $region5
    $region4: #{tpu_custom_call.1} parent=1 // pred_region
      %s25 = ssub.s32 1024, 1024
      %26 = vsyncadd [#allocation6], %s25
      %s27 = sshll.u32 [#allocation5], 4
      %s28 = int_to_ptr.vmem [resolvable:$true] %s27
      %33 = dma.hbm_to_vmem [thread:$0]  %s0, 1024, %s28, [#allocation6], 128, 128, 8
    $region5: #{tpu_custom_call.1} parent=1 // pred_fallthru
      _
    // Predicated region
    $region6: #{tpu_custom_call.1} parent=1 // pred_check
      _
    $region7: #{tpu_custom_call.1} parent=1 // pred_check_branch
      %35 = sbr.rel (0) target = $region9
    $region8: #{tpu_custom_call.1} parent=1 // pred_region
      %s37 = ssub.s32 4096, 4096
      %38 = vsyncadd [#allocation9], %s37
      %s39 = sshll.u32 [#allocation8], 4
      %s40 = int_to_ptr.vmem [resolvable:$true] %s39
      %45 = dma.hbm_to_vmem [thread:$0]  %s1, 4096, %s40, [#allocation9], 512, 512, 32
    $region9: #{tpu_custom_call.1} parent=1 // pred_fallthru
      _
    // Predicated region
    $region10: #{tpu_custom_call.1} parent=1 // pred_check
      _
    $region11: #{tpu_custom_call.1} parent=1 // pred_check_branch
      %47 = sbr.rel (0) target = $region13
    $region12: #{tpu_custom_call.1} parent=1 // pred_region
      %s49 = ssub.s32 8192, 8192
      %50 = vsyncadd [#allocation9], %s49
      %s51 = sshll.u32 [#allocation10], 4
      %s52 = int_to_ptr.vmem [resolvable:$true] %s51
      %57 = dma.hbm_to_vmem [thread:$0]  %s2, 8192, %s52, [#allocation9], 512, 512, 32
    $region13: #{tpu_custom_call.1} parent=1 // pred_fallthru
      _
    // Predicated region
    $region14: #{tpu_custom_call.1} parent=1 // pred_check
      _
    $region15: #{tpu_custom_call.1} parent=1 // pred_check_branch
      %59 = sbr.rel (0) target = $region17
    $region16: #{tpu_custom_call.1} parent=1 // pred_region
      _
    $region17: #{tpu_custom_call.1} parent=1 // pred_fallthru
      _
    // Predicated region
    $region18: #{tpu_custom_call.1} parent=1 // pred_check
      _
    $region19: #{tpu_custom_call.1} parent=1 // pred_check_branch
      %61 = sbr.rel (0) target = $region21
    $region20: #{tpu_custom_call.1} parent=1 // pred_region
      %s63 = ssub.s32 8192, 8192
      %64 = vsyncadd [#allocation12], %s63
      %s65 = sshll.u32 [#allocation11], 4
      %s66 = int_to_ptr.vmem [resolvable:$true] %s65
      %71 = dma.hbm_to_vmem [thread:$0]  %s4, 8192, %s66, [#allocation12], 512, 512, 32
    $region21: #{tpu_custom_call.1} parent=1 // pred_fallthru
      _
    // Predicated region
    $region22: #{tpu_custom_call.1} parent=1 // pred_check
      _
    $region23: #{tpu_custom_call.1} parent=1 // pred_check_branch
      %73 = sbr.rel (0) target = $region25
    $region24: #{tpu_custom_call.1} parent=1 // pred_region
      %s75 = ssub.s32 8192, 8192
      %76 = vsyncadd [#allocation12], %s75
      %s77 = sshll.u32 [#allocation13], 4
      %s78 = int_to_ptr.vmem [resolvable:$true] %s77
      %83 = dma.hbm_to_vmem [thread:$0]  %s5, 8192, %s78, [#allocation12], 512, 512, 32
    $region25: #{tpu_custom_call.1} parent=1 // pred_fallthru
      _
    // Predicated region
    $region26: #{tpu_custom_call.1} parent=1 // pred_check
      _
    $region27: #{tpu_custom_call.1} parent=1 // pred_check_branch
      %85 = sbr.rel (0) target = $region29
    $region28: #{tpu_custom_call.1} parent=1 // pred_region
      _
    $region29: #{tpu_custom_call.1} parent=1 // pred_fallthru
      _
    // Predicated region
    $region30: #{tpu_custom_call.1} parent=1 // pred_check
      _
    $region31: #{tpu_custom_call.1} parent=1 // pred_check_branch
      %87 = sbr.rel (0) target = $region33
    $region32: #{tpu_custom_call.1} parent=1 // pred_region
      %88 = dma.done [#allocation6], 1024
    $region33: #{tpu_custom_call.1} parent=1 // pred_fallthru
      _
    // Predicated region
    $region34: #{tpu_custom_call.1} parent=1 // pred_check
      _
    $region35: #{tpu_custom_call.1} parent=1 // pred_check_branch
      %90 = sbr.rel (0) target = $region37
    $region36: #{tpu_custom_call.1} parent=1 // pred_region
      %91 = dma.done [#allocation9], 4096
    $region37: #{tpu_custom_call.1} parent=1 // pred_fallthru
      _
    // Predicated region
    $region38: #{tpu_custom_call.1} parent=1 // pred_check
      _
    $region39: #{tpu_custom_call.1} parent=1 // pred_check_branch
      %93 = sbr.rel (0) target = $region41
    $region40: #{tpu_custom_call.1} parent=1 // pred_region
      %94 = dma.done [#allocation9], 8192
    $region41: #{tpu_custom_call.1} parent=1 // pred_fallthru
      _
    // Predicated region
    $region42: #{tpu_custom_call.1} parent=1 // pred_check
      _
    $region43: #{tpu_custom_call.1} parent=1 // pred_check_branch
      %96 = sbr.rel (0) target = $region45
    $region44: #{tpu_custom_call.1} parent=1 // pred_region
      %97 = dma.done [#allocation12], 8192
    $region45: #{tpu_custom_call.1} parent=1 // pred_fallthru
      _
    // Predicated region
    $region46: #{tpu_custom_call.1} parent=1 // pred_check
      _
    $region47: #{tpu_custom_call.1} parent=1 // pred_check_branch
      %99 = sbr.rel (0) target = $region49
    $region48: #{tpu_custom_call.1} parent=1 // pred_region
      %100 = dma.done [#allocation12], 8192
    $region49: #{tpu_custom_call.1} parent=1 // pred_fallthru
      _
    %v101 = vld [vmem:[#allocation5] sm:$0xff]
    %v102 = vld [vmem:[#allocation5 + $0x8] sm:$0xff]
    %v103 = vld [vmem:[#allocation5 + $0x10] sm:$0xff]
    %v104 = vld [vmem:[#allocation5 + $0x18] sm:$0xff]
    %v105 = vld [vmem:[#allocation5 + $0x20] sm:$0xff]
    %v106 = vld [vmem:[#allocation5 + $0x28] sm:$0xff]
    %v107 = vld [vmem:[#allocation5 + $0x30] sm:$0xff]
    %v108 = vld [vmem:[#allocation5 + $0x38] sm:$0xff]
    %v109 = vld [vmem:[#allocation8] sm:$0xff]
    %v110 = vld [vmem:[#allocation8 + $0x8] sm:$0xff]
    %v111 = vld [vmem:[#allocation8 + $0x10] sm:$0xff]
    %v112 = vld [vmem:[#allocation8 + $0x18] sm:$0xff]
    %v113 = vld [vmem:[#allocation8 + $0x20] sm:$0xff]
    %v114 = vld [vmem:[#allocation8 + $0x28] sm:$0xff]
    %v115 = vld [vmem:[#allocation8 + $0x30] sm:$0xff]
    %v116 = vld [vmem:[#allocation8 + $0x38] sm:$0xff]
    %v117 = vld [vmem:[#allocation8 + $0x40] sm:$0xff]
    %v118 = vld [vmem:[#allocation8 + $0x48] sm:$0xff]
    %v119 = vld [vmem:[#allocation8 + $0x50] sm:$0xff]
    %v120 = vld [vmem:[#allocation8 + $0x58] sm:$0xff]
    %v121 = vld [vmem:[#allocation8 + $0x60] sm:$0xff]
    %v122 = vld [vmem:[#allocation8 + $0x68] sm:$0xff]
    %v123 = vld [vmem:[#allocation8 + $0x70] sm:$0xff]
    %v124 = vld [vmem:[#allocation8 + $0x78] sm:$0xff]
    %v125 = vld [vmem:[#allocation8 + $0x80] sm:$0xff]
    %v126 = vld [vmem:[#allocation8 + $0x88] sm:$0xff]
    %v127 = vld [vmem:[#allocation8 + $0x90] sm:$0xff]
    %v128 = vld [vmem:[#allocation8 + $0x98] sm:$0xff]
    %v129 = vld [vmem:[#allocation8 + $0xa0] sm:$0xff]
    %v130 = vld [vmem:[#allocation8 + $0xa8] sm:$0xff]
    %v131 = vld [vmem:[#allocation8 + $0xb0] sm:$0xff]
    %v132 = vld [vmem:[#allocation8 + $0xb8] sm:$0xff]
    %v133 = vld [vmem:[#allocation8 + $0xc0] sm:$0xff]
    %v134 = vld [vmem:[#allocation8 + $0xc8] sm:$0xff]
    %v135 = vld [vmem:[#allocation8 + $0xd0] sm:$0xff]
    %v136 = vld [vmem:[#allocation8 + $0xd8] sm:$0xff]
    %v137 = vld [vmem:[#allocation8 + $0xe0] sm:$0xff]
    %v138 = vld [vmem:[#allocation8 + $0xe8] sm:$0xff]
    %v139 = vld [vmem:[#allocation8 + $0xf0] sm:$0xff]
    %v140 = vld [vmem:[#allocation8 + $0xf8] sm:$0xff]
    %v141 = vld [vmem:[%s3] sm:$0xf]
    %v143 = vlaneseq
    %v144 = vshrl.u32 %v143, 7
    %v145 = vsub.s32 0, %v144
    %v146 = vrot.slane %v141, %v145
    %v147 = vlaneseq
    %v148 = vshrl.u32 %v147, 7
    %v149 = vsub.s32 1, %v148
    %v150 = vrot.slane %v141, %v149
    %v151 = vlaneseq
    %v152 = vshrl.u32 %v151, 7
    %v153 = vsub.s32 2, %v152
    %v154 = vrot.slane %v141, %v153
    %v155 = vlaneseq
    %v156 = vshrl.u32 %v155, 7
    %v157 = vsub.s32 3, %v156
    %v158 = vrot.slane %v141, %v157
    %vm163 = vcmask 523264
    %v165 = vsel %vm163, %v101, 0
    %v168 = vsel %vm163, %v102, 0
    %v171 = vsel %vm163, %v103, 0
    %v174 = vsel %vm163, %v104, 0
    %v177 = vsel %vm163, %v105, 0
    %v180 = vsel %vm163, %v106, 0
    %v183 = vsel %vm163, %v107, 0
    %v186 = vsel %vm163, %v108, 0
    %188 = vmatprep.subr.mxu0 %v110
    %189 = vmatpush1.msra.mxu0 %v109
    %190 = vmatprep.subr.mxu0 %v114
    %191 = vmatpush1.msra.mxu0 %v113
    %192 = vmatprep.subr.mxu0 %v118
    %193 = vmatpush1.msra.mxu0 %v117
    %194 = vmatprep.subr.mxu0 %v122
    %195 = vmatpush1.msra.mxu0 %v121
    %196 = vmatprep.subr.mxu0 %v126
    %197 = vmatpush1.msra.mxu0 %v125
    %198 = vmatprep.subr.mxu0 %v130
    %199 = vmatpush1.msra.mxu0 %v129
    %200 = vmatprep.subr.mxu0 %v134
    %201 = vmatpush1.msra.mxu0 %v133
    %202 = vmatprep.subr.mxu0 %v138
    %203 = vmatpush1.msra.mxu0 %v137
    %204 = vmatprep.subr.mxu0 0.0
    %205 = vmatpush1.msra.mxu0 0.0
    %206 = vmatprep.subr.mxu0 0.0
    %207 = vmatpush1.msra.mxu0 0.0
    %208 = vmatprep.subr.mxu0 0.0
    %209 = vmatpush1.msra.mxu0 0.0
    %210 = vmatprep.subr.mxu0 0.0
    %211 = vmatpush1.msra.mxu0 0.0
    %212 = vmatprep.subr.mxu0 0.0
    %213 = vmatpush1.msra.mxu0 0.0
    %214 = vmatprep.subr.mxu0 0.0
    %215 = vmatpush1.msra.mxu0 0.0
    %216 = vmatprep.subr.mxu0 0.0
    %217 = vmatpush1.msra.mxu0 0.0
    %218 = vmatprep.subr.mxu0 0.0
    %219 = vmatpush1.msra.mxu0 0.0
    %220 = vmatprep.subr.mxu0 0.0
    %221 = vmatpush1.msra.mxu0 0.0
    %222 = vmatprep.subr.mxu0 0.0
    %223 = vmatpush1.msra.mxu0 0.0
    %224 = vmatprep.subr.mxu0 0.0
    %225 = vmatpush1.msra.mxu0 0.0
    %226 = vmatprep.subr.mxu0 0.0
    %227 = vmatpush1.msra.mxu0 0.0
    %228 = vmatprep.subr.mxu0 0.0
    %229 = vmatpush1.msra.mxu0 0.0
    %230 = vmatprep.subr.mxu0 0.0
    %231 = vmatpush1.msra.mxu0 0.0
    %232 = vmatprep.subr.mxu0 0.0
    %233 = vmatpush1.msra.mxu0 0.0
    %234 = vmatprep.subr.mxu0 0.0
    %235 = vmatpush1.msra.mxu0 0.0
    %236 = vmatprep.subr.mxu0 0.0
    %237 = vmatpush1.msra.mxu0 0.0
    %238 = vmatprep.subr.mxu0 0.0
    %239 = vmatpush1.msra.mxu0 0.0
    %240 = vmatprep.subr.mxu0 0.0
    %241 = vmatpush1.msra.mxu0 0.0
    %242 = vmatprep.subr.mxu0 0.0
    %243 = vmatpush1.msra.mxu0 0.0
    %244 = vmatprep.subr.mxu0 0.0
    %245 = vmatpush1.msra.mxu0 0.0
    %246 = vmatprep.subr.mxu0 0.0
    %247 = vmatpush1.msra.mxu0 0.0
    %248 = vmatprep.subr.mxu0 0.0
    %249 = vmatpush1.msra.mxu0 0.0
    %250 = vmatprep.subr.mxu0 0.0
    %251 = vmatpush1.msra.mxu0 0.0
    %252 = vmatprep.mubr.f32.mxu0 0.0
    %253 = vmatmul.mubr.f32.gmra.mrb[0].mxu0 %v165
    %v254 = vpop.f32.mrb[0].mxu0
    %v255 = vadd.f32 %v146, %v254
    %v256 = vpop.f32.mrb[0].mxu0
    %v257 = vadd.f32 %v150, %v256
    %258 = vmatprep.mubr.f32.mxu0 0.0
    %259 = vmatmul.mubr.f32.gmra.mrb[0].mxu0 %v168
    %v260 = vpop.f32.mrb[0].mxu0
    %v261 = vadd.f32 %v146, %v260
    %v262 = vpop.f32.mrb[0].mxu0
    %v263 = vadd.f32 %v150, %v262
    %264 = vmatprep.mubr.f32.mxu0 0.0
    %265 = vmatmul.mubr.f32.gmra.mrb[0].mxu0 %v171
    %v266 = vpop.f32.mrb[0].mxu0
    %v267 = vadd.f32 %v146, %v266
    %v268 = vpop.f32.mrb[0].mxu0
    %v269 = vadd.f32 %v150, %v268
    %270 = vmatprep.mubr.f32.mxu0 0.0
    %271 = vmatmul.mubr.f32.gmra.mrb[0].mxu0 %v174
    %v272 = vpop.f32.mrb[0].mxu0
    %v273 = vadd.f32 %v146, %v272
    %v274 = vpop.f32.mrb[0].mxu0
    %v275 = vadd.f32 %v150, %v274
    %276 = vmatprep.mubr.f32.mxu0 0.0
    %277 = vmatmul.mubr.f32.gmra.mrb[0].mxu0 %v177
    %v278 = vpop.f32.mrb[0].mxu0
    %v279 = vadd.f32 %v146, %v278
    %v280 = vpop.f32.mrb[0].mxu0
    %v281 = vadd.f32 %v150, %v280
    %282 = vmatprep.mubr.f32.mxu0 0.0
    %283 = vmatmul.mubr.f32.gmra.mrb[0].mxu0 %v180
    %v284 = vpop.f32.mrb[0].mxu0
    %v285 = vadd.f32 %v146, %v284
    %v286 = vpop.f32.mrb[0].mxu0
    %v287 = vadd.f32 %v150, %v286
    %288 = vmatprep.mubr.f32.mxu0 0.0
    %289 = vmatmul.mubr.f32.gmra.mrb[0].mxu0 %v183
    %v290 = vpop.f32.mrb[0].mxu0
    %v291 = vadd.f32 %v146, %v290
    %v292 = vpop.f32.mrb[0].mxu0
    %v293 = vadd.f32 %v150, %v292
    %294 = vmatprep.mubr.f32.mxu0 0.0
    %295 = vmatmul.mubr.f32.gmra.mrb[0].mxu0 %v186
    %v296 = vpop.f32.mrb[0].mxu0
    %v297 = vadd.f32 %v146, %v296
    %v298 = vpop.f32.mrb[0].mxu0
    %v299 = vadd.f32 %v150, %v298
    %300 = vdwg.mxu0
    %301 = vmatprep.subr.mxu0 %v112
    %302 = vmatpush1.msra.mxu0 %v111
    %303 = vmatprep.subr.mxu0 %v116
    %304 = vmatpush1.msra.mxu0 %v115
    %305 = vmatprep.subr.mxu0 %v120
    %306 = vmatpush1.msra.mxu0 %v119
    %307 = vmatprep.subr.mxu0 %v124
    %308 = vmatpush1.msra.mxu0 %v123
    %309 = vmatprep.subr.mxu0 %v128
    %310 = vmatpush1.msra.mxu0 %v127
    %311 = vmatprep.subr.mxu0 %v132
    %312 = vmatpush1.msra.mxu0 %v131
    %313 = vmatprep.subr.mxu0 %v136
    %314 = vmatpush1.msra.mxu0 %v135
    %315 = vmatprep.subr.mxu0 %v140
    %316 = vmatpush1.msra.mxu0 %v139
    %317 = vmatprep.subr.mxu0 0.0
    %318 = vmatpush1.msra.mxu0 0.0
    %319 = vmatprep.subr.mxu0 0.0
    %320 = vmatpush1.msra.mxu0 0.0
    %321 = vmatprep.subr.mxu0 0.0
    %322 = vmatpush1.msra.mxu0 0.0
    %323 = vmatprep.subr.mxu0 0.0
    %324 = vmatpush1.msra.mxu0 0.0
    %325 = vmatprep.subr.mxu0 0.0
    %326 = vmatpush1.msra.mxu0 0.0
    %327 = vmatprep.subr.mxu0 0.0
    %328 = vmatpush1.msra.mxu0 0.0
    %329 = vmatprep.subr.mxu0 0.0
    %330 = vmatpush1.msra.mxu0 0.0
    %331 = vmatprep.subr.mxu0 0.0
    %332 = vmatpush1.msra.mxu0 0.0
    %333 = vmatprep.subr.mxu0 0.0
    %334 = vmatpush1.msra.mxu0 0.0
    %335 = vmatprep.subr.mxu0 0.0
    %336 = vmatpush1.msra.mxu0 0.0
    %337 = vmatprep.subr.mxu0 0.0
    %338 = vmatpush1.msra.mxu0 0.0
    %339 = vmatprep.subr.mxu0 0.0
    %340 = vmatpush1.msra.mxu0 0.0
    %341 = vmatprep.subr.mxu0 0.0
    %342 = vmatpush1.msra.mxu0 0.0
    %343 = vmatprep.subr.mxu0 0.0
    %344 = vmatpush1.msra.mxu0 0.0
    %345 = vmatprep.subr.mxu0 0.0
    %346 = vmatpush1.msra.mxu0 0.0
    %347 = vmatprep.subr.mxu0 0.0
    %348 = vmatpush1.msra.mxu0 0.0
    %349 = vmatprep.subr.mxu0 0.0
    %350 = vmatpush1.msra.mxu0 0.0
    %351 = vmatprep.subr.mxu0 0.0
    %352 = vmatpush1.msra.mxu0 0.0
    %353 = vmatprep.subr.mxu0 0.0
    %354 = vmatpush1.msra.mxu0 0.0
    %355 = vmatprep.subr.mxu0 0.0
    %356 = vmatpush1.msra.mxu0 0.0
    %357 = vmatprep.subr.mxu0 0.0
    %358 = vmatpush1.msra.mxu0 0.0
    %359 = vmatprep.subr.mxu0 0.0
    %360 = vmatpush1.msra.mxu0 0.0
    %361 = vmatprep.subr.mxu0 0.0
    %362 = vmatpush1.msra.mxu0 0.0
    %363 = vmatprep.subr.mxu0 0.0
    %364 = vmatpush1.msra.mxu0 0.0
    %365 = vmatprep.mubr.f32.mxu0 0.0
    %366 = vmatmul.mubr.f32.gmra.mrb[0].mxu0 %v165
    %v367 = vpop.f32.mrb[0].mxu0
    %v368 = vadd.f32 %v154, %v367
    %v369 = vpop.f32.mrb[0].mxu0
    %v370 = vadd.f32 %v158, %v369
    %371 = vmatprep.mubr.f32.mxu0 0.0
    %372 = vmatmul.mubr.f32.gmra.mrb[0].mxu0 %v168
    %v373 = vpop.f32.mrb[0].mxu0
    %v374 = vadd.f32 %v154, %v373
    %v375 = vpop.f32.mrb[0].mxu0
    %v376 = vadd.f32 %v158, %v375
    %377 = vmatprep.mubr.f32.mxu0 0.0
    %378 = vmatmul.mubr.f32.gmra.mrb[0].mxu0 %v171
    %v379 = vpop.f32.mrb[0].mxu0
    %v380 = vadd.f32 %v154, %v379
    %v381 = vpop.f32.mrb[0].mxu0
    %v382 = vadd.f32 %v158, %v381
    %383 = vmatprep.mubr.f32.mxu0 0.0
    %384 = vmatmul.mubr.f32.gmra.mrb[0].mxu0 %v174
    %v385 = vpop.f32.mrb[0].mxu0
    %v386 = vadd.f32 %v154, %v385
    %v387 = vpop.f32.mrb[0].mxu0
    %v388 = vadd.f32 %v158, %v387
    %389 = vmatprep.mubr.f32.mxu0 0.0
    %390 = vmatmul.mubr.f32.gmra.mrb[0].mxu0 %v177
    %v391 = vpop.f32.mrb[0].mxu0
    %v392 = vadd.f32 %v154, %v391
    %v393 = vpop.f32.mrb[0].mxu0
    %v394 = vadd.f32 %v158, %v393
    %395 = vmatprep.mubr.f32.mxu0 0.0
    %396 = vmatmul.mubr.f32.gmra.mrb[0].mxu0 %v180
    %v397 = vpop.f32.mrb[0].mxu0
    %v398 = vadd.f32 %v154, %v397
    %v399 = vpop.f32.mrb[0].mxu0
    %v400 = vadd.f32 %v158, %v399
    %401 = vmatprep.mubr.f32.mxu0 0.0
    %402 = vmatmul.mubr.f32.gmra.mrb[0].mxu0 %v183
    %v403 = vpop.f32.mrb[0].mxu0
    %v404 = vadd.f32 %v154, %v403
    %v405 = vpop.f32.mrb[0].mxu0
    %v406 = vadd.f32 %v158, %v405
    %407 = vmatprep.mubr.f32.mxu0 0.0
    %408 = vmatmul.mubr.f32.gmra.mrb[0].mxu0 %v186
    %v409 = vpop.f32.mrb[0].mxu0
    %v410 = vadd.f32 %v154, %v409
    %v411 = vpop.f32.mrb[0].mxu0
    %v412 = vadd.f32 %v158, %v411
    %413 = vdwg.mxu0
    %414 = vst [vmem:[#allocation2] sm:$0xff] %v255
    %415 = vst [vmem:[#allocation2 + $0x8] sm:$0xff] %v257
    %416 = vst [vmem:[#allocation2 + $0x10] sm:$0xff] %v368
    %417 = vst [vmem:[#allocation2 + $0x18] sm:$0xff] %v370
    %418 = vst [vmem:[#allocation2 + $0x20] sm:$0xff] %v261
    %419 = vst [vmem:[#allocation2 + $0x28] sm:$0xff] %v263
    %420 = vst [vmem:[#allocation2 + $0x30] sm:$0xff] %v374
    %421 = vst [vmem:[#allocation2 + $0x38] sm:$0xff] %v376
    %422 = vst [vmem:[#allocation2 + $0x40] sm:$0xff] %v267
    %423 = vst [vmem:[#allocation2 + $0x48] sm:$0xff] %v269
    %424 = vst [vmem:[#allocation2 + $0x50] sm:$0xff] %v380
    %425 = vst [vmem:[#allocation2 + $0x58] sm:$0xff] %v382
    %426 = vst [vmem:[#allocation2 + $0x60] sm:$0xff] %v273
    %427 = vst [vmem:[#allocation2 + $0x68] sm:$0xff] %v275
    %428 = vst [vmem:[#allocation2 + $0x70] sm:$0xff] %v386
    %429 = vst [vmem:[#allocation2 + $0x78] sm:$0xff] %v388
    %430 = vst [vmem:[#allocation2 + $0x80] sm:$0xff] %v279
    %431 = vst [vmem:[#allocation2 + $0x88] sm:$0xff] %v281
    %432 = vst [vmem:[#allocation2 + $0x90] sm:$0xff] %v392
    %433 = vst [vmem:[#allocation2 + $0x98] sm:$0xff] %v394
    %434 = vst [vmem:[#allocation2 + $0xa0] sm:$0xff] %v285
    %435 = vst [vmem:[#allocation2 + $0xa8] sm:$0xff] %v287
    %436 = vst [vmem:[#allocation2 + $0xb0] sm:$0xff] %v398
    %437 = vst [vmem:[#allocation2 + $0xb8] sm:$0xff] %v400
    %438 = vst [vmem:[#allocation2 + $0xc0] sm:$0xff] %v291
    %439 = vst [vmem:[#allocation2 + $0xc8] sm:$0xff] %v293
    %440 = vst [vmem:[#allocation2 + $0xd0] sm:$0xff] %v404
    %441 = vst [vmem:[#allocation2 + $0xd8] sm:$0xff] %v406
    %442 = vst [vmem:[#allocation2 + $0xe0] sm:$0xff] %v297
    %443 = vst [vmem:[#allocation2 + $0xe8] sm:$0xff] %v299
    %444 = vst [vmem:[#allocation2 + $0xf0] sm:$0xff] %v410
    %445 = vst [vmem:[#allocation2 + $0xf8] sm:$0xff] %v412
    %v446 = vld [vmem:[#allocation10] sm:$0xff]
    %v447 = vld [vmem:[#allocation10 + $0x8] sm:$0xff]
    %v448 = vld [vmem:[#allocation10 + $0x10] sm:$0xff]
    %v449 = vld [vmem:[#allocation10 + $0x18] sm:$0xff]
    %v450 = vld [vmem:[#allocation10 + $0x20] sm:$0xff]
    %v451 = vld [vmem:[#allocation10 + $0x28] sm:$0xff]
    %v452 = vld [vmem:[#allocation10 + $0x30] sm:$0xff]
    %v453 = vld [vmem:[#allocation10 + $0x38] sm:$0xff]
    %v454 = vld [vmem:[#allocation10 + $0x40] sm:$0xff]
    %v455 = vld [vmem:[#allocation10 + $0x48] sm:$0xff]
    %v456 = vld [vmem:[#allocation10 + $0x50] sm:$0xff]
    %v457 = vld [vmem:[#allocation10 + $0x58] sm:$0xff]
    %v458 = vld [vmem:[#allocation10 + $0x60] sm:$0xff]
    %v459 = vld [vmem:[#allocation10 + $0x68] sm:$0xff]
    %v460 = vld [vmem:[#allocation10 + $0x70] sm:$0xff]
    %v461 = vld [vmem:[#allocation10 + $0x78] sm:$0xff]
    %v462 = vld [vmem:[#allocation10 + $0x80] sm:$0xff]
    %v463 = vld [vmem:[#allocation10 + $0x88] sm:$0xff]
    %v464 = vld [vmem:[#allocation10 + $0x90] sm:$0xff]
    %v465 = vld [vmem:[#allocation10 + $0x98] sm:$0xff]
    %v466 = vld [vmem:[#allocation10 + $0xa0] sm:$0xff]
    %v467 = vld [vmem:[#allocation10 + $0xa8] sm:$0xff]
    %v468 = vld [vmem:[#allocation10 + $0xb0] sm:$0xff]
    %v469 = vld [vmem:[#allocation10 + $0xb8] sm:$0xff]
    %v470 = vld [vmem:[#allocation10 + $0xc0] sm:$0xff]
    %v471 = vld [vmem:[#allocation10 + $0xc8] sm:$0xff]
    %v472 = vld [vmem:[#allocation10 + $0xd0] sm:$0xff]
    %v473 = vld [vmem:[#allocation10 + $0xd8] sm:$0xff]
    %v474 = vld [vmem:[#allocation10 + $0xe0] sm:$0xff]
    %v475 = vld [vmem:[#allocation10 + $0xe8] sm:$0xff]
    %v476 = vld [vmem:[#allocation10 + $0xf0] sm:$0xff]
    %v477 = vld [vmem:[#allocation10 + $0xf8] sm:$0xff]
    %v478 = vld [vmem:[#allocation10 + $0x100] sm:$0xff]
    %v479 = vld [vmem:[#allocation10 + $0x108] sm:$0xff]
    %v480 = vld [vmem:[#allocation10 + $0x110] sm:$0xff]
    %v481 = vld [vmem:[#allocation10 + $0x118] sm:$0xff]
    %v482 = vld [vmem:[#allocation10 + $0x120] sm:$0xff]
    %v483 = vld [vmem:[#allocation10 + $0x128] sm:$0xff]
    %v484 = vld [vmem:[#allocation10 + $0x130] sm:$0xff]
    %v485 = vld [vmem:[#allocation10 + $0x138] sm:$0xff]
    %v486 = vld [vmem:[#allocation10 + $0x140] sm:$0xff]
    %v487 = vld [vmem:[#allocation10 + $0x148] sm:$0xff]
    %v488 = vld [vmem:[#allocation10 + $0x150] sm:$0xff]
    %v489 = vld [vmem:[#allocation10 + $0x158] sm:$0xff]
    %v490 = vld [vmem:[#allocation10 + $0x160] sm:$0xff]
    %v491 = vld [vmem:[#allocation10 + $0x168] sm:$0xff]
    %v492 = vld [vmem:[#allocation10 + $0x170] sm:$0xff]
    %v493 = vld [vmem:[#allocation10 + $0x178] sm:$0xff]
    %v494 = vld [vmem:[#allocation10 + $0x180] sm:$0xff]
    %v495 = vld [vmem:[#allocation10 + $0x188] sm:$0xff]
    %v496 = vld [vmem:[#allocation10 + $0x190] sm:$0xff]
    %v497 = vld [vmem:[#allocation10 + $0x198] sm:$0xff]
    %v498 = vld [vmem:[#allocation10 + $0x1a0] sm:$0xff]
    %v499 = vld [vmem:[#allocation10 + $0x1a8] sm:$0xff]
    %v500 = vld [vmem:[#allocation10 + $0x1b0] sm:$0xff]
    %v501 = vld [vmem:[#allocation10 + $0x1b8] sm:$0xff]
    %v502 = vld [vmem:[#allocation10 + $0x1c0] sm:$0xff]
    %v503 = vld [vmem:[#allocation10 + $0x1c8] sm:$0xff]
    %v504 = vld [vmem:[#allocation10 + $0x1d0] sm:$0xff]
    %v505 = vld [vmem:[#allocation10 + $0x1d8] sm:$0xff]
    %v506 = vld [vmem:[#allocation10 + $0x1e0] sm:$0xff]
    %v507 = vld [vmem:[#allocation10 + $0x1e8] sm:$0xff]
    %v508 = vld [vmem:[#allocation10 + $0x1f0] sm:$0xff]
    %v509 = vld [vmem:[#allocation10 + $0x1f8] sm:$0xff]
    %510 = vmatprep.subr.mxu0 %v447
    %511 = vmatpush1.msra.mxu0 %v446
    %512 = vmatprep.subr.mxu0 %v451
    %513 = vmatpush1.msra.mxu0 %v450
    %514 = vmatprep.subr.mxu0 %v455
    %515 = vmatpush1.msra.mxu0 %v454
    %516 = vmatprep.subr.mxu0 %v459
    %517 = vmatpush1.msra.mxu0 %v458
    %518 = vmatprep.subr.mxu0 %v463
    %519 = vmatpush1.msra.mxu0 %v462
    %520 = vmatprep.subr.mxu0 %v467
    %521 = vmatpush1.msra.mxu0 %v466
    %522 = vmatprep.subr.mxu0 %v471
    %523 = vmatpush1.msra.mxu0 %v470
    %524 = vmatprep.subr.mxu0 %v475
    %525 = vmatpush1.msra.mxu0 %v474
    %526 = vmatprep.subr.mxu0 %v479
    %527 = vmatpush1.msra.mxu0 %v478
    %528 = vmatprep.subr.mxu0 %v483
    %529 = vmatpush1.msra.mxu0 %v482
    %530 = vmatprep.subr.mxu0 %v487
    %531 = vmatpush1.msra.mxu0 %v486
    %532 = vmatprep.subr.mxu0 %v491
    %533 = vmatpush1.msra.mxu0 %v490
    %534 = vmatprep.subr.mxu0 %v495
    %535 = vmatpush1.msra.mxu0 %v494
    %536 = vmatprep.subr.mxu0 %v499
    %537 = vmatpush1.msra.mxu0 %v498
    %538 = vmatprep.subr.mxu0 %v503
    %539 = vmatpush1.msra.mxu0 %v502
    %540 = vmatprep.subr.mxu0 %v507
    %541 = vmatpush1.msra.mxu0 %v506
    %542 = vmatprep.subr.mxu0 0.0
    %543 = vmatpush1.msra.mxu0 0.0
    %544 = vmatprep.subr.mxu0 0.0
    %545 = vmatpush1.msra.mxu0 0.0
    %546 = vmatprep.subr.mxu0 0.0
    %547 = vmatpush1.msra.mxu0 0.0
    %548 = vmatprep.subr.mxu0 0.0
    %549 = vmatpush1.msra.mxu0 0.0
    %550 = vmatprep.subr.mxu0 0.0
    %551 = vmatpush1.msra.mxu0 0.0
    %552 = vmatprep.subr.mxu0 0.0
    %553 = vmatpush1.msra.mxu0 0.0
    %554 = vmatprep.subr.mxu0 0.0
    %555 = vmatpush1.msra.mxu0 0.0
    %556 = vmatprep.subr.mxu0 0.0
    %557 = vmatpush1.msra.mxu0 0.0
    %558 = vmatprep.subr.mxu0 0.0
    %559 = vmatpush1.msra.mxu0 0.0
    %560 = vmatprep.subr.mxu0 0.0
    %561 = vmatpush1.msra.mxu0 0.0
    %562 = vmatprep.subr.mxu0 0.0
    %563 = vmatpush1.msra.mxu0 0.0
    %564 = vmatprep.subr.mxu0 0.0
    %565 = vmatpush1.msra.mxu0 0.0
    %566 = vmatprep.subr.mxu0 0.0
    %567 = vmatpush1.msra.mxu0 0.0
    %568 = vmatprep.subr.mxu0 0.0
    %569 = vmatpush1.msra.mxu0 0.0
    %570 = vmatprep.subr.mxu0 0.0
    %571 = vmatpush1.msra.mxu0 0.0
    %572 = vmatprep.subr.mxu0 0.0
    %573 = vmatpush1.msra.mxu0 0.0
    %574 = vmatprep.mubr.f32.mxu0 0.0
    %575 = vmatmul.mubr.f32.gmra.mrb[0].mxu0 0.0
    %v576 = vpop.f32.mrb[0].mxu0
    %v577 = vadd.f32 0.0, %v576
    %v578 = vpop.f32.mrb[0].mxu0
    %v579 = vadd.f32 0.0, %v578
    %580 = vdwg.mxu0
    %581 = vmatprep.subr.mxu0 %v449
    %582 = vmatpush1.msra.mxu0 %v448
    %583 = vmatprep.subr.mxu0 %v453
    %584 = vmatpush1.msra.mxu0 %v452
    %585 = vmatprep.subr.mxu0 %v457
    %586 = vmatpush1.msra.mxu0 %v456
    %587 = vmatprep.subr.mxu0 %v461
    %588 = vmatpush1.msra.mxu0 %v460
    %589 = vmatprep.subr.mxu0 %v465
    %590 = vmatpush1.msra.mxu0 %v464
    %591 = vmatprep.subr.mxu0 %v469
    %592 = vmatpush1.msra.mxu0 %v468
    %593 = vmatprep.subr.mxu0 %v473
    %594 = vmatpush1.msra.mxu0 %v472
    %595 = vmatprep.subr.mxu0 %v477
    %596 = vmatpush1.msra.mxu0 %v476
    %597 = vmatprep.subr.mxu0 %v481
    %598 = vmatpush1.msra.mxu0 %v480
    %599 = vmatprep.subr.mxu0 %v485
    %600 = vmatpush1.msra.mxu0 %v484
    %601 = vmatprep.subr.mxu0 %v489
    %602 = vmatpush1.msra.mxu0 %v488
    %603 = vmatprep.subr.mxu0 %v493
    %604 = vmatpush1.msra.mxu0 %v492
    %605 = vmatprep.subr.mxu0 %v497
    %606 = vmatpush1.msra.mxu0 %v496
    %607 = vmatprep.subr.mxu0 %v501
    %608 = vmatpush1.msra.mxu0 %v500
    %609 = vmatprep.subr.mxu0 %v505
    %610 = vmatpush1.msra.mxu0 %v504
    %611 = vmatprep.subr.mxu0 %v509
    %612 = vmatpush1.msra.mxu0 %v508
    %613 = vmatprep.subr.mxu0 0.0
    %614 = vmatpush1.msra.mxu0 0.0
    %615 = vmatprep.subr.mxu0 0.0
    %616 = vmatpush1.msra.mxu0 0.0
    %617 = vmatprep.subr.mxu0 0.0
    %618 = vmatpush1.msra.mxu0 0.0
    %619 = vmatprep.subr.mxu0 0.0
    %620 = vmatpush1.msra.mxu0 0.0
    %621 = vmatprep.subr.mxu0 0.0
    %622 = vmatpush1.msra.mxu0 0.0
    %623 = vmatprep.subr.mxu0 0.0
    %624 = vmatpush1.msra.mxu0 0.0
    %625 = vmatprep.subr.mxu0 0.0
    %626 = vmatpush1.msra.mxu0 0.0
    %627 = vmatprep.subr.mxu0 0.0
    %628 = vmatpush1.msra.mxu0 0.0
    %629 = vmatprep.subr.mxu0 0.0
    %630 = vmatpush1.msra.mxu0 0.0
    %631 = vmatprep.subr.mxu0 0.0
    %632 = vmatpush1.msra.mxu0 0.0
    %633 = vmatprep.subr.mxu0 0.0
    %634 = vmatpush1.msra.mxu0 0.0
    %635 = vmatprep.subr.mxu0 0.0
    %636 = vmatpush1.msra.mxu0 0.0
    %637 = vmatprep.subr.mxu0 0.0
    %638 = vmatpush1.msra.mxu0 0.0
    %639 = vmatprep.subr.mxu0 0.0
    %640 = vmatpush1.msra.mxu0 0.0
    %641 = vmatprep.subr.mxu0 0.0
    %642 = vmatpush1.msra.mxu0 0.0
    %643 = vmatprep.subr.mxu0 0.0
    %644 = vmatpush1.msra.mxu0 0.0
    %645 = vmatprep.mubr.f32.mxu0 0.0
    %646 = vmatmul.mubr.f32.gmra.mrb[0].mxu0 0.0
    %v647 = vpop.f32.mrb[0].mxu0
    %v648 = vadd.f32 0.0, %v647
    %v649 = vpop.f32.mrb[0].mxu0
    %v650 = vadd.f32 0.0, %v649
    %651 = vdwg.mxu0
    %s652 = smul.u32 0, 4
    %s653 = smul.addr %s652, 8
    %s654 = scalar_lea.vmem [#allocation2], %s653
    %v655 = vld [vmem:[%s654] sm:$0xff]
    %v656 = vld [vmem:[%s654 + $0x8] sm:$0xff]
    %v657 = vadd.f32 %v577, %v655
    %v658 = vadd.f32 %v579, %v656
    %s659 = smul.u32 7, 4
    %s660 = smul.addr %s659, 8
    %s661 = scalar_lea.vmem [#allocation2], %s660
    %v662 = vld [vmem:[%s661 + $0x10] sm:$0xff]
    %v663 = vld [vmem:[%s661 + $0x18] sm:$0xff]
    %v664 = vadd.f32 %v648, %v662
    %v665 = vadd.f32 %v650, %v663
    %v666 = vxor.u32 %v657, 2147483648
    %v667 = vxor.u32 %v658, 2147483648
    %v668 = vmul.f32 %v666, 1.442695
    %v669 = vpow.pop %v668
    %v670 = vmul.f32 %v667, 1.442695
    %v671 = vpow.pop %v670
    %v672 = vadd.f32 %v669, 1.0
    %v673 = vadd.f32 %v671, 1.0
    %v674 = vrcp.pop %v672
    %v675 = vmul.f32 1.0, %v674
    %v676 = vrcp.pop %v673
    %v677 = vmul.f32 1.0, %v676
    %v678 = vtanh.pop %v658
    %v679 = vmul.f32 %v675, 0.0
    %681 = vrot.lane.b32.xlu0 %v678, 64
    %v682 = vpop.permute.xlu0 %681
    %v684 = vmul.f32 %v675, %v682
    %686 = vrot.lane.b32.xlu0 %v684, 64
    %v687 = vpop.permute.xlu0 %686
    %v689 = vadd.f32 %v679, %v687
    %v690 = vtanh.pop %v689
    %692 = vrot.lane.b32.xlu0 %v690, 64
    %v693 = vpop.permute.xlu0 %692
    %v695 = vmul.f32 %v677, %v693
    %v696 = vxor.u32 %v664, 2147483648
    %v697 = vxor.u32 %v665, 2147483648
    %v698 = vmul.f32 %v696, 1.442695
    %v699 = vpow.pop %v698
    %v700 = vmul.f32 %v697, 1.442695
    %v701 = vpow.pop %v700
    %v702 = vadd.f32 %v699, 1.0
    %v703 = vadd.f32 %v701, 1.0
    %v704 = vrcp.pop %v702
    %v705 = vmul.f32 1.0, %v704
    %v706 = vrcp.pop %v703
    %v707 = vmul.f32 1.0, %v706
    %v708 = vtanh.pop %v665
    %v709 = vmul.f32 %v705, 0.0
    %711 = vrot.lane.b32.xlu0 %v708, 64
    %v712 = vpop.permute.xlu0 %711
    %v714 = vmul.f32 %v705, %v712
    %716 = vrot.lane.b32.xlu0 %v714, 64
    %v717 = vpop.permute.xlu0 %716
    %v719 = vadd.f32 %v709, %v717
    %v720 = vtanh.pop %v719
    %722 = vrot.lane.b32.xlu0 %v720, 64
    %v723 = vpop.permute.xlu0 %722
    %v725 = vmul.f32 %v707, %v723
    %726 = vst.msk [vmem:[#allocation3] sm:$0xff] %vm163, %v695
    %s727 = scalar_lea.vmem [#allocation4], 56
    %728 = vst.msk [vmem:[%s727] sm:$0xff] %vm163, %v725
    %730 = vrot.lane.b32.xlu0 %v725, 64
    %v731 = vpop.permute.xlu0 %730
    %v733 = vsel %vm163, %v695, %v731
    %v734 = vld [vmem:[#allocation10] sm:$0xff]
    %v735 = vld [vmem:[#allocation10 + $0x8] sm:$0xff]
    %v736 = vld [vmem:[#allocation10 + $0x10] sm:$0xff]
    %v737 = vld [vmem:[#allocation10 + $0x18] sm:$0xff]
    %v738 = vld [vmem:[#allocation10 + $0x20] sm:$0xff]
    %v739 = vld [vmem:[#allocation10 + $0x28] sm:$0xff]
    %v740 = vld [vmem:[#allocation10 + $0x30] sm:$0xff]
    %v741 = vld [vmem:[#allocation10 + $0x38] sm:$0xff]
    %v742 = vld [vmem:[#allocation10 + $0x40] sm:$0xff]
    %v743 = vld [vmem:[#allocation10 + $0x48] sm:$0xff]
    %v744 = vld [vmem:[#allocation10 + $0x50] sm:$0xff]
    %v745 = vld [vmem:[#allocation10 + $0x58] sm:$0xff]
    %v746 = vld [vmem:[#allocation10 + $0x60] sm:$0xff]
    %v747 = vld [vmem:[#allocation10 + $0x68] sm:$0xff]
    %v748 = vld [vmem:[#allocation10 + $0x70] sm:$0xff]
    %v749 = vld [vmem:[#allocation10 + $0x78] sm:$0xff]
    %v750 = vld [vmem:[#allocation10 + $0x80] sm:$0xff]
    %v751 = vld [vmem:[#allocation10 + $0x88] sm:$0xff]
    %v752 = vld [vmem:[#allocation10 + $0x90] sm:$0xff]
    %v753 = vld [vmem:[#allocation10 + $0x98] sm:$0xff]
    %v754 = vld [vmem:[#allocation10 + $0xa0] sm:$0xff]
    %v755 = vld [vmem:[#allocation10 + $0xa8] sm:$0xff]
    %v756 = vld [vmem:[#allocation10 + $0xb0] sm:$0xff]
    %v757 = vld [vmem:[#allocation10 + $0xb8] sm:$0xff]
    %v758 = vld [vmem:[#allocation10 + $0xc0] sm:$0xff]
    %v759 = vld [vmem:[#allocation10 + $0xc8] sm:$0xff]
    %v760 = vld [vmem:[#allocation10 + $0xd0] sm:$0xff]
    %v761 = vld [vmem:[#allocation10 + $0xd8] sm:$0xff]
    %v762 = vld [vmem:[#allocation10 + $0xe0] sm:$0xff]
    %v763 = vld [vmem:[#allocation10 + $0xe8] sm:$0xff]
    %v764 = vld [vmem:[#allocation10 + $0xf0] sm:$0xff]
    %v765 = vld [vmem:[#allocation10 + $0xf8] sm:$0xff]
    %v766 = vld [vmem:[#allocation10 + $0x100] sm:$0xff]
    %v767 = vld [vmem:[#allocation10 + $0x108] sm:$0xff]
    %v768 = vld [vmem:[#allocation10 + $0x110] sm:$0xff]
    %v769 = vld [vmem:[#allocation10 + $0x118] sm:$0xff]
    %v770 = vld [vmem:[#allocation10 + $0x120] sm:$0xff]
    %v771 = vld [vmem:[#allocation10 + $0x128] sm:$0xff]
    %v772 = vld [vmem:[#allocation10 + $0x130] sm:$0xff]
    %v773 = vld [vmem:[#allocation10 + $0x138] sm:$0xff]
    %v774 = vld [vmem:[#allocation10 + $0x140] sm:$0xff]
    %v775 = vld [vmem:[#allocation10 + $0x148] sm:$0xff]
    %v776 = vld [vmem:[#allocation10 + $0x150] sm:$0xff]
    %v777 = vld [vmem:[#allocation10 + $0x158] sm:$0xff]
    %v778 = vld [vmem:[#allocation10 + $0x160] sm:$0xff]
    %v779 = vld [vmem:[#allocation10 + $0x168] sm:$0xff]
    %v780 = vld [vmem:[#allocation10 + $0x170] sm:$0xff]
    %v781 = vld [vmem:[#allocation10 + $0x178] sm:$0xff]
    %v782 = vld [vmem:[#allocation10 + $0x180] sm:$0xff]
    %v783 = vld [vmem:[#allocation10 + $0x188] sm:$0xff]
    %v784 = vld [vmem:[#allocation10 + $0x190] sm:$0xff]
    %v785 = vld [vmem:[#allocation10 + $0x198] sm:$0xff]
    %v786 = vld [vmem:[#allocation10 + $0x1a0] sm:$0xff]
    %v787 = vld [vmem:[#allocation10 + $0x1a8] sm:$0xff]
    %v788 = vld [vmem:[#allocation10 + $0x1b0] sm:$0xff]
    %v789 = vld [vmem:[#allocation10 + $0x1b8] sm:$0xff]
    %v790 = vld [vmem:[#allocation10 + $0x1c0] sm:$0xff]
    %v791 = vld [vmem:[#allocation10 + $0x1c8] sm:$0xff]
    %v792 = vld [vmem:[#allocation10 + $0x1d0] sm:$0xff]
    %v793 = vld [vmem:[#allocation10 + $0x1d8] sm:$0xff]
    %v794 = vld [vmem:[#allocation10 + $0x1e0] sm:$0xff]
    %v795 = vld [vmem:[#allocation10 + $0x1e8] sm:$0xff]
    %v796 = vld [vmem:[#allocation10 + $0x1f0] sm:$0xff]
    %v797 = vld [vmem:[#allocation10 + $0x1f8] sm:$0xff]
    %798 = vmatprep.subr.mxu0 %v735
    %799 = vmatpush1.msra.mxu0 %v734
    %800 = vmatprep.subr.mxu0 %v739
    %801 = vmatpush1.msra.mxu0 %v738
    %802 = vmatprep.subr.mxu0 %v743
    %803 = vmatpush1.msra.mxu0 %v742
    %804 = vmatprep.subr.mxu0 %v747
    %805 = vmatpush1.msra.mxu0 %v746
    %806 = vmatprep.subr.mxu0 %v751
    %807 = vmatpush1.msra.mxu0 %v750
    %808 = vmatprep.subr.mxu0 %v755
    %809 = vmatpush1.msra.mxu0 %v754
    %810 = vmatprep.subr.mxu0 %v759
    %811 = vmatpush1.msra.mxu0 %v758
    %812 = vmatprep.subr.mxu0 %v763
    %813 = vmatpush1.msra.mxu0 %v762
    %814 = vmatprep.subr.mxu0 %v767
    %815 = vmatpush1.msra.mxu0 %v766
    %816 = vmatprep.subr.mxu0 %v771
    %817 = vmatpush1.msra.mxu0 %v770
    %818 = vmatprep.subr.mxu0 %v775
    %819 = vmatpush1.msra.mxu0 %v774
    %820 = vmatprep.subr.mxu0 %v779
    %821 = vmatpush1.msra.mxu0 %v778
    %822 = vmatprep.subr.mxu0 %v783
    %823 = vmatpush1.msra.mxu0 %v782
    %824 = vmatprep.subr.mxu0 %v787
    %825 = vmatpush1.msra.mxu0 %v786
    %826 = vmatprep.subr.mxu0 %v791
    %827 = vmatpush1.msra.mxu0 %v790
    %828 = vmatprep.subr.mxu0 %v795
    %829 = vmatpush1.msra.mxu0 %v794
    %830 = vmatprep.subr.mxu0 0.0
    %831 = vmatpush1.msra.mxu0 0.0
    %832 = vmatprep.subr.mxu0 0.0
    %833 = vmatpush1.msra.mxu0 0.0
    %834 = vmatprep.subr.mxu0 0.0
    %835 = vmatpush1.msra.mxu0 0.0
    %836 = vmatprep.subr.mxu0 0.0
    %837 = vmatpush1.msra.mxu0 0.0
    %838 = vmatprep.subr.mxu0 0.0
    %839 = vmatpush1.msra.mxu0 0.0
    %840 = vmatprep.subr.mxu0 0.0
    %841 = vmatpush1.msra.mxu0 0.0
    %842 = vmatprep.subr.mxu0 0.0
    %843 = vmatpush1.msra.mxu0 0.0
    %844 = vmatprep.subr.mxu0 0.0
    %845 = vmatpush1.msra.mxu0 0.0
    %846 = vmatprep.subr.mxu0 0.0
    %847 = vmatpush1.msra.mxu0 0.0
    %848 = vmatprep.subr.mxu0 0.0
    %849 = vmatpush1.msra.mxu0 0.0
    %850 = vmatprep.subr.mxu0 0.0
    %851 = vmatpush1.msra.mxu0 0.0
    %852 = vmatprep.subr.mxu0 0.0
    %853 = vmatpush1.msra.mxu0 0.0
    %854 = vmatprep.subr.mxu0 0.0
    %855 = vmatpush1.msra.mxu0 0.0
    %856 = vmatprep.subr.mxu0 0.0
    %857 = vmatpush1.msra.mxu0 0.0
    %858 = vmatprep.subr.mxu0 0.0
    %859 = vmatpush1.msra.mxu0 0.0
    %860 = vmatprep.subr.mxu0 0.0
    %861 = vmatpush1.msra.mxu0 0.0
    %862 = vmatprep.mubr.f32.mxu0 0.0
    %863 = vmatmul.mubr.f32.gmra.mrb[0].mxu0 %v733
    %v864 = vpop.f32.mrb[0].mxu0
    %v865 = vadd.f32 0.0, %v864
    %v866 = vpop.f32.mrb[0].mxu0
    %v867 = vadd.f32 0.0, %v866
    %868 = vdwg.mxu0
    %869 = vmatprep.subr.mxu0 %v737
    %870 = vmatpush1.msra.mxu0 %v736
    %871 = vmatprep.subr.mxu0 %v741
    %872 = vmatpush1.msra.mxu0 %v740
    %873 = vmatprep.subr.mxu0 %v745
    %874 = vmatpush1.msra.mxu0 %v744
    %875 = vmatprep.subr.mxu0 %v749
    %876 = vmatpush1.msra.mxu0 %v748
    %877 = vmatprep.subr.mxu0 %v753
    %878 = vmatpush1.msra.mxu0 %v752
    %879 = vmatprep.subr.mxu0 %v757
    %880 = vmatpush1.msra.mxu0 %v756
    %881 = vmatprep.subr.mxu0 %v761
    %882 = vmatpush1.msra.mxu0 %v760
    %883 = vmatprep.subr.mxu0 %v765
    %884 = vmatpush1.msra.mxu0 %v764
    %885 = vmatprep.subr.mxu0 %v769
    %886 = vmatpush1.msra.mxu0 %v768
    %887 = vmatprep.subr.mxu0 %v773
    %888 = vmatpush1.msra.mxu0 %v772
    %889 = vmatprep.subr.mxu0 %v777
    %890 = vmatpush1.msra.mxu0 %v776
    %891 = vmatprep.subr.mxu0 %v781
    %892 = vmatpush1.msra.mxu0 %v780
    %893 = vmatprep.subr.mxu0 %v785
    %894 = vmatpush1.msra.mxu0 %v784
    %895 = vmatprep.subr.mxu0 %v789
    %896 = vmatpush1.msra.mxu0 %v788
    %897 = vmatprep.subr.mxu0 %v793
    %898 = vmatpush1.msra.mxu0 %v792
    %899 = vmatprep.subr.mxu0 %v797
    %900 = vmatpush1.msra.mxu0 %v796
    %901 = vmatprep.subr.mxu0 0.0
    %902 = vmatpush1.msra.mxu0 0.0
    %903 = vmatprep.subr.mxu0 0.0
    %904 = vmatpush1.msra.mxu0 0.0
    %905 = vmatprep.subr.mxu0 0.0
    %906 = vmatpush1.msra.mxu0 0.0
    %907 = vmatprep.subr.mxu0 0.0
    %908 = vmatpush1.msra.mxu0 0.0
    %909 = vmatprep.subr.mxu0 0.0
    %910 = vmatpush1.msra.mxu0 0.0
    %911 = vmatprep.subr.mxu0 0.0
    %912 = vmatpush1.msra.mxu0 0.0
    %913 = vmatprep.subr.mxu0 0.0
    %914 = vmatpush1.msra.mxu0 0.0
    %915 = vmatprep.subr.mxu0 0.0
    %916 = vmatpush1.msra.mxu0 0.0
    %917 = vmatprep.subr.mxu0 0.0
    %918 = vmatpush1.msra.mxu0 0.0
    %919 = vmatprep.subr.mxu0 0.0
    %920 = vmatpush1.msra.mxu0 0.0
    %921 = vmatprep.subr.mxu0 0.0
    %922 = vmatpush1.msra.mxu0 0.0
    %923 = vmatprep.subr.mxu0 0.0
    %924 = vmatpush1.msra.mxu0 0.0
    %925 = vmatprep.subr.mxu0 0.0
    %926 = vmatpush1.msra.mxu0 0.0
    %927 = vmatprep.subr.mxu0 0.0
    %928 = vmatpush1.msra.mxu0 0.0
    %929 = vmatprep.subr.mxu0 0.0
    %930 = vmatpush1.msra.mxu0 0.0
    %931 = vmatprep.subr.mxu0 0.0
    %932 = vmatpush1.msra.mxu0 0.0
    %933 = vmatprep.mubr.f32.mxu0 0.0
    %934 = vmatmul.mubr.f32.gmra.mrb[0].mxu0 %v733
    %v935 = vpop.f32.mrb[0].mxu0
    %v936 = vadd.f32 0.0, %v935
    %v937 = vpop.f32.mrb[0].mxu0
    %v938 = vadd.f32 0.0, %v937
    %939 = vdwg.mxu0
    %s940 = smul.u32 1, 4
    %s941 = smul.addr %s940, 8
    %s942 = scalar_lea.vmem [#allocation2], %s941
    %v943 = vld [vmem:[%s942] sm:$0xff]
    %v944 = vld [vmem:[%s942 + $0x8] sm:$0xff]
    %v945 = vadd.f32 %v865, %v943
    %v946 = vadd.f32 %v867, %v944
    %s947 = smul.u32 6, 4
    %s948 = smul.addr %s947, 8
    %s949 = scalar_lea.vmem [#allocation2], %s948
    %v950 = vld [vmem:[%s949 + $0x10] sm:$0xff]
    %v951 = vld [vmem:[%s949 + $0x18] sm:$0xff]
    %v952 = vadd.f32 %v936, %v950
    %v953 = vadd.f32 %v938, %v951
    %v954 = vxor.u32 %v945, 2147483648
    %v955 = vxor.u32 %v946, 2147483648
    %v956 = vmul.f32 %v954, 1.442695
    %v957 = vpow.pop %v956
    %v958 = vmul.f32 %v955, 1.442695
    %v959 = vpow.pop %v958
    %v960 = vadd.f32 %v957, 1.0
    %v961 = vadd.f32 %v959, 1.0
    %v962 = vrcp.pop %v960
    %v963 = vmul.f32 1.0, %v962
    %v964 = vrcp.pop %v961
    %v965 = vmul.f32 1.0, %v964
    %v966 = vtanh.pop %v946
    %v967 = vmul.f32 %v963, %v689
    %969 = vrot.lane.b32.xlu0 %v966, 64
    %v970 = vpop.permute.xlu0 %969
    %v972 = vmul.f32 %v963, %v970
    %974 = vrot.lane.b32.xlu0 %v972, 64
    %v975 = vpop.permute.xlu0 %974
    %v977 = vadd.f32 %v967, %v975
    %v978 = vtanh.pop %v977
    %980 = vrot.lane.b32.xlu0 %v978, 64
    %v981 = vpop.permute.xlu0 %980
    %v983 = vmul.f32 %v965, %v981
    %v984 = vxor.u32 %v952, 2147483648
    %v985 = vxor.u32 %v953, 2147483648
    %v986 = vmul.f32 %v984, 1.442695
    %v987 = vpow.pop %v986
    %v988 = vmul.f32 %v985, 1.442695
    %v989 = vpow.pop %v988
    %v990 = vadd.f32 %v987, 1.0
    %v991 = vadd.f32 %v989, 1.0
    %v992 = vrcp.pop %v990
    %v993 = vmul.f32 1.0, %v992
    %v994 = vrcp.pop %v991
    %v995 = vmul.f32 1.0, %v994
    %v996 = vtanh.pop %v953
    %v997 = vmul.f32 %v993, %v719
    %999 = vrot.lane.b32.xlu0 %v996, 64
    %v1000 = vpop.permute.xlu0 %999
    %v1002 = vmul.f32 %v993, %v1000
    %1004 = vrot.lane.b32.xlu0 %v1002, 64
    %v1005 = vpop.permute.xlu0 %1004
    %v1007 = vadd.f32 %v997, %v1005
    %v1008 = vtanh.pop %v1007
    %1010 = vrot.lane.b32.xlu0 %v1008, 64
    %v1011 = vpop.permute.xlu0 %1010
    %v1013 = vmul.f32 %v995, %v1011
    %s1014 = scalar_lea.vmem [#allocation3], 8
    %1015 = vst.msk [vmem:[%s1014] sm:$0xff] %vm163, %v983
    %s1016 = scalar_lea.vmem [#allocation4], 48
    %1017 = vst.msk [vmem:[%s1016] sm:$0xff] %vm163, %v1013
    %1019 = vrot.lane.b32.xlu0 %v1013, 64
    %v1020 = vpop.permute.xlu0 %1019
    %v1022 = vsel %vm163, %v983, %v1020
    %v1023 = vld [vmem:[#allocation10] sm:$0xff]
    %v1024 = vld [vmem:[#allocation10 + $0x8] sm:$0xff]
    %v1025 = vld [vmem:[#allocation10 + $0x10] sm:$0xff]
    %v1026 = vld [vmem:[#allocation10 + $0x18] sm:$0xff]
    %v1027 = vld [vmem:[#allocation10 + $0x20] sm:$0xff]
    %v1028 = vld [vmem:[#allocation10 + $0x28] sm:$0xff]
    %v1029 = vld [vmem:[#allocation10 + $0x30] sm:$0xff]
    %v1030 = vld [vmem:[#allocation10 + $0x38] sm:$0xff]
    %v1031 = vld [vmem:[#allocation10 + $0x40] sm:$0xff]
    %v1032 = vld [vmem:[#allocation10 + $0x48] sm:$0xff]
    %v1033 = vld [vmem:[#allocation10 + $0x50] sm:$0xff]
    %v1034 = vld [vmem:[#allocation10 + $0x58] sm:$0xff]
    %v1035 = vld [vmem:[#allocation10 + $0x60] sm:$0xff]
    %v1036 = vld [vmem:[#allocation10 + $0x68] sm:$0xff]
    %v1037 = vld [vmem:[#allocation10 + $0x70] sm:$0xff]
    %v1038 = vld [vmem:[#allocation10 + $0x78] sm:$0xff]
    %v1039 = vld [vmem:[#allocation10 + $0x80] sm:$0xff]
    %v1040 = vld [vmem:[#allocation10 + $0x88] sm:$0xff]
    %v1041 = vld [vmem:[#allocation10 + $0x90] sm:$0xff]
    %v1042 = vld [vmem:[#allocation10 + $0x98] sm:$0xff]
    %v1043 = vld [vmem:[#allocation10 + $0xa0] sm:$0xff]
    %v1044 = vld [vmem:[#allocation10 + $0xa8] sm:$0xff]
    %v1045 = vld [vmem:[#allocation10 + $0xb0] sm:$0xff]
    %v1046 = vld [vmem:[#allocation10 + $0xb8] sm:$0xff]
    %v1047 = vld [vmem:[#allocation10 + $0xc0] sm:$0xff]
    %v1048 = vld [vmem:[#allocation10 + $0xc8] sm:$0xff]
    %v1049 = vld [vmem:[#allocation10 + $0xd0] sm:$0xff]
    %v1050 = vld [vmem:[#allocation10 + $0xd8] sm:$0xff]
    %v1051 = vld [vmem:[#allocation10 + $0xe0] sm:$0xff]
    %v1052 = vld [vmem:[#allocation10 + $0xe8] sm:$0xff]
    %v1053 = vld [vmem:[#allocation10 + $0xf0] sm:$0xff]
    %v1054 = vld [vmem:[#allocation10 + $0xf8] sm:$0xff]
    %v1055 = vld [vmem:[#allocation10 + $0x100] sm:$0xff]
    %v1056 = vld [vmem:[#allocation10 + $0x108] sm:$0xff]
    %v1057 = vld [vmem:[#allocation10 + $0x110] sm:$0xff]
    %v1058 = vld [vmem:[#allocation10 + $0x118] sm:$0xff]
    %v1059 = vld [vmem:[#allocation10 + $0x120] sm:$0xff]
    %v1060 = vld [vmem:[#allocation10 + $0x128] sm:$0xff]
    %v1061 = vld [vmem:[#allocation10 + $0x130] sm:$0xff]
    %v1062 = vld [vmem:[#allocation10 + $0x138] sm:$0xff]
    %v1063 = vld [vmem:[#allocation10 + $0x140] sm:$0xff]
    %v1064 = vld [vmem:[#allocation10 + $0x148] sm:$0xff]
    %v1065 = vld [vmem:[#allocation10 + $0x150] sm:$0xff]
    %v1066 = vld [vmem:[#allocation10 + $0x158] sm:$0xff]
    %v1067 = vld [vmem:[#allocation10 + $0x160] sm:$0xff]
    %v1068 = vld [vmem:[#allocation10 + $0x168] sm:$0xff]
    %v1069 = vld [vmem:[#allocation10 + $0x170] sm:$0xff]
    %v1070 = vld [vmem:[#allocation10 + $0x178] sm:$0xff]
    %v1071 = vld [vmem:[#allocation10 + $0x180] sm:$0xff]
    %v1072 = vld [vmem:[#allocation10 + $0x188] sm:$0xff]
    %v1073 = vld [vmem:[#allocation10 + $0x190] sm:$0xff]
    %v1074 = vld [vmem:[#allocation10 + $0x198] sm:$0xff]
    %v1075 = vld [vmem:[#allocation10 + $0x1a0] sm:$0xff]
    %v1076 = vld [vmem:[#allocation10 + $0x1a8] sm:$0xff]
    %v1077 = vld [vmem:[#allocation10 + $0x1b0] sm:$0xff]
    %v1078 = vld [vmem:[#allocation10 + $0x1b8] sm:$0xff]
    %v1079 = vld [vmem:[#allocation10 + $0x1c0] sm:$0xff]
    %v1080 = vld [vmem:[#allocation10 + $0x1c8] sm:$0xff]
    %v1081 = vld [vmem:[#allocation10 + $0x1d0] sm:$0xff]
    %v1082 = vld [vmem:[#allocation10 + $0x1d8] sm:$0xff]
    %v1083 = vld [vmem:[#allocation10 + $0x1e0] sm:$0xff]
    %v1084 = vld [vmem:[#allocation10 + $0x1e8] sm:$0xff]
    %v1085 = vld [vmem:[#allocation10 + $0x1f0] sm:$0xff]
    %v1086 = vld [vmem:[#allocation10 + $0x1f8] sm:$0xff]
    %1087 = vmatprep.subr.mxu0 %v1024
    %1088 = vmatpush1.msra.mxu0 %v1023
    %1089 = vmatprep.subr.mxu0 %v1028
    %1090 = vmatpush1.msra.mxu0 %v1027
    %1091 = vmatprep.subr.mxu0 %v1032
    %1092 = vmatpush1.msra.mxu0 %v1031
    %1093 = vmatprep.subr.mxu0 %v1036
    %1094 = vmatpush1.msra.mxu0 %v1035
    %1095 = vmatprep.subr.mxu0 %v1040
    %1096 = vmatpush1.msra.mxu0 %v1039
    %1097 = vmatprep.subr.mxu0 %v1044
    %1098 = vmatpush1.msra.mxu0 %v1043
    %1099 = vmatprep.subr.mxu0 %v1048
    %1100 = vmatpush1.msra.mxu0 %v1047
    %1101 = vmatprep.subr.mxu0 %v1052
    %1102 = vmatpush1.msra.mxu0 %v1051
    %1103 = vmatprep.subr.mxu0 %v1056
    %1104 = vmatpush1.msra.mxu0 %v1055
    %1105 = vmatprep.subr.mxu0 %v1060
    %1106 = vmatpush1.msra.mxu0 %v1059
    %1107 = vmatprep.subr.mxu0 %v1064
    %1108 = vmatpush1.msra.mxu0 %v1063
    %1109 = vmatprep.subr.mxu0 %v1068
    %1110 = vmatpush1.msra.mxu0 %v1067
    %1111 = vmatprep.subr.mxu0 %v1072
    %1112 = vmatpush1.msra.mxu0 %v1071
    %1113 = vmatprep.subr.mxu0 %v1076
    %1114 = vmatpush1.msra.mxu0 %v1075
    %1115 = vmatprep.subr.mxu0 %v1080
    %1116 = vmatpush1.msra.mxu0 %v1079
    %1117 = vmatprep.subr.mxu0 %v1084
    %1118 = vmatpush1.msra.mxu0 %v1083
    %1119 = vmatprep.subr.mxu0 0.0
    %1120 = vmatpush1.msra.mxu0 0.0
    %1121 = vmatprep.subr.mxu0 0.0
    %1122 = vmatpush1.msra.mxu0 0.0
    %1123 = vmatprep.subr.mxu0 0.0
    %1124 = vmatpush1.msra.mxu0 0.0
    %1125 = vmatprep.subr.mxu0 0.0
    %1126 = vmatpush1.msra.mxu0 0.0
    %1127 = vmatprep.subr.mxu0 0.0
    %1128 = vmatpush1.msra.mxu0 0.0
    %1129 = vmatprep.subr.mxu0 0.0
    %1130 = vmatpush1.msra.mxu0 0.0
    %1131 = vmatprep.subr.mxu0 0.0
    %1132 = vmatpush1.msra.mxu0 0.0
    %1133 = vmatprep.subr.mxu0 0.0
    %1134 = vmatpush1.msra.mxu0 0.0
    %1135 = vmatprep.subr.mxu0 0.0
    %1136 = vmatpush1.msra.mxu0 0.0
    %1137 = vmatprep.subr.mxu0 0.0
    %1138 = vmatpush1.msra.mxu0 0.0
    %1139 = vmatprep.subr.mxu0 0.0
    %1140 = vmatpush1.msra.mxu0 0.0
    %1141 = vmatprep.subr.mxu0 0.0
    %1142 = vmatpush1.msra.mxu0 0.0
    %1143 = vmatprep.subr.mxu0 0.0
    %1144 = vmatpush1.msra.mxu0 0.0
    %1145 = vmatprep.subr.mxu0 0.0
    %1146 = vmatpush1.msra.mxu0 0.0
    %1147 = vmatprep.subr.mxu0 0.0
    %1148 = vmatpush1.msra.mxu0 0.0
    %1149 = vmatprep.subr.mxu0 0.0
    %1150 = vmatpush1.msra.mxu0 0.0
    %1151 = vmatprep.mubr.f32.mxu0 0.0
    %1152 = vmatmul.mubr.f32.gmra.mrb[0].mxu0 %v1022
    %v1153 = vpop.f32.mrb[0].mxu0
    %v1154 = vadd.f32 0.0, %v1153
    %v1155 = vpop.f32.mrb[0].mxu0
    %v1156 = vadd.f32 0.0, %v1155
    %1157 = vdwg.mxu0
    %1158 = vmatprep.subr.mxu0 %v1026
    %1159 = vmatpush1.msra.mxu0 %v1025
    %1160 = vmatprep.subr.mxu0 %v1030
    %1161 = vmatpush1.msra.mxu0 %v1029
    %1162 = vmatprep.subr.mxu0 %v1034
    %1163 = vmatpush1.msra.mxu0 %v1033
    %1164 = vmatprep.subr.mxu0 %v1038
    %1165 = vmatpush1.msra.mxu0 %v1037
    %1166 = vmatprep.subr.mxu0 %v1042
    %1167 = vmatpush1.msra.mxu0 %v1041
    %1168 = vmatprep.subr.mxu0 %v1046
    %1169 = vmatpush1.msra.mxu0 %v1045
    %1170 = vmatprep.subr.mxu0 %v1050
    %1171 = vmatpush1.msra.mxu0 %v1049
    %1172 = vmatprep.subr.mxu0 %v1054
    %1173 = vmatpush1.msra.mxu0 %v1053
    %1174 = vmatprep.subr.mxu0 %v1058
    %1175 = vmatpush1.msra.mxu0 %v1057
    %1176 = vmatprep.subr.mxu0 %v1062
    %1177 = vmatpush1.msra.mxu0 %v1061
    %1178 = vmatprep.subr.mxu0 %v1066
    %1179 = vmatpush1.msra.mxu0 %v1065
    %1180 = vmatprep.subr.mxu0 %v1070
    %1181 = vmatpush1.msra.mxu0 %v1069
    %1182 = vmatprep.subr.mxu0 %v1074
    %1183 = vmatpush1.msra.mxu0 %v1073
    %1184 = vmatprep.subr.mxu0 %v1078
    %1185 = vmatpush1.msra.mxu0 %v1077
    %1186 = vmatprep.subr.mxu0 %v1082
    %1187 = vmatpush1.msra.mxu0 %v1081
    %1188 = vmatprep.subr.mxu0 %v1086
    %1189 = vmatpush1.msra.mxu0 %v1085
    %1190 = vmatprep.subr.mxu0 0.0
    %1191 = vmatpush1.msra.mxu0 0.0
    %1192 = vmatprep.subr.mxu0 0.0
    %1193 = vmatpush1.msra.mxu0 0.0
    %1194 = vmatprep.subr.mxu0 0.0
    %1195 = vmatpush1.msra.mxu0 0.0
    %1196 = vmatprep.subr.mxu0 0.0
    %1197 = vmatpush1.msra.mxu0 0.0
    %1198 = vmatprep.subr.mxu0 0.0
    %1199 = vmatpush1.msra.mxu0 0.0
    %1200 = vmatprep.subr.mxu0 0.0
    %1201 = vmatpush1.msra.mxu0 0.0
    %1202 = vmatprep.subr.mxu0 0.0
    %1203 = vmatpush1.msra.mxu0 0.0
    %1204 = vmatprep.subr.mxu0 0.0
    %1205 = vmatpush1.msra.mxu0 0.0
    %1206 = vmatprep.subr.mxu0 0.0
    %1207 = vmatpush1.msra.mxu0 0.0
    %1208 = vmatprep.subr.mxu0 0.0
    %1209 = vmatpush1.msra.mxu0 0.0
    %1210 = vmatprep.subr.mxu0 0.0
    %1211 = vmatpush1.msra.mxu0 0.0
    %1212 = vmatprep.subr.mxu0 0.0
    %1213 = vmatpush1.msra.mxu0 0.0
    %1214 = vmatprep.subr.mxu0 0.0
    %1215 = vmatpush1.msra.mxu0 0.0
    %1216 = vmatprep.subr.mxu0 0.0
    %1217 = vmatpush1.msra.mxu0 0.0
    %1218 = vmatprep.subr.mxu0 0.0
    %1219 = vmatpush1.msra.mxu0 0.0
    %1220 = vmatprep.subr.mxu0 0.0
    %1221 = vmatpush1.msra.mxu0 0.0
    %1222 = vmatprep.mubr.f32.mxu0 0.0
    %1223 = vmatmul.mubr.f32.gmra.mrb[0].mxu0 %v1022
    %v1224 = vpop.f32.mrb[0].mxu0
    %v1225 = vadd.f32 0.0, %v1224
    %v1226 = vpop.f32.mrb[0].mxu0
    %v1227 = vadd.f32 0.0, %v1226
    %1228 = vdwg.mxu0
    %s1229 = smul.u32 2, 4
    %s1230 = smul.addr %s1229, 8
    %s1231 = scalar_lea.vmem [#allocation2], %s1230
    %v1232 = vld [vmem:[%s1231] sm:$0xff]
    %v1233 = vld [vmem:[%s1231 + $0x8] sm:$0xff]
    %v1234 = vadd.f32 %v1154, %v1232
    %v1235 = vadd.f32 %v1156, %v1233
    %s1236 = smul.u32 5, 4
    %s1237 = smul.addr %s1236, 8
    %s1238 = scalar_lea.vmem [#allocation2], %s1237
    %v1239 = vld [vmem:[%s1238 + $0x10] sm:$0xff]
    %v1240 = vld [vmem:[%s1238 + $0x18] sm:$0xff]
    %v1241 = vadd.f32 %v1225, %v1239
    %v1242 = vadd.f32 %v1227, %v1240
    %v1243 = vxor.u32 %v1234, 2147483648
    %v1244 = vxor.u32 %v1235, 2147483648
    %v1245 = vmul.f32 %v1243, 1.442695
    %v1246 = vpow.pop %v1245
    %v1247 = vmul.f32 %v1244, 1.442695
    %v1248 = vpow.pop %v1247
    %v1249 = vadd.f32 %v1246, 1.0
    %v1250 = vadd.f32 %v1248, 1.0
    %v1251 = vrcp.pop %v1249
    %v1252 = vmul.f32 1.0, %v1251
    %v1253 = vrcp.pop %v1250
    %v1254 = vmul.f32 1.0, %v1253
    %v1255 = vtanh.pop %v1235
    %v1256 = vmul.f32 %v1252, %v977
    %1258 = vrot.lane.b32.xlu0 %v1255, 64
    %v1259 = vpop.permute.xlu0 %1258
    %v1261 = vmul.f32 %v1252, %v1259
    %1263 = vrot.lane.b32.xlu0 %v1261, 64
    %v1264 = vpop.permute.xlu0 %1263
    %v1266 = vadd.f32 %v1256, %v1264
    %v1267 = vtanh.pop %v1266
    %1269 = vrot.lane.b32.xlu0 %v1267, 64
    %v1270 = vpop.permute.xlu0 %1269
    %v1272 = vmul.f32 %v1254, %v1270
    %v1273 = vxor.u32 %v1241, 2147483648
    %v1274 = vxor.u32 %v1242, 2147483648
    %v1275 = vmul.f32 %v1273, 1.442695
    %v1276 = vpow.pop %v1275
    %v1277 = vmul.f32 %v1274, 1.442695
    %v1278 = vpow.pop %v1277
    %v1279 = vadd.f32 %v1276, 1.0
    %v1280 = vadd.f32 %v1278, 1.0
    %v1281 = vrcp.pop %v1279
    %v1282 = vmul.f32 1.0, %v1281
    %v1283 = vrcp.pop %v1280
    %v1284 = vmul.f32 1.0, %v1283
    %v1285 = vtanh.pop %v1242
    %v1286 = vmul.f32 %v1282, %v1007
    %1288 = vrot.lane.b32.xlu0 %v1285, 64
    %v1289 = vpop.permute.xlu0 %1288
    %v1291 = vmul.f32 %v1282, %v1289
    %1293 = vrot.lane.b32.xlu0 %v1291, 64
    %v1294 = vpop.permute.xlu0 %1293
    %v1296 = vadd.f32 %v1286, %v1294
    %v1297 = vtanh.pop %v1296
    %1299 = vrot.lane.b32.xlu0 %v1297, 64
    %v1300 = vpop.permute.xlu0 %1299
    %v1302 = vmul.f32 %v1284, %v1300
    %s1303 = scalar_lea.vmem [#allocation3], 16
    %1304 = vst.msk [vmem:[%s1303] sm:$0xff] %vm163, %v1272
    %s1305 = scalar_lea.vmem [#allocation4], 40
    %1306 = vst.msk [vmem:[%s1305] sm:$0xff] %vm163, %v1302
    %1308 = vrot.lane.b32.xlu0 %v1302, 64
    %v1309 = vpop.permute.xlu0 %1308
    %v1311 = vsel %vm163, %v1272, %v1309
    %v1312 = vld [vmem:[#allocation10] sm:$0xff]
    %v1313 = vld [vmem:[#allocation10 + $0x8] sm:$0xff]
    %v1314 = vld [vmem:[#allocation10 + $0x10] sm:$0xff]
    %v1315 = vld [vmem:[#allocation10 + $0x18] sm:$0xff]
    %v1316 = vld [vmem:[#allocation10 + $0x20] sm:$0xff]
    %v1317 = vld [vmem:[#allocation10 + $0x28] sm:$0xff]
    %v1318 = vld [vmem:[#allocation10 + $0x30] sm:$0xff]
    %v1319 = vld [vmem:[#allocation10 + $0x38] sm:$0xff]
    %v1320 = vld [vmem:[#allocation10 + $0x40] sm:$0xff]
    %v1321 = vld [vmem:[#allocation10 + $0x48] sm:$0xff]
    %v1322 = vld [vmem:[#allocation10 + $0x50] sm:$0xff]
    %v1323 = vld [vmem:[#allocation10 + $0x58] sm:$0xff]
    %v1324 = vld [vmem:[#allocation10 + $0x60] sm:$0xff]
    %v1325 = vld [vmem:[#allocation10 + $0x68] sm:$0xff]
    %v1326 = vld [vmem:[#allocation10 + $0x70] sm:$0xff]
    %v1327 = vld [vmem:[#allocation10 + $0x78] sm:$0xff]
    %v1328 = vld [vmem:[#allocation10 + $0x80] sm:$0xff]
    %v1329 = vld [vmem:[#allocation10 + $0x88] sm:$0xff]
    %v1330 = vld [vmem:[#allocation10 + $0x90] sm:$0xff]
    %v1331 = vld [vmem:[#allocation10 + $0x98] sm:$0xff]
    %v1332 = vld [vmem:[#allocation10 + $0xa0] sm:$0xff]
    %v1333 = vld [vmem:[#allocation10 + $0xa8] sm:$0xff]
    %v1334 = vld [vmem:[#allocation10 + $0xb0] sm:$0xff]
    %v1335 = vld [vmem:[#allocation10 + $0xb8] sm:$0xff]
    %v1336 = vld [vmem:[#allocation10 + $0xc0] sm:$0xff]
    %v1337 = vld [vmem:[#allocation10 + $0xc8] sm:$0xff]
    %v1338 = vld [vmem:[#allocation10 + $0xd0] sm:$0xff]
    %v1339 = vld [vmem:[#allocation10 + $0xd8] sm:$0xff]
    %v1340 = vld [vmem:[#allocation10 + $0xe0] sm:$0xff]
    %v1341 = vld [vmem:[#allocation10 + $0xe8] sm:$0xff]
    %v1342 = vld [vmem:[#allocation10 + $0xf0] sm:$0xff]
    %v1343 = vld [vmem:[#allocation10 + $0xf8] sm:$0xff]
    %v1344 = vld [vmem:[#allocation10 + $0x100] sm:$0xff]
    %v1345 = vld [vmem:[#allocation10 + $0x108] sm:$0xff]
    %v1346 = vld [vmem:[#allocation10 + $0x110] sm:$0xff]
    %v1347 = vld [vmem:[#allocation10 + $0x118] sm:$0xff]
    %v1348 = vld [vmem:[#allocation10 + $0x120] sm:$0xff]
    %v1349 = vld [vmem:[#allocation10 + $0x128] sm:$0xff]
    %v1350 = vld [vmem:[#allocation10 + $0x130] sm:$0xff]
    %v1351 = vld [vmem:[#allocation10 + $0x138] sm:$0xff]
    %v1352 = vld [vmem:[#allocation10 + $0x140] sm:$0xff]
    %v1353 = vld [vmem:[#allocation10 + $0x148] sm:$0xff]
    %v1354 = vld [vmem:[#allocation10 + $0x150] sm:$0xff]
    %v1355 = vld [vmem:[#allocation10 + $0x158] sm:$0xff]
    %v1356 = vld [vmem:[#allocation10 + $0x160] sm:$0xff]
    %v1357 = vld [vmem:[#allocation10 + $0x168] sm:$0xff]
    %v1358 = vld [vmem:[#allocation10 + $0x170] sm:$0xff]
    %v1359 = vld [vmem:[#allocation10 + $0x178] sm:$0xff]
    %v1360 = vld [vmem:[#allocation10 + $0x180] sm:$0xff]
    %v1361 = vld [vmem:[#allocation10 + $0x188] sm:$0xff]
    %v1362 = vld [vmem:[#allocation10 + $0x190] sm:$0xff]
    %v1363 = vld [vmem:[#allocation10 + $0x198] sm:$0xff]
    %v1364 = vld [vmem:[#allocation10 + $0x1a0] sm:$0xff]
    %v1365 = vld [vmem:[#allocation10 + $0x1a8] sm:$0xff]
    %v1366 = vld [vmem:[#allocation10 + $0x1b0] sm:$0xff]
    %v1367 = vld [vmem:[#allocation10 + $0x1b8] sm:$0xff]
    %v1368 = vld [vmem:[#allocation10 + $0x1c0] sm:$0xff]
    %v1369 = vld [vmem:[#allocation10 + $0x1c8] sm:$0xff]
    %v1370 = vld [vmem:[#allocation10 + $0x1d0] sm:$0xff]
    %v1371 = vld [vmem:[#allocation10 + $0x1d8] sm:$0xff]
    %v1372 = vld [vmem:[#allocation10 + $0x1e0] sm:$0xff]
    %v1373 = vld [vmem:[#allocation10 + $0x1e8] sm:$0xff]
    %v1374 = vld [vmem:[#allocation10 + $0x1f0] sm:$0xff]
    %v1375 = vld [vmem:[#allocation10 + $0x1f8] sm:$0xff]
    %1376 = vmatprep.subr.mxu0 %v1313
    %1377 = vmatpush1.msra.mxu0 %v1312
    %1378 = vmatprep.subr.mxu0 %v1317
    %1379 = vmatpush1.msra.mxu0 %v1316
    %1380 = vmatprep.subr.mxu0 %v1321
    %1381 = vmatpush1.msra.mxu0 %v1320
    %1382 = vmatprep.subr.mxu0 %v1325
    %1383 = vmatpush1.msra.mxu0 %v1324
    %1384 = vmatprep.subr.mxu0 %v1329
    %1385 = vmatpush1.msra.mxu0 %v1328
    %1386 = vmatprep.subr.mxu0 %v1333
    %1387 = vmatpush1.msra.mxu0 %v1332
    %1388 = vmatprep.subr.mxu0 %v1337
    %1389 = vmatpush1.msra.mxu0 %v1336
    %1390 = vmatprep.subr.mxu0 %v1341
    %1391 = vmatpush1.msra.mxu0 %v1340
    %1392 = vmatprep.subr.mxu0 %v1345
    %1393 = vmatpush1.msra.mxu0 %v1344
    %1394 = vmatprep.subr.mxu0 %v1349
    %1395 = vmatpush1.msra.mxu0 %v1348
    %1396 = vmatprep.subr.mxu0 %v1353
    %1397 = vmatpush1.msra.mxu0 %v1352
    %1398 = vmatprep.subr.mxu0 %v1357
    %1399 = vmatpush1.msra.mxu0 %v1356
    %1400 = vmatprep.subr.mxu0 %v1361
    %1401 = vmatpush1.msra.mxu0 %v1360
    %1402 = vmatprep.subr.mxu0 %v1365
    %1403 = vmatpush1.msra.mxu0 %v1364
    %1404 = vmatprep.subr.mxu0 %v1369
    %1405 = vmatpush1.msra.mxu0 %v1368
    %1406 = vmatprep.subr.mxu0 %v1373
    %1407 = vmatpush1.msra.mxu0 %v1372
    %1408 = vmatprep.subr.mxu0 0.0
    %1409 = vmatpush1.msra.mxu0 0.0
    %1410 = vmatprep.subr.mxu0 0.0
    %1411 = vmatpush1.msra.mxu0 0.0
    %1412 = vmatprep.subr.mxu0 0.0
    %1413 = vmatpush1.msra.mxu0 0.0
    %1414 = vmatprep.subr.mxu0 0.0
    %1415 = vmatpush1.msra.mxu0 0.0
    %1416 = vmatprep.subr.mxu0 0.0
    %1417 = vmatpush1.msra.mxu0 0.0
    %1418 = vmatprep.subr.mxu0 0.0
    %1419 = vmatpush1.msra.mxu0 0.0
    %1420 = vmatprep.subr.mxu0 0.0
    %1421 = vmatpush1.msra.mxu0 0.0
    %1422 = vmatprep.subr.mxu0 0.0
    %1423 = vmatpush1.msra.mxu0 0.0
    %1424 = vmatprep.subr.mxu0 0.0
    %1425 = vmatpush1.msra.mxu0 0.0
    %1426 = vmatprep.subr.mxu0 0.0
    %1427 = vmatpush1.msra.mxu0 0.0
    %1428 = vmatprep.subr.mxu0 0.0
    %1429 = vmatpush1.msra.mxu0 0.0
    %1430 = vmatprep.subr.mxu0 0.0
    %1431 = vmatpush1.msra.mxu0 0.0
    %1432 = vmatprep.subr.mxu0 0.0
    %1433 = vmatpush1.msra.mxu0 0.0
    %1434 = vmatprep.subr.mxu0 0.0
    %1435 = vmatpush1.msra.mxu0 0.0
    %1436 = vmatprep.subr.mxu0 0.0
    %1437 = vmatpush1.msra.mxu0 0.0
    %1438 = vmatprep.subr.mxu0 0.0
    %1439 = vmatpush1.msra.mxu0 0.0
    %1440 = vmatprep.mubr.f32.mxu0 0.0
    %1441 = vmatmul.mubr.f32.gmra.mrb[0].mxu0 %v1311
    %v1442 = vpop.f32.mrb[0].mxu0
    %v1443 = vadd.f32 0.0, %v1442
    %v1444 = vpop.f32.mrb[0].mxu0
    %v1445 = vadd.f32 0.0, %v1444
    %1446 = vdwg.mxu0
    %1447 = vmatprep.subr.mxu0 %v1315
    %1448 = vmatpush1.msra.mxu0 %v1314
    %1449 = vmatprep.subr.mxu0 %v1319
    %1450 = vmatpush1.msra.mxu0 %v1318
    %1451 = vmatprep.subr.mxu0 %v1323
    %1452 = vmatpush1.msra.mxu0 %v1322
    %1453 = vmatprep.subr.mxu0 %v1327
    %1454 = vmatpush1.msra.mxu0 %v1326
    %1455 = vmatprep.subr.mxu0 %v1331
    %1456 = vmatpush1.msra.mxu0 %v1330
    %1457 = vmatprep.subr.mxu0 %v1335
    %1458 = vmatpush1.msra.mxu0 %v1334
    %1459 = vmatprep.subr.mxu0 %v1339
    %1460 = vmatpush1.msra.mxu0 %v1338
    %1461 = vmatprep.subr.mxu0 %v1343
    %1462 = vmatpush1.msra.mxu0 %v1342
    %1463 = vmatprep.subr.mxu0 %v1347
    %1464 = vmatpush1.msra.mxu0 %v1346
    %1465 = vmatprep.subr.mxu0 %v1351
    %1466 = vmatpush1.msra.mxu0 %v1350
    %1467 = vmatprep.subr.mxu0 %v1355
    %1468 = vmatpush1.msra.mxu0 %v1354
    %1469 = vmatprep.subr.mxu0 %v1359
    %1470 = vmatpush1.msra.mxu0 %v1358
    %1471 = vmatprep.subr.mxu0 %v1363
    %1472 = vmatpush1.msra.mxu0 %v1362
    %1473 = vmatprep.subr.mxu0 %v1367
    %1474 = vmatpush1.msra.mxu0 %v1366
    %1475 = vmatprep.subr.mxu0 %v1371
    %1476 = vmatpush1.msra.mxu0 %v1370
    %1477 = vmatprep.subr.mxu0 %v1375
    %1478 = vmatpush1.msra.mxu0 %v1374
    %1479 = vmatprep.subr.mxu0 0.0
    %1480 = vmatpush1.msra.mxu0 0.0
    %1481 = vmatprep.subr.mxu0 0.0
    %1482 = vmatpush1.msra.mxu0 0.0
    %1483 = vmatprep.subr.mxu0 0.0
    %1484 = vmatpush1.msra.mxu0 0.0
    %1485 = vmatprep.subr.mxu0 0.0
    %1486 = vmatpush1.msra.mxu0 0.0
    %1487 = vmatprep.subr.mxu0 0.0
    %1488 = vmatpush1.msra.mxu0 0.0
    %1489 = vmatprep.subr.mxu0 0.0
    %1490 = vmatpush1.msra.mxu0 0.0
    %1491 = vmatprep.subr.mxu0 0.0
    %1492 = vmatpush1.msra.mxu0 0.0
    %1493 = vmatprep.subr.mxu0 0.0
    %1494 = vmatpush1.msra.mxu0 0.0
    %1495 = vmatprep.subr.mxu0 0.0
    %1496 = vmatpush1.msra.mxu0 0.0
    %1497 = vmatprep.subr.mxu0 0.0
    %1498 = vmatpush1.msra.mxu0 0.0
    %1499 = vmatprep.subr.mxu0 0.0
    %1500 = vmatpush1.msra.mxu0 0.0
    %1501 = vmatprep.subr.mxu0 0.0
    %1502 = vmatpush1.msra.mxu0 0.0
    %1503 = vmatprep.subr.mxu0 0.0
    %1504 = vmatpush1.msra.mxu0 0.0
    %1505 = vmatprep.subr.mxu0 0.0
    %1506 = vmatpush1.msra.mxu0 0.0
    %1507 = vmatprep.subr.mxu0 0.0
    %1508 = vmatpush1.msra.mxu0 0.0
    %1509 = vmatprep.subr.mxu0 0.0
    %1510 = vmatpush1.msra.mxu0 0.0
    %1511 = vmatprep.mubr.f32.mxu0 0.0
    %1512 = vmatmul.mubr.f32.gmra.mrb[0].mxu0 %v1311
    %v1513 = vpop.f32.mrb[0].mxu0
    %v1514 = vadd.f32 0.0, %v1513
    %v1515 = vpop.f32.mrb[0].mxu0
    %v1516 = vadd.f32 0.0, %v1515
    %1517 = vdwg.mxu0
    %s1518 = smul.u32 3, 4
    %s1519 = smul.addr %s1518, 8
    %s1520 = scalar_lea.vmem [#allocation2], %s1519
    %v1521 = vld [vmem:[%s1520] sm:$0xff]
    %v1522 = vld [vmem:[%s1520 + $0x8] sm:$0xff]
    %v1523 = vadd.f32 %v1443, %v1521
    %v1524 = vadd.f32 %v1445, %v1522
    %s1525 = smul.u32 4, 4
    %s1526 = smul.addr %s1525, 8
    %s1527 = scalar_lea.vmem [#allocation2], %s1526
    %v1528 = vld [vmem:[%s1527 + $0x10] sm:$0xff]
    %v1529 = vld [vmem:[%s1527 + $0x18] sm:$0xff]
    %v1530 = vadd.f32 %v1514, %v1528
    %v1531 = vadd.f32 %v1516, %v1529
    %v1532 = vxor.u32 %v1523, 2147483648
    %v1533 = vxor.u32 %v1524, 2147483648
    %v1534 = vmul.f32 %v1532, 1.442695
    %v1535 = vpow.pop %v1534
    %v1536 = vmul.f32 %v1533, 1.442695
    %v1537 = vpow.pop %v1536
    %v1538 = vadd.f32 %v1535, 1.0
    %v1539 = vadd.f32 %v1537, 1.0
    %v1540 = vrcp.pop %v1538
    %v1541 = vmul.f32 1.0, %v1540
    %v1542 = vrcp.pop %v1539
    %v1543 = vmul.f32 1.0, %v1542
    %v1544 = vtanh.pop %v1524
    %v1545 = vmul.f32 %v1541, %v1266
    %1547 = vrot.lane.b32.xlu0 %v1544, 64
    %v1548 = vpop.permute.xlu0 %1547
    %v1550 = vmul.f32 %v1541, %v1548
    %1552 = vrot.lane.b32.xlu0 %v1550, 64
    %v1553 = vpop.permute.xlu0 %1552
    %v1555 = vadd.f32 %v1545, %v1553
    %v1556 = vtanh.pop %v1555
    %1558 = vrot.lane.b32.xlu0 %v1556, 64
    %v1559 = vpop.permute.xlu0 %1558
    %v1561 = vmul.f32 %v1543, %v1559
    %v1562 = vxor.u32 %v1530, 2147483648
    %v1563 = vxor.u32 %v1531, 2147483648
    %v1564 = vmul.f32 %v1562, 1.442695
    %v1565 = vpow.pop %v1564
    %v1566 = vmul.f32 %v1563, 1.442695
    %v1567 = vpow.pop %v1566
    %v1568 = vadd.f32 %v1565, 1.0
    %v1569 = vadd.f32 %v1567, 1.0
    %v1570 = vrcp.pop %v1568
    %v1571 = vmul.f32 1.0, %v1570
    %v1572 = vrcp.pop %v1569
    %v1573 = vmul.f32 1.0, %v1572
    %v1574 = vtanh.pop %v1531
    %v1575 = vmul.f32 %v1571, %v1296
    %1577 = vrot.lane.b32.xlu0 %v1574, 64
    %v1578 = vpop.permute.xlu0 %1577
    %v1580 = vmul.f32 %v1571, %v1578
    %1582 = vrot.lane.b32.xlu0 %v1580, 64
    %v1583 = vpop.permute.xlu0 %1582
    %v1585 = vadd.f32 %v1575, %v1583
    %v1586 = vtanh.pop %v1585
    %1588 = vrot.lane.b32.xlu0 %v1586, 64
    %v1589 = vpop.permute.xlu0 %1588
    %v1591 = vmul.f32 %v1573, %v1589
    %s1592 = scalar_lea.vmem [#allocation3], 24
    %1593 = vst.msk [vmem:[%s1592] sm:$0xff] %vm163, %v1561
    %s1594 = scalar_lea.vmem [#allocation4], 32
    %1595 = vst.msk [vmem:[%s1594] sm:$0xff] %vm163, %v1591
    %1597 = vrot.lane.b32.xlu0 %v1591, 64
    %v1598 = vpop.permute.xlu0 %1597
    %v1600 = vsel %vm163, %v1561, %v1598
    %v1601 = vld [vmem:[#allocation10] sm:$0xff]
    %v1602 = vld [vmem:[#allocation10 + $0x8] sm:$0xff]
    %v1603 = vld [vmem:[#allocation10 + $0x10] sm:$0xff]
    %v1604 = vld [vmem:[#allocation10 + $0x18] sm:$0xff]
    %v1605 = vld [vmem:[#allocation10 + $0x20] sm:$0xff]
    %v1606 = vld [vmem:[#allocation10 + $0x28] sm:$0xff]
    %v1607 = vld [vmem:[#allocation10 + $0x30] sm:$0xff]
    %v1608 = vld [vmem:[#allocation10 + $0x38] sm:$0xff]
    %v1609 = vld [vmem:[#allocation10 + $0x40] sm:$0xff]
    %v1610 = vld [vmem:[#allocation10 + $0x48] sm:$0xff]
    %v1611 = vld [vmem:[#allocation10 + $0x50] sm:$0xff]
    %v1612 = vld [vmem:[#allocation10 + $0x58] sm:$0xff]
    %v1613 = vld [vmem:[#allocation10 + $0x60] sm:$0xff]
    %v1614 = vld [vmem:[#allocation10 + $0x68] sm:$0xff]
    %v1615 = vld [vmem:[#allocation10 + $0x70] sm:$0xff]
    %v1616 = vld [vmem:[#allocation10 + $0x78] sm:$0xff]
    %v1617 = vld [vmem:[#allocation10 + $0x80] sm:$0xff]
    %v1618 = vld [vmem:[#allocation10 + $0x88] sm:$0xff]
    %v1619 = vld [vmem:[#allocation10 + $0x90] sm:$0xff]
    %v1620 = vld [vmem:[#allocation10 + $0x98] sm:$0xff]
    %v1621 = vld [vmem:[#allocation10 + $0xa0] sm:$0xff]
    %v1622 = vld [vmem:[#allocation10 + $0xa8] sm:$0xff]
    %v1623 = vld [vmem:[#allocation10 + $0xb0] sm:$0xff]
    %v1624 = vld [vmem:[#allocation10 + $0xb8] sm:$0xff]
    %v1625 = vld [vmem:[#allocation10 + $0xc0] sm:$0xff]
    %v1626 = vld [vmem:[#allocation10 + $0xc8] sm:$0xff]
    %v1627 = vld [vmem:[#allocation10 + $0xd0] sm:$0xff]
    %v1628 = vld [vmem:[#allocation10 + $0xd8] sm:$0xff]
    %v1629 = vld [vmem:[#allocation10 + $0xe0] sm:$0xff]
    %v1630 = vld [vmem:[#allocation10 + $0xe8] sm:$0xff]
    %v1631 = vld [vmem:[#allocation10 + $0xf0] sm:$0xff]
    %v1632 = vld [vmem:[#allocation10 + $0xf8] sm:$0xff]
    %v1633 = vld [vmem:[#allocation10 + $0x100] sm:$0xff]
    %v1634 = vld [vmem:[#allocation10 + $0x108] sm:$0xff]
    %v1635 = vld [vmem:[#allocation10 + $0x110] sm:$0xff]
    %v1636 = vld [vmem:[#allocation10 + $0x118] sm:$0xff]
    %v1637 = vld [vmem:[#allocation10 + $0x120] sm:$0xff]
    %v1638 = vld [vmem:[#allocation10 + $0x128] sm:$0xff]
    %v1639 = vld [vmem:[#allocation10 + $0x130] sm:$0xff]
    %v1640 = vld [vmem:[#allocation10 + $0x138] sm:$0xff]
    %v1641 = vld [vmem:[#allocation10 + $0x140] sm:$0xff]
    %v1642 = vld [vmem:[#allocation10 + $0x148] sm:$0xff]
    %v1643 = vld [vmem:[#allocation10 + $0x150] sm:$0xff]
    %v1644 = vld [vmem:[#allocation10 + $0x158] sm:$0xff]
    %v1645 = vld [vmem:[#allocation10 + $0x160] sm:$0xff]
    %v1646 = vld [vmem:[#allocation10 + $0x168] sm:$0xff]
    %v1647 = vld [vmem:[#allocation10 + $0x170] sm:$0xff]
    %v1648 = vld [vmem:[#allocation10 + $0x178] sm:$0xff]
    %v1649 = vld [vmem:[#allocation10 + $0x180] sm:$0xff]
    %v1650 = vld [vmem:[#allocation10 + $0x188] sm:$0xff]
    %v1651 = vld [vmem:[#allocation10 + $0x190] sm:$0xff]
    %v1652 = vld [vmem:[#allocation10 + $0x198] sm:$0xff]
    %v1653 = vld [vmem:[#allocation10 + $0x1a0] sm:$0xff]
    %v1654 = vld [vmem:[#allocation10 + $0x1a8] sm:$0xff]
    %v1655 = vld [vmem:[#allocation10 + $0x1b0] sm:$0xff]
    %v1656 = vld [vmem:[#allocation10 + $0x1b8] sm:$0xff]
    %v1657 = vld [vmem:[#allocation10 + $0x1c0] sm:$0xff]
    %v1658 = vld [vmem:[#allocation10 + $0x1c8] sm:$0xff]
    %v1659 = vld [vmem:[#allocation10 + $0x1d0] sm:$0xff]
    %v1660 = vld [vmem:[#allocation10 + $0x1d8] sm:$0xff]
    %v1661 = vld [vmem:[#allocation10 + $0x1e0] sm:$0xff]
    %v1662 = vld [vmem:[#allocation10 + $0x1e8] sm:$0xff]
    %v1663 = vld [vmem:[#allocation10 + $0x1f0] sm:$0xff]
    %v1664 = vld [vmem:[#allocation10 + $0x1f8] sm:$0xff]
    %1665 = vmatprep.subr.mxu0 %v1602
    %1666 = vmatpush1.msra.mxu0 %v1601
    %1667 = vmatprep.subr.mxu0 %v1606
    %1668 = vmatpush1.msra.mxu0 %v1605
    %1669 = vmatprep.subr.mxu0 %v1610
    %1670 = vmatpush1.msra.mxu0 %v1609
    %1671 = vmatprep.subr.mxu0 %v1614
    %1672 = vmatpush1.msra.mxu0 %v1613
    %1673 = vmatprep.subr.mxu0 %v1618
    %1674 = vmatpush1.msra.mxu0 %v1617
    %1675 = vmatprep.subr.mxu0 %v1622
    %1676 = vmatpush1.msra.mxu0 %v1621
    %1677 = vmatprep.subr.mxu0 %v1626
    %1678 = vmatpush1.msra.mxu0 %v1625
    %1679 = vmatprep.subr.mxu0 %v1630
    %1680 = vmatpush1.msra.mxu0 %v1629
    %1681 = vmatprep.subr.mxu0 %v1634
    %1682 = vmatpush1.msra.mxu0 %v1633
    %1683 = vmatprep.subr.mxu0 %v1638
    %1684 = vmatpush1.msra.mxu0 %v1637
    %1685 = vmatprep.subr.mxu0 %v1642
    %1686 = vmatpush1.msra.mxu0 %v1641
    %1687 = vmatprep.subr.mxu0 %v1646
    %1688 = vmatpush1.msra.mxu0 %v1645
    %1689 = vmatprep.subr.mxu0 %v1650
    %1690 = vmatpush1.msra.mxu0 %v1649
    %1691 = vmatprep.subr.mxu0 %v1654
    %1692 = vmatpush1.msra.mxu0 %v1653
    %1693 = vmatprep.subr.mxu0 %v1658
    %1694 = vmatpush1.msra.mxu0 %v1657
    %1695 = vmatprep.subr.mxu0 %v1662
    %1696 = vmatpush1.msra.mxu0 %v1661
    %1697 = vmatprep.subr.mxu0 0.0
    %1698 = vmatpush1.msra.mxu0 0.0
    %1699 = vmatprep.subr.mxu0 0.0
    %1700 = vmatpush1.msra.mxu0 0.0
    %1701 = vmatprep.subr.mxu0 0.0
    %1702 = vmatpush1.msra.mxu0 0.0
    %1703 = vmatprep.subr.mxu0 0.0
    %1704 = vmatpush1.msra.mxu0 0.0
    %1705 = vmatprep.subr.mxu0 0.0
    %1706 = vmatpush1.msra.mxu0 0.0
    %1707 = vmatprep.subr.mxu0 0.0
    %1708 = vmatpush1.msra.mxu0 0.0
    %1709 = vmatprep.subr.mxu0 0.0
    %1710 = vmatpush1.msra.mxu0 0.0
    %1711 = vmatprep.subr.mxu0 0.0
    %1712 = vmatpush1.msra.mxu0 0.0
    %1713 = vmatprep.subr.mxu0 0.0
    %1714 = vmatpush1.msra.mxu0 0.0
    %1715 = vmatprep.subr.mxu0 0.0
    %1716 = vmatpush1.msra.mxu0 0.0
    %1717 = vmatprep.subr.mxu0 0.0
    %1718 = vmatpush1.msra.mxu0 0.0
    %1719 = vmatprep.subr.mxu0 0.0
    %1720 = vmatpush1.msra.mxu0 0.0
    %1721 = vmatprep.subr.mxu0 0.0
    %1722 = vmatpush1.msra.mxu0 0.0
    %1723 = vmatprep.subr.mxu0 0.0
    %1724 = vmatpush1.msra.mxu0 0.0
    %1725 = vmatprep.subr.mxu0 0.0
    %1726 = vmatpush1.msra.mxu0 0.0
    %1727 = vmatprep.subr.mxu0 0.0
    %1728 = vmatpush1.msra.mxu0 0.0
    %1729 = vmatprep.mubr.f32.mxu0 0.0
    %1730 = vmatmul.mubr.f32.gmra.mrb[0].mxu0 %v1600
    %v1731 = vpop.f32.mrb[0].mxu0
    %v1732 = vadd.f32 0.0, %v1731
    %v1733 = vpop.f32.mrb[0].mxu0
    %v1734 = vadd.f32 0.0, %v1733
    %1735 = vdwg.mxu0
    %1736 = vmatprep.subr.mxu0 %v1604
    %1737 = vmatpush1.msra.mxu0 %v1603
    %1738 = vmatprep.subr.mxu0 %v1608
    %1739 = vmatpush1.msra.mxu0 %v1607
    %1740 = vmatprep.subr.mxu0 %v1612
    %1741 = vmatpush1.msra.mxu0 %v1611
    %1742 = vmatprep.subr.mxu0 %v1616
    %1743 = vmatpush1.msra.mxu0 %v1615
    %1744 = vmatprep.subr.mxu0 %v1620
    %1745 = vmatpush1.msra.mxu0 %v1619
    %1746 = vmatprep.subr.mxu0 %v1624
    %1747 = vmatpush1.msra.mxu0 %v1623
    %1748 = vmatprep.subr.mxu0 %v1628
    %1749 = vmatpush1.msra.mxu0 %v1627
    %1750 = vmatprep.subr.mxu0 %v1632
    %1751 = vmatpush1.msra.mxu0 %v1631
    %1752 = vmatprep.subr.mxu0 %v1636
    %1753 = vmatpush1.msra.mxu0 %v1635
    %1754 = vmatprep.subr.mxu0 %v1640
    %1755 = vmatpush1.msra.mxu0 %v1639
    %1756 = vmatprep.subr.mxu0 %v1644
    %1757 = vmatpush1.msra.mxu0 %v1643
    %1758 = vmatprep.subr.mxu0 %v1648
    %1759 = vmatpush1.msra.mxu0 %v1647
    %1760 = vmatprep.subr.mxu0 %v1652
    %1761 = vmatpush1.msra.mxu0 %v1651
    %1762 = vmatprep.subr.mxu0 %v1656
    %1763 = vmatpush1.msra.mxu0 %v1655
    %1764 = vmatprep.subr.mxu0 %v1660
    %1765 = vmatpush1.msra.mxu0 %v1659
    %1766 = vmatprep.subr.mxu0 %v1664
    %1767 = vmatpush1.msra.mxu0 %v1663
    %1768 = vmatprep.subr.mxu0 0.0
    %1769 = vmatpush1.msra.mxu0 0.0
    %1770 = vmatprep.subr.mxu0 0.0
    %1771 = vmatpush1.msra.mxu0 0.0
    %1772 = vmatprep.subr.mxu0 0.0
    %1773 = vmatpush1.msra.mxu0 0.0
    %1774 = vmatprep.subr.mxu0 0.0
    %1775 = vmatpush1.msra.mxu0 0.0
    %1776 = vmatprep.subr.mxu0 0.0
    %1777 = vmatpush1.msra.mxu0 0.0
    %1778 = vmatprep.subr.mxu0 0.0
    %1779 = vmatpush1.msra.mxu0 0.0
    %1780 = vmatprep.subr.mxu0 0.0
    %1781 = vmatpush1.msra.mxu0 0.0
    %1782 = vmatprep.subr.mxu0 0.0
    %1783 = vmatpush1.msra.mxu0 0.0
    %1784 = vmatprep.subr.mxu0 0.0
    %1785 = vmatpush1.msra.mxu0 0.0
    %1786 = vmatprep.subr.mxu0 0.0
    %1787 = vmatpush1.msra.mxu0 0.0
    %1788 = vmatprep.subr.mxu0 0.0
    %1789 = vmatpush1.msra.mxu0 0.0
    %1790 = vmatprep.subr.mxu0 0.0
    %1791 = vmatpush1.msra.mxu0 0.0
    %1792 = vmatprep.subr.mxu0 0.0
    %1793 = vmatpush1.msra.mxu0 0.0
    %1794 = vmatprep.subr.mxu0 0.0
    %1795 = vmatpush1.msra.mxu0 0.0
    %1796 = vmatprep.subr.mxu0 0.0
    %1797 = vmatpush1.msra.mxu0 0.0
    %1798 = vmatprep.subr.mxu0 0.0
    %1799 = vmatpush1.msra.mxu0 0.0
    %1800 = vmatprep.mubr.f32.mxu0 0.0
    %1801 = vmatmul.mubr.f32.gmra.mrb[0].mxu0 %v1600
    %v1802 = vpop.f32.mrb[0].mxu0
    %v1803 = vadd.f32 0.0, %v1802
    %v1804 = vpop.f32.mrb[0].mxu0
    %v1805 = vadd.f32 0.0, %v1804
    %1806 = vdwg.mxu0
    %v1807 = vld [vmem:[%s1527] sm:$0xff]
    %v1808 = vld [vmem:[%s1527 + $0x8] sm:$0xff]
    %v1809 = vadd.f32 %v1732, %v1807
    %v1810 = vadd.f32 %v1734, %v1808
    %v1811 = vld [vmem:[%s1520 + $0x10] sm:$0xff]
    %v1812 = vld [vmem:[%s1520 + $0x18] sm:$0xff]
    %v1813 = vadd.f32 %v1803, %v1811
    %v1814 = vadd.f32 %v1805, %v1812
    %v1815 = vxor.u32 %v1809, 2147483648
    %v1816 = vxor.u32 %v1810, 2147483648
    %v1817 = vmul.f32 %v1815, 1.442695
    %v1818 = vpow.pop %v1817
    %v1819 = vmul.f32 %v1816, 1.442695
    %v1820 = vpow.pop %v1819
    %v1821 = vadd.f32 %v1818, 1.0
    %v1822 = vadd.f32 %v1820, 1.0
    %v1823 = vrcp.pop %v1821
    %v1824 = vmul.f32 1.0, %v1823
    %v1825 = vrcp.pop %v1822
    %v1826 = vmul.f32 1.0, %v1825
    %v1827 = vtanh.pop %v1810
    %v1828 = vmul.f32 %v1824, %v1555
    %1830 = vrot.lane.b32.xlu0 %v1827, 64
    %v1831 = vpop.permute.xlu0 %1830
    %v1833 = vmul.f32 %v1824, %v1831
    %1835 = vrot.lane.b32.xlu0 %v1833, 64
    %v1836 = vpop.permute.xlu0 %1835
    %v1838 = vadd.f32 %v1828, %v1836
    %v1839 = vtanh.pop %v1838
    %1841 = vrot.lane.b32.xlu0 %v1839, 64
    %v1842 = vpop.permute.xlu0 %1841
    %v1844 = vmul.f32 %v1826, %v1842
    %v1845 = vxor.u32 %v1813, 2147483648
    %v1846 = vxor.u32 %v1814, 2147483648
    %v1847 = vmul.f32 %v1845, 1.442695
    %v1848 = vpow.pop %v1847
    %v1849 = vmul.f32 %v1846, 1.442695
    %v1850 = vpow.pop %v1849
    %v1851 = vadd.f32 %v1848, 1.0
    %v1852 = vadd.f32 %v1850, 1.0
    %v1853 = vrcp.pop %v1851
    %v1854 = vmul.f32 1.0, %v1853
    %v1855 = vrcp.pop %v1852
    %v1856 = vmul.f32 1.0, %v1855
    %v1857 = vtanh.pop %v1814
    %v1858 = vmul.f32 %v1854, %v1585
    %1860 = vrot.lane.b32.xlu0 %v1857, 64
    %v1861 = vpop.permute.xlu0 %1860
    %v1863 = vmul.f32 %v1854, %v1861
    %1865 = vrot.lane.b32.xlu0 %v1863, 64
    %v1866 = vpop.permute.xlu0 %1865
    %v1868 = vadd.f32 %v1858, %v1866
    %v1869 = vtanh.pop %v1868
    %1871 = vrot.lane.b32.xlu0 %v1869, 64
    %v1872 = vpop.permute.xlu0 %1871
    %v1874 = vmul.f32 %v1856, %v1872
    %s1875 = scalar_lea.vmem [#allocation3], 32
    %1876 = vst.msk [vmem:[%s1875] sm:$0xff] %vm163, %v1844
    %s1877 = scalar_lea.vmem [#allocation4], 24
    %1878 = vst.msk [vmem:[%s1877] sm:$0xff] %vm163, %v1874
    %1880 = vrot.lane.b32.xlu0 %v1874, 64
    %v1881 = vpop.permute.xlu0 %1880
    %v1883 = vsel %vm163, %v1844, %v1881
    %v1884 = vld [vmem:[#allocation10] sm:$0xff]
    %v1885 = vld [vmem:[#allocation10 + $0x8] sm:$0xff]
    %v1886 = vld [vmem:[#allocation10 + $0x10] sm:$0xff]
    %v1887 = vld [vmem:[#allocation10 + $0x18] sm:$0xff]
    %v1888 = vld [vmem:[#allocation10 + $0x20] sm:$0xff]
    %v1889 = vld [vmem:[#allocation10 + $0x28] sm:$0xff]
    %v1890 = vld [vmem:[#allocation10 + $0x30] sm:$0xff]
    %v1891 = vld [vmem:[#allocation10 + $0x38] sm:$0xff]
    %v1892 = vld [vmem:[#allocation10 + $0x40] sm:$0xff]
    %v1893 = vld [vmem:[#allocation10 + $0x48] sm:$0xff]
    %v1894 = vld [vmem:[#allocation10 + $0x50] sm:$0xff]
    %v1895 = vld [vmem:[#allocation10 + $0x58] sm:$0xff]
    %v1896 = vld [vmem:[#allocation10 + $0x60] sm:$0xff]
    %v1897 = vld [vmem:[#allocation10 + $0x68] sm:$0xff]
    %v1898 = vld [vmem:[#allocation10 + $0x70] sm:$0xff]
    %v1899 = vld [vmem:[#allocation10 + $0x78] sm:$0xff]
    %v1900 = vld [vmem:[#allocation10 + $0x80] sm:$0xff]
    %v1901 = vld [vmem:[#allocation10 + $0x88] sm:$0xff]
    %v1902 = vld [vmem:[#allocation10 + $0x90] sm:$0xff]
    %v1903 = vld [vmem:[#allocation10 + $0x98] sm:$0xff]
    %v1904 = vld [vmem:[#allocation10 + $0xa0] sm:$0xff]
    %v1905 = vld [vmem:[#allocation10 + $0xa8] sm:$0xff]
    %v1906 = vld [vmem:[#allocation10 + $0xb0] sm:$0xff]
    %v1907 = vld [vmem:[#allocation10 + $0xb8] sm:$0xff]
    %v1908 = vld [vmem:[#allocation10 + $0xc0] sm:$0xff]
    %v1909 = vld [vmem:[#allocation10 + $0xc8] sm:$0xff]
    %v1910 = vld [vmem:[#allocation10 + $0xd0] sm:$0xff]
    %v1911 = vld [vmem:[#allocation10 + $0xd8] sm:$0xff]
    %v1912 = vld [vmem:[#allocation10 + $0xe0] sm:$0xff]
    %v1913 = vld [vmem:[#allocation10 + $0xe8] sm:$0xff]
    %v1914 = vld [vmem:[#allocation10 + $0xf0] sm:$0xff]
    %v1915 = vld [vmem:[#allocation10 + $0xf8] sm:$0xff]
    %v1916 = vld [vmem:[#allocation10 + $0x100] sm:$0xff]
    %v1917 = vld [vmem:[#allocation10 + $0x108] sm:$0xff]
    %v1918 = vld [vmem:[#allocation10 + $0x110] sm:$0xff]
    %v1919 = vld [vmem:[#allocation10 + $0x118] sm:$0xff]
    %v1920 = vld [vmem:[#allocation10 + $0x120] sm:$0xff]
    %v1921 = vld [vmem:[#allocation10 + $0x128] sm:$0xff]
    %v1922 = vld [vmem:[#allocation10 + $0x130] sm:$0xff]
    %v1923 = vld [vmem:[#allocation10 + $0x138] sm:$0xff]
    %v1924 = vld [vmem:[#allocation10 + $0x140] sm:$0xff]
    %v1925 = vld [vmem:[#allocation10 + $0x148] sm:$0xff]
    %v1926 = vld [vmem:[#allocation10 + $0x150] sm:$0xff]
    %v1927 = vld [vmem:[#allocation10 + $0x158] sm:$0xff]
    %v1928 = vld [vmem:[#allocation10 + $0x160] sm:$0xff]
    %v1929 = vld [vmem:[#allocation10 + $0x168] sm:$0xff]
    %v1930 = vld [vmem:[#allocation10 + $0x170] sm:$0xff]
    %v1931 = vld [vmem:[#allocation10 + $0x178] sm:$0xff]
    %v1932 = vld [vmem:[#allocation10 + $0x180] sm:$0xff]
    %v1933 = vld [vmem:[#allocation10 + $0x188] sm:$0xff]
    %v1934 = vld [vmem:[#allocation10 + $0x190] sm:$0xff]
    %v1935 = vld [vmem:[#allocation10 + $0x198] sm:$0xff]
    %v1936 = vld [vmem:[#allocation10 + $0x1a0] sm:$0xff]
    %v1937 = vld [vmem:[#allocation10 + $0x1a8] sm:$0xff]
    %v1938 = vld [vmem:[#allocation10 + $0x1b0] sm:$0xff]
    %v1939 = vld [vmem:[#allocation10 + $0x1b8] sm:$0xff]
    %v1940 = vld [vmem:[#allocation10 + $0x1c0] sm:$0xff]
    %v1941 = vld [vmem:[#allocation10 + $0x1c8] sm:$0xff]
    %v1942 = vld [vmem:[#allocation10 + $0x1d0] sm:$0xff]
    %v1943 = vld [vmem:[#allocation10 + $0x1d8] sm:$0xff]
    %v1944 = vld [vmem:[#allocation10 + $0x1e0] sm:$0xff]
    %v1945 = vld [vmem:[#allocation10 + $0x1e8] sm:$0xff]
    %v1946 = vld [vmem:[#allocation10 + $0x1f0] sm:$0xff]
    %v1947 = vld [vmem:[#allocation10 + $0x1f8] sm:$0xff]
    %1948 = vmatprep.subr.mxu0 %v1885
    %1949 = vmatpush1.msra.mxu0 %v1884
    %1950 = vmatprep.subr.mxu0 %v1889
    %1951 = vmatpush1.msra.mxu0 %v1888
    %1952 = vmatprep.subr.mxu0 %v1893
    %1953 = vmatpush1.msra.mxu0 %v1892
    %1954 = vmatprep.subr.mxu0 %v1897
    %1955 = vmatpush1.msra.mxu0 %v1896
    %1956 = vmatprep.subr.mxu0 %v1901
    %1957 = vmatpush1.msra.mxu0 %v1900
    %1958 = vmatprep.subr.mxu0 %v1905
    %1959 = vmatpush1.msra.mxu0 %v1904
    %1960 = vmatprep.subr.mxu0 %v1909
    %1961 = vmatpush1.msra.mxu0 %v1908
    %1962 = vmatprep.subr.mxu0 %v1913
    %1963 = vmatpush1.msra.mxu0 %v1912
    %1964 = vmatprep.subr.mxu0 %v1917
    %1965 = vmatpush1.msra.mxu0 %v1916
    %1966 = vmatprep.subr.mxu0 %v1921
    %1967 = vmatpush1.msra.mxu0 %v1920
    %1968 = vmatprep.subr.mxu0 %v1925
    %1969 = vmatpush1.msra.mxu0 %v1924
    %1970 = vmatprep.subr.mxu0 %v1929
    %1971 = vmatpush1.msra.mxu0 %v1928
    %1972 = vmatprep.subr.mxu0 %v1933
    %1973 = vmatpush1.msra.mxu0 %v1932
    %1974 = vmatprep.subr.mxu0 %v1937
    %1975 = vmatpush1.msra.mxu0 %v1936
    %1976 = vmatprep.subr.mxu0 %v1941
    %1977 = vmatpush1.msra.mxu0 %v1940
    %1978 = vmatprep.subr.mxu0 %v1945
    %1979 = vmatpush1.msra.mxu0 %v1944
    %1980 = vmatprep.subr.mxu0 0.0
    %1981 = vmatpush1.msra.mxu0 0.0
    %1982 = vmatprep.subr.mxu0 0.0
    %1983 = vmatpush1.msra.mxu0 0.0
    %1984 = vmatprep.subr.mxu0 0.0
    %1985 = vmatpush1.msra.mxu0 0.0
    %1986 = vmatprep.subr.mxu0 0.0
    %1987 = vmatpush1.msra.mxu0 0.0
    %1988 = vmatprep.subr.mxu0 0.0
    %1989 = vmatpush1.msra.mxu0 0.0
    %1990 = vmatprep.subr.mxu0 0.0
    %1991 = vmatpush1.msra.mxu0 0.0
    %1992 = vmatprep.subr.mxu0 0.0
    %1993 = vmatpush1.msra.mxu0 0.0
    %1994 = vmatprep.subr.mxu0 0.0
    %1995 = vmatpush1.msra.mxu0 0.0
    %1996 = vmatprep.subr.mxu0 0.0
    %1997 = vmatpush1.msra.mxu0 0.0
    %1998 = vmatprep.subr.mxu0 0.0
    %1999 = vmatpush1.msra.mxu0 0.0
    %2000 = vmatprep.subr.mxu0 0.0
    %2001 = vmatpush1.msra.mxu0 0.0
    %2002 = vmatprep.subr.mxu0 0.0
    %2003 = vmatpush1.msra.mxu0 0.0
    %2004 = vmatprep.subr.mxu0 0.0
    %2005 = vmatpush1.msra.mxu0 0.0
    %2006 = vmatprep.subr.mxu0 0.0
    %2007 = vmatpush1.msra.mxu0 0.0
    %2008 = vmatprep.subr.mxu0 0.0
    %2009 = vmatpush1.msra.mxu0 0.0
    %2010 = vmatprep.subr.mxu0 0.0
    %2011 = vmatpush1.msra.mxu0 0.0
    %2012 = vmatprep.mubr.f32.mxu0 0.0
    %2013 = vmatmul.mubr.f32.gmra.mrb[0].mxu0 %v1883
    %v2014 = vpop.f32.mrb[0].mxu0
    %v2015 = vadd.f32 0.0, %v2014
    %v2016 = vpop.f32.mrb[0].mxu0
    %v2017 = vadd.f32 0.0, %v2016
    %2018 = vdwg.mxu0
    %2019 = vmatprep.subr.mxu0 %v1887
    %2020 = vmatpush1.msra.mxu0 %v1886
    %2021 = vmatprep.subr.mxu0 %v1891
    %2022 = vmatpush1.msra.mxu0 %v1890
    %2023 = vmatprep.subr.mxu0 %v1895
    %2024 = vmatpush1.msra.mxu0 %v1894
    %2025 = vmatprep.subr.mxu0 %v1899
    %2026 = vmatpush1.msra.mxu0 %v1898
    %2027 = vmatprep.subr.mxu0 %v1903
    %2028 = vmatpush1.msra.mxu0 %v1902
    %2029 = vmatprep.subr.mxu0 %v1907
    %2030 = vmatpush1.msra.mxu0 %v1906
    %2031 = vmatprep.subr.mxu0 %v1911
    %2032 = vmatpush1.msra.mxu0 %v1910
    %2033 = vmatprep.subr.mxu0 %v1915
    %2034 = vmatpush1.msra.mxu0 %v1914
    %2035 = vmatprep.subr.mxu0 %v1919
    %2036 = vmatpush1.msra.mxu0 %v1918
    %2037 = vmatprep.subr.mxu0 %v1923
    %2038 = vmatpush1.msra.mxu0 %v1922
    %2039 = vmatprep.subr.mxu0 %v1927
    %2040 = vmatpush1.msra.mxu0 %v1926
    %2041 = vmatprep.subr.mxu0 %v1931
    %2042 = vmatpush1.msra.mxu0 %v1930
    %2043 = vmatprep.subr.mxu0 %v1935
    %2044 = vmatpush1.msra.mxu0 %v1934
    %2045 = vmatprep.subr.mxu0 %v1939
    %2046 = vmatpush1.msra.mxu0 %v1938
    %2047 = vmatprep.subr.mxu0 %v1943
    %2048 = vmatpush1.msra.mxu0 %v1942
    %2049 = vmatprep.subr.mxu0 %v1947
    %2050 = vmatpush1.msra.mxu0 %v1946
    %2051 = vmatprep.subr.mxu0 0.0
    %2052 = vmatpush1.msra.mxu0 0.0
    %2053 = vmatprep.subr.mxu0 0.0
    %2054 = vmatpush1.msra.mxu0 0.0
    %2055 = vmatprep.subr.mxu0 0.0
    %2056 = vmatpush1.msra.mxu0 0.0
    %2057 = vmatprep.subr.mxu0 0.0
    %2058 = vmatpush1.msra.mxu0 0.0
    %2059 = vmatprep.subr.mxu0 0.0
    %2060 = vmatpush1.msra.mxu0 0.0
    %2061 = vmatprep.subr.mxu0 0.0
    %2062 = vmatpush1.msra.mxu0 0.0
    %2063 = vmatprep.subr.mxu0 0.0
    %2064 = vmatpush1.msra.mxu0 0.0
    %2065 = vmatprep.subr.mxu0 0.0
    %2066 = vmatpush1.msra.mxu0 0.0
    %2067 = vmatprep.subr.mxu0 0.0
    %2068 = vmatpush1.msra.mxu0 0.0
    %2069 = vmatprep.subr.mxu0 0.0
    %2070 = vmatpush1.msra.mxu0 0.0
    %2071 = vmatprep.subr.mxu0 0.0
    %2072 = vmatpush1.msra.mxu0 0.0
    %2073 = vmatprep.subr.mxu0 0.0
    %2074 = vmatpush1.msra.mxu0 0.0
    %2075 = vmatprep.subr.mxu0 0.0
    %2076 = vmatpush1.msra.mxu0 0.0
    %2077 = vmatprep.subr.mxu0 0.0
    %2078 = vmatpush1.msra.mxu0 0.0
    %2079 = vmatprep.subr.mxu0 0.0
    %2080 = vmatpush1.msra.mxu0 0.0
    %2081 = vmatprep.subr.mxu0 0.0
    %2082 = vmatpush1.msra.mxu0 0.0
    %2083 = vmatprep.mubr.f32.mxu0 0.0
    %2084 = vmatmul.mubr.f32.gmra.mrb[0].mxu0 %v1883
    %v2085 = vpop.f32.mrb[0].mxu0
    %v2086 = vadd.f32 0.0, %v2085
    %v2087 = vpop.f32.mrb[0].mxu0
    %v2088 = vadd.f32 0.0, %v2087
    %2089 = vdwg.mxu0
    %v2090 = vld [vmem:[%s1238] sm:$0xff]
    %v2091 = vld [vmem:[%s1238 + $0x8] sm:$0xff]
    %v2092 = vadd.f32 %v2015, %v2090
    %v2093 = vadd.f32 %v2017, %v2091
    %v2094 = vld [vmem:[%s1231 + $0x10] sm:$0xff]
    %v2095 = vld [vmem:[%s1231 + $0x18] sm:$0xff]
    %v2096 = vadd.f32 %v2086, %v2094
    %v2097 = vadd.f32 %v2088, %v2095
    %v2098 = vxor.u32 %v2092, 2147483648
    %v2099 = vxor.u32 %v2093, 2147483648
    %v2100 = vmul.f32 %v2098, 1.442695
    %v2101 = vpow.pop %v2100
    %v2102 = vmul.f32 %v2099, 1.442695
    %v2103 = vpow.pop %v2102
    %v2104 = vadd.f32 %v2101, 1.0
    %v2105 = vadd.f32 %v2103, 1.0
    %v2106 = vrcp.pop %v2104
    %v2107 = vmul.f32 1.0, %v2106
    %v2108 = vrcp.pop %v2105
    %v2109 = vmul.f32 1.0, %v2108
    %v2110 = vtanh.pop %v2093
    %v2111 = vmul.f32 %v2107, %v1838
    %2113 = vrot.lane.b32.xlu0 %v2110, 64
    %v2114 = vpop.permute.xlu0 %2113
    %v2116 = vmul.f32 %v2107, %v2114
    %2118 = vrot.lane.b32.xlu0 %v2116, 64
    %v2119 = vpop.permute.xlu0 %2118
    %v2121 = vadd.f32 %v2111, %v2119
    %v2122 = vtanh.pop %v2121
    %2124 = vrot.lane.b32.xlu0 %v2122, 64
    %v2125 = vpop.permute.xlu0 %2124
    %v2127 = vmul.f32 %v2109, %v2125
    %v2128 = vxor.u32 %v2096, 2147483648
    %v2129 = vxor.u32 %v2097, 2147483648
    %v2130 = vmul.f32 %v2128, 1.442695
    %v2131 = vpow.pop %v2130
    %v2132 = vmul.f32 %v2129, 1.442695
    %v2133 = vpow.pop %v2132
    %v2134 = vadd.f32 %v2131, 1.0
    %v2135 = vadd.f32 %v2133, 1.0
    %v2136 = vrcp.pop %v2134
    %v2137 = vmul.f32 1.0, %v2136
    %v2138 = vrcp.pop %v2135
    %v2139 = vmul.f32 1.0, %v2138
    %v2140 = vtanh.pop %v2097
    %v2141 = vmul.f32 %v2137, %v1868
    %2143 = vrot.lane.b32.xlu0 %v2140, 64
    %v2144 = vpop.permute.xlu0 %2143
    %v2146 = vmul.f32 %v2137, %v2144
    %2148 = vrot.lane.b32.xlu0 %v2146, 64
    %v2149 = vpop.permute.xlu0 %2148
    %v2151 = vadd.f32 %v2141, %v2149
    %v2152 = vtanh.pop %v2151
    %2154 = vrot.lane.b32.xlu0 %v2152, 64
    %v2155 = vpop.permute.xlu0 %2154
    %v2157 = vmul.f32 %v2139, %v2155
    %s2158 = scalar_lea.vmem [#allocation3], 40
    %2159 = vst.msk [vmem:[%s2158] sm:$0xff] %vm163, %v2127
    %s2160 = scalar_lea.vmem [#allocation4], 16
    %2161 = vst.msk [vmem:[%s2160] sm:$0xff] %vm163, %v2157
    %2163 = vrot.lane.b32.xlu0 %v2157, 64
    %v2164 = vpop.permute.xlu0 %2163
    %v2166 = vsel %vm163, %v2127, %v2164
    %v2167 = vld [vmem:[#allocation10] sm:$0xff]
    %v2168 = vld [vmem:[#allocation10 + $0x8] sm:$0xff]
    %v2169 = vld [vmem:[#allocation10 + $0x10] sm:$0xff]
    %v2170 = vld [vmem:[#allocation10 + $0x18] sm:$0xff]
    %v2171 = vld [vmem:[#allocation10 + $0x20] sm:$0xff]
    %v2172 = vld [vmem:[#allocation10 + $0x28] sm:$0xff]
    %v2173 = vld [vmem:[#allocation10 + $0x30] sm:$0xff]
    %v2174 = vld [vmem:[#allocation10 + $0x38] sm:$0xff]
    %v2175 = vld [vmem:[#allocation10 + $0x40] sm:$0xff]
    %v2176 = vld [vmem:[#allocation10 + $0x48] sm:$0xff]
    %v2177 = vld [vmem:[#allocation10 + $0x50] sm:$0xff]
    %v2178 = vld [vmem:[#allocation10 + $0x58] sm:$0xff]
    %v2179 = vld [vmem:[#allocation10 + $0x60] sm:$0xff]
    %v2180 = vld [vmem:[#allocation10 + $0x68] sm:$0xff]
    %v2181 = vld [vmem:[#allocation10 + $0x70] sm:$0xff]
    %v2182 = vld [vmem:[#allocation10 + $0x78] sm:$0xff]
    %v2183 = vld [vmem:[#allocation10 + $0x80] sm:$0xff]
    %v2184 = vld [vmem:[#allocation10 + $0x88] sm:$0xff]
    %v2185 = vld [vmem:[#allocation10 + $0x90] sm:$0xff]
    %v2186 = vld [vmem:[#allocation10 + $0x98] sm:$0xff]
    %v2187 = vld [vmem:[#allocation10 + $0xa0] sm:$0xff]
    %v2188 = vld [vmem:[#allocation10 + $0xa8] sm:$0xff]
    %v2189 = vld [vmem:[#allocation10 + $0xb0] sm:$0xff]
    %v2190 = vld [vmem:[#allocation10 + $0xb8] sm:$0xff]
    %v2191 = vld [vmem:[#allocation10 + $0xc0] sm:$0xff]
    %v2192 = vld [vmem:[#allocation10 + $0xc8] sm:$0xff]
    %v2193 = vld [vmem:[#allocation10 + $0xd0] sm:$0xff]
    %v2194 = vld [vmem:[#allocation10 + $0xd8] sm:$0xff]
    %v2195 = vld [vmem:[#allocation10 + $0xe0] sm:$0xff]
    %v2196 = vld [vmem:[#allocation10 + $0xe8] sm:$0xff]
    %v2197 = vld [vmem:[#allocation10 + $0xf0] sm:$0xff]
    %v2198 = vld [vmem:[#allocation10 + $0xf8] sm:$0xff]
    %v2199 = vld [vmem:[#allocation10 + $0x100] sm:$0xff]
    %v2200 = vld [vmem:[#allocation10 + $0x108] sm:$0xff]
    %v2201 = vld [vmem:[#allocation10 + $0x110] sm:$0xff]
    %v2202 = vld [vmem:[#allocation10 + $0x118] sm:$0xff]
    %v2203 = vld [vmem:[#allocation10 + $0x120] sm:$0xff]
    %v2204 = vld [vmem:[#allocation10 + $0x128] sm:$0xff]
    %v2205 = vld [vmem:[#allocation10 + $0x130] sm:$0xff]
    %v2206 = vld [vmem:[#allocation10 + $0x138] sm:$0xff]
    %v2207 = vld [vmem:[#allocation10 + $0x140] sm:$0xff]
    %v2208 = vld [vmem:[#allocation10 + $0x148] sm:$0xff]
    %v2209 = vld [vmem:[#allocation10 + $0x150] sm:$0xff]
    %v2210 = vld [vmem:[#allocation10 + $0x158] sm:$0xff]
    %v2211 = vld [vmem:[#allocation10 + $0x160] sm:$0xff]
    %v2212 = vld [vmem:[#allocation10 + $0x168] sm:$0xff]
    %v2213 = vld [vmem:[#allocation10 + $0x170] sm:$0xff]
    %v2214 = vld [vmem:[#allocation10 + $0x178] sm:$0xff]
    %v2215 = vld [vmem:[#allocation10 + $0x180] sm:$0xff]
    %v2216 = vld [vmem:[#allocation10 + $0x188] sm:$0xff]
    %v2217 = vld [vmem:[#allocation10 + $0x190] sm:$0xff]
    %v2218 = vld [vmem:[#allocation10 + $0x198] sm:$0xff]
    %v2219 = vld [vmem:[#allocation10 + $0x1a0] sm:$0xff]
    %v2220 = vld [vmem:[#allocation10 + $0x1a8] sm:$0xff]
    %v2221 = vld [vmem:[#allocation10 + $0x1b0] sm:$0xff]
    %v2222 = vld [vmem:[#allocation10 + $0x1b8] sm:$0xff]
    %v2223 = vld [vmem:[#allocation10 + $0x1c0] sm:$0xff]
    %v2224 = vld [vmem:[#allocation10 + $0x1c8] sm:$0xff]
    %v2225 = vld [vmem:[#allocation10 + $0x1d0] sm:$0xff]
    %v2226 = vld [vmem:[#allocation10 + $0x1d8] sm:$0xff]
    %v2227 = vld [vmem:[#allocation10 + $0x1e0] sm:$0xff]
    %v2228 = vld [vmem:[#allocation10 + $0x1e8] sm:$0xff]
    %v2229 = vld [vmem:[#allocation10 + $0x1f0] sm:$0xff]
    %v2230 = vld [vmem:[#allocation10 + $0x1f8] sm:$0xff]
    %2231 = vmatprep.subr.mxu0 %v2168
    %2232 = vmatpush1.msra.mxu0 %v2167
    %2233 = vmatprep.subr.mxu0 %v2172
    %2234 = vmatpush1.msra.mxu0 %v2171
    %2235 = vmatprep.subr.mxu0 %v2176
    %2236 = vmatpush1.msra.mxu0 %v2175
    %2237 = vmatprep.subr.mxu0 %v2180
    %2238 = vmatpush1.msra.mxu0 %v2179
    %2239 = vmatprep.subr.mxu0 %v2184
    %2240 = vmatpush1.msra.mxu0 %v2183
    %2241 = vmatprep.subr.mxu0 %v2188
    %2242 = vmatpush1.msra.mxu0 %v2187
    %2243 = vmatprep.subr.mxu0 %v2192
    %2244 = vmatpush1.msra.mxu0 %v2191
    %2245 = vmatprep.subr.mxu0 %v2196
    %2246 = vmatpush1.msra.mxu0 %v2195
    %2247 = vmatprep.subr.mxu0 %v2200
    %2248 = vmatpush1.msra.mxu0 %v2199
    %2249 = vmatprep.subr.mxu0 %v2204
    %2250 = vmatpush1.msra.mxu0 %v2203
    %2251 = vmatprep.subr.mxu0 %v2208
    %2252 = vmatpush1.msra.mxu0 %v2207
    %2253 = vmatprep.subr.mxu0 %v2212
    %2254 = vmatpush1.msra.mxu0 %v2211
    %2255 = vmatprep.subr.mxu0 %v2216
    %2256 = vmatpush1.msra.mxu0 %v2215
    %2257 = vmatprep.subr.mxu0 %v2220
    %2258 = vmatpush1.msra.mxu0 %v2219
    %2259 = vmatprep.subr.mxu0 %v2224
    %2260 = vmatpush1.msra.mxu0 %v2223
    %2261 = vmatprep.subr.mxu0 %v2228
    %2262 = vmatpush1.msra.mxu0 %v2227
    %2263 = vmatprep.subr.mxu0 0.0
    %2264 = vmatpush1.msra.mxu0 0.0
    %2265 = vmatprep.subr.mxu0 0.0
    %2266 = vmatpush1.msra.mxu0 0.0
    %2267 = vmatprep.subr.mxu0 0.0
    %2268 = vmatpush1.msra.mxu0 0.0
    %2269 = vmatprep.subr.mxu0 0.0
    %2270 = vmatpush1.msra.mxu0 0.0
    %2271 = vmatprep.subr.mxu0 0.0
    %2272 = vmatpush1.msra.mxu0 0.0
    %2273 = vmatprep.subr.mxu0 0.0
    %2274 = vmatpush1.msra.mxu0 0.0
    %2275 = vmatprep.subr.mxu0 0.0
    %2276 = vmatpush1.msra.mxu0 0.0
    %2277 = vmatprep.subr.mxu0 0.0
    %2278 = vmatpush1.msra.mxu0 0.0
    %2279 = vmatprep.subr.mxu0 0.0
    %2280 = vmatpush1.msra.mxu0 0.0
    %2281 = vmatprep.subr.mxu0 0.0
    %2282 = vmatpush1.msra.mxu0 0.0
    %2283 = vmatprep.subr.mxu0 0.0
    %2284 = vmatpush1.msra.mxu0 0.0
    %2285 = vmatprep.subr.mxu0 0.0
    %2286 = vmatpush1.msra.mxu0 0.0
    %2287 = vmatprep.subr.mxu0 0.0
    %2288 = vmatpush1.msra.mxu0 0.0
    %2289 = vmatprep.subr.mxu0 0.0
    %2290 = vmatpush1.msra.mxu0 0.0
    %2291 = vmatprep.subr.mxu0 0.0
    %2292 = vmatpush1.msra.mxu0 0.0
    %2293 = vmatprep.subr.mxu0 0.0
    %2294 = vmatpush1.msra.mxu0 0.0
    %2295 = vmatprep.mubr.f32.mxu0 0.0
    %2296 = vmatmul.mubr.f32.gmra.mrb[0].mxu0 %v2166
    %v2297 = vpop.f32.mrb[0].mxu0
    %v2298 = vadd.f32 0.0, %v2297
    %v2299 = vpop.f32.mrb[0].mxu0
    %v2300 = vadd.f32 0.0, %v2299
    %2301 = vdwg.mxu0
    %2302 = vmatprep.subr.mxu0 %v2170
    %2303 = vmatpush1.msra.mxu0 %v2169
    %2304 = vmatprep.subr.mxu0 %v2174
    %2305 = vmatpush1.msra.mxu0 %v2173
    %2306 = vmatprep.subr.mxu0 %v2178
    %2307 = vmatpush1.msra.mxu0 %v2177
    %2308 = vmatprep.subr.mxu0 %v2182
    %2309 = vmatpush1.msra.mxu0 %v2181
    %2310 = vmatprep.subr.mxu0 %v2186
    %2311 = vmatpush1.msra.mxu0 %v2185
    %2312 = vmatprep.subr.mxu0 %v2190
    %2313 = vmatpush1.msra.mxu0 %v2189
    %2314 = vmatprep.subr.mxu0 %v2194
    %2315 = vmatpush1.msra.mxu0 %v2193
    %2316 = vmatprep.subr.mxu0 %v2198
    %2317 = vmatpush1.msra.mxu0 %v2197
    %2318 = vmatprep.subr.mxu0 %v2202
    %2319 = vmatpush1.msra.mxu0 %v2201
    %2320 = vmatprep.subr.mxu0 %v2206
    %2321 = vmatpush1.msra.mxu0 %v2205
    %2322 = vmatprep.subr.mxu0 %v2210
    %2323 = vmatpush1.msra.mxu0 %v2209
    %2324 = vmatprep.subr.mxu0 %v2214
    %2325 = vmatpush1.msra.mxu0 %v2213
    %2326 = vmatprep.subr.mxu0 %v2218
    %2327 = vmatpush1.msra.mxu0 %v2217
    %2328 = vmatprep.subr.mxu0 %v2222
    %2329 = vmatpush1.msra.mxu0 %v2221
    %2330 = vmatprep.subr.mxu0 %v2226
    %2331 = vmatpush1.msra.mxu0 %v2225
    %2332 = vmatprep.subr.mxu0 %v2230
    %2333 = vmatpush1.msra.mxu0 %v2229
    %2334 = vmatprep.subr.mxu0 0.0
    %2335 = vmatpush1.msra.mxu0 0.0
    %2336 = vmatprep.subr.mxu0 0.0
    %2337 = vmatpush1.msra.mxu0 0.0
    %2338 = vmatprep.subr.mxu0 0.0
    %2339 = vmatpush1.msra.mxu0 0.0
    %2340 = vmatprep.subr.mxu0 0.0
    %2341 = vmatpush1.msra.mxu0 0.0
    %2342 = vmatprep.subr.mxu0 0.0
    %2343 = vmatpush1.msra.mxu0 0.0
    %2344 = vmatprep.subr.mxu0 0.0
    %2345 = vmatpush1.msra.mxu0 0.0
    %2346 = vmatprep.subr.mxu0 0.0
    %2347 = vmatpush1.msra.mxu0 0.0
    %2348 = vmatprep.subr.mxu0 0.0
    %2349 = vmatpush1.msra.mxu0 0.0
    %2350 = vmatprep.subr.mxu0 0.0
    %2351 = vmatpush1.msra.mxu0 0.0
    %2352 = vmatprep.subr.mxu0 0.0
    %2353 = vmatpush1.msra.mxu0 0.0
    %2354 = vmatprep.subr.mxu0 0.0
    %2355 = vmatpush1.msra.mxu0 0.0
    %2356 = vmatprep.subr.mxu0 0.0
    %2357 = vmatpush1.msra.mxu0 0.0
    %2358 = vmatprep.subr.mxu0 0.0
    %2359 = vmatpush1.msra.mxu0 0.0
    %2360 = vmatprep.subr.mxu0 0.0
    %2361 = vmatpush1.msra.mxu0 0.0
    %2362 = vmatprep.subr.mxu0 0.0
    %2363 = vmatpush1.msra.mxu0 0.0
    %2364 = vmatprep.subr.mxu0 0.0
    %2365 = vmatpush1.msra.mxu0 0.0
    %2366 = vmatprep.mubr.f32.mxu0 0.0
    %2367 = vmatmul.mubr.f32.gmra.mrb[0].mxu0 %v2166
    %v2368 = vpop.f32.mrb[0].mxu0
    %v2369 = vadd.f32 0.0, %v2368
    %v2370 = vpop.f32.mrb[0].mxu0
    %v2371 = vadd.f32 0.0, %v2370
    %2372 = vdwg.mxu0
    %v2373 = vld [vmem:[%s949] sm:$0xff]
    %v2374 = vld [vmem:[%s949 + $0x8] sm:$0xff]
    %v2375 = vadd.f32 %v2298, %v2373
    %v2376 = vadd.f32 %v2300, %v2374
    %v2377 = vld [vmem:[%s942 + $0x10] sm:$0xff]
    %v2378 = vld [vmem:[%s942 + $0x18] sm:$0xff]
    %v2379 = vadd.f32 %v2369, %v2377
    %v2380 = vadd.f32 %v2371, %v2378
    %v2381 = vxor.u32 %v2375, 2147483648
    %v2382 = vxor.u32 %v2376, 2147483648
    %v2383 = vmul.f32 %v2381, 1.442695
    %v2384 = vpow.pop %v2383
    %v2385 = vmul.f32 %v2382, 1.442695
    %v2386 = vpow.pop %v2385
    %v2387 = vadd.f32 %v2384, 1.0
    %v2388 = vadd.f32 %v2386, 1.0
    %v2389 = vrcp.pop %v2387
    %v2390 = vmul.f32 1.0, %v2389
    %v2391 = vrcp.pop %v2388
    %v2392 = vmul.f32 1.0, %v2391
    %v2393 = vtanh.pop %v2376
    %v2394 = vmul.f32 %v2390, %v2121
    %2396 = vrot.lane.b32.xlu0 %v2393, 64
    %v2397 = vpop.permute.xlu0 %2396
    %v2399 = vmul.f32 %v2390, %v2397
    %2401 = vrot.lane.b32.xlu0 %v2399, 64
    %v2402 = vpop.permute.xlu0 %2401
    %v2404 = vadd.f32 %v2394, %v2402
    %v2405 = vtanh.pop %v2404
    %2407 = vrot.lane.b32.xlu0 %v2405, 64
    %v2408 = vpop.permute.xlu0 %2407
    %v2410 = vmul.f32 %v2392, %v2408
    %v2411 = vxor.u32 %v2379, 2147483648
    %v2412 = vxor.u32 %v2380, 2147483648
    %v2413 = vmul.f32 %v2411, 1.442695
    %v2414 = vpow.pop %v2413
    %v2415 = vmul.f32 %v2412, 1.442695
    %v2416 = vpow.pop %v2415
    %v2417 = vadd.f32 %v2414, 1.0
    %v2418 = vadd.f32 %v2416, 1.0
    %v2419 = vrcp.pop %v2417
    %v2420 = vmul.f32 1.0, %v2419
    %v2421 = vrcp.pop %v2418
    %v2422 = vmul.f32 1.0, %v2421
    %v2423 = vtanh.pop %v2380
    %v2424 = vmul.f32 %v2420, %v2151
    %2426 = vrot.lane.b32.xlu0 %v2423, 64
    %v2427 = vpop.permute.xlu0 %2426
    %v2429 = vmul.f32 %v2420, %v2427
    %2431 = vrot.lane.b32.xlu0 %v2429, 64
    %v2432 = vpop.permute.xlu0 %2431
    %v2434 = vadd.f32 %v2424, %v2432
    %v2435 = vtanh.pop %v2434
    %2437 = vrot.lane.b32.xlu0 %v2435, 64
    %v2438 = vpop.permute.xlu0 %2437
    %v2440 = vmul.f32 %v2422, %v2438
    %s2441 = scalar_lea.vmem [#allocation3], 48
    %2442 = vst.msk [vmem:[%s2441] sm:$0xff] %vm163, %v2410
    %s2443 = scalar_lea.vmem [#allocation4], 8
    %2444 = vst.msk [vmem:[%s2443] sm:$0xff] %vm163, %v2440
    %2446 = vrot.lane.b32.xlu0 %v2440, 64
    %v2447 = vpop.permute.xlu0 %2446
    %v2449 = vsel %vm163, %v2410, %v2447
    %v2450 = vld [vmem:[#allocation10] sm:$0xff]
    %v2451 = vld [vmem:[#allocation10 + $0x8] sm:$0xff]
    %v2452 = vld [vmem:[#allocation10 + $0x10] sm:$0xff]
    %v2453 = vld [vmem:[#allocation10 + $0x18] sm:$0xff]
    %v2454 = vld [vmem:[#allocation10 + $0x20] sm:$0xff]
    %v2455 = vld [vmem:[#allocation10 + $0x28] sm:$0xff]
    %v2456 = vld [vmem:[#allocation10 + $0x30] sm:$0xff]
    %v2457 = vld [vmem:[#allocation10 + $0x38] sm:$0xff]
    %v2458 = vld [vmem:[#allocation10 + $0x40] sm:$0xff]
    %v2459 = vld [vmem:[#allocation10 + $0x48] sm:$0xff]
    %v2460 = vld [vmem:[#allocation10 + $0x50] sm:$0xff]
    %v2461 = vld [vmem:[#allocation10 + $0x58] sm:$0xff]
    %v2462 = vld [vmem:[#allocation10 + $0x60] sm:$0xff]
    %v2463 = vld [vmem:[#allocation10 + $0x68] sm:$0xff]
    %v2464 = vld [vmem:[#allocation10 + $0x70] sm:$0xff]
    %v2465 = vld [vmem:[#allocation10 + $0x78] sm:$0xff]
    %v2466 = vld [vmem:[#allocation10 + $0x80] sm:$0xff]
    %v2467 = vld [vmem:[#allocation10 + $0x88] sm:$0xff]
    %v2468 = vld [vmem:[#allocation10 + $0x90] sm:$0xff]
    %v2469 = vld [vmem:[#allocation10 + $0x98] sm:$0xff]
    %v2470 = vld [vmem:[#allocation10 + $0xa0] sm:$0xff]
    %v2471 = vld [vmem:[#allocation10 + $0xa8] sm:$0xff]
    %v2472 = vld [vmem:[#allocation10 + $0xb0] sm:$0xff]
    %v2473 = vld [vmem:[#allocation10 + $0xb8] sm:$0xff]
    %v2474 = vld [vmem:[#allocation10 + $0xc0] sm:$0xff]
    %v2475 = vld [vmem:[#allocation10 + $0xc8] sm:$0xff]
    %v2476 = vld [vmem:[#allocation10 + $0xd0] sm:$0xff]
    %v2477 = vld [vmem:[#allocation10 + $0xd8] sm:$0xff]
    %v2478 = vld [vmem:[#allocation10 + $0xe0] sm:$0xff]
    %v2479 = vld [vmem:[#allocation10 + $0xe8] sm:$0xff]
    %v2480 = vld [vmem:[#allocation10 + $0xf0] sm:$0xff]
    %v2481 = vld [vmem:[#allocation10 + $0xf8] sm:$0xff]
    %v2482 = vld [vmem:[#allocation10 + $0x100] sm:$0xff]
    %v2483 = vld [vmem:[#allocation10 + $0x108] sm:$0xff]
    %v2484 = vld [vmem:[#allocation10 + $0x110] sm:$0xff]
    %v2485 = vld [vmem:[#allocation10 + $0x118] sm:$0xff]
    %v2486 = vld [vmem:[#allocation10 + $0x120] sm:$0xff]
    %v2487 = vld [vmem:[#allocation10 + $0x128] sm:$0xff]
    %v2488 = vld [vmem:[#allocation10 + $0x130] sm:$0xff]
    %v2489 = vld [vmem:[#allocation10 + $0x138] sm:$0xff]
    %v2490 = vld [vmem:[#allocation10 + $0x140] sm:$0xff]
    %v2491 = vld [vmem:[#allocation10 + $0x148] sm:$0xff]
    %v2492 = vld [vmem:[#allocation10 + $0x150] sm:$0xff]
    %v2493 = vld [vmem:[#allocation10 + $0x158] sm:$0xff]
    %v2494 = vld [vmem:[#allocation10 + $0x160] sm:$0xff]
    %v2495 = vld [vmem:[#allocation10 + $0x168] sm:$0xff]
    %v2496 = vld [vmem:[#allocation10 + $0x170] sm:$0xff]
    %v2497 = vld [vmem:[#allocation10 + $0x178] sm:$0xff]
    %v2498 = vld [vmem:[#allocation10 + $0x180] sm:$0xff]
    %v2499 = vld [vmem:[#allocation10 + $0x188] sm:$0xff]
    %v2500 = vld [vmem:[#allocation10 + $0x190] sm:$0xff]
    %v2501 = vld [vmem:[#allocation10 + $0x198] sm:$0xff]
    %v2502 = vld [vmem:[#allocation10 + $0x1a0] sm:$0xff]
    %v2503 = vld [vmem:[#allocation10 + $0x1a8] sm:$0xff]
    %v2504 = vld [vmem:[#allocation10 + $0x1b0] sm:$0xff]
    %v2505 = vld [vmem:[#allocation10 + $0x1b8] sm:$0xff]
    %v2506 = vld [vmem:[#allocation10 + $0x1c0] sm:$0xff]
    %v2507 = vld [vmem:[#allocation10 + $0x1c8] sm:$0xff]
    %v2508 = vld [vmem:[#allocation10 + $0x1d0] sm:$0xff]
    %v2509 = vld [vmem:[#allocation10 + $0x1d8] sm:$0xff]
    %v2510 = vld [vmem:[#allocation10 + $0x1e0] sm:$0xff]
    %v2511 = vld [vmem:[#allocation10 + $0x1e8] sm:$0xff]
    %v2512 = vld [vmem:[#allocation10 + $0x1f0] sm:$0xff]
    %v2513 = vld [vmem:[#allocation10 + $0x1f8] sm:$0xff]
    %2514 = vmatprep.subr.mxu0 %v2451
    %2515 = vmatpush1.msra.mxu0 %v2450
    %2516 = vmatprep.subr.mxu0 %v2455
    %2517 = vmatpush1.msra.mxu0 %v2454
    %2518 = vmatprep.subr.mxu0 %v2459
    %2519 = vmatpush1.msra.mxu0 %v2458
    %2520 = vmatprep.subr.mxu0 %v2463
    %2521 = vmatpush1.msra.mxu0 %v2462
    %2522 = vmatprep.subr.mxu0 %v2467
    %2523 = vmatpush1.msra.mxu0 %v2466
    %2524 = vmatprep.subr.mxu0 %v2471
    %2525 = vmatpush1.msra.mxu0 %v2470
    %2526 = vmatprep.subr.mxu0 %v2475
    %2527 = vmatpush1.msra.mxu0 %v2474
    %2528 = vmatprep.subr.mxu0 %v2479
    %2529 = vmatpush1.msra.mxu0 %v2478
    %2530 = vmatprep.subr.mxu0 %v2483
    %2531 = vmatpush1.msra.mxu0 %v2482
    %2532 = vmatprep.subr.mxu0 %v2487
    %2533 = vmatpush1.msra.mxu0 %v2486
    %2534 = vmatprep.subr.mxu0 %v2491
    %2535 = vmatpush1.msra.mxu0 %v2490
    %2536 = vmatprep.subr.mxu0 %v2495
    %2537 = vmatpush1.msra.mxu0 %v2494
    %2538 = vmatprep.subr.mxu0 %v2499
    %2539 = vmatpush1.msra.mxu0 %v2498
    %2540 = vmatprep.subr.mxu0 %v2503
    %2541 = vmatpush1.msra.mxu0 %v2502
    %2542 = vmatprep.subr.mxu0 %v2507
    %2543 = vmatpush1.msra.mxu0 %v2506
    %2544 = vmatprep.subr.mxu0 %v2511
    %2545 = vmatpush1.msra.mxu0 %v2510
    %2546 = vmatprep.subr.mxu0 0.0
    %2547 = vmatpush1.msra.mxu0 0.0
    %2548 = vmatprep.subr.mxu0 0.0
    %2549 = vmatpush1.msra.mxu0 0.0
    %2550 = vmatprep.subr.mxu0 0.0
    %2551 = vmatpush1.msra.mxu0 0.0
    %2552 = vmatprep.subr.mxu0 0.0
    %2553 = vmatpush1.msra.mxu0 0.0
    %2554 = vmatprep.subr.mxu0 0.0
    %2555 = vmatpush1.msra.mxu0 0.0
    %2556 = vmatprep.subr.mxu0 0.0
    %2557 = vmatpush1.msra.mxu0 0.0
    %2558 = vmatprep.subr.mxu0 0.0
    %2559 = vmatpush1.msra.mxu0 0.0
    %2560 = vmatprep.subr.mxu0 0.0
    %2561 = vmatpush1.msra.mxu0 0.0
    %2562 = vmatprep.subr.mxu0 0.0
    %2563 = vmatpush1.msra.mxu0 0.0
    %2564 = vmatprep.subr.mxu0 0.0
    %2565 = vmatpush1.msra.mxu0 0.0
    %2566 = vmatprep.subr.mxu0 0.0
    %2567 = vmatpush1.msra.mxu0 0.0
    %2568 = vmatprep.subr.mxu0 0.0
    %2569 = vmatpush1.msra.mxu0 0.0
    %2570 = vmatprep.subr.mxu0 0.0
    %2571 = vmatpush1.msra.mxu0 0.0
    %2572 = vmatprep.subr.mxu0 0.0
    %2573 = vmatpush1.msra.mxu0 0.0
    %2574 = vmatprep.subr.mxu0 0.0
    %2575 = vmatpush1.msra.mxu0 0.0
    %2576 = vmatprep.subr.mxu0 0.0
    %2577 = vmatpush1.msra.mxu0 0.0
    %2578 = vmatprep.mubr.f32.mxu0 0.0
    %2579 = vmatmul.mubr.f32.gmra.mrb[0].mxu0 %v2449
    %v2580 = vpop.f32.mrb[0].mxu0
    %v2581 = vadd.f32 0.0, %v2580
    %v2582 = vpop.f32.mrb[0].mxu0
    %v2583 = vadd.f32 0.0, %v2582
    %2584 = vdwg.mxu0
    %2585 = vmatprep.subr.mxu0 %v2453
    %2586 = vmatpush1.msra.mxu0 %v2452
    %2587 = vmatprep.subr.mxu0 %v2457
    %2588 = vmatpush1.msra.mxu0 %v2456
    %2589 = vmatprep.subr.mxu0 %v2461
    %2590 = vmatpush1.msra.mxu0 %v2460
    %2591 = vmatprep.subr.mxu0 %v2465
    %2592 = vmatpush1.msra.mxu0 %v2464
    %2593 = vmatprep.subr.mxu0 %v2469
    %2594 = vmatpush1.msra.mxu0 %v2468
    %2595 = vmatprep.subr.mxu0 %v2473
    %2596 = vmatpush1.msra.mxu0 %v2472
    %2597 = vmatprep.subr.mxu0 %v2477
    %2598 = vmatpush1.msra.mxu0 %v2476
    %2599 = vmatprep.subr.mxu0 %v2481
    %2600 = vmatpush1.msra.mxu0 %v2480
    %2601 = vmatprep.subr.mxu0 %v2485
    %2602 = vmatpush1.msra.mxu0 %v2484
    %2603 = vmatprep.subr.mxu0 %v2489
    %2604 = vmatpush1.msra.mxu0 %v2488
    %2605 = vmatprep.subr.mxu0 %v2493
    %2606 = vmatpush1.msra.mxu0 %v2492
    %2607 = vmatprep.subr.mxu0 %v2497
    %2608 = vmatpush1.msra.mxu0 %v2496
    %2609 = vmatprep.subr.mxu0 %v2501
    %2610 = vmatpush1.msra.mxu0 %v2500
    %2611 = vmatprep.subr.mxu0 %v2505
    %2612 = vmatpush1.msra.mxu0 %v2504
    %2613 = vmatprep.subr.mxu0 %v2509
    %2614 = vmatpush1.msra.mxu0 %v2508
    %2615 = vmatprep.subr.mxu0 %v2513
    %2616 = vmatpush1.msra.mxu0 %v2512
    %2617 = vmatprep.subr.mxu0 0.0
    %2618 = vmatpush1.msra.mxu0 0.0
    %2619 = vmatprep.subr.mxu0 0.0
    %2620 = vmatpush1.msra.mxu0 0.0
    %2621 = vmatprep.subr.mxu0 0.0
    %2622 = vmatpush1.msra.mxu0 0.0
    %2623 = vmatprep.subr.mxu0 0.0
    %2624 = vmatpush1.msra.mxu0 0.0
    %2625 = vmatprep.subr.mxu0 0.0
    %2626 = vmatpush1.msra.mxu0 0.0
    %2627 = vmatprep.subr.mxu0 0.0
    %2628 = vmatpush1.msra.mxu0 0.0
    %2629 = vmatprep.subr.mxu0 0.0
    %2630 = vmatpush1.msra.mxu0 0.0
    %2631 = vmatprep.subr.mxu0 0.0
    %2632 = vmatpush1.msra.mxu0 0.0
    %2633 = vmatprep.subr.mxu0 0.0
    %2634 = vmatpush1.msra.mxu0 0.0
    %2635 = vmatprep.subr.mxu0 0.0
    %2636 = vmatpush1.msra.mxu0 0.0
    %2637 = vmatprep.subr.mxu0 0.0
    %2638 = vmatpush1.msra.mxu0 0.0
    %2639 = vmatprep.subr.mxu0 0.0
    %2640 = vmatpush1.msra.mxu0 0.0
    %2641 = vmatprep.subr.mxu0 0.0
    %2642 = vmatpush1.msra.mxu0 0.0
    %2643 = vmatprep.subr.mxu0 0.0
    %2644 = vmatpush1.msra.mxu0 0.0
    %2645 = vmatprep.subr.mxu0 0.0
    %2646 = vmatpush1.msra.mxu0 0.0
    %2647 = vmatprep.subr.mxu0 0.0
    %2648 = vmatpush1.msra.mxu0 0.0
    %2649 = vmatprep.mubr.f32.mxu0 0.0
    %2650 = vmatmul.mubr.f32.gmra.mrb[0].mxu0 %v2449
    %v2651 = vpop.f32.mrb[0].mxu0
    %v2652 = vadd.f32 0.0, %v2651
    %v2653 = vpop.f32.mrb[0].mxu0
    %v2654 = vadd.f32 0.0, %v2653
    %2655 = vdwg.mxu0
    %v2656 = vld [vmem:[%s661] sm:$0xff]
    %v2657 = vld [vmem:[%s661 + $0x8] sm:$0xff]
    %v2658 = vadd.f32 %v2581, %v2656
    %v2659 = vadd.f32 %v2583, %v2657
    %v2660 = vld [vmem:[%s654 + $0x10] sm:$0xff]
    %v2661 = vld [vmem:[%s654 + $0x18] sm:$0xff]
    %v2662 = vadd.f32 %v2652, %v2660
    %v2663 = vadd.f32 %v2654, %v2661
    %v2664 = vxor.u32 %v2658, 2147483648
    %v2665 = vxor.u32 %v2659, 2147483648
    %v2666 = vmul.f32 %v2664, 1.442695
    %v2667 = vpow.pop %v2666
    %v2668 = vmul.f32 %v2665, 1.442695
    %v2669 = vpow.pop %v2668
    %v2670 = vadd.f32 %v2667, 1.0
    %v2671 = vadd.f32 %v2669, 1.0
    %v2672 = vrcp.pop %v2670
    %v2673 = vmul.f32 1.0, %v2672
    %v2674 = vrcp.pop %v2671
    %v2675 = vmul.f32 1.0, %v2674
    %v2676 = vtanh.pop %v2659
    %v2677 = vmul.f32 %v2673, %v2404
    %2679 = vrot.lane.b32.xlu0 %v2676, 64
    %v2680 = vpop.permute.xlu0 %2679
    %v2682 = vmul.f32 %v2673, %v2680
    %2684 = vrot.lane.b32.xlu0 %v2682, 64
    %v2685 = vpop.permute.xlu0 %2684
    %v2687 = vadd.f32 %v2677, %v2685
    %v2688 = vtanh.pop %v2687
    %2690 = vrot.lane.b32.xlu0 %v2688, 64
    %v2691 = vpop.permute.xlu0 %2690
    %v2693 = vmul.f32 %v2675, %v2691
    %v2694 = vxor.u32 %v2662, 2147483648
    %v2695 = vxor.u32 %v2663, 2147483648
    %v2696 = vmul.f32 %v2694, 1.442695
    %v2697 = vpow.pop %v2696
    %v2698 = vmul.f32 %v2695, 1.442695
    %v2699 = vpow.pop %v2698
    %v2700 = vadd.f32 %v2697, 1.0
    %v2701 = vadd.f32 %v2699, 1.0
    %v2702 = vrcp.pop %v2700
    %v2703 = vmul.f32 1.0, %v2702
    %v2704 = vrcp.pop %v2701
    %v2705 = vmul.f32 1.0, %v2704
    %v2706 = vtanh.pop %v2663
    %v2707 = vmul.f32 %v2703, %v2434
    %2709 = vrot.lane.b32.xlu0 %v2706, 64
    %v2710 = vpop.permute.xlu0 %2709
    %v2712 = vmul.f32 %v2703, %v2710
    %2714 = vrot.lane.b32.xlu0 %v2712, 64
    %v2715 = vpop.permute.xlu0 %2714
    %v2717 = vadd.f32 %v2707, %v2715
    %v2718 = vtanh.pop %v2717
    %2720 = vrot.lane.b32.xlu0 %v2718, 64
    %v2721 = vpop.permute.xlu0 %2720
    %v2723 = vmul.f32 %v2705, %v2721
    %s2724 = scalar_lea.vmem [#allocation3], 56
    %2725 = vst.msk [vmem:[%s2724] sm:$0xff] %vm163, %v2693
    %2726 = vst.msk [vmem:[#allocation4] sm:$0xff] %vm163, %v2723
    %2727 = vst.msk [vmem:[#allocation17] sm:$0xff] %vm163, %v2693
    %s2728 = scalar_lea.vmem [#allocation17], 8
    %2729 = vst.msk [vmem:[%s2728] sm:$0xff] %vm163, %v2723
    %2731 = vrot.lane.b32.xlu0 %v2687, 64
    %v2732 = vpop.permute.xlu0 %2731
    %2734 = vst.msk [vmem:[#allocation18] sm:$0xff] %vm163, %v2732
    %2736 = vrot.lane.b32.xlu0 %v2717, 64
    %v2737 = vpop.permute.xlu0 %2736
    %s2739 = scalar_lea.vmem [#allocation18], 8
    %2740 = vst.msk [vmem:[%s2739] sm:$0xff] %vm163, %v2737
    %v2741 = vld [vmem:[#allocation3] sm:$0xff]
    %v2742 = vld [vmem:[#allocation3 + $0x8] sm:$0xff]
    %v2743 = vld [vmem:[#allocation3 + $0x10] sm:$0xff]
    %v2744 = vld [vmem:[#allocation3 + $0x18] sm:$0xff]
    %v2745 = vld [vmem:[#allocation3 + $0x20] sm:$0xff]
    %v2746 = vld [vmem:[#allocation3 + $0x28] sm:$0xff]
    %v2747 = vld [vmem:[#allocation3 + $0x30] sm:$0xff]
    %v2748 = vld [vmem:[#allocation3 + $0x38] sm:$0xff]
    %v2749 = vld [vmem:[#allocation11] sm:$0xff]
    %v2750 = vld [vmem:[#allocation11 + $0x8] sm:$0xff]
    %v2751 = vld [vmem:[#allocation11 + $0x10] sm:$0xff]
    %v2752 = vld [vmem:[#allocation11 + $0x18] sm:$0xff]
    %v2753 = vld [vmem:[#allocation11 + $0x20] sm:$0xff]
    %v2754 = vld [vmem:[#allocation11 + $0x28] sm:$0xff]
    %v2755 = vld [vmem:[#allocation11 + $0x30] sm:$0xff]
    %v2756 = vld [vmem:[#allocation11 + $0x38] sm:$0xff]
    %v2757 = vld [vmem:[#allocation11 + $0x40] sm:$0xff]
    %v2758 = vld [vmem:[#allocation11 + $0x48] sm:$0xff]
    %v2759 = vld [vmem:[#allocation11 + $0x50] sm:$0xff]
    %v2760 = vld [vmem:[#allocation11 + $0x58] sm:$0xff]
    %v2761 = vld [vmem:[#allocation11 + $0x60] sm:$0xff]
    %v2762 = vld [vmem:[#allocation11 + $0x68] sm:$0xff]
    %v2763 = vld [vmem:[#allocation11 + $0x70] sm:$0xff]
    %v2764 = vld [vmem:[#allocation11 + $0x78] sm:$0xff]
    %v2765 = vld [vmem:[#allocation11 + $0x80] sm:$0xff]
    %v2766 = vld [vmem:[#allocation11 + $0x88] sm:$0xff]
    %v2767 = vld [vmem:[#allocation11 + $0x90] sm:$0xff]
    %v2768 = vld [vmem:[#allocation11 + $0x98] sm:$0xff]
    %v2769 = vld [vmem:[#allocation11 + $0xa0] sm:$0xff]
    %v2770 = vld [vmem:[#allocation11 + $0xa8] sm:$0xff]
    %v2771 = vld [vmem:[#allocation11 + $0xb0] sm:$0xff]
    %v2772 = vld [vmem:[#allocation11 + $0xb8] sm:$0xff]
    %v2773 = vld [vmem:[#allocation11 + $0xc0] sm:$0xff]
    %v2774 = vld [vmem:[#allocation11 + $0xc8] sm:$0xff]
    %v2775 = vld [vmem:[#allocation11 + $0xd0] sm:$0xff]
    %v2776 = vld [vmem:[#allocation11 + $0xd8] sm:$0xff]
    %v2777 = vld [vmem:[#allocation11 + $0xe0] sm:$0xff]
    %v2778 = vld [vmem:[#allocation11 + $0xe8] sm:$0xff]
    %v2779 = vld [vmem:[#allocation11 + $0xf0] sm:$0xff]
    %v2780 = vld [vmem:[#allocation11 + $0xf8] sm:$0xff]
    %v2781 = vld [vmem:[#allocation4] sm:$0xff]
    %v2782 = vld [vmem:[#allocation4 + $0x8] sm:$0xff]
    %v2783 = vld [vmem:[#allocation4 + $0x10] sm:$0xff]
    %v2784 = vld [vmem:[#allocation4 + $0x18] sm:$0xff]
    %v2785 = vld [vmem:[#allocation4 + $0x20] sm:$0xff]
    %v2786 = vld [vmem:[#allocation4 + $0x28] sm:$0xff]
    %v2787 = vld [vmem:[#allocation4 + $0x30] sm:$0xff]
    %v2788 = vld [vmem:[#allocation4 + $0x38] sm:$0xff]
    %v2789 = vld [vmem:[#allocation11 + $0x100] sm:$0xff]
    %v2790 = vld [vmem:[#allocation11 + $0x108] sm:$0xff]
    %v2791 = vld [vmem:[#allocation11 + $0x110] sm:$0xff]
    %v2792 = vld [vmem:[#allocation11 + $0x118] sm:$0xff]
    %v2793 = vld [vmem:[#allocation11 + $0x120] sm:$0xff]
    %v2794 = vld [vmem:[#allocation11 + $0x128] sm:$0xff]
    %v2795 = vld [vmem:[#allocation11 + $0x130] sm:$0xff]
    %v2796 = vld [vmem:[#allocation11 + $0x138] sm:$0xff]
    %v2797 = vld [vmem:[#allocation11 + $0x140] sm:$0xff]
    %v2798 = vld [vmem:[#allocation11 + $0x148] sm:$0xff]
    %v2799 = vld [vmem:[#allocation11 + $0x150] sm:$0xff]
    %v2800 = vld [vmem:[#allocation11 + $0x158] sm:$0xff]
    %v2801 = vld [vmem:[#allocation11 + $0x160] sm:$0xff]
    %v2802 = vld [vmem:[#allocation11 + $0x168] sm:$0xff]
    %v2803 = vld [vmem:[#allocation11 + $0x170] sm:$0xff]
    %v2804 = vld [vmem:[#allocation11 + $0x178] sm:$0xff]
    %v2805 = vld [vmem:[#allocation11 + $0x180] sm:$0xff]
    %v2806 = vld [vmem:[#allocation11 + $0x188] sm:$0xff]
    %v2807 = vld [vmem:[#allocation11 + $0x190] sm:$0xff]
    %v2808 = vld [vmem:[#allocation11 + $0x198] sm:$0xff]
    %v2809 = vld [vmem:[#allocation11 + $0x1a0] sm:$0xff]
    %v2810 = vld [vmem:[#allocation11 + $0x1a8] sm:$0xff]
    %v2811 = vld [vmem:[#allocation11 + $0x1b0] sm:$0xff]
    %v2812 = vld [vmem:[#allocation11 + $0x1b8] sm:$0xff]
    %v2813 = vld [vmem:[#allocation11 + $0x1c0] sm:$0xff]
    %v2814 = vld [vmem:[#allocation11 + $0x1c8] sm:$0xff]
    %v2815 = vld [vmem:[#allocation11 + $0x1d0] sm:$0xff]
    %v2816 = vld [vmem:[#allocation11 + $0x1d8] sm:$0xff]
    %v2817 = vld [vmem:[#allocation11 + $0x1e0] sm:$0xff]
    %v2818 = vld [vmem:[#allocation11 + $0x1e8] sm:$0xff]
    %v2819 = vld [vmem:[#allocation11 + $0x1f0] sm:$0xff]
    %v2820 = vld [vmem:[#allocation11 + $0x1f8] sm:$0xff]
    %v2822 = vsel %vm163, %v2781, 0
    %v2825 = vsel %vm163, %v2782, 0
    %v2828 = vsel %vm163, %v2783, 0
    %v2831 = vsel %vm163, %v2784, 0
    %v2834 = vsel %vm163, %v2785, 0
    %v2837 = vsel %vm163, %v2786, 0
    %v2840 = vsel %vm163, %v2787, 0
    %v2843 = vsel %vm163, %v2788, 0
    %2845 = vmatprep.subr.mxu0 %v2790
    %2846 = vmatpush1.msra.mxu0 %v2789
    %2847 = vmatprep.subr.mxu0 %v2794
    %2848 = vmatpush1.msra.mxu0 %v2793
    %2849 = vmatprep.subr.mxu0 %v2798
    %2850 = vmatpush1.msra.mxu0 %v2797
    %2851 = vmatprep.subr.mxu0 %v2802
    %2852 = vmatpush1.msra.mxu0 %v2801
    %2853 = vmatprep.subr.mxu0 %v2806
    %2854 = vmatpush1.msra.mxu0 %v2805
    %2855 = vmatprep.subr.mxu0 %v2810
    %2856 = vmatpush1.msra.mxu0 %v2809
    %2857 = vmatprep.subr.mxu0 %v2814
    %2858 = vmatpush1.msra.mxu0 %v2813
    %2859 = vmatprep.subr.mxu0 %v2818
    %2860 = vmatpush1.msra.mxu0 %v2817
    %2861 = vmatprep.subr.mxu0 0.0
    %2862 = vmatpush1.msra.mxu0 0.0
    %2863 = vmatprep.subr.mxu0 0.0
    %2864 = vmatpush1.msra.mxu0 0.0
    %2865 = vmatprep.subr.mxu0 0.0
    %2866 = vmatpush1.msra.mxu0 0.0
    %2867 = vmatprep.subr.mxu0 0.0
    %2868 = vmatpush1.msra.mxu0 0.0
    %2869 = vmatprep.subr.mxu0 0.0
    %2870 = vmatpush1.msra.mxu0 0.0
    %2871 = vmatprep.subr.mxu0 0.0
    %2872 = vmatpush1.msra.mxu0 0.0
    %2873 = vmatprep.subr.mxu0 0.0
    %2874 = vmatpush1.msra.mxu0 0.0
    %2875 = vmatprep.subr.mxu0 0.0
    %2876 = vmatpush1.msra.mxu0 0.0
    %2877 = vmatprep.subr.mxu0 0.0
    %2878 = vmatpush1.msra.mxu0 0.0
    %2879 = vmatprep.subr.mxu0 0.0
    %2880 = vmatpush1.msra.mxu0 0.0
    %2881 = vmatprep.subr.mxu0 0.0
    %2882 = vmatpush1.msra.mxu0 0.0
    %2883 = vmatprep.subr.mxu0 0.0
    %2884 = vmatpush1.msra.mxu0 0.0
    %2885 = vmatprep.subr.mxu0 0.0
    %2886 = vmatpush1.msra.mxu0 0.0
    %2887 = vmatprep.subr.mxu0 0.0
    %2888 = vmatpush1.msra.mxu0 0.0
    %2889 = vmatprep.subr.mxu0 0.0
    %2890 = vmatpush1.msra.mxu0 0.0
    %2891 = vmatprep.subr.mxu0 0.0
    %2892 = vmatpush1.msra.mxu0 0.0
    %2893 = vmatprep.subr.mxu0 0.0
    %2894 = vmatpush1.msra.mxu0 0.0
    %2895 = vmatprep.subr.mxu0 0.0
    %2896 = vmatpush1.msra.mxu0 0.0
    %2897 = vmatprep.subr.mxu0 0.0
    %2898 = vmatpush1.msra.mxu0 0.0
    %2899 = vmatprep.subr.mxu0 0.0
    %2900 = vmatpush1.msra.mxu0 0.0
    %2901 = vmatprep.subr.mxu0 0.0
    %2902 = vmatpush1.msra.mxu0 0.0
    %2903 = vmatprep.subr.mxu0 0.0
    %2904 = vmatpush1.msra.mxu0 0.0
    %2905 = vmatprep.subr.mxu0 0.0
    %2906 = vmatpush1.msra.mxu0 0.0
    %2907 = vmatprep.subr.mxu0 0.0
    %2908 = vmatpush1.msra.mxu0 0.0
    %2909 = vmatprep.mubr.f32.mxu0 0.0
    %2910 = vmatmul.mubr.f32.gmra.mrb[0].mxu0 %v2822
    %v2911 = vpop.f32.mrb[0].mxu0
    %v2912 = vadd.f32 0.0, %v2911
    %v2913 = vpop.f32.mrb[0].mxu0
    %v2914 = vadd.f32 0.0, %v2913
    %2915 = vmatprep.mubr.f32.mxu0 0.0
    %2916 = vmatmul.mubr.f32.gmra.mrb[0].mxu0 %v2825
    %v2917 = vpop.f32.mrb[0].mxu0
    %v2918 = vadd.f32 0.0, %v2917
    %v2919 = vpop.f32.mrb[0].mxu0
    %v2920 = vadd.f32 0.0, %v2919
    %2921 = vmatprep.mubr.f32.mxu0 0.0
    %2922 = vmatmul.mubr.f32.gmra.mrb[0].mxu0 %v2828
    %v2923 = vpop.f32.mrb[0].mxu0
    %v2924 = vadd.f32 0.0, %v2923
    %v2925 = vpop.f32.mrb[0].mxu0
    %v2926 = vadd.f32 0.0, %v2925
    %2927 = vmatprep.mubr.f32.mxu0 0.0
    %2928 = vmatmul.mubr.f32.gmra.mrb[0].mxu0 %v2831
    %v2929 = vpop.f32.mrb[0].mxu0
    %v2930 = vadd.f32 0.0, %v2929
    %v2931 = vpop.f32.mrb[0].mxu0
    %v2932 = vadd.f32 0.0, %v2931
    %2933 = vmatprep.mubr.f32.mxu0 0.0
    %2934 = vmatmul.mubr.f32.gmra.mrb[0].mxu0 %v2834
    %v2935 = vpop.f32.mrb[0].mxu0
    %v2936 = vadd.f32 0.0, %v2935
    %v2937 = vpop.f32.mrb[0].mxu0
    %v2938 = vadd.f32 0.0, %v2937
    %2939 = vmatprep.mubr.f32.mxu0 0.0
    %2940 = vmatmul.mubr.f32.gmra.mrb[0].mxu0 %v2837
    %v2941 = vpop.f32.mrb[0].mxu0
    %v2942 = vadd.f32 0.0, %v2941
    %v2943 = vpop.f32.mrb[0].mxu0
    %v2944 = vadd.f32 0.0, %v2943
    %2945 = vmatprep.mubr.f32.mxu0 0.0
    %2946 = vmatmul.mubr.f32.gmra.mrb[0].mxu0 %v2840
    %v2947 = vpop.f32.mrb[0].mxu0
    %v2948 = vadd.f32 0.0, %v2947
    %v2949 = vpop.f32.mrb[0].mxu0
    %v2950 = vadd.f32 0.0, %v2949
    %2951 = vmatprep.mubr.f32.mxu0 0.0
    %2952 = vmatmul.mubr.f32.gmra.mrb[0].mxu0 %v2843
    %v2953 = vpop.f32.mrb[0].mxu0
    %v2954 = vadd.f32 0.0, %v2953
    %v2955 = vpop.f32.mrb[0].mxu0
    %v2956 = vadd.f32 0.0, %v2955
    %2957 = vdwg.mxu0
    %2958 = vmatprep.subr.mxu0 %v2792
    %2959 = vmatpush1.msra.mxu0 %v2791
    %2960 = vmatprep.subr.mxu0 %v2796
    %2961 = vmatpush1.msra.mxu0 %v2795
    %2962 = vmatprep.subr.mxu0 %v2800
    %2963 = vmatpush1.msra.mxu0 %v2799
    %2964 = vmatprep.subr.mxu0 %v2804
    %2965 = vmatpush1.msra.mxu0 %v2803
    %2966 = vmatprep.subr.mxu0 %v2808
    %2967 = vmatpush1.msra.mxu0 %v2807
    %2968 = vmatprep.subr.mxu0 %v2812
    %2969 = vmatpush1.msra.mxu0 %v2811
    %2970 = vmatprep.subr.mxu0 %v2816
    %2971 = vmatpush1.msra.mxu0 %v2815
    %2972 = vmatprep.subr.mxu0 %v2820
    %2973 = vmatpush1.msra.mxu0 %v2819
    %2974 = vmatprep.subr.mxu0 0.0
    %2975 = vmatpush1.msra.mxu0 0.0
    %2976 = vmatprep.subr.mxu0 0.0
    %2977 = vmatpush1.msra.mxu0 0.0
    %2978 = vmatprep.subr.mxu0 0.0
    %2979 = vmatpush1.msra.mxu0 0.0
    %2980 = vmatprep.subr.mxu0 0.0
    %2981 = vmatpush1.msra.mxu0 0.0
    %2982 = vmatprep.subr.mxu0 0.0
    %2983 = vmatpush1.msra.mxu0 0.0
    %2984 = vmatprep.subr.mxu0 0.0
    %2985 = vmatpush1.msra.mxu0 0.0
    %2986 = vmatprep.subr.mxu0 0.0
    %2987 = vmatpush1.msra.mxu0 0.0
    %2988 = vmatprep.subr.mxu0 0.0
    %2989 = vmatpush1.msra.mxu0 0.0
    %2990 = vmatprep.subr.mxu0 0.0
    %2991 = vmatpush1.msra.mxu0 0.0
    %2992 = vmatprep.subr.mxu0 0.0
    %2993 = vmatpush1.msra.mxu0 0.0
    %2994 = vmatprep.subr.mxu0 0.0
    %2995 = vmatpush1.msra.mxu0 0.0
    %2996 = vmatprep.subr.mxu0 0.0
    %2997 = vmatpush1.msra.mxu0 0.0
    %2998 = vmatprep.subr.mxu0 0.0
    %2999 = vmatpush1.msra.mxu0 0.0
    %3000 = vmatprep.subr.mxu0 0.0
    %3001 = vmatpush1.msra.mxu0 0.0
    %3002 = vmatprep.subr.mxu0 0.0
    %3003 = vmatpush1.msra.mxu0 0.0
    %3004 = vmatprep.subr.mxu0 0.0
    %3005 = vmatpush1.msra.mxu0 0.0
    %3006 = vmatprep.subr.mxu0 0.0
    %3007 = vmatpush1.msra.mxu0 0.0
    %3008 = vmatprep.subr.mxu0 0.0
    %3009 = vmatpush1.msra.mxu0 0.0
    %3010 = vmatprep.subr.mxu0 0.0
    %3011 = vmatpush1.msra.mxu0 0.0
    %3012 = vmatprep.subr.mxu0 0.0
    %3013 = vmatpush1.msra.mxu0 0.0
    %3014 = vmatprep.subr.mxu0 0.0
    %3015 = vmatpush1.msra.mxu0 0.0
    %3016 = vmatprep.subr.mxu0 0.0
    %3017 = vmatpush1.msra.mxu0 0.0
    %3018 = vmatprep.subr.mxu0 0.0
    %3019 = vmatpush1.msra.mxu0 0.0
    %3020 = vmatprep.subr.mxu0 0.0
    %3021 = vmatpush1.msra.mxu0 0.0
    %3022 = vmatprep.mubr.f32.mxu0 0.0
    %3023 = vmatmul.mubr.f32.gmra.mrb[0].mxu0 %v2822
    %v3024 = vpop.f32.mrb[0].mxu0
    %v3025 = vadd.f32 0.0, %v3024
    %v3026 = vpop.f32.mrb[0].mxu0
    %v3027 = vadd.f32 0.0, %v3026
    %3028 = vmatprep.mubr.f32.mxu0 0.0
    %3029 = vmatmul.mubr.f32.gmra.mrb[0].mxu0 %v2825
    %v3030 = vpop.f32.mrb[0].mxu0
    %v3031 = vadd.f32 0.0, %v3030
    %v3032 = vpop.f32.mrb[0].mxu0
    %v3033 = vadd.f32 0.0, %v3032
    %3034 = vmatprep.mubr.f32.mxu0 0.0
    %3035 = vmatmul.mubr.f32.gmra.mrb[0].mxu0 %v2828
    %v3036 = vpop.f32.mrb[0].mxu0
    %v3037 = vadd.f32 0.0, %v3036
    %v3038 = vpop.f32.mrb[0].mxu0
    %v3039 = vadd.f32 0.0, %v3038
    %3040 = vmatprep.mubr.f32.mxu0 0.0
    %3041 = vmatmul.mubr.f32.gmra.mrb[0].mxu0 %v2831
    %v3042 = vpop.f32.mrb[0].mxu0
    %v3043 = vadd.f32 0.0, %v3042
    %v3044 = vpop.f32.mrb[0].mxu0
    %v3045 = vadd.f32 0.0, %v3044
    %3046 = vmatprep.mubr.f32.mxu0 0.0
    %3047 = vmatmul.mubr.f32.gmra.mrb[0].mxu0 %v2834
    %v3048 = vpop.f32.mrb[0].mxu0
    %v3049 = vadd.f32 0.0, %v3048
    %v3050 = vpop.f32.mrb[0].mxu0
    %v3051 = vadd.f32 0.0, %v3050
    %3052 = vmatprep.mubr.f32.mxu0 0.0
    %3053 = vmatmul.mubr.f32.gmra.mrb[0].mxu0 %v2837
    %v3054 = vpop.f32.mrb[0].mxu0
    %v3055 = vadd.f32 0.0, %v3054
    %v3056 = vpop.f32.mrb[0].mxu0
    %v3057 = vadd.f32 0.0, %v3056
    %3058 = vmatprep.mubr.f32.mxu0 0.0
    %3059 = vmatmul.mubr.f32.gmra.mrb[0].mxu0 %v2840
    %v3060 = vpop.f32.mrb[0].mxu0
    %v3061 = vadd.f32 0.0, %v3060
    %v3062 = vpop.f32.mrb[0].mxu0
    %v3063 = vadd.f32 0.0, %v3062
    %3064 = vmatprep.mubr.f32.mxu0 0.0
    %3065 = vmatmul.mubr.f32.gmra.mrb[0].mxu0 %v2843
    %v3066 = vpop.f32.mrb[0].mxu0
    %v3067 = vadd.f32 0.0, %v3066
    %v3068 = vpop.f32.mrb[0].mxu0
    %v3069 = vadd.f32 0.0, %v3068
    %3070 = vdwg.mxu0
    %v3072 = vsel %vm163, %v2741, 0
    %v3075 = vsel %vm163, %v2742, 0
    %v3078 = vsel %vm163, %v2743, 0
    %v3081 = vsel %vm163, %v2744, 0
    %v3084 = vsel %vm163, %v2745, 0
    %v3087 = vsel %vm163, %v2746, 0
    %v3090 = vsel %vm163, %v2747, 0
    %v3093 = vsel %vm163, %v2748, 0
    %3095 = vmatprep.subr.mxu0 %v2750
    %3096 = vmatpush1.msra.mxu0 %v2749
    %3097 = vmatprep.subr.mxu0 %v2754
    %3098 = vmatpush1.msra.mxu0 %v2753
    %3099 = vmatprep.subr.mxu0 %v2758
    %3100 = vmatpush1.msra.mxu0 %v2757
    %3101 = vmatprep.subr.mxu0 %v2762
    %3102 = vmatpush1.msra.mxu0 %v2761
    %3103 = vmatprep.subr.mxu0 %v2766
    %3104 = vmatpush1.msra.mxu0 %v2765
    %3105 = vmatprep.subr.mxu0 %v2770
    %3106 = vmatpush1.msra.mxu0 %v2769
    %3107 = vmatprep.subr.mxu0 %v2774
    %3108 = vmatpush1.msra.mxu0 %v2773
    %3109 = vmatprep.subr.mxu0 %v2778
    %3110 = vmatpush1.msra.mxu0 %v2777
    %3111 = vmatprep.subr.mxu0 0.0
    %3112 = vmatpush1.msra.mxu0 0.0
    %3113 = vmatprep.subr.mxu0 0.0
    %3114 = vmatpush1.msra.mxu0 0.0
    %3115 = vmatprep.subr.mxu0 0.0
    %3116 = vmatpush1.msra.mxu0 0.0
    %3117 = vmatprep.subr.mxu0 0.0
    %3118 = vmatpush1.msra.mxu0 0.0
    %3119 = vmatprep.subr.mxu0 0.0
    %3120 = vmatpush1.msra.mxu0 0.0
    %3121 = vmatprep.subr.mxu0 0.0
    %3122 = vmatpush1.msra.mxu0 0.0
    %3123 = vmatprep.subr.mxu0 0.0
    %3124 = vmatpush1.msra.mxu0 0.0
    %3125 = vmatprep.subr.mxu0 0.0
    %3126 = vmatpush1.msra.mxu0 0.0
    %3127 = vmatprep.subr.mxu0 0.0
    %3128 = vmatpush1.msra.mxu0 0.0
    %3129 = vmatprep.subr.mxu0 0.0
    %3130 = vmatpush1.msra.mxu0 0.0
    %3131 = vmatprep.subr.mxu0 0.0
    %3132 = vmatpush1.msra.mxu0 0.0
    %3133 = vmatprep.subr.mxu0 0.0
    %3134 = vmatpush1.msra.mxu0 0.0
    %3135 = vmatprep.subr.mxu0 0.0
    %3136 = vmatpush1.msra.mxu0 0.0
    %3137 = vmatprep.subr.mxu0 0.0
    %3138 = vmatpush1.msra.mxu0 0.0
    %3139 = vmatprep.subr.mxu0 0.0
    %3140 = vmatpush1.msra.mxu0 0.0
    %3141 = vmatprep.subr.mxu0 0.0
    %3142 = vmatpush1.msra.mxu0 0.0
    %3143 = vmatprep.subr.mxu0 0.0
    %3144 = vmatpush1.msra.mxu0 0.0
    %3145 = vmatprep.subr.mxu0 0.0
    %3146 = vmatpush1.msra.mxu0 0.0
    %3147 = vmatprep.subr.mxu0 0.0
    %3148 = vmatpush1.msra.mxu0 0.0
    %3149 = vmatprep.subr.mxu0 0.0
    %3150 = vmatpush1.msra.mxu0 0.0
    %3151 = vmatprep.subr.mxu0 0.0
    %3152 = vmatpush1.msra.mxu0 0.0
    %3153 = vmatprep.subr.mxu0 0.0
    %3154 = vmatpush1.msra.mxu0 0.0
    %3155 = vmatprep.subr.mxu0 0.0
    %3156 = vmatpush1.msra.mxu0 0.0
    %3157 = vmatprep.subr.mxu0 0.0
    %3158 = vmatpush1.msra.mxu0 0.0
    %3159 = vmatprep.mubr.f32.mxu0 0.0
    %3160 = vmatmul.mubr.f32.gmra.mrb[0].mxu0 %v3072
    %v3161 = vpop.f32.mrb[0].mxu0
    %v3162 = vadd.f32 %v2912, %v3161
    %v3163 = vpop.f32.mrb[0].mxu0
    %v3164 = vadd.f32 %v2914, %v3163
    %3165 = vmatprep.mubr.f32.mxu0 0.0
    %3166 = vmatmul.mubr.f32.gmra.mrb[0].mxu0 %v3075
    %v3167 = vpop.f32.mrb[0].mxu0
    %v3168 = vadd.f32 %v2918, %v3167
    %v3169 = vpop.f32.mrb[0].mxu0
    %v3170 = vadd.f32 %v2920, %v3169
    %3171 = vmatprep.mubr.f32.mxu0 0.0
    %3172 = vmatmul.mubr.f32.gmra.mrb[0].mxu0 %v3078
    %v3173 = vpop.f32.mrb[0].mxu0
    %v3174 = vadd.f32 %v2924, %v3173
    %v3175 = vpop.f32.mrb[0].mxu0
    %v3176 = vadd.f32 %v2926, %v3175
    %3177 = vmatprep.mubr.f32.mxu0 0.0
    %3178 = vmatmul.mubr.f32.gmra.mrb[0].mxu0 %v3081
    %v3179 = vpop.f32.mrb[0].mxu0
    %v3180 = vadd.f32 %v2930, %v3179
    %v3181 = vpop.f32.mrb[0].mxu0
    %v3182 = vadd.f32 %v2932, %v3181
    %3183 = vmatprep.mubr.f32.mxu0 0.0
    %3184 = vmatmul.mubr.f32.gmra.mrb[0].mxu0 %v3084
    %v3185 = vpop.f32.mrb[0].mxu0
    %v3186 = vadd.f32 %v2936, %v3185
    %v3187 = vpop.f32.mrb[0].mxu0
    %v3188 = vadd.f32 %v2938, %v3187
    %3189 = vmatprep.mubr.f32.mxu0 0.0
    %3190 = vmatmul.mubr.f32.gmra.mrb[0].mxu0 %v3087
    %v3191 = vpop.f32.mrb[0].mxu0
    %v3192 = vadd.f32 %v2942, %v3191
    %v3193 = vpop.f32.mrb[0].mxu0
    %v3194 = vadd.f32 %v2944, %v3193
    %3195 = vmatprep.mubr.f32.mxu0 0.0
    %3196 = vmatmul.mubr.f32.gmra.mrb[0].mxu0 %v3090
    %v3197 = vpop.f32.mrb[0].mxu0
    %v3198 = vadd.f32 %v2948, %v3197
    %v3199 = vpop.f32.mrb[0].mxu0
    %v3200 = vadd.f32 %v2950, %v3199
    %3201 = vmatprep.mubr.f32.mxu0 0.0
    %3202 = vmatmul.mubr.f32.gmra.mrb[0].mxu0 %v3093
    %v3203 = vpop.f32.mrb[0].mxu0
    %v3204 = vadd.f32 %v2954, %v3203
    %v3205 = vpop.f32.mrb[0].mxu0
    %v3206 = vadd.f32 %v2956, %v3205
    %3207 = vdwg.mxu0
    %3208 = vmatprep.subr.mxu0 %v2752
    %3209 = vmatpush1.msra.mxu0 %v2751
    %3210 = vmatprep.subr.mxu0 %v2756
    %3211 = vmatpush1.msra.mxu0 %v2755
    %3212 = vmatprep.subr.mxu0 %v2760
    %3213 = vmatpush1.msra.mxu0 %v2759
    %3214 = vmatprep.subr.mxu0 %v2764
    %3215 = vmatpush1.msra.mxu0 %v2763
    %3216 = vmatprep.subr.mxu0 %v2768
    %3217 = vmatpush1.msra.mxu0 %v2767
    %3218 = vmatprep.subr.mxu0 %v2772
    %3219 = vmatpush1.msra.mxu0 %v2771
    %3220 = vmatprep.subr.mxu0 %v2776
    %3221 = vmatpush1.msra.mxu0 %v2775
    %3222 = vmatprep.subr.mxu0 %v2780
    %3223 = vmatpush1.msra.mxu0 %v2779
    %3224 = vmatprep.subr.mxu0 0.0
    %3225 = vmatpush1.msra.mxu0 0.0
    %3226 = vmatprep.subr.mxu0 0.0
    %3227 = vmatpush1.msra.mxu0 0.0
    %3228 = vmatprep.subr.mxu0 0.0
    %3229 = vmatpush1.msra.mxu0 0.0
    %3230 = vmatprep.subr.mxu0 0.0
    %3231 = vmatpush1.msra.mxu0 0.0
    %3232 = vmatprep.subr.mxu0 0.0
    %3233 = vmatpush1.msra.mxu0 0.0
    %3234 = vmatprep.subr.mxu0 0.0
    %3235 = vmatpush1.msra.mxu0 0.0
    %3236 = vmatprep.subr.mxu0 0.0
    %3237 = vmatpush1.msra.mxu0 0.0
    %3238 = vmatprep.subr.mxu0 0.0
    %3239 = vmatpush1.msra.mxu0 0.0
    %3240 = vmatprep.subr.mxu0 0.0
    %3241 = vmatpush1.msra.mxu0 0.0
    %3242 = vmatprep.subr.mxu0 0.0
    %3243 = vmatpush1.msra.mxu0 0.0
    %3244 = vmatprep.subr.mxu0 0.0
    %3245 = vmatpush1.msra.mxu0 0.0
    %3246 = vmatprep.subr.mxu0 0.0
    %3247 = vmatpush1.msra.mxu0 0.0
    %3248 = vmatprep.subr.mxu0 0.0
    %3249 = vmatpush1.msra.mxu0 0.0
    %3250 = vmatprep.subr.mxu0 0.0
    %3251 = vmatpush1.msra.mxu0 0.0
    %3252 = vmatprep.subr.mxu0 0.0
    %3253 = vmatpush1.msra.mxu0 0.0
    %3254 = vmatprep.subr.mxu0 0.0
    %3255 = vmatpush1.msra.mxu0 0.0
    %3256 = vmatprep.subr.mxu0 0.0
    %3257 = vmatpush1.msra.mxu0 0.0
    %3258 = vmatprep.subr.mxu0 0.0
    %3259 = vmatpush1.msra.mxu0 0.0
    %3260 = vmatprep.subr.mxu0 0.0
    %3261 = vmatpush1.msra.mxu0 0.0
    %3262 = vmatprep.subr.mxu0 0.0
    %3263 = vmatpush1.msra.mxu0 0.0
    %3264 = vmatprep.subr.mxu0 0.0
    %3265 = vmatpush1.msra.mxu0 0.0
    %3266 = vmatprep.subr.mxu0 0.0
    %3267 = vmatpush1.msra.mxu0 0.0
    %3268 = vmatprep.subr.mxu0 0.0
    %3269 = vmatpush1.msra.mxu0 0.0
    %3270 = vmatprep.subr.mxu0 0.0
    %3271 = vmatpush1.msra.mxu0 0.0
    %3272 = vmatprep.mubr.f32.mxu0 0.0
    %3273 = vmatmul.mubr.f32.gmra.mrb[0].mxu0 %v3072
    %v3274 = vpop.f32.mrb[0].mxu0
    %v3275 = vadd.f32 %v3025, %v3274
    %v3276 = vpop.f32.mrb[0].mxu0
    %v3277 = vadd.f32 %v3027, %v3276
    %3278 = vmatprep.mubr.f32.mxu0 0.0
    %3279 = vmatmul.mubr.f32.gmra.mrb[0].mxu0 %v3075
    %v3280 = vpop.f32.mrb[0].mxu0
    %v3281 = vadd.f32 %v3031, %v3280
    %v3282 = vpop.f32.mrb[0].mxu0
    %v3283 = vadd.f32 %v3033, %v3282
    %3284 = vmatprep.mubr.f32.mxu0 0.0
    %3285 = vmatmul.mubr.f32.gmra.mrb[0].mxu0 %v3078
    %v3286 = vpop.f32.mrb[0].mxu0
    %v3287 = vadd.f32 %v3037, %v3286
    %v3288 = vpop.f32.mrb[0].mxu0
    %v3289 = vadd.f32 %v3039, %v3288
    %3290 = vmatprep.mubr.f32.mxu0 0.0
    %3291 = vmatmul.mubr.f32.gmra.mrb[0].mxu0 %v3081
    %v3292 = vpop.f32.mrb[0].mxu0
    %v3293 = vadd.f32 %v3043, %v3292
    %v3294 = vpop.f32.mrb[0].mxu0
    %v3295 = vadd.f32 %v3045, %v3294
    %3296 = vmatprep.mubr.f32.mxu0 0.0
    %3297 = vmatmul.mubr.f32.gmra.mrb[0].mxu0 %v3084
    %v3298 = vpop.f32.mrb[0].mxu0
    %v3299 = vadd.f32 %v3049, %v3298
    %v3300 = vpop.f32.mrb[0].mxu0
    %v3301 = vadd.f32 %v3051, %v3300
    %3302 = vmatprep.mubr.f32.mxu0 0.0
    %3303 = vmatmul.mubr.f32.gmra.mrb[0].mxu0 %v3087
    %v3304 = vpop.f32.mrb[0].mxu0
    %v3305 = vadd.f32 %v3055, %v3304
    %v3306 = vpop.f32.mrb[0].mxu0
    %v3307 = vadd.f32 %v3057, %v3306
    %3308 = vmatprep.mubr.f32.mxu0 0.0
    %3309 = vmatmul.mubr.f32.gmra.mrb[0].mxu0 %v3090
    %v3310 = vpop.f32.mrb[0].mxu0
    %v3311 = vadd.f32 %v3061, %v3310
    %v3312 = vpop.f32.mrb[0].mxu0
    %v3313 = vadd.f32 %v3063, %v3312
    %3314 = vmatprep.mubr.f32.mxu0 0.0
    %3315 = vmatmul.mubr.f32.gmra.mrb[0].mxu0 %v3093
    %v3316 = vpop.f32.mrb[0].mxu0
    %v3317 = vadd.f32 %v3067, %v3316
    %v3318 = vpop.f32.mrb[0].mxu0
    %v3319 = vadd.f32 %v3069, %v3318
    %3320 = vdwg.mxu0
    %v3321 = vld [vmem:[%s6] sm:$0xf]
    %v3323 = vlaneseq
    %v3324 = vshrl.u32 %v3323, 7
    %v3325 = vsub.s32 0, %v3324
    %v3326 = vrot.slane %v3321, %v3325
    %v3327 = vlaneseq
    %v3328 = vshrl.u32 %v3327, 7
    %v3329 = vsub.s32 1, %v3328
    %v3330 = vrot.slane %v3321, %v3329
    %v3331 = vlaneseq
    %v3332 = vshrl.u32 %v3331, 7
    %v3333 = vsub.s32 2, %v3332
    %v3334 = vrot.slane %v3321, %v3333
    %v3335 = vlaneseq
    %v3336 = vshrl.u32 %v3335, 7
    %v3337 = vsub.s32 3, %v3336
    %v3338 = vrot.slane %v3321, %v3337
    %v3343 = vadd.f32 %v3162, %v3326
    %v3344 = vadd.f32 %v3164, %v3330
    %v3345 = vadd.f32 %v3275, %v3334
    %v3346 = vadd.f32 %v3277, %v3338
    %v3347 = vadd.f32 %v3168, %v3326
    %v3348 = vadd.f32 %v3170, %v3330
    %v3349 = vadd.f32 %v3281, %v3334
    %v3350 = vadd.f32 %v3283, %v3338
    %v3351 = vadd.f32 %v3174, %v3326
    %v3352 = vadd.f32 %v3176, %v3330
    %v3353 = vadd.f32 %v3287, %v3334
    %v3354 = vadd.f32 %v3289, %v3338
    %v3355 = vadd.f32 %v3180, %v3326
    %v3356 = vadd.f32 %v3182, %v3330
    %v3357 = vadd.f32 %v3293, %v3334
    %v3358 = vadd.f32 %v3295, %v3338
    %v3359 = vadd.f32 %v3186, %v3326
    %v3360 = vadd.f32 %v3188, %v3330
    %v3361 = vadd.f32 %v3299, %v3334
    %v3362 = vadd.f32 %v3301, %v3338
    %v3363 = vadd.f32 %v3192, %v3326
    %v3364 = vadd.f32 %v3194, %v3330
    %v3365 = vadd.f32 %v3305, %v3334
    %v3366 = vadd.f32 %v3307, %v3338
    %v3367 = vadd.f32 %v3198, %v3326
    %v3368 = vadd.f32 %v3200, %v3330
    %v3369 = vadd.f32 %v3311, %v3334
    %v3370 = vadd.f32 %v3313, %v3338
    %v3371 = vadd.f32 %v3204, %v3326
    %v3372 = vadd.f32 %v3206, %v3330
    %v3373 = vadd.f32 %v3317, %v3334
    %v3374 = vadd.f32 %v3319, %v3338
    %3375 = vst [vmem:[#allocation2] sm:$0xff] %v3343
    %3376 = vst [vmem:[#allocation2 + $0x8] sm:$0xff] %v3344
    %3377 = vst [vmem:[#allocation2 + $0x10] sm:$0xff] %v3345
    %3378 = vst [vmem:[#allocation2 + $0x18] sm:$0xff] %v3346
    %3379 = vst [vmem:[#allocation2 + $0x20] sm:$0xff] %v3347
    %3380 = vst [vmem:[#allocation2 + $0x28] sm:$0xff] %v3348
    %3381 = vst [vmem:[#allocation2 + $0x30] sm:$0xff] %v3349
    %3382 = vst [vmem:[#allocation2 + $0x38] sm:$0xff] %v3350
    %3383 = vst [vmem:[#allocation2 + $0x40] sm:$0xff] %v3351
    %3384 = vst [vmem:[#allocation2 + $0x48] sm:$0xff] %v3352
    %3385 = vst [vmem:[#allocation2 + $0x50] sm:$0xff] %v3353
    %3386 = vst [vmem:[#allocation2 + $0x58] sm:$0xff] %v3354
    %3387 = vst [vmem:[#allocation2 + $0x60] sm:$0xff] %v3355
    %3388 = vst [vmem:[#allocation2 + $0x68] sm:$0xff] %v3356
    %3389 = vst [vmem:[#allocation2 + $0x70] sm:$0xff] %v3357
    %3390 = vst [vmem:[#allocation2 + $0x78] sm:$0xff] %v3358
    %3391 = vst [vmem:[#allocation2 + $0x80] sm:$0xff] %v3359
    %3392 = vst [vmem:[#allocation2 + $0x88] sm:$0xff] %v3360
    %3393 = vst [vmem:[#allocation2 + $0x90] sm:$0xff] %v3361
    %3394 = vst [vmem:[#allocation2 + $0x98] sm:$0xff] %v3362
    %3395 = vst [vmem:[#allocation2 + $0xa0] sm:$0xff] %v3363
    %3396 = vst [vmem:[#allocation2 + $0xa8] sm:$0xff] %v3364
    %3397 = vst [vmem:[#allocation2 + $0xb0] sm:$0xff] %v3365
    %3398 = vst [vmem:[#allocation2 + $0xb8] sm:$0xff] %v3366
    %3399 = vst [vmem:[#allocation2 + $0xc0] sm:$0xff] %v3367
    %3400 = vst [vmem:[#allocation2 + $0xc8] sm:$0xff] %v3368
    %3401 = vst [vmem:[#allocation2 + $0xd0] sm:$0xff] %v3369
    %3402 = vst [vmem:[#allocation2 + $0xd8] sm:$0xff] %v3370
    %3403 = vst [vmem:[#allocation2 + $0xe0] sm:$0xff] %v3371
    %3404 = vst [vmem:[#allocation2 + $0xe8] sm:$0xff] %v3372
    %3405 = vst [vmem:[#allocation2 + $0xf0] sm:$0xff] %v3373
    %3406 = vst [vmem:[#allocation2 + $0xf8] sm:$0xff] %v3374
    %v3407 = vld [vmem:[#allocation13] sm:$0xff]
    %v3408 = vld [vmem:[#allocation13 + $0x8] sm:$0xff]
    %v3409 = vld [vmem:[#allocation13 + $0x10] sm:$0xff]
    %v3410 = vld [vmem:[#allocation13 + $0x18] sm:$0xff]
    %v3411 = vld [vmem:[#allocation13 + $0x20] sm:$0xff]
    %v3412 = vld [vmem:[#allocation13 + $0x28] sm:$0xff]
    %v3413 = vld [vmem:[#allocation13 + $0x30] sm:$0xff]
    %v3414 = vld [vmem:[#allocation13 + $0x38] sm:$0xff]
    %v3415 = vld [vmem:[#allocation13 + $0x40] sm:$0xff]
    %v3416 = vld [vmem:[#allocation13 + $0x48] sm:$0xff]
    %v3417 = vld [vmem:[#allocation13 + $0x50] sm:$0xff]
    %v3418 = vld [vmem:[#allocation13 + $0x58] sm:$0xff]
    %v3419 = vld [vmem:[#allocation13 + $0x60] sm:$0xff]
    %v3420 = vld [vmem:[#allocation13 + $0x68] sm:$0xff]
    %v3421 = vld [vmem:[#allocation13 + $0x70] sm:$0xff]
    %v3422 = vld [vmem:[#allocation13 + $0x78] sm:$0xff]
    %v3423 = vld [vmem:[#allocation13 + $0x80] sm:$0xff]
    %v3424 = vld [vmem:[#allocation13 + $0x88] sm:$0xff]
    %v3425 = vld [vmem:[#allocation13 + $0x90] sm:$0xff]
    %v3426 = vld [vmem:[#allocation13 + $0x98] sm:$0xff]
    %v3427 = vld [vmem:[#allocation13 + $0xa0] sm:$0xff]
    %v3428 = vld [vmem:[#allocation13 + $0xa8] sm:$0xff]
    %v3429 = vld [vmem:[#allocation13 + $0xb0] sm:$0xff]
    %v3430 = vld [vmem:[#allocation13 + $0xb8] sm:$0xff]
    %v3431 = vld [vmem:[#allocation13 + $0xc0] sm:$0xff]
    %v3432 = vld [vmem:[#allocation13 + $0xc8] sm:$0xff]
    %v3433 = vld [vmem:[#allocation13 + $0xd0] sm:$0xff]
    %v3434 = vld [vmem:[#allocation13 + $0xd8] sm:$0xff]
    %v3435 = vld [vmem:[#allocation13 + $0xe0] sm:$0xff]
    %v3436 = vld [vmem:[#allocation13 + $0xe8] sm:$0xff]
    %v3437 = vld [vmem:[#allocation13 + $0xf0] sm:$0xff]
    %v3438 = vld [vmem:[#allocation13 + $0xf8] sm:$0xff]
    %v3439 = vld [vmem:[#allocation13 + $0x100] sm:$0xff]
    %v3440 = vld [vmem:[#allocation13 + $0x108] sm:$0xff]
    %v3441 = vld [vmem:[#allocation13 + $0x110] sm:$0xff]
    %v3442 = vld [vmem:[#allocation13 + $0x118] sm:$0xff]
    %v3443 = vld [vmem:[#allocation13 + $0x120] sm:$0xff]
    %v3444 = vld [vmem:[#allocation13 + $0x128] sm:$0xff]
    %v3445 = vld [vmem:[#allocation13 + $0x130] sm:$0xff]
    %v3446 = vld [vmem:[#allocation13 + $0x138] sm:$0xff]
    %v3447 = vld [vmem:[#allocation13 + $0x140] sm:$0xff]
    %v3448 = vld [vmem:[#allocation13 + $0x148] sm:$0xff]
    %v3449 = vld [vmem:[#allocation13 + $0x150] sm:$0xff]
    %v3450 = vld [vmem:[#allocation13 + $0x158] sm:$0xff]
    %v3451 = vld [vmem:[#allocation13 + $0x160] sm:$0xff]
    %v3452 = vld [vmem:[#allocation13 + $0x168] sm:$0xff]
    %v3453 = vld [vmem:[#allocation13 + $0x170] sm:$0xff]
    %v3454 = vld [vmem:[#allocation13 + $0x178] sm:$0xff]
    %v3455 = vld [vmem:[#allocation13 + $0x180] sm:$0xff]
    %v3456 = vld [vmem:[#allocation13 + $0x188] sm:$0xff]
    %v3457 = vld [vmem:[#allocation13 + $0x190] sm:$0xff]
    %v3458 = vld [vmem:[#allocation13 + $0x198] sm:$0xff]
    %v3459 = vld [vmem:[#allocation13 + $0x1a0] sm:$0xff]
    %v3460 = vld [vmem:[#allocation13 + $0x1a8] sm:$0xff]
    %v3461 = vld [vmem:[#allocation13 + $0x1b0] sm:$0xff]
    %v3462 = vld [vmem:[#allocation13 + $0x1b8] sm:$0xff]
    %v3463 = vld [vmem:[#allocation13 + $0x1c0] sm:$0xff]
    %v3464 = vld [vmem:[#allocation13 + $0x1c8] sm:$0xff]
    %v3465 = vld [vmem:[#allocation13 + $0x1d0] sm:$0xff]
    %v3466 = vld [vmem:[#allocation13 + $0x1d8] sm:$0xff]
    %v3467 = vld [vmem:[#allocation13 + $0x1e0] sm:$0xff]
    %v3468 = vld [vmem:[#allocation13 + $0x1e8] sm:$0xff]
    %v3469 = vld [vmem:[#allocation13 + $0x1f0] sm:$0xff]
    %v3470 = vld [vmem:[#allocation13 + $0x1f8] sm:$0xff]
    %3471 = vmatprep.subr.mxu0 %v3408
    %3472 = vmatpush1.msra.mxu0 %v3407
    %3473 = vmatprep.subr.mxu0 %v3412
    %3474 = vmatpush1.msra.mxu0 %v3411
    %3475 = vmatprep.subr.mxu0 %v3416
    %3476 = vmatpush1.msra.mxu0 %v3415
    %3477 = vmatprep.subr.mxu0 %v3420
    %3478 = vmatpush1.msra.mxu0 %v3419
    %3479 = vmatprep.subr.mxu0 %v3424
    %3480 = vmatpush1.msra.mxu0 %v3423
    %3481 = vmatprep.subr.mxu0 %v3428
    %3482 = vmatpush1.msra.mxu0 %v3427
    %3483 = vmatprep.subr.mxu0 %v3432
    %3484 = vmatpush1.msra.mxu0 %v3431
    %3485 = vmatprep.subr.mxu0 %v3436
    %3486 = vmatpush1.msra.mxu0 %v3435
    %3487 = vmatprep.subr.mxu0 %v3440
    %3488 = vmatpush1.msra.mxu0 %v3439
    %3489 = vmatprep.subr.mxu0 %v3444
    %3490 = vmatpush1.msra.mxu0 %v3443
    %3491 = vmatprep.subr.mxu0 %v3448
    %3492 = vmatpush1.msra.mxu0 %v3447
    %3493 = vmatprep.subr.mxu0 %v3452
    %3494 = vmatpush1.msra.mxu0 %v3451
    %3495 = vmatprep.subr.mxu0 %v3456
    %3496 = vmatpush1.msra.mxu0 %v3455
    %3497 = vmatprep.subr.mxu0 %v3460
    %3498 = vmatpush1.msra.mxu0 %v3459
    %3499 = vmatprep.subr.mxu0 %v3464
    %3500 = vmatpush1.msra.mxu0 %v3463
    %3501 = vmatprep.subr.mxu0 %v3468
    %3502 = vmatpush1.msra.mxu0 %v3467
    %3503 = vmatprep.subr.mxu0 0.0
    %3504 = vmatpush1.msra.mxu0 0.0
    %3505 = vmatprep.subr.mxu0 0.0
    %3506 = vmatpush1.msra.mxu0 0.0
    %3507 = vmatprep.subr.mxu0 0.0
    %3508 = vmatpush1.msra.mxu0 0.0
    %3509 = vmatprep.subr.mxu0 0.0
    %3510 = vmatpush1.msra.mxu0 0.0
    %3511 = vmatprep.subr.mxu0 0.0
    %3512 = vmatpush1.msra.mxu0 0.0
    %3513 = vmatprep.subr.mxu0 0.0
    %3514 = vmatpush1.msra.mxu0 0.0
    %3515 = vmatprep.subr.mxu0 0.0
    %3516 = vmatpush1.msra.mxu0 0.0
    %3517 = vmatprep.subr.mxu0 0.0
    %3518 = vmatpush1.msra.mxu0 0.0
    %3519 = vmatprep.subr.mxu0 0.0
    %3520 = vmatpush1.msra.mxu0 0.0
    %3521 = vmatprep.subr.mxu0 0.0
    %3522 = vmatpush1.msra.mxu0 0.0
    %3523 = vmatprep.subr.mxu0 0.0
    %3524 = vmatpush1.msra.mxu0 0.0
    %3525 = vmatprep.subr.mxu0 0.0
    %3526 = vmatpush1.msra.mxu0 0.0
    %3527 = vmatprep.subr.mxu0 0.0
    %3528 = vmatpush1.msra.mxu0 0.0
    %3529 = vmatprep.subr.mxu0 0.0
    %3530 = vmatpush1.msra.mxu0 0.0
    %3531 = vmatprep.subr.mxu0 0.0
    %3532 = vmatpush1.msra.mxu0 0.0
    %3533 = vmatprep.subr.mxu0 0.0
    %3534 = vmatpush1.msra.mxu0 0.0
    %3535 = vmatprep.mubr.f32.mxu0 0.0
    %3536 = vmatmul.mubr.f32.gmra.mrb[0].mxu0 0.0
    %v3537 = vpop.f32.mrb[0].mxu0
    %v3538 = vadd.f32 0.0, %v3537
    %v3539 = vpop.f32.mrb[0].mxu0
    %v3540 = vadd.f32 0.0, %v3539
    %3541 = vdwg.mxu0
    %3542 = vmatprep.subr.mxu0 %v3410
    %3543 = vmatpush1.msra.mxu0 %v3409
    %3544 = vmatprep.subr.mxu0 %v3414
    %3545 = vmatpush1.msra.mxu0 %v3413
    %3546 = vmatprep.subr.mxu0 %v3418
    %3547 = vmatpush1.msra.mxu0 %v3417
    %3548 = vmatprep.subr.mxu0 %v3422
    %3549 = vmatpush1.msra.mxu0 %v3421
    %3550 = vmatprep.subr.mxu0 %v3426
    %3551 = vmatpush1.msra.mxu0 %v3425
    %3552 = vmatprep.subr.mxu0 %v3430
    %3553 = vmatpush1.msra.mxu0 %v3429
    %3554 = vmatprep.subr.mxu0 %v3434
    %3555 = vmatpush1.msra.mxu0 %v3433
    %3556 = vmatprep.subr.mxu0 %v3438
    %3557 = vmatpush1.msra.mxu0 %v3437
    %3558 = vmatprep.subr.mxu0 %v3442
    %3559 = vmatpush1.msra.mxu0 %v3441
    %3560 = vmatprep.subr.mxu0 %v3446
    %3561 = vmatpush1.msra.mxu0 %v3445
    %3562 = vmatprep.subr.mxu0 %v3450
    %3563 = vmatpush1.msra.mxu0 %v3449
    %3564 = vmatprep.subr.mxu0 %v3454
    %3565 = vmatpush1.msra.mxu0 %v3453
    %3566 = vmatprep.subr.mxu0 %v3458
    %3567 = vmatpush1.msra.mxu0 %v3457
    %3568 = vmatprep.subr.mxu0 %v3462
    %3569 = vmatpush1.msra.mxu0 %v3461
    %3570 = vmatprep.subr.mxu0 %v3466
    %3571 = vmatpush1.msra.mxu0 %v3465
    %3572 = vmatprep.subr.mxu0 %v3470
    %3573 = vmatpush1.msra.mxu0 %v3469
    %3574 = vmatprep.subr.mxu0 0.0
    %3575 = vmatpush1.msra.mxu0 0.0
    %3576 = vmatprep.subr.mxu0 0.0
    %3577 = vmatpush1.msra.mxu0 0.0
    %3578 = vmatprep.subr.mxu0 0.0
    %3579 = vmatpush1.msra.mxu0 0.0
    %3580 = vmatprep.subr.mxu0 0.0
    %3581 = vmatpush1.msra.mxu0 0.0
    %3582 = vmatprep.subr.mxu0 0.0
    %3583 = vmatpush1.msra.mxu0 0.0
    %3584 = vmatprep.subr.mxu0 0.0
    %3585 = vmatpush1.msra.mxu0 0.0
    %3586 = vmatprep.subr.mxu0 0.0
    %3587 = vmatpush1.msra.mxu0 0.0
    %3588 = vmatprep.subr.mxu0 0.0
    %3589 = vmatpush1.msra.mxu0 0.0
    %3590 = vmatprep.subr.mxu0 0.0
    %3591 = vmatpush1.msra.mxu0 0.0
    %3592 = vmatprep.subr.mxu0 0.0
    %3593 = vmatpush1.msra.mxu0 0.0
    %3594 = vmatprep.subr.mxu0 0.0
    %3595 = vmatpush1.msra.mxu0 0.0
    %3596 = vmatprep.subr.mxu0 0.0
    %3597 = vmatpush1.msra.mxu0 0.0
    %3598 = vmatprep.subr.mxu0 0.0
    %3599 = vmatpush1.msra.mxu0 0.0
    %3600 = vmatprep.subr.mxu0 0.0
    %3601 = vmatpush1.msra.mxu0 0.0
    %3602 = vmatprep.subr.mxu0 0.0
    %3603 = vmatpush1.msra.mxu0 0.0
    %3604 = vmatprep.subr.mxu0 0.0
    %3605 = vmatpush1.msra.mxu0 0.0
    %3606 = vmatprep.mubr.f32.mxu0 0.0
    %3607 = vmatmul.mubr.f32.gmra.mrb[0].mxu0 0.0
    %v3608 = vpop.f32.mrb[0].mxu0
    %v3609 = vadd.f32 0.0, %v3608
    %v3610 = vpop.f32.mrb[0].mxu0
    %v3611 = vadd.f32 0.0, %v3610
    %3612 = vdwg.mxu0
    %v3613 = vld [vmem:[%s654] sm:$0xff]
    %v3614 = vld [vmem:[%s654 + $0x8] sm:$0xff]
    %v3615 = vadd.f32 %v3538, %v3613
    %v3616 = vadd.f32 %v3540, %v3614
    %v3617 = vld [vmem:[%s661 + $0x10] sm:$0xff]
    %v3618 = vld [vmem:[%s661 + $0x18] sm:$0xff]
    %v3619 = vadd.f32 %v3609, %v3617
    %v3620 = vadd.f32 %v3611, %v3618
    %v3621 = vxor.u32 %v3615, 2147483648
    %v3622 = vxor.u32 %v3616, 2147483648
    %v3623 = vmul.f32 %v3621, 1.442695
    %v3624 = vpow.pop %v3623
    %v3625 = vmul.f32 %v3622, 1.442695
    %v3626 = vpow.pop %v3625
    %v3627 = vadd.f32 %v3624, 1.0
    %v3628 = vadd.f32 %v3626, 1.0
    %v3629 = vrcp.pop %v3627
    %v3630 = vmul.f32 1.0, %v3629
    %v3631 = vrcp.pop %v3628
    %v3632 = vmul.f32 1.0, %v3631
    %v3633 = vtanh.pop %v3616
    %v3634 = vmul.f32 %v3630, 0.0
    %3636 = vrot.lane.b32.xlu0 %v3633, 64
    %v3637 = vpop.permute.xlu0 %3636
    %v3639 = vmul.f32 %v3630, %v3637
    %3641 = vrot.lane.b32.xlu0 %v3639, 64
    %v3642 = vpop.permute.xlu0 %3641
    %v3644 = vadd.f32 %v3634, %v3642
    %v3645 = vtanh.pop %v3644
    %3647 = vrot.lane.b32.xlu0 %v3645, 64
    %v3648 = vpop.permute.xlu0 %3647
    %v3650 = vmul.f32 %v3632, %v3648
    %v3651 = vxor.u32 %v3619, 2147483648
    %v3652 = vxor.u32 %v3620, 2147483648
    %v3653 = vmul.f32 %v3651, 1.442695
    %v3654 = vpow.pop %v3653
    %v3655 = vmul.f32 %v3652, 1.442695
    %v3656 = vpow.pop %v3655
    %v3657 = vadd.f32 %v3654, 1.0
    %v3658 = vadd.f32 %v3656, 1.0
    %v3659 = vrcp.pop %v3657
    %v3660 = vmul.f32 1.0, %v3659
    %v3661 = vrcp.pop %v3658
    %v3662 = vmul.f32 1.0, %v3661
    %v3663 = vtanh.pop %v3620
    %v3664 = vmul.f32 %v3660, 0.0
    %3666 = vrot.lane.b32.xlu0 %v3663, 64
    %v3667 = vpop.permute.xlu0 %3666
    %v3669 = vmul.f32 %v3660, %v3667
    %3671 = vrot.lane.b32.xlu0 %v3669, 64
    %v3672 = vpop.permute.xlu0 %3671
    %v3674 = vadd.f32 %v3664, %v3672
    %v3675 = vtanh.pop %v3674
    %3677 = vrot.lane.b32.xlu0 %v3675, 64
    %v3678 = vpop.permute.xlu0 %3677
    %v3680 = vmul.f32 %v3662, %v3678
    %3681 = vst.msk [vmem:[#allocation14] sm:$0xff] %vm163, %v3650
    %s3682 = scalar_lea.vmem [#allocation15], 56
    %3683 = vst.msk [vmem:[%s3682] sm:$0xff] %vm163, %v3680
    %3685 = vrot.lane.b32.xlu0 %v3680, 64
    %v3686 = vpop.permute.xlu0 %3685
    %v3688 = vsel %vm163, %v3650, %v3686
    %v3689 = vld [vmem:[#allocation13] sm:$0xff]
    %v3690 = vld [vmem:[#allocation13 + $0x8] sm:$0xff]
    %v3691 = vld [vmem:[#allocation13 + $0x10] sm:$0xff]
    %v3692 = vld [vmem:[#allocation13 + $0x18] sm:$0xff]
    %v3693 = vld [vmem:[#allocation13 + $0x20] sm:$0xff]
    %v3694 = vld [vmem:[#allocation13 + $0x28] sm:$0xff]
    %v3695 = vld [vmem:[#allocation13 + $0x30] sm:$0xff]
    %v3696 = vld [vmem:[#allocation13 + $0x38] sm:$0xff]
    %v3697 = vld [vmem:[#allocation13 + $0x40] sm:$0xff]
    %v3698 = vld [vmem:[#allocation13 + $0x48] sm:$0xff]
    %v3699 = vld [vmem:[#allocation13 + $0x50] sm:$0xff]
    %v3700 = vld [vmem:[#allocation13 + $0x58] sm:$0xff]
    %v3701 = vld [vmem:[#allocation13 + $0x60] sm:$0xff]
    %v3702 = vld [vmem:[#allocation13 + $0x68] sm:$0xff]
    %v3703 = vld [vmem:[#allocation13 + $0x70] sm:$0xff]
    %v3704 = vld [vmem:[#allocation13 + $0x78] sm:$0xff]
    %v3705 = vld [vmem:[#allocation13 + $0x80] sm:$0xff]
    %v3706 = vld [vmem:[#allocation13 + $0x88] sm:$0xff]
    %v3707 = vld [vmem:[#allocation13 + $0x90] sm:$0xff]
    %v3708 = vld [vmem:[#allocation13 + $0x98] sm:$0xff]
    %v3709 = vld [vmem:[#allocation13 + $0xa0] sm:$0xff]
    %v3710 = vld [vmem:[#allocation13 + $0xa8] sm:$0xff]
    %v3711 = vld [vmem:[#allocation13 + $0xb0] sm:$0xff]
    %v3712 = vld [vmem:[#allocation13 + $0xb8] sm:$0xff]
    %v3713 = vld [vmem:[#allocation13 + $0xc0] sm:$0xff]
    %v3714 = vld [vmem:[#allocation13 + $0xc8] sm:$0xff]
    %v3715 = vld [vmem:[#allocation13 + $0xd0] sm:$0xff]
    %v3716 = vld [vmem:[#allocation13 + $0xd8] sm:$0xff]
    %v3717 = vld [vmem:[#allocation13 + $0xe0] sm:$0xff]
    %v3718 = vld [vmem:[#allocation13 + $0xe8] sm:$0xff]
    %v3719 = vld [vmem:[#allocation13 + $0xf0] sm:$0xff]
    %v3720 = vld [vmem:[#allocation13 + $0xf8] sm:$0xff]
    %v3721 = vld [vmem:[#allocation13 + $0x100] sm:$0xff]
    %v3722 = vld [vmem:[#allocation13 + $0x108] sm:$0xff]
    %v3723 = vld [vmem:[#allocation13 + $0x110] sm:$0xff]
    %v3724 = vld [vmem:[#allocation13 + $0x118] sm:$0xff]
    %v3725 = vld [vmem:[#allocation13 + $0x120] sm:$0xff]
    %v3726 = vld [vmem:[#allocation13 + $0x128] sm:$0xff]
    %v3727 = vld [vmem:[#allocation13 + $0x130] sm:$0xff]
    %v3728 = vld [vmem:[#allocation13 + $0x138] sm:$0xff]
    %v3729 = vld [vmem:[#allocation13 + $0x140] sm:$0xff]
    %v3730 = vld [vmem:[#allocation13 + $0x148] sm:$0xff]
    %v3731 = vld [vmem:[#allocation13 + $0x150] sm:$0xff]
    %v3732 = vld [vmem:[#allocation13 + $0x158] sm:$0xff]
    %v3733 = vld [vmem:[#allocation13 + $0x160] sm:$0xff]
    %v3734 = vld [vmem:[#allocation13 + $0x168] sm:$0xff]
    %v3735 = vld [vmem:[#allocation13 + $0x170] sm:$0xff]
    %v3736 = vld [vmem:[#allocation13 + $0x178] sm:$0xff]
    %v3737 = vld [vmem:[#allocation13 + $0x180] sm:$0xff]
    %v3738 = vld [vmem:[#allocation13 + $0x188] sm:$0xff]
    %v3739 = vld [vmem:[#allocation13 + $0x190] sm:$0xff]
    %v3740 = vld [vmem:[#allocation13 + $0x198] sm:$0xff]
    %v3741 = vld [vmem:[#allocation13 + $0x1a0] sm:$0xff]
    %v3742 = vld [vmem:[#allocation13 + $0x1a8] sm:$0xff]
    %v3743 = vld [vmem:[#allocation13 + $0x1b0] sm:$0xff]
    %v3744 = vld [vmem:[#allocation13 + $0x1b8] sm:$0xff]
    %v3745 = vld [vmem:[#allocation13 + $0x1c0] sm:$0xff]
    %v3746 = vld [vmem:[#allocation13 + $0x1c8] sm:$0xff]
    %v3747 = vld [vmem:[#allocation13 + $0x1d0] sm:$0xff]
    %v3748 = vld [vmem:[#allocation13 + $0x1d8] sm:$0xff]
    %v3749 = vld [vmem:[#allocation13 + $0x1e0] sm:$0xff]
    %v3750 = vld [vmem:[#allocation13 + $0x1e8] sm:$0xff]
    %v3751 = vld [vmem:[#allocation13 + $0x1f0] sm:$0xff]
    %v3752 = vld [vmem:[#allocation13 + $0x1f8] sm:$0xff]
    %3753 = vmatprep.subr.mxu0 %v3690
    %3754 = vmatpush1.msra.mxu0 %v3689
    %3755 = vmatprep.subr.mxu0 %v3694
    %3756 = vmatpush1.msra.mxu0 %v3693
    %3757 = vmatprep.subr.mxu0 %v3698
    %3758 = vmatpush1.msra.mxu0 %v3697
    %3759 = vmatprep.subr.mxu0 %v3702
    %3760 = vmatpush1.msra.mxu0 %v3701
    %3761 = vmatprep.subr.mxu0 %v3706
    %3762 = vmatpush1.msra.mxu0 %v3705
    %3763 = vmatprep.subr.mxu0 %v3710
    %3764 = vmatpush1.msra.mxu0 %v3709
    %3765 = vmatprep.subr.mxu0 %v3714
    %3766 = vmatpush1.msra.mxu0 %v3713
    %3767 = vmatprep.subr.mxu0 %v3718
    %3768 = vmatpush1.msra.mxu0 %v3717
    %3769 = vmatprep.subr.mxu0 %v3722
    %3770 = vmatpush1.msra.mxu0 %v3721
    %3771 = vmatprep.subr.mxu0 %v3726
    %3772 = vmatpush1.msra.mxu0 %v3725
    %3773 = vmatprep.subr.mxu0 %v3730
    %3774 = vmatpush1.msra.mxu0 %v3729
    %3775 = vmatprep.subr.mxu0 %v3734
    %3776 = vmatpush1.msra.mxu0 %v3733
    %3777 = vmatprep.subr.mxu0 %v3738
    %3778 = vmatpush1.msra.mxu0 %v3737
    %3779 = vmatprep.subr.mxu0 %v3742
    %3780 = vmatpush1.msra.mxu0 %v3741
    %3781 = vmatprep.subr.mxu0 %v3746
    %3782 = vmatpush1.msra.mxu0 %v3745
    %3783 = vmatprep.subr.mxu0 %v3750
    %3784 = vmatpush1.msra.mxu0 %v3749
    %3785 = vmatprep.subr.mxu0 0.0
    %3786 = vmatpush1.msra.mxu0 0.0
    %3787 = vmatprep.subr.mxu0 0.0
    %3788 = vmatpush1.msra.mxu0 0.0
    %3789 = vmatprep.subr.mxu0 0.0
    %3790 = vmatpush1.msra.mxu0 0.0
    %3791 = vmatprep.subr.mxu0 0.0
    %3792 = vmatpush1.msra.mxu0 0.0
    %3793 = vmatprep.subr.mxu0 0.0
    %3794 = vmatpush1.msra.mxu0 0.0
    %3795 = vmatprep.subr.mxu0 0.0
    %3796 = vmatpush1.msra.mxu0 0.0
    %3797 = vmatprep.subr.mxu0 0.0
    %3798 = vmatpush1.msra.mxu0 0.0
    %3799 = vmatprep.subr.mxu0 0.0
    %3800 = vmatpush1.msra.mxu0 0.0
    %3801 = vmatprep.subr.mxu0 0.0
    %3802 = vmatpush1.msra.mxu0 0.0
    %3803 = vmatprep.subr.mxu0 0.0
    %3804 = vmatpush1.msra.mxu0 0.0
    %3805 = vmatprep.subr.mxu0 0.0
    %3806 = vmatpush1.msra.mxu0 0.0
    %3807 = vmatprep.subr.mxu0 0.0
    %3808 = vmatpush1.msra.mxu0 0.0
    %3809 = vmatprep.subr.mxu0 0.0
    %3810 = vmatpush1.msra.mxu0 0.0
    %3811 = vmatprep.subr.mxu0 0.0
    %3812 = vmatpush1.msra.mxu0 0.0
    %3813 = vmatprep.subr.mxu0 0.0
    %3814 = vmatpush1.msra.mxu0 0.0
    %3815 = vmatprep.subr.mxu0 0.0
    %3816 = vmatpush1.msra.mxu0 0.0
    %3817 = vmatprep.mubr.f32.mxu0 0.0
    %3818 = vmatmul.mubr.f32.gmra.mrb[0].mxu0 %v3688
    %v3819 = vpop.f32.mrb[0].mxu0
    %v3820 = vadd.f32 0.0, %v3819
    %v3821 = vpop.f32.mrb[0].mxu0
    %v3822 = vadd.f32 0.0, %v3821
    %3823 = vdwg.mxu0
    %3824 = vmatprep.subr.mxu0 %v3692
    %3825 = vmatpush1.msra.mxu0 %v3691
    %3826 = vmatprep.subr.mxu0 %v3696
    %3827 = vmatpush1.msra.mxu0 %v3695
    %3828 = vmatprep.subr.mxu0 %v3700
    %3829 = vmatpush1.msra.mxu0 %v3699
    %3830 = vmatprep.subr.mxu0 %v3704
    %3831 = vmatpush1.msra.mxu0 %v3703
    %3832 = vmatprep.subr.mxu0 %v3708
    %3833 = vmatpush1.msra.mxu0 %v3707
    %3834 = vmatprep.subr.mxu0 %v3712
    %3835 = vmatpush1.msra.mxu0 %v3711
    %3836 = vmatprep.subr.mxu0 %v3716
    %3837 = vmatpush1.msra.mxu0 %v3715
    %3838 = vmatprep.subr.mxu0 %v3720
    %3839 = vmatpush1.msra.mxu0 %v3719
    %3840 = vmatprep.subr.mxu0 %v3724
    %3841 = vmatpush1.msra.mxu0 %v3723
    %3842 = vmatprep.subr.mxu0 %v3728
    %3843 = vmatpush1.msra.mxu0 %v3727
    %3844 = vmatprep.subr.mxu0 %v3732
    %3845 = vmatpush1.msra.mxu0 %v3731
    %3846 = vmatprep.subr.mxu0 %v3736
    %3847 = vmatpush1.msra.mxu0 %v3735
    %3848 = vmatprep.subr.mxu0 %v3740
    %3849 = vmatpush1.msra.mxu0 %v3739
    %3850 = vmatprep.subr.mxu0 %v3744
    %3851 = vmatpush1.msra.mxu0 %v3743
    %3852 = vmatprep.subr.mxu0 %v3748
    %3853 = vmatpush1.msra.mxu0 %v3747
    %3854 = vmatprep.subr.mxu0 %v3752
    %3855 = vmatpush1.msra.mxu0 %v3751
    %3856 = vmatprep.subr.mxu0 0.0
    %3857 = vmatpush1.msra.mxu0 0.0
    %3858 = vmatprep.subr.mxu0 0.0
    %3859 = vmatpush1.msra.mxu0 0.0
    %3860 = vmatprep.subr.mxu0 0.0
    %3861 = vmatpush1.msra.mxu0 0.0
    %3862 = vmatprep.subr.mxu0 0.0
    %3863 = vmatpush1.msra.mxu0 0.0
    %3864 = vmatprep.subr.mxu0 0.0
    %3865 = vmatpush1.msra.mxu0 0.0
    %3866 = vmatprep.subr.mxu0 0.0
    %3867 = vmatpush1.msra.mxu0 0.0
    %3868 = vmatprep.subr.mxu0 0.0
    %3869 = vmatpush1.msra.mxu0 0.0
    %3870 = vmatprep.subr.mxu0 0.0
    %3871 = vmatpush1.msra.mxu0 0.0
    %3872 = vmatprep.subr.mxu0 0.0
    %3873 = vmatpush1.msra.mxu0 0.0
    %3874 = vmatprep.subr.mxu0 0.0
    %3875 = vmatpush1.msra.mxu0 0.0
    %3876 = vmatprep.subr.mxu0 0.0
    %3877 = vmatpush1.msra.mxu0 0.0
    %3878 = vmatprep.subr.mxu0 0.0
    %3879 = vmatpush1.msra.mxu0 0.0
    %3880 = vmatprep.subr.mxu0 0.0
    %3881 = vmatpush1.msra.mxu0 0.0
    %3882 = vmatprep.subr.mxu0 0.0
    %3883 = vmatpush1.msra.mxu0 0.0
    %3884 = vmatprep.subr.mxu0 0.0
    %3885 = vmatpush1.msra.mxu0 0.0
    %3886 = vmatprep.subr.mxu0 0.0
    %3887 = vmatpush1.msra.mxu0 0.0
    %3888 = vmatprep.mubr.f32.mxu0 0.0
    %3889 = vmatmul.mubr.f32.gmra.mrb[0].mxu0 %v3688
    %v3890 = vpop.f32.mrb[0].mxu0
    %v3891 = vadd.f32 0.0, %v3890
    %v3892 = vpop.f32.mrb[0].mxu0
    %v3893 = vadd.f32 0.0, %v3892
    %3894 = vdwg.mxu0
    %v3895 = vld [vmem:[%s942] sm:$0xff]
    %v3896 = vld [vmem:[%s942 + $0x8] sm:$0xff]
    %v3897 = vadd.f32 %v3820, %v3895
    %v3898 = vadd.f32 %v3822, %v3896
    %v3899 = vld [vmem:[%s949 + $0x10] sm:$0xff]
    %v3900 = vld [vmem:[%s949 + $0x18] sm:$0xff]
    %v3901 = vadd.f32 %v3891, %v3899
    %v3902 = vadd.f32 %v3893, %v3900
    %v3903 = vxor.u32 %v3897, 2147483648
    %v3904 = vxor.u32 %v3898, 2147483648
    %v3905 = vmul.f32 %v3903, 1.442695
    %v3906 = vpow.pop %v3905
    %v3907 = vmul.f32 %v3904, 1.442695
    %v3908 = vpow.pop %v3907
    %v3909 = vadd.f32 %v3906, 1.0
    %v3910 = vadd.f32 %v3908, 1.0
    %v3911 = vrcp.pop %v3909
    %v3912 = vmul.f32 1.0, %v3911
    %v3913 = vrcp.pop %v3910
    %v3914 = vmul.f32 1.0, %v3913
    %v3915 = vtanh.pop %v3898
    %v3916 = vmul.f32 %v3912, %v3644
    %3918 = vrot.lane.b32.xlu0 %v3915, 64
    %v3919 = vpop.permute.xlu0 %3918
    %v3921 = vmul.f32 %v3912, %v3919
    %3923 = vrot.lane.b32.xlu0 %v3921, 64
    %v3924 = vpop.permute.xlu0 %3923
    %v3926 = vadd.f32 %v3916, %v3924
    %v3927 = vtanh.pop %v3926
    %3929 = vrot.lane.b32.xlu0 %v3927, 64
    %v3930 = vpop.permute.xlu0 %3929
    %v3932 = vmul.f32 %v3914, %v3930
    %v3933 = vxor.u32 %v3901, 2147483648
    %v3934 = vxor.u32 %v3902, 2147483648
    %v3935 = vmul.f32 %v3933, 1.442695
    %v3936 = vpow.pop %v3935
    %v3937 = vmul.f32 %v3934, 1.442695
    %v3938 = vpow.pop %v3937
    %v3939 = vadd.f32 %v3936, 1.0
    %v3940 = vadd.f32 %v3938, 1.0
    %v3941 = vrcp.pop %v3939
    %v3942 = vmul.f32 1.0, %v3941
    %v3943 = vrcp.pop %v3940
    %v3944 = vmul.f32 1.0, %v3943
    %v3945 = vtanh.pop %v3902
    %v3946 = vmul.f32 %v3942, %v3674
    %3948 = vrot.lane.b32.xlu0 %v3945, 64
    %v3949 = vpop.permute.xlu0 %3948
    %v3951 = vmul.f32 %v3942, %v3949
    %3953 = vrot.lane.b32.xlu0 %v3951, 64
    %v3954 = vpop.permute.xlu0 %3953
    %v3956 = vadd.f32 %v3946, %v3954
    %v3957 = vtanh.pop %v3956
    %3959 = vrot.lane.b32.xlu0 %v3957, 64
    %v3960 = vpop.permute.xlu0 %3959
    %v3962 = vmul.f32 %v3944, %v3960
    %s3963 = scalar_lea.vmem [#allocation14], 8
    %3964 = vst.msk [vmem:[%s3963] sm:$0xff] %vm163, %v3932
    %s3965 = scalar_lea.vmem [#allocation15], 48
    %3966 = vst.msk [vmem:[%s3965] sm:$0xff] %vm163, %v3962
    %3968 = vrot.lane.b32.xlu0 %v3962, 64
    %v3969 = vpop.permute.xlu0 %3968
    %v3971 = vsel %vm163, %v3932, %v3969
    %v3972 = vld [vmem:[#allocation13] sm:$0xff]
    %v3973 = vld [vmem:[#allocation13 + $0x8] sm:$0xff]
    %v3974 = vld [vmem:[#allocation13 + $0x10] sm:$0xff]
    %v3975 = vld [vmem:[#allocation13 + $0x18] sm:$0xff]
    %v3976 = vld [vmem:[#allocation13 + $0x20] sm:$0xff]
    %v3977 = vld [vmem:[#allocation13 + $0x28] sm:$0xff]
    %v3978 = vld [vmem:[#allocation13 + $0x30] sm:$0xff]
    %v3979 = vld [vmem:[#allocation13 + $0x38] sm:$0xff]
    %v3980 = vld [vmem:[#allocation13 + $0x40] sm:$0xff]
    %v3981 = vld [vmem:[#allocation13 + $0x48] sm:$0xff]
    %v3982 = vld [vmem:[#allocation13 + $0x50] sm:$0xff]
    %v3983 = vld [vmem:[#allocation13 + $0x58] sm:$0xff]
    %v3984 = vld [vmem:[#allocation13 + $0x60] sm:$0xff]
    %v3985 = vld [vmem:[#allocation13 + $0x68] sm:$0xff]
    %v3986 = vld [vmem:[#allocation13 + $0x70] sm:$0xff]
    %v3987 = vld [vmem:[#allocation13 + $0x78] sm:$0xff]
    %v3988 = vld [vmem:[#allocation13 + $0x80] sm:$0xff]
    %v3989 = vld [vmem:[#allocation13 + $0x88] sm:$0xff]
    %v3990 = vld [vmem:[#allocation13 + $0x90] sm:$0xff]
    %v3991 = vld [vmem:[#allocation13 + $0x98] sm:$0xff]
    %v3992 = vld [vmem:[#allocation13 + $0xa0] sm:$0xff]
    %v3993 = vld [vmem:[#allocation13 + $0xa8] sm:$0xff]
    %v3994 = vld [vmem:[#allocation13 + $0xb0] sm:$0xff]
    %v3995 = vld [vmem:[#allocation13 + $0xb8] sm:$0xff]
    %v3996 = vld [vmem:[#allocation13 + $0xc0] sm:$0xff]
    %v3997 = vld [vmem:[#allocation13 + $0xc8] sm:$0xff]
    %v3998 = vld [vmem:[#allocation13 + $0xd0] sm:$0xff]
    %v3999 = vld [vmem:[#allocation13 + $0xd8] sm:$0xff]
    %v4000 = vld [vmem:[#allocation13 + $0xe0] sm:$0xff]
    %v4001 = vld [vmem:[#allocation13 + $0xe8] sm:$0xff]
    %v4002 = vld [vmem:[#allocation13 + $0xf0] sm:$0xff]
    %v4003 = vld [vmem:[#allocation13 + $0xf8] sm:$0xff]
    %v4004 = vld [vmem:[#allocation13 + $0x100] sm:$0xff]
    %v4005 = vld [vmem:[#allocation13 + $0x108] sm:$0xff]
    %v4006 = vld [vmem:[#allocation13 + $0x110] sm:$0xff]
    %v4007 = vld [vmem:[#allocation13 + $0x118] sm:$0xff]
    %v4008 = vld [vmem:[#allocation13 + $0x120] sm:$0xff]
    %v4009 = vld [vmem:[#allocation13 + $0x128] sm:$0xff]
    %v4010 = vld [vmem:[#allocation13 + $0x130] sm:$0xff]
    %v4011 = vld [vmem:[#allocation13 + $0x138] sm:$0xff]
    %v4012 = vld [vmem:[#allocation13 + $0x140] sm:$0xff]
    %v4013 = vld [vmem:[#allocation13 + $0x148] sm:$0xff]
    %v4014 = vld [vmem:[#allocation13 + $0x150] sm:$0xff]
    %v4015 = vld [vmem:[#allocation13 + $0x158] sm:$0xff]
    %v4016 = vld [vmem:[#allocation13 + $0x160] sm:$0xff]
    %v4017 = vld [vmem:[#allocation13 + $0x168] sm:$0xff]
    %v4018 = vld [vmem:[#allocation13 + $0x170] sm:$0xff]
    %v4019 = vld [vmem:[#allocation13 + $0x178] sm:$0xff]
    %v4020 = vld [vmem:[#allocation13 + $0x180] sm:$0xff]
    %v4021 = vld [vmem:[#allocation13 + $0x188] sm:$0xff]
    %v4022 = vld [vmem:[#allocation13 + $0x190] sm:$0xff]
    %v4023 = vld [vmem:[#allocation13 + $0x198] sm:$0xff]
    %v4024 = vld [vmem:[#allocation13 + $0x1a0] sm:$0xff]
    %v4025 = vld [vmem:[#allocation13 + $0x1a8] sm:$0xff]
    %v4026 = vld [vmem:[#allocation13 + $0x1b0] sm:$0xff]
    %v4027 = vld [vmem:[#allocation13 + $0x1b8] sm:$0xff]
    %v4028 = vld [vmem:[#allocation13 + $0x1c0] sm:$0xff]
    %v4029 = vld [vmem:[#allocation13 + $0x1c8] sm:$0xff]
    %v4030 = vld [vmem:[#allocation13 + $0x1d0] sm:$0xff]
    %v4031 = vld [vmem:[#allocation13 + $0x1d8] sm:$0xff]
    %v4032 = vld [vmem:[#allocation13 + $0x1e0] sm:$0xff]
    %v4033 = vld [vmem:[#allocation13 + $0x1e8] sm:$0xff]
    %v4034 = vld [vmem:[#allocation13 + $0x1f0] sm:$0xff]
    %v4035 = vld [vmem:[#allocation13 + $0x1f8] sm:$0xff]
    %4036 = vmatprep.subr.mxu0 %v3973
    %4037 = vmatpush1.msra.mxu0 %v3972
    %4038 = vmatprep.subr.mxu0 %v3977
    %4039 = vmatpush1.msra.mxu0 %v3976
    %4040 = vmatprep.subr.mxu0 %v3981
    %4041 = vmatpush1.msra.mxu0 %v3980
    %4042 = vmatprep.subr.mxu0 %v3985
    %4043 = vmatpush1.msra.mxu0 %v3984
    %4044 = vmatprep.subr.mxu0 %v3989
    %4045 = vmatpush1.msra.mxu0 %v3988
    %4046 = vmatprep.subr.mxu0 %v3993
    %4047 = vmatpush1.msra.mxu0 %v3992
    %4048 = vmatprep.subr.mxu0 %v3997
    %4049 = vmatpush1.msra.mxu0 %v3996
    %4050 = vmatprep.subr.mxu0 %v4001
    %4051 = vmatpush1.msra.mxu0 %v4000
    %4052 = vmatprep.subr.mxu0 %v4005
    %4053 = vmatpush1.msra.mxu0 %v4004
    %4054 = vmatprep.subr.mxu0 %v4009
    %4055 = vmatpush1.msra.mxu0 %v4008
    %4056 = vmatprep.subr.mxu0 %v4013
    %4057 = vmatpush1.msra.mxu0 %v4012
    %4058 = vmatprep.subr.mxu0 %v4017
    %4059 = vmatpush1.msra.mxu0 %v4016
    %4060 = vmatprep.subr.mxu0 %v4021
    %4061 = vmatpush1.msra.mxu0 %v4020
    %4062 = vmatprep.subr.mxu0 %v4025
    %4063 = vmatpush1.msra.mxu0 %v4024
    %4064 = vmatprep.subr.mxu0 %v4029
    %4065 = vmatpush1.msra.mxu0 %v4028
    %4066 = vmatprep.subr.mxu0 %v4033
    %4067 = vmatpush1.msra.mxu0 %v4032
    %4068 = vmatprep.subr.mxu0 0.0
    %4069 = vmatpush1.msra.mxu0 0.0
    %4070 = vmatprep.subr.mxu0 0.0
    %4071 = vmatpush1.msra.mxu0 0.0
    %4072 = vmatprep.subr.mxu0 0.0
    %4073 = vmatpush1.msra.mxu0 0.0
    %4074 = vmatprep.subr.mxu0 0.0
    %4075 = vmatpush1.msra.mxu0 0.0
    %4076 = vmatprep.subr.mxu0 0.0
    %4077 = vmatpush1.msra.mxu0 0.0
    %4078 = vmatprep.subr.mxu0 0.0
    %4079 = vmatpush1.msra.mxu0 0.0
    %4080 = vmatprep.subr.mxu0 0.0
    %4081 = vmatpush1.msra.mxu0 0.0
    %4082 = vmatprep.subr.mxu0 0.0
    %4083 = vmatpush1.msra.mxu0 0.0
    %4084 = vmatprep.subr.mxu0 0.0
    %4085 = vmatpush1.msra.mxu0 0.0
    %4086 = vmatprep.subr.mxu0 0.0
    %4087 = vmatpush1.msra.mxu0 0.0
    %4088 = vmatprep.subr.mxu0 0.0
    %4089 = vmatpush1.msra.mxu0 0.0
    %4090 = vmatprep.subr.mxu0 0.0
    %4091 = vmatpush1.msra.mxu0 0.0
    %4092 = vmatprep.subr.mxu0 0.0
    %4093 = vmatpush1.msra.mxu0 0.0
    %4094 = vmatprep.subr.mxu0 0.0
    %4095 = vmatpush1.msra.mxu0 0.0
    %4096 = vmatprep.subr.mxu0 0.0
    %4097 = vmatpush1.msra.mxu0 0.0
    %4098 = vmatprep.subr.mxu0 0.0
    %4099 = vmatpush1.msra.mxu0 0.0
    %4100 = vmatprep.mubr.f32.mxu0 0.0
    %4101 = vmatmul.mubr.f32.gmra.mrb[0].mxu0 %v3971
    %v4102 = vpop.f32.mrb[0].mxu0
    %v4103 = vadd.f32 0.0, %v4102
    %v4104 = vpop.f32.mrb[0].mxu0
    %v4105 = vadd.f32 0.0, %v4104
    %4106 = vdwg.mxu0
    %4107 = vmatprep.subr.mxu0 %v3975
    %4108 = vmatpush1.msra.mxu0 %v3974
    %4109 = vmatprep.subr.mxu0 %v3979
    %4110 = vmatpush1.msra.mxu0 %v3978
    %4111 = vmatprep.subr.mxu0 %v3983
    %4112 = vmatpush1.msra.mxu0 %v3982
    %4113 = vmatprep.subr.mxu0 %v3987
    %4114 = vmatpush1.msra.mxu0 %v3986
    %4115 = vmatprep.subr.mxu0 %v3991
    %4116 = vmatpush1.msra.mxu0 %v3990
    %4117 = vmatprep.subr.mxu0 %v3995
    %4118 = vmatpush1.msra.mxu0 %v3994
    %4119 = vmatprep.subr.mxu0 %v3999
    %4120 = vmatpush1.msra.mxu0 %v3998
    %4121 = vmatprep.subr.mxu0 %v4003
    %4122 = vmatpush1.msra.mxu0 %v4002
    %4123 = vmatprep.subr.mxu0 %v4007
    %4124 = vmatpush1.msra.mxu0 %v4006
    %4125 = vmatprep.subr.mxu0 %v4011
    %4126 = vmatpush1.msra.mxu0 %v4010
    %4127 = vmatprep.subr.mxu0 %v4015
    %4128 = vmatpush1.msra.mxu0 %v4014
    %4129 = vmatprep.subr.mxu0 %v4019
    %4130 = vmatpush1.msra.mxu0 %v4018
    %4131 = vmatprep.subr.mxu0 %v4023
    %4132 = vmatpush1.msra.mxu0 %v4022
    %4133 = vmatprep.subr.mxu0 %v4027
    %4134 = vmatpush1.msra.mxu0 %v4026
    %4135 = vmatprep.subr.mxu0 %v4031
    %4136 = vmatpush1.msra.mxu0 %v4030
    %4137 = vmatprep.subr.mxu0 %v4035
    %4138 = vmatpush1.msra.mxu0 %v4034
    %4139 = vmatprep.subr.mxu0 0.0
    %4140 = vmatpush1.msra.mxu0 0.0
    %4141 = vmatprep.subr.mxu0 0.0
    %4142 = vmatpush1.msra.mxu0 0.0
    %4143 = vmatprep.subr.mxu0 0.0
    %4144 = vmatpush1.msra.mxu0 0.0
    %4145 = vmatprep.subr.mxu0 0.0
    %4146 = vmatpush1.msra.mxu0 0.0
    %4147 = vmatprep.subr.mxu0 0.0
    %4148 = vmatpush1.msra.mxu0 0.0
    %4149 = vmatprep.subr.mxu0 0.0
    %4150 = vmatpush1.msra.mxu0 0.0
    %4151 = vmatprep.subr.mxu0 0.0
    %4152 = vmatpush1.msra.mxu0 0.0
    %4153 = vmatprep.subr.mxu0 0.0
    %4154 = vmatpush1.msra.mxu0 0.0
    %4155 = vmatprep.subr.mxu0 0.0
    %4156 = vmatpush1.msra.mxu0 0.0
    %4157 = vmatprep.subr.mxu0 0.0
    %4158 = vmatpush1.msra.mxu0 0.0
    %4159 = vmatprep.subr.mxu0 0.0
    %4160 = vmatpush1.msra.mxu0 0.0
    %4161 = vmatprep.subr.mxu0 0.0
    %4162 = vmatpush1.msra.mxu0 0.0
    %4163 = vmatprep.subr.mxu0 0.0
    %4164 = vmatpush1.msra.mxu0 0.0
    %4165 = vmatprep.subr.mxu0 0.0
    %4166 = vmatpush1.msra.mxu0 0.0
    %4167 = vmatprep.subr.mxu0 0.0
    %4168 = vmatpush1.msra.mxu0 0.0
    %4169 = vmatprep.subr.mxu0 0.0
    %4170 = vmatpush1.msra.mxu0 0.0
    %4171 = vmatprep.mubr.f32.mxu0 0.0
    %4172 = vmatmul.mubr.f32.gmra.mrb[0].mxu0 %v3971
    %v4173 = vpop.f32.mrb[0].mxu0
    %v4174 = vadd.f32 0.0, %v4173
    %v4175 = vpop.f32.mrb[0].mxu0
    %v4176 = vadd.f32 0.0, %v4175
    %4177 = vdwg.mxu0
    %v4178 = vld [vmem:[%s1231] sm:$0xff]
    %v4179 = vld [vmem:[%s1231 + $0x8] sm:$0xff]
    %v4180 = vadd.f32 %v4103, %v4178
    %v4181 = vadd.f32 %v4105, %v4179
    %v4182 = vld [vmem:[%s1238 + $0x10] sm:$0xff]
    %v4183 = vld [vmem:[%s1238 + $0x18] sm:$0xff]
    %v4184 = vadd.f32 %v4174, %v4182
    %v4185 = vadd.f32 %v4176, %v4183
    %v4186 = vxor.u32 %v4180, 2147483648
    %v4187 = vxor.u32 %v4181, 2147483648
    %v4188 = vmul.f32 %v4186, 1.442695
    %v4189 = vpow.pop %v4188
    %v4190 = vmul.f32 %v4187, 1.442695
    %v4191 = vpow.pop %v4190
    %v4192 = vadd.f32 %v4189, 1.0
    %v4193 = vadd.f32 %v4191, 1.0
    %v4194 = vrcp.pop %v4192
    %v4195 = vmul.f32 1.0, %v4194
    %v4196 = vrcp.pop %v4193
    %v4197 = vmul.f32 1.0, %v4196
    %v4198 = vtanh.pop %v4181
    %v4199 = vmul.f32 %v4195, %v3926
    %4201 = vrot.lane.b32.xlu0 %v4198, 64
    %v4202 = vpop.permute.xlu0 %4201
    %v4204 = vmul.f32 %v4195, %v4202
    %4206 = vrot.lane.b32.xlu0 %v4204, 64
    %v4207 = vpop.permute.xlu0 %4206
    %v4209 = vadd.f32 %v4199, %v4207
    %v4210 = vtanh.pop %v4209
    %4212 = vrot.lane.b32.xlu0 %v4210, 64
    %v4213 = vpop.permute.xlu0 %4212
    %v4215 = vmul.f32 %v4197, %v4213
    %v4216 = vxor.u32 %v4184, 2147483648
    %v4217 = vxor.u32 %v4185, 2147483648
    %v4218 = vmul.f32 %v4216, 1.442695
    %v4219 = vpow.pop %v4218
    %v4220 = vmul.f32 %v4217, 1.442695
    %v4221 = vpow.pop %v4220
    %v4222 = vadd.f32 %v4219, 1.0
    %v4223 = vadd.f32 %v4221, 1.0
    %v4224 = vrcp.pop %v4222
    %v4225 = vmul.f32 1.0, %v4224
    %v4226 = vrcp.pop %v4223
    %v4227 = vmul.f32 1.0, %v4226
    %v4228 = vtanh.pop %v4185
    %v4229 = vmul.f32 %v4225, %v3956
    %4231 = vrot.lane.b32.xlu0 %v4228, 64
    %v4232 = vpop.permute.xlu0 %4231
    %v4234 = vmul.f32 %v4225, %v4232
    %4236 = vrot.lane.b32.xlu0 %v4234, 64
    %v4237 = vpop.permute.xlu0 %4236
    %v4239 = vadd.f32 %v4229, %v4237
    %v4240 = vtanh.pop %v4239
    %4242 = vrot.lane.b32.xlu0 %v4240, 64
    %v4243 = vpop.permute.xlu0 %4242
    %v4245 = vmul.f32 %v4227, %v4243
    %s4246 = scalar_lea.vmem [#allocation14], 16
    %4247 = vst.msk [vmem:[%s4246] sm:$0xff] %vm163, %v4215
    %s4248 = scalar_lea.vmem [#allocation15], 40
    %4249 = vst.msk [vmem:[%s4248] sm:$0xff] %vm163, %v4245
    %4251 = vrot.lane.b32.xlu0 %v4245, 64
    %v4252 = vpop.permute.xlu0 %4251
    %v4254 = vsel %vm163, %v4215, %v4252
    %v4255 = vld [vmem:[#allocation13] sm:$0xff]
    %v4256 = vld [vmem:[#allocation13 + $0x8] sm:$0xff]
    %v4257 = vld [vmem:[#allocation13 + $0x10] sm:$0xff]
    %v4258 = vld [vmem:[#allocation13 + $0x18] sm:$0xff]
    %v4259 = vld [vmem:[#allocation13 + $0x20] sm:$0xff]
    %v4260 = vld [vmem:[#allocation13 + $0x28] sm:$0xff]
    %v4261 = vld [vmem:[#allocation13 + $0x30] sm:$0xff]
    %v4262 = vld [vmem:[#allocation13 + $0x38] sm:$0xff]
    %v4263 = vld [vmem:[#allocation13 + $0x40] sm:$0xff]
    %v4264 = vld [vmem:[#allocation13 + $0x48] sm:$0xff]
    %v4265 = vld [vmem:[#allocation13 + $0x50] sm:$0xff]
    %v4266 = vld [vmem:[#allocation13 + $0x58] sm:$0xff]
    %v4267 = vld [vmem:[#allocation13 + $0x60] sm:$0xff]
    %v4268 = vld [vmem:[#allocation13 + $0x68] sm:$0xff]
    %v4269 = vld [vmem:[#allocation13 + $0x70] sm:$0xff]
    %v4270 = vld [vmem:[#allocation13 + $0x78] sm:$0xff]
    %v4271 = vld [vmem:[#allocation13 + $0x80] sm:$0xff]
    %v4272 = vld [vmem:[#allocation13 + $0x88] sm:$0xff]
    %v4273 = vld [vmem:[#allocation13 + $0x90] sm:$0xff]
    %v4274 = vld [vmem:[#allocation13 + $0x98] sm:$0xff]
    %v4275 = vld [vmem:[#allocation13 + $0xa0] sm:$0xff]
    %v4276 = vld [vmem:[#allocation13 + $0xa8] sm:$0xff]
    %v4277 = vld [vmem:[#allocation13 + $0xb0] sm:$0xff]
    %v4278 = vld [vmem:[#allocation13 + $0xb8] sm:$0xff]
    %v4279 = vld [vmem:[#allocation13 + $0xc0] sm:$0xff]
    %v4280 = vld [vmem:[#allocation13 + $0xc8] sm:$0xff]
    %v4281 = vld [vmem:[#allocation13 + $0xd0] sm:$0xff]
    %v4282 = vld [vmem:[#allocation13 + $0xd8] sm:$0xff]
    %v4283 = vld [vmem:[#allocation13 + $0xe0] sm:$0xff]
    %v4284 = vld [vmem:[#allocation13 + $0xe8] sm:$0xff]
    %v4285 = vld [vmem:[#allocation13 + $0xf0] sm:$0xff]
    %v4286 = vld [vmem:[#allocation13 + $0xf8] sm:$0xff]
    %v4287 = vld [vmem:[#allocation13 + $0x100] sm:$0xff]
    %v4288 = vld [vmem:[#allocation13 + $0x108] sm:$0xff]
    %v4289 = vld [vmem:[#allocation13 + $0x110] sm:$0xff]
    %v4290 = vld [vmem:[#allocation13 + $0x118] sm:$0xff]
    %v4291 = vld [vmem:[#allocation13 + $0x120] sm:$0xff]
    %v4292 = vld [vmem:[#allocation13 + $0x128] sm:$0xff]
    %v4293 = vld [vmem:[#allocation13 + $0x130] sm:$0xff]
    %v4294 = vld [vmem:[#allocation13 + $0x138] sm:$0xff]
    %v4295 = vld [vmem:[#allocation13 + $0x140] sm:$0xff]
    %v4296 = vld [vmem:[#allocation13 + $0x148] sm:$0xff]
    %v4297 = vld [vmem:[#allocation13 + $0x150] sm:$0xff]
    %v4298 = vld [vmem:[#allocation13 + $0x158] sm:$0xff]
    %v4299 = vld [vmem:[#allocation13 + $0x160] sm:$0xff]
    %v4300 = vld [vmem:[#allocation13 + $0x168] sm:$0xff]
    %v4301 = vld [vmem:[#allocation13 + $0x170] sm:$0xff]
    %v4302 = vld [vmem:[#allocation13 + $0x178] sm:$0xff]
    %v4303 = vld [vmem:[#allocation13 + $0x180] sm:$0xff]
    %v4304 = vld [vmem:[#allocation13 + $0x188] sm:$0xff]
    %v4305 = vld [vmem:[#allocation13 + $0x190] sm:$0xff]
    %v4306 = vld [vmem:[#allocation13 + $0x198] sm:$0xff]
    %v4307 = vld [vmem:[#allocation13 + $0x1a0] sm:$0xff]
    %v4308 = vld [vmem:[#allocation13 + $0x1a8] sm:$0xff]
    %v4309 = vld [vmem:[#allocation13 + $0x1b0] sm:$0xff]
    %v4310 = vld [vmem:[#allocation13 + $0x1b8] sm:$0xff]
    %v4311 = vld [vmem:[#allocation13 + $0x1c0] sm:$0xff]
    %v4312 = vld [vmem:[#allocation13 + $0x1c8] sm:$0xff]
    %v4313 = vld [vmem:[#allocation13 + $0x1d0] sm:$0xff]
    %v4314 = vld [vmem:[#allocation13 + $0x1d8] sm:$0xff]
    %v4315 = vld [vmem:[#allocation13 + $0x1e0] sm:$0xff]
    %v4316 = vld [vmem:[#allocation13 + $0x1e8] sm:$0xff]
    %v4317 = vld [vmem:[#allocation13 + $0x1f0] sm:$0xff]
    %v4318 = vld [vmem:[#allocation13 + $0x1f8] sm:$0xff]
    %4319 = vmatprep.subr.mxu0 %v4256
    %4320 = vmatpush1.msra.mxu0 %v4255
    %4321 = vmatprep.subr.mxu0 %v4260
    %4322 = vmatpush1.msra.mxu0 %v4259
    %4323 = vmatprep.subr.mxu0 %v4264
    %4324 = vmatpush1.msra.mxu0 %v4263
    %4325 = vmatprep.subr.mxu0 %v4268
    %4326 = vmatpush1.msra.mxu0 %v4267
    %4327 = vmatprep.subr.mxu0 %v4272
    %4328 = vmatpush1.msra.mxu0 %v4271
    %4329 = vmatprep.subr.mxu0 %v4276
    %4330 = vmatpush1.msra.mxu0 %v4275
    %4331 = vmatprep.subr.mxu0 %v4280
    %4332 = vmatpush1.msra.mxu0 %v4279
    %4333 = vmatprep.subr.mxu0 %v4284
    %4334 = vmatpush1.msra.mxu0 %v4283
    %4335 = vmatprep.subr.mxu0 %v4288
    %4336 = vmatpush1.msra.mxu0 %v4287
    %4337 = vmatprep.subr.mxu0 %v4292
    %4338 = vmatpush1.msra.mxu0 %v4291
    %4339 = vmatprep.subr.mxu0 %v4296
    %4340 = vmatpush1.msra.mxu0 %v4295
    %4341 = vmatprep.subr.mxu0 %v4300
    %4342 = vmatpush1.msra.mxu0 %v4299
    %4343 = vmatprep.subr.mxu0 %v4304
    %4344 = vmatpush1.msra.mxu0 %v4303
    %4345 = vmatprep.subr.mxu0 %v4308
    %4346 = vmatpush1.msra.mxu0 %v4307
    %4347 = vmatprep.subr.mxu0 %v4312
    %4348 = vmatpush1.msra.mxu0 %v4311
    %4349 = vmatprep.subr.mxu0 %v4316
    %4350 = vmatpush1.msra.mxu0 %v4315
    %4351 = vmatprep.subr.mxu0 0.0
    %4352 = vmatpush1.msra.mxu0 0.0
    %4353 = vmatprep.subr.mxu0 0.0
    %4354 = vmatpush1.msra.mxu0 0.0
    %4355 = vmatprep.subr.mxu0 0.0
    %4356 = vmatpush1.msra.mxu0 0.0
    %4357 = vmatprep.subr.mxu0 0.0
    %4358 = vmatpush1.msra.mxu0 0.0
    %4359 = vmatprep.subr.mxu0 0.0
    %4360 = vmatpush1.msra.mxu0 0.0
    %4361 = vmatprep.subr.mxu0 0.0
    %4362 = vmatpush1.msra.mxu0 0.0
    %4363 = vmatprep.subr.mxu0 0.0
    %4364 = vmatpush1.msra.mxu0 0.0
    %4365 = vmatprep.subr.mxu0 0.0
    %4366 = vmatpush1.msra.mxu0 0.0
    %4367 = vmatprep.subr.mxu0 0.0
    %4368 = vmatpush1.msra.mxu0 0.0
    %4369 = vmatprep.subr.mxu0 0.0
    %4370 = vmatpush1.msra.mxu0 0.0
    %4371 = vmatprep.subr.mxu0 0.0
    %4372 = vmatpush1.msra.mxu0 0.0
    %4373 = vmatprep.subr.mxu0 0.0
    %4374 = vmatpush1.msra.mxu0 0.0
    %4375 = vmatprep.subr.mxu0 0.0
    %4376 = vmatpush1.msra.mxu0 0.0
    %4377 = vmatprep.subr.mxu0 0.0
    %4378 = vmatpush1.msra.mxu0 0.0
    %4379 = vmatprep.subr.mxu0 0.0
    %4380 = vmatpush1.msra.mxu0 0.0
    %4381 = vmatprep.subr.mxu0 0.0
    %4382 = vmatpush1.msra.mxu0 0.0
    %4383 = vmatprep.mubr.f32.mxu0 0.0
    %4384 = vmatmul.mubr.f32.gmra.mrb[0].mxu0 %v4254
    %v4385 = vpop.f32.mrb[0].mxu0
    %v4386 = vadd.f32 0.0, %v4385
    %v4387 = vpop.f32.mrb[0].mxu0
    %v4388 = vadd.f32 0.0, %v4387
    %4389 = vdwg.mxu0
    %4390 = vmatprep.subr.mxu0 %v4258
    %4391 = vmatpush1.msra.mxu0 %v4257
    %4392 = vmatprep.subr.mxu0 %v4262
    %4393 = vmatpush1.msra.mxu0 %v4261
    %4394 = vmatprep.subr.mxu0 %v4266
    %4395 = vmatpush1.msra.mxu0 %v4265
    %4396 = vmatprep.subr.mxu0 %v4270
    %4397 = vmatpush1.msra.mxu0 %v4269
    %4398 = vmatprep.subr.mxu0 %v4274
    %4399 = vmatpush1.msra.mxu0 %v4273
    %4400 = vmatprep.subr.mxu0 %v4278
    %4401 = vmatpush1.msra.mxu0 %v4277
    %4402 = vmatprep.subr.mxu0 %v4282
    %4403 = vmatpush1.msra.mxu0 %v4281
    %4404 = vmatprep.subr.mxu0 %v4286
    %4405 = vmatpush1.msra.mxu0 %v4285
    %4406 = vmatprep.subr.mxu0 %v4290
    %4407 = vmatpush1.msra.mxu0 %v4289
    %4408 = vmatprep.subr.mxu0 %v4294
    %4409 = vmatpush1.msra.mxu0 %v4293
    %4410 = vmatprep.subr.mxu0 %v4298
    %4411 = vmatpush1.msra.mxu0 %v4297
    %4412 = vmatprep.subr.mxu0 %v4302
    %4413 = vmatpush1.msra.mxu0 %v4301
    %4414 = vmatprep.subr.mxu0 %v4306
    %4415 = vmatpush1.msra.mxu0 %v4305
    %4416 = vmatprep.subr.mxu0 %v4310
    %4417 = vmatpush1.msra.mxu0 %v4309
    %4418 = vmatprep.subr.mxu0 %v4314
    %4419 = vmatpush1.msra.mxu0 %v4313
    %4420 = vmatprep.subr.mxu0 %v4318
    %4421 = vmatpush1.msra.mxu0 %v4317
    %4422 = vmatprep.subr.mxu0 0.0
    %4423 = vmatpush1.msra.mxu0 0.0
    %4424 = vmatprep.subr.mxu0 0.0
    %4425 = vmatpush1.msra.mxu0 0.0
    %4426 = vmatprep.subr.mxu0 0.0
    %4427 = vmatpush1.msra.mxu0 0.0
    %4428 = vmatprep.subr.mxu0 0.0
    %4429 = vmatpush1.msra.mxu0 0.0
    %4430 = vmatprep.subr.mxu0 0.0
    %4431 = vmatpush1.msra.mxu0 0.0
    %4432 = vmatprep.subr.mxu0 0.0
    %4433 = vmatpush1.msra.mxu0 0.0
    %4434 = vmatprep.subr.mxu0 0.0
    %4435 = vmatpush1.msra.mxu0 0.0
    %4436 = vmatprep.subr.mxu0 0.0
    %4437 = vmatpush1.msra.mxu0 0.0
    %4438 = vmatprep.subr.mxu0 0.0
    %4439 = vmatpush1.msra.mxu0 0.0
    %4440 = vmatprep.subr.mxu0 0.0
    %4441 = vmatpush1.msra.mxu0 0.0
    %4442 = vmatprep.subr.mxu0 0.0
    %4443 = vmatpush1.msra.mxu0 0.0
    %4444 = vmatprep.subr.mxu0 0.0
    %4445 = vmatpush1.msra.mxu0 0.0
    %4446 = vmatprep.subr.mxu0 0.0
    %4447 = vmatpush1.msra.mxu0 0.0
    %4448 = vmatprep.subr.mxu0 0.0
    %4449 = vmatpush1.msra.mxu0 0.0
    %4450 = vmatprep.subr.mxu0 0.0
    %4451 = vmatpush1.msra.mxu0 0.0
    %4452 = vmatprep.subr.mxu0 0.0
    %4453 = vmatpush1.msra.mxu0 0.0
    %4454 = vmatprep.mubr.f32.mxu0 0.0
    %4455 = vmatmul.mubr.f32.gmra.mrb[0].mxu0 %v4254
    %v4456 = vpop.f32.mrb[0].mxu0
    %v4457 = vadd.f32 0.0, %v4456
    %v4458 = vpop.f32.mrb[0].mxu0
    %v4459 = vadd.f32 0.0, %v4458
    %4460 = vdwg.mxu0
    %v4461 = vld [vmem:[%s1520] sm:$0xff]
    %v4462 = vld [vmem:[%s1520 + $0x8] sm:$0xff]
    %v4463 = vadd.f32 %v4386, %v4461
    %v4464 = vadd.f32 %v4388, %v4462
    %v4465 = vld [vmem:[%s1527 + $0x10] sm:$0xff]
    %v4466 = vld [vmem:[%s1527 + $0x18] sm:$0xff]
    %v4467 = vadd.f32 %v4457, %v4465
    %v4468 = vadd.f32 %v4459, %v4466
    %v4469 = vxor.u32 %v4463, 2147483648
    %v4470 = vxor.u32 %v4464, 2147483648
    %v4471 = vmul.f32 %v4469, 1.442695
    %v4472 = vpow.pop %v4471
    %v4473 = vmul.f32 %v4470, 1.442695
    %v4474 = vpow.pop %v4473
    %v4475 = vadd.f32 %v4472, 1.0
    %v4476 = vadd.f32 %v4474, 1.0
    %v4477 = vrcp.pop %v4475
    %v4478 = vmul.f32 1.0, %v4477
    %v4479 = vrcp.pop %v4476
    %v4480 = vmul.f32 1.0, %v4479
    %v4481 = vtanh.pop %v4464
    %v4482 = vmul.f32 %v4478, %v4209
    %4484 = vrot.lane.b32.xlu0 %v4481, 64
    %v4485 = vpop.permute.xlu0 %4484
    %v4487 = vmul.f32 %v4478, %v4485
    %4489 = vrot.lane.b32.xlu0 %v4487, 64
    %v4490 = vpop.permute.xlu0 %4489
    %v4492 = vadd.f32 %v4482, %v4490
    %v4493 = vtanh.pop %v4492
    %4495 = vrot.lane.b32.xlu0 %v4493, 64
    %v4496 = vpop.permute.xlu0 %4495
    %v4498 = vmul.f32 %v4480, %v4496
    %v4499 = vxor.u32 %v4467, 2147483648
    %v4500 = vxor.u32 %v4468, 2147483648
    %v4501 = vmul.f32 %v4499, 1.442695
    %v4502 = vpow.pop %v4501
    %v4503 = vmul.f32 %v4500, 1.442695
    %v4504 = vpow.pop %v4503
    %v4505 = vadd.f32 %v4502, 1.0
    %v4506 = vadd.f32 %v4504, 1.0
    %v4507 = vrcp.pop %v4505
    %v4508 = vmul.f32 1.0, %v4507
    %v4509 = vrcp.pop %v4506
    %v4510 = vmul.f32 1.0, %v4509
    %v4511 = vtanh.pop %v4468
    %v4512 = vmul.f32 %v4508, %v4239
    %4514 = vrot.lane.b32.xlu0 %v4511, 64
    %v4515 = vpop.permute.xlu0 %4514
    %v4517 = vmul.f32 %v4508, %v4515
    %4519 = vrot.lane.b32.xlu0 %v4517, 64
    %v4520 = vpop.permute.xlu0 %4519
    %v4522 = vadd.f32 %v4512, %v4520
    %v4523 = vtanh.pop %v4522
    %4525 = vrot.lane.b32.xlu0 %v4523, 64
    %v4526 = vpop.permute.xlu0 %4525
    %v4528 = vmul.f32 %v4510, %v4526
    %s4529 = scalar_lea.vmem [#allocation14], 24
    %4530 = vst.msk [vmem:[%s4529] sm:$0xff] %vm163, %v4498
    %s4531 = scalar_lea.vmem [#allocation15], 32
    %4532 = vst.msk [vmem:[%s4531] sm:$0xff] %vm163, %v4528
    %4534 = vrot.lane.b32.xlu0 %v4528, 64
    %v4535 = vpop.permute.xlu0 %4534
    %v4537 = vsel %vm163, %v4498, %v4535
    %v4538 = vld [vmem:[#allocation13] sm:$0xff]
    %v4539 = vld [vmem:[#allocation13 + $0x8] sm:$0xff]
    %v4540 = vld [vmem:[#allocation13 + $0x10] sm:$0xff]
    %v4541 = vld [vmem:[#allocation13 + $0x18] sm:$0xff]
    %v4542 = vld [vmem:[#allocation13 + $0x20] sm:$0xff]
    %v4543 = vld [vmem:[#allocation13 + $0x28] sm:$0xff]
    %v4544 = vld [vmem:[#allocation13 + $0x30] sm:$0xff]
    %v4545 = vld [vmem:[#allocation13 + $0x38] sm:$0xff]
    %v4546 = vld [vmem:[#allocation13 + $0x40] sm:$0xff]
    %v4547 = vld [vmem:[#allocation13 + $0x48] sm:$0xff]
    %v4548 = vld [vmem:[#allocation13 + $0x50] sm:$0xff]
    %v4549 = vld [vmem:[#allocation13 + $0x58] sm:$0xff]
    %v4550 = vld [vmem:[#allocation13 + $0x60] sm:$0xff]
    %v4551 = vld [vmem:[#allocation13 + $0x68] sm:$0xff]
    %v4552 = vld [vmem:[#allocation13 + $0x70] sm:$0xff]
    %v4553 = vld [vmem:[#allocation13 + $0x78] sm:$0xff]
    %v4554 = vld [vmem:[#allocation13 + $0x80] sm:$0xff]
    %v4555 = vld [vmem:[#allocation13 + $0x88] sm:$0xff]
    %v4556 = vld [vmem:[#allocation13 + $0x90] sm:$0xff]
    %v4557 = vld [vmem:[#allocation13 + $0x98] sm:$0xff]
    %v4558 = vld [vmem:[#allocation13 + $0xa0] sm:$0xff]
    %v4559 = vld [vmem:[#allocation13 + $0xa8] sm:$0xff]
    %v4560 = vld [vmem:[#allocation13 + $0xb0] sm:$0xff]
    %v4561 = vld [vmem:[#allocation13 + $0xb8] sm:$0xff]
    %v4562 = vld [vmem:[#allocation13 + $0xc0] sm:$0xff]
    %v4563 = vld [vmem:[#allocation13 + $0xc8] sm:$0xff]
    %v4564 = vld [vmem:[#allocation13 + $0xd0] sm:$0xff]
    %v4565 = vld [vmem:[#allocation13 + $0xd8] sm:$0xff]
    %v4566 = vld [vmem:[#allocation13 + $0xe0] sm:$0xff]
    %v4567 = vld [vmem:[#allocation13 + $0xe8] sm:$0xff]
    %v4568 = vld [vmem:[#allocation13 + $0xf0] sm:$0xff]
    %v4569 = vld [vmem:[#allocation13 + $0xf8] sm:$0xff]
    %v4570 = vld [vmem:[#allocation13 + $0x100] sm:$0xff]
    %v4571 = vld [vmem:[#allocation13 + $0x108] sm:$0xff]
    %v4572 = vld [vmem:[#allocation13 + $0x110] sm:$0xff]
    %v4573 = vld [vmem:[#allocation13 + $0x118] sm:$0xff]
    %v4574 = vld [vmem:[#allocation13 + $0x120] sm:$0xff]
    %v4575 = vld [vmem:[#allocation13 + $0x128] sm:$0xff]
    %v4576 = vld [vmem:[#allocation13 + $0x130] sm:$0xff]
    %v4577 = vld [vmem:[#allocation13 + $0x138] sm:$0xff]
    %v4578 = vld [vmem:[#allocation13 + $0x140] sm:$0xff]
    %v4579 = vld [vmem:[#allocation13 + $0x148] sm:$0xff]
    %v4580 = vld [vmem:[#allocation13 + $0x150] sm:$0xff]
    %v4581 = vld [vmem:[#allocation13 + $0x158] sm:$0xff]
    %v4582 = vld [vmem:[#allocation13 + $0x160] sm:$0xff]
    %v4583 = vld [vmem:[#allocation13 + $0x168] sm:$0xff]
    %v4584 = vld [vmem:[#allocation13 + $0x170] sm:$0xff]
    %v4585 = vld [vmem:[#allocation13 + $0x178] sm:$0xff]
    %v4586 = vld [vmem:[#allocation13 + $0x180] sm:$0xff]
    %v4587 = vld [vmem:[#allocation13 + $0x188] sm:$0xff]
    %v4588 = vld [vmem:[#allocation13 + $0x190] sm:$0xff]
    %v4589 = vld [vmem:[#allocation13 + $0x198] sm:$0xff]
    %v4590 = vld [vmem:[#allocation13 + $0x1a0] sm:$0xff]
    %v4591 = vld [vmem:[#allocation13 + $0x1a8] sm:$0xff]
    %v4592 = vld [vmem:[#allocation13 + $0x1b0] sm:$0xff]
    %v4593 = vld [vmem:[#allocation13 + $0x1b8] sm:$0xff]
    %v4594 = vld [vmem:[#allocation13 + $0x1c0] sm:$0xff]
    %v4595 = vld [vmem:[#allocation13 + $0x1c8] sm:$0xff]
    %v4596 = vld [vmem:[#allocation13 + $0x1d0] sm:$0xff]
    %v4597 = vld [vmem:[#allocation13 + $0x1d8] sm:$0xff]
    %v4598 = vld [vmem:[#allocation13 + $0x1e0] sm:$0xff]
    %v4599 = vld [vmem:[#allocation13 + $0x1e8] sm:$0xff]
    %v4600 = vld [vmem:[#allocation13 + $0x1f0] sm:$0xff]
    %v4601 = vld [vmem:[#allocation13 + $0x1f8] sm:$0xff]
    %4602 = vmatprep.subr.mxu0 %v4539
    %4603 = vmatpush1.msra.mxu0 %v4538
    %4604 = vmatprep.subr.mxu0 %v4543
    %4605 = vmatpush1.msra.mxu0 %v4542
    %4606 = vmatprep.subr.mxu0 %v4547
    %4607 = vmatpush1.msra.mxu0 %v4546
    %4608 = vmatprep.subr.mxu0 %v4551
    %4609 = vmatpush1.msra.mxu0 %v4550
    %4610 = vmatprep.subr.mxu0 %v4555
    %4611 = vmatpush1.msra.mxu0 %v4554
    %4612 = vmatprep.subr.mxu0 %v4559
    %4613 = vmatpush1.msra.mxu0 %v4558
    %4614 = vmatprep.subr.mxu0 %v4563
    %4615 = vmatpush1.msra.mxu0 %v4562
    %4616 = vmatprep.subr.mxu0 %v4567
    %4617 = vmatpush1.msra.mxu0 %v4566
    %4618 = vmatprep.subr.mxu0 %v4571
    %4619 = vmatpush1.msra.mxu0 %v4570
    %4620 = vmatprep.subr.mxu0 %v4575
    %4621 = vmatpush1.msra.mxu0 %v4574
    %4622 = vmatprep.subr.mxu0 %v4579
    %4623 = vmatpush1.msra.mxu0 %v4578
    %4624 = vmatprep.subr.mxu0 %v4583
    %4625 = vmatpush1.msra.mxu0 %v4582
    %4626 = vmatprep.subr.mxu0 %v4587
    %4627 = vmatpush1.msra.mxu0 %v4586
    %4628 = vmatprep.subr.mxu0 %v4591
    %4629 = vmatpush1.msra.mxu0 %v4590
    %4630 = vmatprep.subr.mxu0 %v4595
    %4631 = vmatpush1.msra.mxu0 %v4594
    %4632 = vmatprep.subr.mxu0 %v4599
    %4633 = vmatpush1.msra.mxu0 %v4598
    %4634 = vmatprep.subr.mxu0 0.0
    %4635 = vmatpush1.msra.mxu0 0.0
    %4636 = vmatprep.subr.mxu0 0.0
    %4637 = vmatpush1.msra.mxu0 0.0
    %4638 = vmatprep.subr.mxu0 0.0
    %4639 = vmatpush1.msra.mxu0 0.0
    %4640 = vmatprep.subr.mxu0 0.0
    %4641 = vmatpush1.msra.mxu0 0.0
    %4642 = vmatprep.subr.mxu0 0.0
    %4643 = vmatpush1.msra.mxu0 0.0
    %4644 = vmatprep.subr.mxu0 0.0
    %4645 = vmatpush1.msra.mxu0 0.0
    %4646 = vmatprep.subr.mxu0 0.0
    %4647 = vmatpush1.msra.mxu0 0.0
    %4648 = vmatprep.subr.mxu0 0.0
    %4649 = vmatpush1.msra.mxu0 0.0
    %4650 = vmatprep.subr.mxu0 0.0
    %4651 = vmatpush1.msra.mxu0 0.0
    %4652 = vmatprep.subr.mxu0 0.0
    %4653 = vmatpush1.msra.mxu0 0.0
    %4654 = vmatprep.subr.mxu0 0.0
    %4655 = vmatpush1.msra.mxu0 0.0
    %4656 = vmatprep.subr.mxu0 0.0
    %4657 = vmatpush1.msra.mxu0 0.0
    %4658 = vmatprep.subr.mxu0 0.0
    %4659 = vmatpush1.msra.mxu0 0.0
    %4660 = vmatprep.subr.mxu0 0.0
    %4661 = vmatpush1.msra.mxu0 0.0
    %4662 = vmatprep.subr.mxu0 0.0
    %4663 = vmatpush1.msra.mxu0 0.0
    %4664 = vmatprep.subr.mxu0 0.0
    %4665 = vmatpush1.msra.mxu0 0.0
    %4666 = vmatprep.mubr.f32.mxu0 0.0
    %4667 = vmatmul.mubr.f32.gmra.mrb[0].mxu0 %v4537
    %v4668 = vpop.f32.mrb[0].mxu0
    %v4669 = vadd.f32 0.0, %v4668
    %v4670 = vpop.f32.mrb[0].mxu0
    %v4671 = vadd.f32 0.0, %v4670
    %4672 = vdwg.mxu0
    %4673 = vmatprep.subr.mxu0 %v4541
    %4674 = vmatpush1.msra.mxu0 %v4540
    %4675 = vmatprep.subr.mxu0 %v4545
    %4676 = vmatpush1.msra.mxu0 %v4544
    %4677 = vmatprep.subr.mxu0 %v4549
    %4678 = vmatpush1.msra.mxu0 %v4548
    %4679 = vmatprep.subr.mxu0 %v4553
    %4680 = vmatpush1.msra.mxu0 %v4552
    %4681 = vmatprep.subr.mxu0 %v4557
    %4682 = vmatpush1.msra.mxu0 %v4556
    %4683 = vmatprep.subr.mxu0 %v4561
    %4684 = vmatpush1.msra.mxu0 %v4560
    %4685 = vmatprep.subr.mxu0 %v4565
    %4686 = vmatpush1.msra.mxu0 %v4564
    %4687 = vmatprep.subr.mxu0 %v4569
    %4688 = vmatpush1.msra.mxu0 %v4568
    %4689 = vmatprep.subr.mxu0 %v4573
    %4690 = vmatpush1.msra.mxu0 %v4572
    %4691 = vmatprep.subr.mxu0 %v4577
    %4692 = vmatpush1.msra.mxu0 %v4576
    %4693 = vmatprep.subr.mxu0 %v4581
    %4694 = vmatpush1.msra.mxu0 %v4580
    %4695 = vmatprep.subr.mxu0 %v4585
    %4696 = vmatpush1.msra.mxu0 %v4584
    %4697 = vmatprep.subr.mxu0 %v4589
    %4698 = vmatpush1.msra.mxu0 %v4588
    %4699 = vmatprep.subr.mxu0 %v4593
    %4700 = vmatpush1.msra.mxu0 %v4592
    %4701 = vmatprep.subr.mxu0 %v4597
    %4702 = vmatpush1.msra.mxu0 %v4596
    %4703 = vmatprep.subr.mxu0 %v4601
    %4704 = vmatpush1.msra.mxu0 %v4600
    %4705 = vmatprep.subr.mxu0 0.0
    %4706 = vmatpush1.msra.mxu0 0.0
    %4707 = vmatprep.subr.mxu0 0.0
    %4708 = vmatpush1.msra.mxu0 0.0
    %4709 = vmatprep.subr.mxu0 0.0
    %4710 = vmatpush1.msra.mxu0 0.0
    %4711 = vmatprep.subr.mxu0 0.0
    %4712 = vmatpush1.msra.mxu0 0.0
    %4713 = vmatprep.subr.mxu0 0.0
    %4714 = vmatpush1.msra.mxu0 0.0
    %4715 = vmatprep.subr.mxu0 0.0
    %4716 = vmatpush1.msra.mxu0 0.0
    %4717 = vmatprep.subr.mxu0 0.0
    %4718 = vmatpush1.msra.mxu0 0.0
    %4719 = vmatprep.subr.mxu0 0.0
    %4720 = vmatpush1.msra.mxu0 0.0
    %4721 = vmatprep.subr.mxu0 0.0
    %4722 = vmatpush1.msra.mxu0 0.0
    %4723 = vmatprep.subr.mxu0 0.0
    %4724 = vmatpush1.msra.mxu0 0.0
    %4725 = vmatprep.subr.mxu0 0.0
    %4726 = vmatpush1.msra.mxu0 0.0
    %4727 = vmatprep.subr.mxu0 0.0
    %4728 = vmatpush1.msra.mxu0 0.0
    %4729 = vmatprep.subr.mxu0 0.0
    %4730 = vmatpush1.msra.mxu0 0.0
    %4731 = vmatprep.subr.mxu0 0.0
    %4732 = vmatpush1.msra.mxu0 0.0
    %4733 = vmatprep.subr.mxu0 0.0
    %4734 = vmatpush1.msra.mxu0 0.0
    %4735 = vmatprep.subr.mxu0 0.0
    %4736 = vmatpush1.msra.mxu0 0.0
    %4737 = vmatprep.mubr.f32.mxu0 0.0
    %4738 = vmatmul.mubr.f32.gmra.mrb[0].mxu0 %v4537
    %v4739 = vpop.f32.mrb[0].mxu0
    %v4740 = vadd.f32 0.0, %v4739
    %v4741 = vpop.f32.mrb[0].mxu0
    %v4742 = vadd.f32 0.0, %v4741
    %4743 = vdwg.mxu0
    %v4744 = vld [vmem:[%s1527] sm:$0xff]
    %v4745 = vld [vmem:[%s1527 + $0x8] sm:$0xff]
    %v4746 = vadd.f32 %v4669, %v4744
    %v4747 = vadd.f32 %v4671, %v4745
    %v4748 = vld [vmem:[%s1520 + $0x10] sm:$0xff]
    %v4749 = vld [vmem:[%s1520 + $0x18] sm:$0xff]
    %v4750 = vadd.f32 %v4740, %v4748
    %v4751 = vadd.f32 %v4742, %v4749
    %v4752 = vxor.u32 %v4746, 2147483648
    %v4753 = vxor.u32 %v4747, 2147483648
    %v4754 = vmul.f32 %v4752, 1.442695
    %v4755 = vpow.pop %v4754
    %v4756 = vmul.f32 %v4753, 1.442695
    %v4757 = vpow.pop %v4756
    %v4758 = vadd.f32 %v4755, 1.0
    %v4759 = vadd.f32 %v4757, 1.0
    %v4760 = vrcp.pop %v4758
    %v4761 = vmul.f32 1.0, %v4760
    %v4762 = vrcp.pop %v4759
    %v4763 = vmul.f32 1.0, %v4762
    %v4764 = vtanh.pop %v4747
    %v4765 = vmul.f32 %v4761, %v4492
    %4767 = vrot.lane.b32.xlu0 %v4764, 64
    %v4768 = vpop.permute.xlu0 %4767
    %v4770 = vmul.f32 %v4761, %v4768
    %4772 = vrot.lane.b32.xlu0 %v4770, 64
    %v4773 = vpop.permute.xlu0 %4772
    %v4775 = vadd.f32 %v4765, %v4773
    %v4776 = vtanh.pop %v4775
    %4778 = vrot.lane.b32.xlu0 %v4776, 64
    %v4779 = vpop.permute.xlu0 %4778
    %v4781 = vmul.f32 %v4763, %v4779
    %v4782 = vxor.u32 %v4750, 2147483648
    %v4783 = vxor.u32 %v4751, 2147483648
    %v4784 = vmul.f32 %v4782, 1.442695
    %v4785 = vpow.pop %v4784
    %v4786 = vmul.f32 %v4783, 1.442695
    %v4787 = vpow.pop %v4786
    %v4788 = vadd.f32 %v4785, 1.0
    %v4789 = vadd.f32 %v4787, 1.0
    %v4790 = vrcp.pop %v4788
    %v4791 = vmul.f32 1.0, %v4790
    %v4792 = vrcp.pop %v4789
    %v4793 = vmul.f32 1.0, %v4792
    %v4794 = vtanh.pop %v4751
    %v4795 = vmul.f32 %v4791, %v4522
    %4797 = vrot.lane.b32.xlu0 %v4794, 64
    %v4798 = vpop.permute.xlu0 %4797
    %v4800 = vmul.f32 %v4791, %v4798
    %4802 = vrot.lane.b32.xlu0 %v4800, 64
    %v4803 = vpop.permute.xlu0 %4802
    %v4805 = vadd.f32 %v4795, %v4803
    %v4806 = vtanh.pop %v4805
    %4808 = vrot.lane.b32.xlu0 %v4806, 64
    %v4809 = vpop.permute.xlu0 %4808
    %v4811 = vmul.f32 %v4793, %v4809
    %s4812 = scalar_lea.vmem [#allocation14], 32
    %4813 = vst.msk [vmem:[%s4812] sm:$0xff] %vm163, %v4781
    %s4814 = scalar_lea.vmem [#allocation15], 24
    %4815 = vst.msk [vmem:[%s4814] sm:$0xff] %vm163, %v4811
    %4817 = vrot.lane.b32.xlu0 %v4811, 64
    %v4818 = vpop.permute.xlu0 %4817
    %v4820 = vsel %vm163, %v4781, %v4818
    %v4821 = vld [vmem:[#allocation13] sm:$0xff]
    %v4822 = vld [vmem:[#allocation13 + $0x8] sm:$0xff]
    %v4823 = vld [vmem:[#allocation13 + $0x10] sm:$0xff]
    %v4824 = vld [vmem:[#allocation13 + $0x18] sm:$0xff]
    %v4825 = vld [vmem:[#allocation13 + $0x20] sm:$0xff]
    %v4826 = vld [vmem:[#allocation13 + $0x28] sm:$0xff]
    %v4827 = vld [vmem:[#allocation13 + $0x30] sm:$0xff]
    %v4828 = vld [vmem:[#allocation13 + $0x38] sm:$0xff]
    %v4829 = vld [vmem:[#allocation13 + $0x40] sm:$0xff]
    %v4830 = vld [vmem:[#allocation13 + $0x48] sm:$0xff]
    %v4831 = vld [vmem:[#allocation13 + $0x50] sm:$0xff]
    %v4832 = vld [vmem:[#allocation13 + $0x58] sm:$0xff]
    %v4833 = vld [vmem:[#allocation13 + $0x60] sm:$0xff]
    %v4834 = vld [vmem:[#allocation13 + $0x68] sm:$0xff]
    %v4835 = vld [vmem:[#allocation13 + $0x70] sm:$0xff]
    %v4836 = vld [vmem:[#allocation13 + $0x78] sm:$0xff]
    %v4837 = vld [vmem:[#allocation13 + $0x80] sm:$0xff]
    %v4838 = vld [vmem:[#allocation13 + $0x88] sm:$0xff]
    %v4839 = vld [vmem:[#allocation13 + $0x90] sm:$0xff]
    %v4840 = vld [vmem:[#allocation13 + $0x98] sm:$0xff]
    %v4841 = vld [vmem:[#allocation13 + $0xa0] sm:$0xff]
    %v4842 = vld [vmem:[#allocation13 + $0xa8] sm:$0xff]
    %v4843 = vld [vmem:[#allocation13 + $0xb0] sm:$0xff]
    %v4844 = vld [vmem:[#allocation13 + $0xb8] sm:$0xff]
    %v4845 = vld [vmem:[#allocation13 + $0xc0] sm:$0xff]
    %v4846 = vld [vmem:[#allocation13 + $0xc8] sm:$0xff]
    %v4847 = vld [vmem:[#allocation13 + $0xd0] sm:$0xff]
    %v4848 = vld [vmem:[#allocation13 + $0xd8] sm:$0xff]
    %v4849 = vld [vmem:[#allocation13 + $0xe0] sm:$0xff]
    %v4850 = vld [vmem:[#allocation13 + $0xe8] sm:$0xff]
    %v4851 = vld [vmem:[#allocation13 + $0xf0] sm:$0xff]
    %v4852 = vld [vmem:[#allocation13 + $0xf8] sm:$0xff]
    %v4853 = vld [vmem:[#allocation13 + $0x100] sm:$0xff]
    %v4854 = vld [vmem:[#allocation13 + $0x108] sm:$0xff]
    %v4855 = vld [vmem:[#allocation13 + $0x110] sm:$0xff]
    %v4856 = vld [vmem:[#allocation13 + $0x118] sm:$0xff]
    %v4857 = vld [vmem:[#allocation13 + $0x120] sm:$0xff]
    %v4858 = vld [vmem:[#allocation13 + $0x128] sm:$0xff]
    %v4859 = vld [vmem:[#allocation13 + $0x130] sm:$0xff]
    %v4860 = vld [vmem:[#allocation13 + $0x138] sm:$0xff]
    %v4861 = vld [vmem:[#allocation13 + $0x140] sm:$0xff]
    %v4862 = vld [vmem:[#allocation13 + $0x148] sm:$0xff]
    %v4863 = vld [vmem:[#allocation13 + $0x150] sm:$0xff]
    %v4864 = vld [vmem:[#allocation13 + $0x158] sm:$0xff]
    %v4865 = vld [vmem:[#allocation13 + $0x160] sm:$0xff]
    %v4866 = vld [vmem:[#allocation13 + $0x168] sm:$0xff]
    %v4867 = vld [vmem:[#allocation13 + $0x170] sm:$0xff]
    %v4868 = vld [vmem:[#allocation13 + $0x178] sm:$0xff]
    %v4869 = vld [vmem:[#allocation13 + $0x180] sm:$0xff]
    %v4870 = vld [vmem:[#allocation13 + $0x188] sm:$0xff]
    %v4871 = vld [vmem:[#allocation13 + $0x190] sm:$0xff]
    %v4872 = vld [vmem:[#allocation13 + $0x198] sm:$0xff]
    %v4873 = vld [vmem:[#allocation13 + $0x1a0] sm:$0xff]
    %v4874 = vld [vmem:[#allocation13 + $0x1a8] sm:$0xff]
    %v4875 = vld [vmem:[#allocation13 + $0x1b0] sm:$0xff]
    %v4876 = vld [vmem:[#allocation13 + $0x1b8] sm:$0xff]
    %v4877 = vld [vmem:[#allocation13 + $0x1c0] sm:$0xff]
    %v4878 = vld [vmem:[#allocation13 + $0x1c8] sm:$0xff]
    %v4879 = vld [vmem:[#allocation13 + $0x1d0] sm:$0xff]
    %v4880 = vld [vmem:[#allocation13 + $0x1d8] sm:$0xff]
    %v4881 = vld [vmem:[#allocation13 + $0x1e0] sm:$0xff]
    %v4882 = vld [vmem:[#allocation13 + $0x1e8] sm:$0xff]
    %v4883 = vld [vmem:[#allocation13 + $0x1f0] sm:$0xff]
    %v4884 = vld [vmem:[#allocation13 + $0x1f8] sm:$0xff]
    %4885 = vmatprep.subr.mxu0 %v4822
    %4886 = vmatpush1.msra.mxu0 %v4821
    %4887 = vmatprep.subr.mxu0 %v4826
    %4888 = vmatpush1.msra.mxu0 %v4825
    %4889 = vmatprep.subr.mxu0 %v4830
    %4890 = vmatpush1.msra.mxu0 %v4829
    %4891 = vmatprep.subr.mxu0 %v4834
    %4892 = vmatpush1.msra.mxu0 %v4833
    %4893 = vmatprep.subr.mxu0 %v4838
    %4894 = vmatpush1.msra.mxu0 %v4837
    %4895 = vmatprep.subr.mxu0 %v4842
    %4896 = vmatpush1.msra.mxu0 %v4841
    %4897 = vmatprep.subr.mxu0 %v4846
    %4898 = vmatpush1.msra.mxu0 %v4845
    %4899 = vmatprep.subr.mxu0 %v4850
    %4900 = vmatpush1.msra.mxu0 %v4849
    %4901 = vmatprep.subr.mxu0 %v4854
    %4902 = vmatpush1.msra.mxu0 %v4853
    %4903 = vmatprep.subr.mxu0 %v4858
    %4904 = vmatpush1.msra.mxu0 %v4857
    %4905 = vmatprep.subr.mxu0 %v4862
    %4906 = vmatpush1.msra.mxu0 %v4861
    %4907 = vmatprep.subr.mxu0 %v4866
    %4908 = vmatpush1.msra.mxu0 %v4865
    %4909 = vmatprep.subr.mxu0 %v4870
    %4910 = vmatpush1.msra.mxu0 %v4869
    %4911 = vmatprep.subr.mxu0 %v4874
    %4912 = vmatpush1.msra.mxu0 %v4873
    %4913 = vmatprep.subr.mxu0 %v4878
    %4914 = vmatpush1.msra.mxu0 %v4877
    %4915 = vmatprep.subr.mxu0 %v4882
    %4916 = vmatpush1.msra.mxu0 %v4881
    %4917 = vmatprep.subr.mxu0 0.0
    %4918 = vmatpush1.msra.mxu0 0.0
    %4919 = vmatprep.subr.mxu0 0.0
    %4920 = vmatpush1.msra.mxu0 0.0
    %4921 = vmatprep.subr.mxu0 0.0
    %4922 = vmatpush1.msra.mxu0 0.0
    %4923 = vmatprep.subr.mxu0 0.0
    %4924 = vmatpush1.msra.mxu0 0.0
    %4925 = vmatprep.subr.mxu0 0.0
    %4926 = vmatpush1.msra.mxu0 0.0
    %4927 = vmatprep.subr.mxu0 0.0
    %4928 = vmatpush1.msra.mxu0 0.0
    %4929 = vmatprep.subr.mxu0 0.0
    %4930 = vmatpush1.msra.mxu0 0.0
    %4931 = vmatprep.subr.mxu0 0.0
    %4932 = vmatpush1.msra.mxu0 0.0
    %4933 = vmatprep.subr.mxu0 0.0
    %4934 = vmatpush1.msra.mxu0 0.0
    %4935 = vmatprep.subr.mxu0 0.0
    %4936 = vmatpush1.msra.mxu0 0.0
    %4937 = vmatprep.subr.mxu0 0.0
    %4938 = vmatpush1.msra.mxu0 0.0
    %4939 = vmatprep.subr.mxu0 0.0
    %4940 = vmatpush1.msra.mxu0 0.0
    %4941 = vmatprep.subr.mxu0 0.0
    %4942 = vmatpush1.msra.mxu0 0.0
    %4943 = vmatprep.subr.mxu0 0.0
    %4944 = vmatpush1.msra.mxu0 0.0
    %4945 = vmatprep.subr.mxu0 0.0
    %4946 = vmatpush1.msra.mxu0 0.0
    %4947 = vmatprep.subr.mxu0 0.0
    %4948 = vmatpush1.msra.mxu0 0.0
    %4949 = vmatprep.mubr.f32.mxu0 0.0
    %4950 = vmatmul.mubr.f32.gmra.mrb[0].mxu0 %v4820
    %v4951 = vpop.f32.mrb[0].mxu0
    %v4952 = vadd.f32 0.0, %v4951
    %v4953 = vpop.f32.mrb[0].mxu0
    %v4954 = vadd.f32 0.0, %v4953
    %4955 = vdwg.mxu0
    %4956 = vmatprep.subr.mxu0 %v4824
    %4957 = vmatpush1.msra.mxu0 %v4823
    %4958 = vmatprep.subr.mxu0 %v4828
    %4959 = vmatpush1.msra.mxu0 %v4827
    %4960 = vmatprep.subr.mxu0 %v4832
    %4961 = vmatpush1.msra.mxu0 %v4831
    %4962 = vmatprep.subr.mxu0 %v4836
    %4963 = vmatpush1.msra.mxu0 %v4835
    %4964 = vmatprep.subr.mxu0 %v4840
    %4965 = vmatpush1.msra.mxu0 %v4839
    %4966 = vmatprep.subr.mxu0 %v4844
    %4967 = vmatpush1.msra.mxu0 %v4843
    %4968 = vmatprep.subr.mxu0 %v4848
    %4969 = vmatpush1.msra.mxu0 %v4847
    %4970 = vmatprep.subr.mxu0 %v4852
    %4971 = vmatpush1.msra.mxu0 %v4851
    %4972 = vmatprep.subr.mxu0 %v4856
    %4973 = vmatpush1.msra.mxu0 %v4855
    %4974 = vmatprep.subr.mxu0 %v4860
    %4975 = vmatpush1.msra.mxu0 %v4859
    %4976 = vmatprep.subr.mxu0 %v4864
    %4977 = vmatpush1.msra.mxu0 %v4863
    %4978 = vmatprep.subr.mxu0 %v4868
    %4979 = vmatpush1.msra.mxu0 %v4867
    %4980 = vmatprep.subr.mxu0 %v4872
    %4981 = vmatpush1.msra.mxu0 %v4871
    %4982 = vmatprep.subr.mxu0 %v4876
    %4983 = vmatpush1.msra.mxu0 %v4875
    %4984 = vmatprep.subr.mxu0 %v4880
    %4985 = vmatpush1.msra.mxu0 %v4879
    %4986 = vmatprep.subr.mxu0 %v4884
    %4987 = vmatpush1.msra.mxu0 %v4883
    %4988 = vmatprep.subr.mxu0 0.0
    %4989 = vmatpush1.msra.mxu0 0.0
    %4990 = vmatprep.subr.mxu0 0.0
    %4991 = vmatpush1.msra.mxu0 0.0
    %4992 = vmatprep.subr.mxu0 0.0
    %4993 = vmatpush1.msra.mxu0 0.0
    %4994 = vmatprep.subr.mxu0 0.0
    %4995 = vmatpush1.msra.mxu0 0.0
    %4996 = vmatprep.subr.mxu0 0.0
    %4997 = vmatpush1.msra.mxu0 0.0
    %4998 = vmatprep.subr.mxu0 0.0
    %4999 = vmatpush1.msra.mxu0 0.0
    %5000 = vmatprep.subr.mxu0 0.0
    %5001 = vmatpush1.msra.mxu0 0.0
    %5002 = vmatprep.subr.mxu0 0.0
    %5003 = vmatpush1.msra.mxu0 0.0
    %5004 = vmatprep.subr.mxu0 0.0
    %5005 = vmatpush1.msra.mxu0 0.0
    %5006 = vmatprep.subr.mxu0 0.0
    %5007 = vmatpush1.msra.mxu0 0.0
    %5008 = vmatprep.subr.mxu0 0.0
    %5009 = vmatpush1.msra.mxu0 0.0
    %5010 = vmatprep.subr.mxu0 0.0
    %5011 = vmatpush1.msra.mxu0 0.0
    %5012 = vmatprep.subr.mxu0 0.0
    %5013 = vmatpush1.msra.mxu0 0.0
    %5014 = vmatprep.subr.mxu0 0.0
    %5015 = vmatpush1.msra.mxu0 0.0
    %5016 = vmatprep.subr.mxu0 0.0
    %5017 = vmatpush1.msra.mxu0 0.0
    %5018 = vmatprep.subr.mxu0 0.0
    %5019 = vmatpush1.msra.mxu0 0.0
    %5020 = vmatprep.mubr.f32.mxu0 0.0
    %5021 = vmatmul.mubr.f32.gmra.mrb[0].mxu0 %v4820
    %v5022 = vpop.f32.mrb[0].mxu0
    %v5023 = vadd.f32 0.0, %v5022
    %v5024 = vpop.f32.mrb[0].mxu0
    %v5025 = vadd.f32 0.0, %v5024
    %5026 = vdwg.mxu0
    %v5027 = vld [vmem:[%s1238] sm:$0xff]
    %v5028 = vld [vmem:[%s1238 + $0x8] sm:$0xff]
    %v5029 = vadd.f32 %v4952, %v5027
    %v5030 = vadd.f32 %v4954, %v5028
    %v5031 = vld [vmem:[%s1231 + $0x10] sm:$0xff]
    %v5032 = vld [vmem:[%s1231 + $0x18] sm:$0xff]
    %v5033 = vadd.f32 %v5023, %v5031
    %v5034 = vadd.f32 %v5025, %v5032
    %v5035 = vxor.u32 %v5029, 2147483648
    %v5036 = vxor.u32 %v5030, 2147483648
    %v5037 = vmul.f32 %v5035, 1.442695
    %v5038 = vpow.pop %v5037
    %v5039 = vmul.f32 %v5036, 1.442695
    %v5040 = vpow.pop %v5039
    %v5041 = vadd.f32 %v5038, 1.0
    %v5042 = vadd.f32 %v5040, 1.0
    %v5043 = vrcp.pop %v5041
    %v5044 = vmul.f32 1.0, %v5043
    %v5045 = vrcp.pop %v5042
    %v5046 = vmul.f32 1.0, %v5045
    %v5047 = vtanh.pop %v5030
    %v5048 = vmul.f32 %v5044, %v4775
    %5050 = vrot.lane.b32.xlu0 %v5047, 64
    %v5051 = vpop.permute.xlu0 %5050
    %v5053 = vmul.f32 %v5044, %v5051
    %5055 = vrot.lane.b32.xlu0 %v5053, 64
    %v5056 = vpop.permute.xlu0 %5055
    %v5058 = vadd.f32 %v5048, %v5056
    %v5059 = vtanh.pop %v5058
    %5061 = vrot.lane.b32.xlu0 %v5059, 64
    %v5062 = vpop.permute.xlu0 %5061
    %v5064 = vmul.f32 %v5046, %v5062
    %v5065 = vxor.u32 %v5033, 2147483648
    %v5066 = vxor.u32 %v5034, 2147483648
    %v5067 = vmul.f32 %v5065, 1.442695
    %v5068 = vpow.pop %v5067
    %v5069 = vmul.f32 %v5066, 1.442695
    %v5070 = vpow.pop %v5069
    %v5071 = vadd.f32 %v5068, 1.0
    %v5072 = vadd.f32 %v5070, 1.0
    %v5073 = vrcp.pop %v5071
    %v5074 = vmul.f32 1.0, %v5073
    %v5075 = vrcp.pop %v5072
    %v5076 = vmul.f32 1.0, %v5075
    %v5077 = vtanh.pop %v5034
    %v5078 = vmul.f32 %v5074, %v4805
    %5080 = vrot.lane.b32.xlu0 %v5077, 64
    %v5081 = vpop.permute.xlu0 %5080
    %v5083 = vmul.f32 %v5074, %v5081
    %5085 = vrot.lane.b32.xlu0 %v5083, 64
    %v5086 = vpop.permute.xlu0 %5085
    %v5088 = vadd.f32 %v5078, %v5086
    %v5089 = vtanh.pop %v5088
    %5091 = vrot.lane.b32.xlu0 %v5089, 64
    %v5092 = vpop.permute.xlu0 %5091
    %v5094 = vmul.f32 %v5076, %v5092
    %s5095 = scalar_lea.vmem [#allocation14], 40
    %5096 = vst.msk [vmem:[%s5095] sm:$0xff] %vm163, %v5064
    %s5097 = scalar_lea.vmem [#allocation15], 16
    %5098 = vst.msk [vmem:[%s5097] sm:$0xff] %vm163, %v5094
    %5100 = vrot.lane.b32.xlu0 %v5094, 64
    %v5101 = vpop.permute.xlu0 %5100
    %v5103 = vsel %vm163, %v5064, %v5101
    %v5104 = vld [vmem:[#allocation13] sm:$0xff]
    %v5105 = vld [vmem:[#allocation13 + $0x8] sm:$0xff]
    %v5106 = vld [vmem:[#allocation13 + $0x10] sm:$0xff]
    %v5107 = vld [vmem:[#allocation13 + $0x18] sm:$0xff]
    %v5108 = vld [vmem:[#allocation13 + $0x20] sm:$0xff]
    %v5109 = vld [vmem:[#allocation13 + $0x28] sm:$0xff]
    %v5110 = vld [vmem:[#allocation13 + $0x30] sm:$0xff]
    %v5111 = vld [vmem:[#allocation13 + $0x38] sm:$0xff]
    %v5112 = vld [vmem:[#allocation13 + $0x40] sm:$0xff]
    %v5113 = vld [vmem:[#allocation13 + $0x48] sm:$0xff]
    %v5114 = vld [vmem:[#allocation13 + $0x50] sm:$0xff]
    %v5115 = vld [vmem:[#allocation13 + $0x58] sm:$0xff]
    %v5116 = vld [vmem:[#allocation13 + $0x60] sm:$0xff]
    %v5117 = vld [vmem:[#allocation13 + $0x68] sm:$0xff]
    %v5118 = vld [vmem:[#allocation13 + $0x70] sm:$0xff]
    %v5119 = vld [vmem:[#allocation13 + $0x78] sm:$0xff]
    %v5120 = vld [vmem:[#allocation13 + $0x80] sm:$0xff]
    %v5121 = vld [vmem:[#allocation13 + $0x88] sm:$0xff]
    %v5122 = vld [vmem:[#allocation13 + $0x90] sm:$0xff]
    %v5123 = vld [vmem:[#allocation13 + $0x98] sm:$0xff]
    %v5124 = vld [vmem:[#allocation13 + $0xa0] sm:$0xff]
    %v5125 = vld [vmem:[#allocation13 + $0xa8] sm:$0xff]
    %v5126 = vld [vmem:[#allocation13 + $0xb0] sm:$0xff]
    %v5127 = vld [vmem:[#allocation13 + $0xb8] sm:$0xff]
    %v5128 = vld [vmem:[#allocation13 + $0xc0] sm:$0xff]
    %v5129 = vld [vmem:[#allocation13 + $0xc8] sm:$0xff]
    %v5130 = vld [vmem:[#allocation13 + $0xd0] sm:$0xff]
    %v5131 = vld [vmem:[#allocation13 + $0xd8] sm:$0xff]
    %v5132 = vld [vmem:[#allocation13 + $0xe0] sm:$0xff]
    %v5133 = vld [vmem:[#allocation13 + $0xe8] sm:$0xff]
    %v5134 = vld [vmem:[#allocation13 + $0xf0] sm:$0xff]
    %v5135 = vld [vmem:[#allocation13 + $0xf8] sm:$0xff]
    %v5136 = vld [vmem:[#allocation13 + $0x100] sm:$0xff]
    %v5137 = vld [vmem:[#allocation13 + $0x108] sm:$0xff]
    %v5138 = vld [vmem:[#allocation13 + $0x110] sm:$0xff]
    %v5139 = vld [vmem:[#allocation13 + $0x118] sm:$0xff]
    %v5140 = vld [vmem:[#allocation13 + $0x120] sm:$0xff]
    %v5141 = vld [vmem:[#allocation13 + $0x128] sm:$0xff]
    %v5142 = vld [vmem:[#allocation13 + $0x130] sm:$0xff]
    %v5143 = vld [vmem:[#allocation13 + $0x138] sm:$0xff]
    %v5144 = vld [vmem:[#allocation13 + $0x140] sm:$0xff]
    %v5145 = vld [vmem:[#allocation13 + $0x148] sm:$0xff]
    %v5146 = vld [vmem:[#allocation13 + $0x150] sm:$0xff]
    %v5147 = vld [vmem:[#allocation13 + $0x158] sm:$0xff]
    %v5148 = vld [vmem:[#allocation13 + $0x160] sm:$0xff]
    %v5149 = vld [vmem:[#allocation13 + $0x168] sm:$0xff]
    %v5150 = vld [vmem:[#allocation13 + $0x170] sm:$0xff]
    %v5151 = vld [vmem:[#allocation13 + $0x178] sm:$0xff]
    %v5152 = vld [vmem:[#allocation13 + $0x180] sm:$0xff]
    %v5153 = vld [vmem:[#allocation13 + $0x188] sm:$0xff]
    %v5154 = vld [vmem:[#allocation13 + $0x190] sm:$0xff]
    %v5155 = vld [vmem:[#allocation13 + $0x198] sm:$0xff]
    %v5156 = vld [vmem:[#allocation13 + $0x1a0] sm:$0xff]
    %v5157 = vld [vmem:[#allocation13 + $0x1a8] sm:$0xff]
    %v5158 = vld [vmem:[#allocation13 + $0x1b0] sm:$0xff]
    %v5159 = vld [vmem:[#allocation13 + $0x1b8] sm:$0xff]
    %v5160 = vld [vmem:[#allocation13 + $0x1c0] sm:$0xff]
    %v5161 = vld [vmem:[#allocation13 + $0x1c8] sm:$0xff]
    %v5162 = vld [vmem:[#allocation13 + $0x1d0] sm:$0xff]
    %v5163 = vld [vmem:[#allocation13 + $0x1d8] sm:$0xff]
    %v5164 = vld [vmem:[#allocation13 + $0x1e0] sm:$0xff]
    %v5165 = vld [vmem:[#allocation13 + $0x1e8] sm:$0xff]
    %v5166 = vld [vmem:[#allocation13 + $0x1f0] sm:$0xff]
    %v5167 = vld [vmem:[#allocation13 + $0x1f8] sm:$0xff]
    %5168 = vmatprep.subr.mxu0 %v5105
    %5169 = vmatpush1.msra.mxu0 %v5104
    %5170 = vmatprep.subr.mxu0 %v5109
    %5171 = vmatpush1.msra.mxu0 %v5108
    %5172 = vmatprep.subr.mxu0 %v5113
    %5173 = vmatpush1.msra.mxu0 %v5112
    %5174 = vmatprep.subr.mxu0 %v5117
    %5175 = vmatpush1.msra.mxu0 %v5116
    %5176 = vmatprep.subr.mxu0 %v5121
    %5177 = vmatpush1.msra.mxu0 %v5120
    %5178 = vmatprep.subr.mxu0 %v5125
    %5179 = vmatpush1.msra.mxu0 %v5124
    %5180 = vmatprep.subr.mxu0 %v5129
    %5181 = vmatpush1.msra.mxu0 %v5128
    %5182 = vmatprep.subr.mxu0 %v5133
    %5183 = vmatpush1.msra.mxu0 %v5132
    %5184 = vmatprep.subr.mxu0 %v5137
    %5185 = vmatpush1.msra.mxu0 %v5136
    %5186 = vmatprep.subr.mxu0 %v5141
    %5187 = vmatpush1.msra.mxu0 %v5140
    %5188 = vmatprep.subr.mxu0 %v5145
    %5189 = vmatpush1.msra.mxu0 %v5144
    %5190 = vmatprep.subr.mxu0 %v5149
    %5191 = vmatpush1.msra.mxu0 %v5148
    %5192 = vmatprep.subr.mxu0 %v5153
    %5193 = vmatpush1.msra.mxu0 %v5152
    %5194 = vmatprep.subr.mxu0 %v5157
    %5195 = vmatpush1.msra.mxu0 %v5156
    %5196 = vmatprep.subr.mxu0 %v5161
    %5197 = vmatpush1.msra.mxu0 %v5160
    %5198 = vmatprep.subr.mxu0 %v5165
    %5199 = vmatpush1.msra.mxu0 %v5164
    %5200 = vmatprep.subr.mxu0 0.0
    %5201 = vmatpush1.msra.mxu0 0.0
    %5202 = vmatprep.subr.mxu0 0.0
    %5203 = vmatpush1.msra.mxu0 0.0
    %5204 = vmatprep.subr.mxu0 0.0
    %5205 = vmatpush1.msra.mxu0 0.0
    %5206 = vmatprep.subr.mxu0 0.0
    %5207 = vmatpush1.msra.mxu0 0.0
    %5208 = vmatprep.subr.mxu0 0.0
    %5209 = vmatpush1.msra.mxu0 0.0
    %5210 = vmatprep.subr.mxu0 0.0
    %5211 = vmatpush1.msra.mxu0 0.0
    %5212 = vmatprep.subr.mxu0 0.0
    %5213 = vmatpush1.msra.mxu0 0.0
    %5214 = vmatprep.subr.mxu0 0.0
    %5215 = vmatpush1.msra.mxu0 0.0
    %5216 = vmatprep.subr.mxu0 0.0
    %5217 = vmatpush1.msra.mxu0 0.0
    %5218 = vmatprep.subr.mxu0 0.0
    %5219 = vmatpush1.msra.mxu0 0.0
    %5220 = vmatprep.subr.mxu0 0.0
    %5221 = vmatpush1.msra.mxu0 0.0
    %5222 = vmatprep.subr.mxu0 0.0
    %5223 = vmatpush1.msra.mxu0 0.0
    %5224 = vmatprep.subr.mxu0 0.0
    %5225 = vmatpush1.msra.mxu0 0.0
    %5226 = vmatprep.subr.mxu0 0.0
    %5227 = vmatpush1.msra.mxu0 0.0
    %5228 = vmatprep.subr.mxu0 0.0
    %5229 = vmatpush1.msra.mxu0 0.0
    %5230 = vmatprep.subr.mxu0 0.0
    %5231 = vmatpush1.msra.mxu0 0.0
    %5232 = vmatprep.mubr.f32.mxu0 0.0
    %5233 = vmatmul.mubr.f32.gmra.mrb[0].mxu0 %v5103
    %v5234 = vpop.f32.mrb[0].mxu0
    %v5235 = vadd.f32 0.0, %v5234
    %v5236 = vpop.f32.mrb[0].mxu0
    %v5237 = vadd.f32 0.0, %v5236
    %5238 = vdwg.mxu0
    %5239 = vmatprep.subr.mxu0 %v5107
    %5240 = vmatpush1.msra.mxu0 %v5106
    %5241 = vmatprep.subr.mxu0 %v5111
    %5242 = vmatpush1.msra.mxu0 %v5110
    %5243 = vmatprep.subr.mxu0 %v5115
    %5244 = vmatpush1.msra.mxu0 %v5114
    %5245 = vmatprep.subr.mxu0 %v5119
    %5246 = vmatpush1.msra.mxu0 %v5118
    %5247 = vmatprep.subr.mxu0 %v5123
    %5248 = vmatpush1.msra.mxu0 %v5122
    %5249 = vmatprep.subr.mxu0 %v5127
    %5250 = vmatpush1.msra.mxu0 %v5126
    %5251 = vmatprep.subr.mxu0 %v5131
    %5252 = vmatpush1.msra.mxu0 %v5130
    %5253 = vmatprep.subr.mxu0 %v5135
    %5254 = vmatpush1.msra.mxu0 %v5134
    %5255 = vmatprep.subr.mxu0 %v5139
    %5256 = vmatpush1.msra.mxu0 %v5138
    %5257 = vmatprep.subr.mxu0 %v5143
    %5258 = vmatpush1.msra.mxu0 %v5142
    %5259 = vmatprep.subr.mxu0 %v5147
    %5260 = vmatpush1.msra.mxu0 %v5146
    %5261 = vmatprep.subr.mxu0 %v5151
    %5262 = vmatpush1.msra.mxu0 %v5150
    %5263 = vmatprep.subr.mxu0 %v5155
    %5264 = vmatpush1.msra.mxu0 %v5154
    %5265 = vmatprep.subr.mxu0 %v5159
    %5266 = vmatpush1.msra.mxu0 %v5158
    %5267 = vmatprep.subr.mxu0 %v5163
    %5268 = vmatpush1.msra.mxu0 %v5162
    %5269 = vmatprep.subr.mxu0 %v5167
    %5270 = vmatpush1.msra.mxu0 %v5166
    %5271 = vmatprep.subr.mxu0 0.0
    %5272 = vmatpush1.msra.mxu0 0.0
    %5273 = vmatprep.subr.mxu0 0.0
    %5274 = vmatpush1.msra.mxu0 0.0
    %5275 = vmatprep.subr.mxu0 0.0
    %5276 = vmatpush1.msra.mxu0 0.0
    %5277 = vmatprep.subr.mxu0 0.0
    %5278 = vmatpush1.msra.mxu0 0.0
    %5279 = vmatprep.subr.mxu0 0.0
    %5280 = vmatpush1.msra.mxu0 0.0
    %5281 = vmatprep.subr.mxu0 0.0
    %5282 = vmatpush1.msra.mxu0 0.0
    %5283 = vmatprep.subr.mxu0 0.0
    %5284 = vmatpush1.msra.mxu0 0.0
    %5285 = vmatprep.subr.mxu0 0.0
    %5286 = vmatpush1.msra.mxu0 0.0
    %5287 = vmatprep.subr.mxu0 0.0
    %5288 = vmatpush1.msra.mxu0 0.0
    %5289 = vmatprep.subr.mxu0 0.0
    %5290 = vmatpush1.msra.mxu0 0.0
    %5291 = vmatprep.subr.mxu0 0.0
    %5292 = vmatpush1.msra.mxu0 0.0
    %5293 = vmatprep.subr.mxu0 0.0
    %5294 = vmatpush1.msra.mxu0 0.0
    %5295 = vmatprep.subr.mxu0 0.0
    %5296 = vmatpush1.msra.mxu0 0.0
    %5297 = vmatprep.subr.mxu0 0.0
    %5298 = vmatpush1.msra.mxu0 0.0
    %5299 = vmatprep.subr.mxu0 0.0
    %5300 = vmatpush1.msra.mxu0 0.0
    %5301 = vmatprep.subr.mxu0 0.0
    %5302 = vmatpush1.msra.mxu0 0.0
    %5303 = vmatprep.mubr.f32.mxu0 0.0
    %5304 = vmatmul.mubr.f32.gmra.mrb[0].mxu0 %v5103
    %v5305 = vpop.f32.mrb[0].mxu0
    %v5306 = vadd.f32 0.0, %v5305
    %v5307 = vpop.f32.mrb[0].mxu0
    %v5308 = vadd.f32 0.0, %v5307
    %5309 = vdwg.mxu0
    %v5310 = vld [vmem:[%s949] sm:$0xff]
    %v5311 = vld [vmem:[%s949 + $0x8] sm:$0xff]
    %v5312 = vadd.f32 %v5235, %v5310
    %v5313 = vadd.f32 %v5237, %v5311
    %v5314 = vld [vmem:[%s942 + $0x10] sm:$0xff]
    %v5315 = vld [vmem:[%s942 + $0x18] sm:$0xff]
    %v5316 = vadd.f32 %v5306, %v5314
    %v5317 = vadd.f32 %v5308, %v5315
    %v5318 = vxor.u32 %v5312, 2147483648
    %v5319 = vxor.u32 %v5313, 2147483648
    %v5320 = vmul.f32 %v5318, 1.442695
    %v5321 = vpow.pop %v5320
    %v5322 = vmul.f32 %v5319, 1.442695
    %v5323 = vpow.pop %v5322
    %v5324 = vadd.f32 %v5321, 1.0
    %v5325 = vadd.f32 %v5323, 1.0
    %v5326 = vrcp.pop %v5324
    %v5327 = vmul.f32 1.0, %v5326
    %v5328 = vrcp.pop %v5325
    %v5329 = vmul.f32 1.0, %v5328
    %v5330 = vtanh.pop %v5313
    %v5331 = vmul.f32 %v5327, %v5058
    %5333 = vrot.lane.b32.xlu0 %v5330, 64
    %v5334 = vpop.permute.xlu0 %5333
    %v5336 = vmul.f32 %v5327, %v5334
    %5338 = vrot.lane.b32.xlu0 %v5336, 64
    %v5339 = vpop.permute.xlu0 %5338
    %v5341 = vadd.f32 %v5331, %v5339
    %v5342 = vtanh.pop %v5341
    %5344 = vrot.lane.b32.xlu0 %v5342, 64
    %v5345 = vpop.permute.xlu0 %5344
    %v5347 = vmul.f32 %v5329, %v5345
    %v5348 = vxor.u32 %v5316, 2147483648
    %v5349 = vxor.u32 %v5317, 2147483648
    %v5350 = vmul.f32 %v5348, 1.442695
    %v5351 = vpow.pop %v5350
    %v5352 = vmul.f32 %v5349, 1.442695
    %v5353 = vpow.pop %v5352
    %v5354 = vadd.f32 %v5351, 1.0
    %v5355 = vadd.f32 %v5353, 1.0
    %v5356 = vrcp.pop %v5354
    %v5357 = vmul.f32 1.0, %v5356
    %v5358 = vrcp.pop %v5355
    %v5359 = vmul.f32 1.0, %v5358
    %v5360 = vtanh.pop %v5317
    %v5361 = vmul.f32 %v5357, %v5088
    %5363 = vrot.lane.b32.xlu0 %v5360, 64
    %v5364 = vpop.permute.xlu0 %5363
    %v5366 = vmul.f32 %v5357, %v5364
    %5368 = vrot.lane.b32.xlu0 %v5366, 64
    %v5369 = vpop.permute.xlu0 %5368
    %v5371 = vadd.f32 %v5361, %v5369
    %v5372 = vtanh.pop %v5371
    %5374 = vrot.lane.b32.xlu0 %v5372, 64
    %v5375 = vpop.permute.xlu0 %5374
    %v5377 = vmul.f32 %v5359, %v5375
    %s5378 = scalar_lea.vmem [#allocation14], 48
    %5379 = vst.msk [vmem:[%s5378] sm:$0xff] %vm163, %v5347
    %s5380 = scalar_lea.vmem [#allocation15], 8
    %5381 = vst.msk [vmem:[%s5380] sm:$0xff] %vm163, %v5377
    %5383 = vrot.lane.b32.xlu0 %v5377, 64
    %v5384 = vpop.permute.xlu0 %5383
    %v5386 = vsel %vm163, %v5347, %v5384
    %v5387 = vld [vmem:[#allocation13] sm:$0xff]
    %v5388 = vld [vmem:[#allocation13 + $0x8] sm:$0xff]
    %v5389 = vld [vmem:[#allocation13 + $0x10] sm:$0xff]
    %v5390 = vld [vmem:[#allocation13 + $0x18] sm:$0xff]
    %v5391 = vld [vmem:[#allocation13 + $0x20] sm:$0xff]
    %v5392 = vld [vmem:[#allocation13 + $0x28] sm:$0xff]
    %v5393 = vld [vmem:[#allocation13 + $0x30] sm:$0xff]
    %v5394 = vld [vmem:[#allocation13 + $0x38] sm:$0xff]
    %v5395 = vld [vmem:[#allocation13 + $0x40] sm:$0xff]
    %v5396 = vld [vmem:[#allocation13 + $0x48] sm:$0xff]
    %v5397 = vld [vmem:[#allocation13 + $0x50] sm:$0xff]
    %v5398 = vld [vmem:[#allocation13 + $0x58] sm:$0xff]
    %v5399 = vld [vmem:[#allocation13 + $0x60] sm:$0xff]
    %v5400 = vld [vmem:[#allocation13 + $0x68] sm:$0xff]
    %v5401 = vld [vmem:[#allocation13 + $0x70] sm:$0xff]
    %v5402 = vld [vmem:[#allocation13 + $0x78] sm:$0xff]
    %v5403 = vld [vmem:[#allocation13 + $0x80] sm:$0xff]
    %v5404 = vld [vmem:[#allocation13 + $0x88] sm:$0xff]
    %v5405 = vld [vmem:[#allocation13 + $0x90] sm:$0xff]
    %v5406 = vld [vmem:[#allocation13 + $0x98] sm:$0xff]
    %v5407 = vld [vmem:[#allocation13 + $0xa0] sm:$0xff]
    %v5408 = vld [vmem:[#allocation13 + $0xa8] sm:$0xff]
    %v5409 = vld [vmem:[#allocation13 + $0xb0] sm:$0xff]
    %v5410 = vld [vmem:[#allocation13 + $0xb8] sm:$0xff]
    %v5411 = vld [vmem:[#allocation13 + $0xc0] sm:$0xff]
    %v5412 = vld [vmem:[#allocation13 + $0xc8] sm:$0xff]
    %v5413 = vld [vmem:[#allocation13 + $0xd0] sm:$0xff]
    %v5414 = vld [vmem:[#allocation13 + $0xd8] sm:$0xff]
    %v5415 = vld [vmem:[#allocation13 + $0xe0] sm:$0xff]
    %v5416 = vld [vmem:[#allocation13 + $0xe8] sm:$0xff]
    %v5417 = vld [vmem:[#allocation13 + $0xf0] sm:$0xff]
    %v5418 = vld [vmem:[#allocation13 + $0xf8] sm:$0xff]
    %v5419 = vld [vmem:[#allocation13 + $0x100] sm:$0xff]
    %v5420 = vld [vmem:[#allocation13 + $0x108] sm:$0xff]
    %v5421 = vld [vmem:[#allocation13 + $0x110] sm:$0xff]
    %v5422 = vld [vmem:[#allocation13 + $0x118] sm:$0xff]
    %v5423 = vld [vmem:[#allocation13 + $0x120] sm:$0xff]
    %v5424 = vld [vmem:[#allocation13 + $0x128] sm:$0xff]
    %v5425 = vld [vmem:[#allocation13 + $0x130] sm:$0xff]
    %v5426 = vld [vmem:[#allocation13 + $0x138] sm:$0xff]
    %v5427 = vld [vmem:[#allocation13 + $0x140] sm:$0xff]
    %v5428 = vld [vmem:[#allocation13 + $0x148] sm:$0xff]
    %v5429 = vld [vmem:[#allocation13 + $0x150] sm:$0xff]
    %v5430 = vld [vmem:[#allocation13 + $0x158] sm:$0xff]
    %v5431 = vld [vmem:[#allocation13 + $0x160] sm:$0xff]
    %v5432 = vld [vmem:[#allocation13 + $0x168] sm:$0xff]
    %v5433 = vld [vmem:[#allocation13 + $0x170] sm:$0xff]
    %v5434 = vld [vmem:[#allocation13 + $0x178] sm:$0xff]
    %v5435 = vld [vmem:[#allocation13 + $0x180] sm:$0xff]
    %v5436 = vld [vmem:[#allocation13 + $0x188] sm:$0xff]
    %v5437 = vld [vmem:[#allocation13 + $0x190] sm:$0xff]
    %v5438 = vld [vmem:[#allocation13 + $0x198] sm:$0xff]
    %v5439 = vld [vmem:[#allocation13 + $0x1a0] sm:$0xff]
    %v5440 = vld [vmem:[#allocation13 + $0x1a8] sm:$0xff]
    %v5441 = vld [vmem:[#allocation13 + $0x1b0] sm:$0xff]
    %v5442 = vld [vmem:[#allocation13 + $0x1b8] sm:$0xff]
    %v5443 = vld [vmem:[#allocation13 + $0x1c0] sm:$0xff]
    %v5444 = vld [vmem:[#allocation13 + $0x1c8] sm:$0xff]
    %v5445 = vld [vmem:[#allocation13 + $0x1d0] sm:$0xff]
    %v5446 = vld [vmem:[#allocation13 + $0x1d8] sm:$0xff]
    %v5447 = vld [vmem:[#allocation13 + $0x1e0] sm:$0xff]
    %v5448 = vld [vmem:[#allocation13 + $0x1e8] sm:$0xff]
    %v5449 = vld [vmem:[#allocation13 + $0x1f0] sm:$0xff]
    %v5450 = vld [vmem:[#allocation13 + $0x1f8] sm:$0xff]
    %5451 = vmatprep.subr.mxu0 %v5388
    %5452 = vmatpush1.msra.mxu0 %v5387
    %5453 = vmatprep.subr.mxu0 %v5392
    %5454 = vmatpush1.msra.mxu0 %v5391
    %5455 = vmatprep.subr.mxu0 %v5396
    %5456 = vmatpush1.msra.mxu0 %v5395
    %5457 = vmatprep.subr.mxu0 %v5400
    %5458 = vmatpush1.msra.mxu0 %v5399
    %5459 = vmatprep.subr.mxu0 %v5404
    %5460 = vmatpush1.msra.mxu0 %v5403
    %5461 = vmatprep.subr.mxu0 %v5408
    %5462 = vmatpush1.msra.mxu0 %v5407
    %5463 = vmatprep.subr.mxu0 %v5412
    %5464 = vmatpush1.msra.mxu0 %v5411
    %5465 = vmatprep.subr.mxu0 %v5416
    %5466 = vmatpush1.msra.mxu0 %v5415
    %5467 = vmatprep.subr.mxu0 %v5420
    %5468 = vmatpush1.msra.mxu0 %v5419
    %5469 = vmatprep.subr.mxu0 %v5424
    %5470 = vmatpush1.msra.mxu0 %v5423
    %5471 = vmatprep.subr.mxu0 %v5428
    %5472 = vmatpush1.msra.mxu0 %v5427
    %5473 = vmatprep.subr.mxu0 %v5432
    %5474 = vmatpush1.msra.mxu0 %v5431
    %5475 = vmatprep.subr.mxu0 %v5436
    %5476 = vmatpush1.msra.mxu0 %v5435
    %5477 = vmatprep.subr.mxu0 %v5440
    %5478 = vmatpush1.msra.mxu0 %v5439
    %5479 = vmatprep.subr.mxu0 %v5444
    %5480 = vmatpush1.msra.mxu0 %v5443
    %5481 = vmatprep.subr.mxu0 %v5448
    %5482 = vmatpush1.msra.mxu0 %v5447
    %5483 = vmatprep.subr.mxu0 0.0
    %5484 = vmatpush1.msra.mxu0 0.0
    %5485 = vmatprep.subr.mxu0 0.0
    %5486 = vmatpush1.msra.mxu0 0.0
    %5487 = vmatprep.subr.mxu0 0.0
    %5488 = vmatpush1.msra.mxu0 0.0
    %5489 = vmatprep.subr.mxu0 0.0
    %5490 = vmatpush1.msra.mxu0 0.0
    %5491 = vmatprep.subr.mxu0 0.0
    %5492 = vmatpush1.msra.mxu0 0.0
    %5493 = vmatprep.subr.mxu0 0.0
    %5494 = vmatpush1.msra.mxu0 0.0
    %5495 = vmatprep.subr.mxu0 0.0
    %5496 = vmatpush1.msra.mxu0 0.0
    %5497 = vmatprep.subr.mxu0 0.0
    %5498 = vmatpush1.msra.mxu0 0.0
    %5499 = vmatprep.subr.mxu0 0.0
    %5500 = vmatpush1.msra.mxu0 0.0
    %5501 = vmatprep.subr.mxu0 0.0
    %5502 = vmatpush1.msra.mxu0 0.0
    %5503 = vmatprep.subr.mxu0 0.0
    %5504 = vmatpush1.msra.mxu0 0.0
    %5505 = vmatprep.subr.mxu0 0.0
    %5506 = vmatpush1.msra.mxu0 0.0
    %5507 = vmatprep.subr.mxu0 0.0
    %5508 = vmatpush1.msra.mxu0 0.0
    %5509 = vmatprep.subr.mxu0 0.0
    %5510 = vmatpush1.msra.mxu0 0.0
    %5511 = vmatprep.subr.mxu0 0.0
    %5512 = vmatpush1.msra.mxu0 0.0
    %5513 = vmatprep.subr.mxu0 0.0
    %5514 = vmatpush1.msra.mxu0 0.0
    %5515 = vmatprep.mubr.f32.mxu0 0.0
    %5516 = vmatmul.mubr.f32.gmra.mrb[0].mxu0 %v5386
    %v5517 = vpop.f32.mrb[0].mxu0
    %v5518 = vadd.f32 0.0, %v5517
    %v5519 = vpop.f32.mrb[0].mxu0
    %v5520 = vadd.f32 0.0, %v5519
    %5521 = vdwg.mxu0
    %5522 = vmatprep.subr.mxu0 %v5390
    %5523 = vmatpush1.msra.mxu0 %v5389
    %5524 = vmatprep.subr.mxu0 %v5394
    %5525 = vmatpush1.msra.mxu0 %v5393
    %5526 = vmatprep.subr.mxu0 %v5398
    %5527 = vmatpush1.msra.mxu0 %v5397
    %5528 = vmatprep.subr.mxu0 %v5402
    %5529 = vmatpush1.msra.mxu0 %v5401
    %5530 = vmatprep.subr.mxu0 %v5406
    %5531 = vmatpush1.msra.mxu0 %v5405
    %5532 = vmatprep.subr.mxu0 %v5410
    %5533 = vmatpush1.msra.mxu0 %v5409
    %5534 = vmatprep.subr.mxu0 %v5414
    %5535 = vmatpush1.msra.mxu0 %v5413
    %5536 = vmatprep.subr.mxu0 %v5418
    %5537 = vmatpush1.msra.mxu0 %v5417
    %5538 = vmatprep.subr.mxu0 %v5422
    %5539 = vmatpush1.msra.mxu0 %v5421
    %5540 = vmatprep.subr.mxu0 %v5426
    %5541 = vmatpush1.msra.mxu0 %v5425
    %5542 = vmatprep.subr.mxu0 %v5430
    %5543 = vmatpush1.msra.mxu0 %v5429
    %5544 = vmatprep.subr.mxu0 %v5434
    %5545 = vmatpush1.msra.mxu0 %v5433
    %5546 = vmatprep.subr.mxu0 %v5438
    %5547 = vmatpush1.msra.mxu0 %v5437
    %5548 = vmatprep.subr.mxu0 %v5442
    %5549 = vmatpush1.msra.mxu0 %v5441
    %5550 = vmatprep.subr.mxu0 %v5446
    %5551 = vmatpush1.msra.mxu0 %v5445
    %5552 = vmatprep.subr.mxu0 %v5450
    %5553 = vmatpush1.msra.mxu0 %v5449
    %5554 = vmatprep.subr.mxu0 0.0
    %5555 = vmatpush1.msra.mxu0 0.0
    %5556 = vmatprep.subr.mxu0 0.0
    %5557 = vmatpush1.msra.mxu0 0.0
    %5558 = vmatprep.subr.mxu0 0.0
    %5559 = vmatpush1.msra.mxu0 0.0
    %5560 = vmatprep.subr.mxu0 0.0
    %5561 = vmatpush1.msra.mxu0 0.0
    %5562 = vmatprep.subr.mxu0 0.0
    %5563 = vmatpush1.msra.mxu0 0.0
    %5564 = vmatprep.subr.mxu0 0.0
    %5565 = vmatpush1.msra.mxu0 0.0
    %5566 = vmatprep.subr.mxu0 0.0
    %5567 = vmatpush1.msra.mxu0 0.0
    %5568 = vmatprep.subr.mxu0 0.0
    %5569 = vmatpush1.msra.mxu0 0.0
    %5570 = vmatprep.subr.mxu0 0.0
    %5571 = vmatpush1.msra.mxu0 0.0
    %5572 = vmatprep.subr.mxu0 0.0
    %5573 = vmatpush1.msra.mxu0 0.0
    %5574 = vmatprep.subr.mxu0 0.0
    %5575 = vmatpush1.msra.mxu0 0.0
    %5576 = vmatprep.subr.mxu0 0.0
    %5577 = vmatpush1.msra.mxu0 0.0
    %5578 = vmatprep.subr.mxu0 0.0
    %5579 = vmatpush1.msra.mxu0 0.0
    %5580 = vmatprep.subr.mxu0 0.0
    %5581 = vmatpush1.msra.mxu0 0.0
    %5582 = vmatprep.subr.mxu0 0.0
    %5583 = vmatpush1.msra.mxu0 0.0
    %5584 = vmatprep.subr.mxu0 0.0
    %5585 = vmatpush1.msra.mxu0 0.0
    %5586 = vmatprep.mubr.f32.mxu0 0.0
    %5587 = vmatmul.mubr.f32.gmra.mrb[0].mxu0 %v5386
    %v5588 = vpop.f32.mrb[0].mxu0
    %v5589 = vadd.f32 0.0, %v5588
    %v5590 = vpop.f32.mrb[0].mxu0
    %v5591 = vadd.f32 0.0, %v5590
    %5592 = vdwg.mxu0
    %v5593 = vld [vmem:[%s661] sm:$0xff]
    %v5594 = vld [vmem:[%s661 + $0x8] sm:$0xff]
    %v5595 = vadd.f32 %v5518, %v5593
    %v5596 = vadd.f32 %v5520, %v5594
    %v5597 = vld [vmem:[%s654 + $0x10] sm:$0xff]
    %v5598 = vld [vmem:[%s654 + $0x18] sm:$0xff]
    %v5599 = vadd.f32 %v5589, %v5597
    %v5600 = vadd.f32 %v5591, %v5598
    %v5601 = vxor.u32 %v5595, 2147483648
    %v5602 = vxor.u32 %v5596, 2147483648
    %v5603 = vmul.f32 %v5601, 1.442695
    %v5604 = vpow.pop %v5603
    %v5605 = vmul.f32 %v5602, 1.442695
    %v5606 = vpow.pop %v5605
    %v5607 = vadd.f32 %v5604, 1.0
    %v5608 = vadd.f32 %v5606, 1.0
    %v5609 = vrcp.pop %v5607
    %v5610 = vmul.f32 1.0, %v5609
    %v5611 = vrcp.pop %v5608
    %v5612 = vmul.f32 1.0, %v5611
    %v5613 = vtanh.pop %v5596
    %v5614 = vmul.f32 %v5610, %v5341
    %5616 = vrot.lane.b32.xlu0 %v5613, 64
    %v5617 = vpop.permute.xlu0 %5616
    %v5619 = vmul.f32 %v5610, %v5617
    %5621 = vrot.lane.b32.xlu0 %v5619, 64
    %v5622 = vpop.permute.xlu0 %5621
    %v5624 = vadd.f32 %v5614, %v5622
    %v5625 = vtanh.pop %v5624
    %5627 = vrot.lane.b32.xlu0 %v5625, 64
    %v5628 = vpop.permute.xlu0 %5627
    %v5630 = vmul.f32 %v5612, %v5628
    %v5631 = vxor.u32 %v5599, 2147483648
    %v5632 = vxor.u32 %v5600, 2147483648
    %v5633 = vmul.f32 %v5631, 1.442695
    %v5634 = vpow.pop %v5633
    %v5635 = vmul.f32 %v5632, 1.442695
    %v5636 = vpow.pop %v5635
    %v5637 = vadd.f32 %v5634, 1.0
    %v5638 = vadd.f32 %v5636, 1.0
    %v5639 = vrcp.pop %v5637
    %v5640 = vmul.f32 1.0, %v5639
    %v5641 = vrcp.pop %v5638
    %v5642 = vmul.f32 1.0, %v5641
    %v5643 = vtanh.pop %v5600
    %v5644 = vmul.f32 %v5640, %v5371
    %5646 = vrot.lane.b32.xlu0 %v5643, 64
    %v5647 = vpop.permute.xlu0 %5646
    %v5649 = vmul.f32 %v5640, %v5647
    %5651 = vrot.lane.b32.xlu0 %v5649, 64
    %v5652 = vpop.permute.xlu0 %5651
    %v5654 = vadd.f32 %v5644, %v5652
    %v5655 = vtanh.pop %v5654
    %5657 = vrot.lane.b32.xlu0 %v5655, 64
    %v5658 = vpop.permute.xlu0 %5657
    %v5660 = vmul.f32 %v5642, %v5658
    %s5661 = scalar_lea.vmem [#allocation14], 56
    %5662 = vst.msk [vmem:[%s5661] sm:$0xff] %vm163, %v5630
    %5663 = vst.msk [vmem:[#allocation15] sm:$0xff] %vm163, %v5660
    %s5664 = scalar_lea.vmem [#allocation17], 16
    %5665 = vst.msk [vmem:[%s5664] sm:$0xff] %vm163, %v5630
    %s5666 = scalar_lea.vmem [#allocation17], 24
    %5667 = vst.msk [vmem:[%s5666] sm:$0xff] %vm163, %v5660
    %5669 = vrot.lane.b32.xlu0 %v5624, 64
    %v5670 = vpop.permute.xlu0 %5669
    %s5672 = scalar_lea.vmem [#allocation18], 16
    %5673 = vst.msk [vmem:[%s5672] sm:$0xff] %vm163, %v5670
    %5675 = vrot.lane.b32.xlu0 %v5654, 64
    %v5676 = vpop.permute.xlu0 %5675
    %s5678 = scalar_lea.vmem [#allocation18], 24
    %5679 = vst.msk [vmem:[%s5678] sm:$0xff] %vm163, %v5676
    // Predicated region
    $region50: #{tpu_custom_call.1} parent=1 // pred_check
      _
    $region51: #{tpu_custom_call.1} parent=1 // pred_check_branch
      %5681 = sbr.rel (0) target = $region53
    $region52: #{tpu_custom_call.1} parent=1 // pred_region
      %s5683 = ssub.s32 1024, 1024
      %5684 = vsyncadd [#allocation7], %s5683
      %s5685 = sshll.u32 [#allocation14], 4
      %s5686 = int_to_ptr.vmem [resolvable:$true] %s5685
      %5691 = dma.vmem_to_hbm [thread:$0]  %s5686, 1024, %s7, [#allocation7], 128, 128, 8
    $region53: #{tpu_custom_call.1} parent=1 // pred_fallthru
      _
    // Predicated region
    $region54: #{tpu_custom_call.1} parent=1 // pred_check
      _
    $region55: #{tpu_custom_call.1} parent=1 // pred_check_branch
      %5693 = sbr.rel (0) target = $region57
    $region56: #{tpu_custom_call.1} parent=1 // pred_region
      %s5695 = ssub.s32 1024, 1024
      %5696 = vsyncadd [#allocation16], %s5695
      %s5697 = sshll.u32 [#allocation15], 4
      %s5698 = int_to_ptr.vmem [resolvable:$true] %s5697
      %5703 = dma.vmem_to_hbm [thread:$0]  %s5698, 1024, %s8, [#allocation16], 128, 128, 8
    $region57: #{tpu_custom_call.1} parent=1 // pred_fallthru
      _
    // Predicated region
    $region58: #{tpu_custom_call.1} parent=1 // pred_check
      _
    $region59: #{tpu_custom_call.1} parent=1 // pred_check_branch
      %5705 = sbr.rel (0) target = $region61
    $region60: #{tpu_custom_call.1} parent=1 // pred_region
      %s5707 = ssub.s32 512, 512
      %5708 = vsyncadd [#allocation16], %s5707
      %s5709 = sshll.u32 [#allocation17], 4
      %s5710 = int_to_ptr.vmem [resolvable:$true] %s5709
      %5715 = dma.vmem_to_hbm [thread:$0]  %s5710, 512, %s9, [#allocation16], 128, 128, 8
    $region61: #{tpu_custom_call.1} parent=1 // pred_fallthru
      _
    // Predicated region
    $region62: #{tpu_custom_call.1} parent=1 // pred_check
      _
    $region63: #{tpu_custom_call.1} parent=1 // pred_check_branch
      %5717 = sbr.rel (0) target = $region65
    $region64: #{tpu_custom_call.1} parent=1 // pred_region
      %s5719 = ssub.s32 512, 512
      %5720 = vsyncadd [#allocation19], %s5719
      %s5721 = sshll.u32 [#allocation18], 4
      %s5722 = int_to_ptr.vmem [resolvable:$true] %s5721
      %5727 = dma.vmem_to_hbm [thread:$0]  %s5722, 512, %s10, [#allocation19], 128, 128, 8
    $region65: #{tpu_custom_call.1} parent=1 // pred_fallthru
      _
    // Predicated region
    $region66: #{tpu_custom_call.1} parent=1 // pred_check
      _
    $region67: #{tpu_custom_call.1} parent=1 // pred_check_branch
      %5729 = sbr.rel (0) target = $region69
    $region68: #{tpu_custom_call.1} parent=1 // pred_region
      %5730 = dma.done [#allocation7], 1024
    $region69: #{tpu_custom_call.1} parent=1 // pred_fallthru
      _
    // Predicated region
    $region70: #{tpu_custom_call.1} parent=1 // pred_check
      _
    $region71: #{tpu_custom_call.1} parent=1 // pred_check_branch
      %5732 = sbr.rel (0) target = $region73
    $region72: #{tpu_custom_call.1} parent=1 // pred_region
      %5733 = dma.done [#allocation16], 1024
    $region73: #{tpu_custom_call.1} parent=1 // pred_fallthru
      _
    // Predicated region
    $region74: #{tpu_custom_call.1} parent=1 // pred_check
      _
    $region75: #{tpu_custom_call.1} parent=1 // pred_check_branch
      %5735 = sbr.rel (0) target = $region77
    $region76: #{tpu_custom_call.1} parent=1 // pred_region
      %5736 = dma.done [#allocation16], 512
    $region77: #{tpu_custom_call.1} parent=1 // pred_fallthru
      _
    // Predicated region
    $region78: #{tpu_custom_call.1} parent=1 // pred_check
      _
    $region79: #{tpu_custom_call.1} parent=1 // pred_check_branch
      %5738 = sbr.rel (0) target = $region81
    $region80: #{tpu_custom_call.1} parent=1 // pred_region
      %5739 = dma.done [#allocation19], 512
    $region81: #{tpu_custom_call.1} parent=1 // pred_fallthru
      _
    %5740 = vsyncpa [#allocation6], 1
    %5741 = vsyncpa [#allocation9], 1
    %5742 = vsyncpa [#allocation12], 1
    %5743 = vsyncpa [#allocation7], 1
    %5744 = vsyncpa [#allocation16], 1
    %5745 = vsyncpa [#allocation19], 1

</llo_original>
